<compile_context>
chip_gen: v6e
topology: v6e:2x2x1
jax: 0.10.0
libtpu: 0.0.40
codegen_flags: <defaults>
</compile_context>

<pallas_src>
import functools

import jax
import jax.numpy as jnp
from jax.experimental import pallas as pl
from jax.experimental.pallas import tpu as pltpu


def _make_kernel(num_layers: int, seq_len: int, hidden_size: int):
    """Builds the wavefront Pallas kernel body (all sizes static)."""
    L, S, H = num_layers, seq_len, hidden_size
    DOT = dict(preferred_element_type=jnp.float32,
               precision=jax.lax.Precision.HIGHEST)

    def kernel(x_ref, h0_ref, w_ih0_ref, w_deep_ref, w_outb_ref, b_ref,
               y_ref, h_new_ref):
        # x_ref      : [S, In]
        # h0_ref     : [L, H]            (aliased with h_new_ref)
        # w_ih0_ref  : [In, H]           layer-0 input->hidden
        # w_deep_ref : [L, 2H, H]        rows 0..H-1 = w_ih[l] (zero for l=0),
        #                                rows H..2H-1 = w_hh[l]
        # w_outb_ref : [H+1, Out]        rows 0..H-1 = w_out, row H = b_out
        # b_ref      : [L, H]
        # y_ref      : [S, Out]
        # h_new_ref  : [L, H]

        # ---- loop-invariant loads, hoisted once ------------------------------
        b = b_ref[...]                                     # [L, H]
        w_hh0 = w_deep_ref[0][H:, :]                       # [H, H] layer-0 recurrent
        w_cat = [w_deep_ref[l] for l in range(1, L)]       # [2H, H] per deep layer
        h = [h0_ref[pl.ds(l, 1), :] for l in range(L)]     # [1, H] each (read before
                                                           # any write to h_new_ref)

        # ---- layer-0 input projection for ALL timesteps: one batched matmul --
        pre0 = jnp.dot(x_ref[...], w_ih0_ref[...], **DOT) + b[0:1, :]   # [S, H]

        # ---- wavefront recurrence: step w runs layer l at t = w - l ----------
        # All updates within a wavefront step are mutually independent (each
        # layer reads only values produced in previous wavefront steps), so the
        # commit happens after the per-step loop over layers.
        last = [None] * S                                  # last layer's output per t
        for w in range(S + L - 1):                         # static, fully unrolled
            updates = []
            for l in range(L):
                t = w - l
                if t < 0 or t >= S:
                    continue
                if l == 0:
                    nh = jnp.tanh(pre0[t:t + 1, :]
                                  + jnp.dot(h[0], w_hh0, **DOT))
                else:
                    # fused input-proj + recurrence: [1,2H] x [2H,H] MXU matmul
                    lhs = jnp.concatenate([h[l - 1], h[l]], axis=1)     # [1, 2H]
                    nh = jnp.tanh(jnp.dot(lhs, w_cat[l - 1], **DOT)
                                  + b[l:l + 1, :])
                updates.append((l, t, nh))
            for l, t, nh in updates:                       # commit after compute
                h[l] = nh
                if l == L - 1:
                    last[t] = nh

        # ---- hidden sequence never touches VMEM: one concat + one batched ----
        # output projection + single dense stores.
        seq = jnp.concatenate(last, axis=0)                # [S, H] (one vreg here)
        wob = w_outb_ref[...]                              # [H+1, Out]
        y_ref[...] = jnp.dot(seq, wob[:H, :], **DOT) + wob[H:, :]
        h_new_ref[...] = jnp.concatenate(h, axis=0)        # [L, H]

    return kernel


@functools.partial(jax.jit, static_argnames=("num_layers",))
def model_forward(x, h0, w_ih0, w_deep, w_outb, b, *, num_layers):
    seq_len, _ = x.shape
    hidden_size = h0.shape[1]
    output_size = w_outb.shape[1]

    kernel = _make_kernel(num_layers, seq_len, hidden_size)
    vmem = pl.BlockSpec(memory_space=pltpu.MemorySpace.VMEM)

    # Everything (x, packed params, y) is a few KiB — fully VMEM-resident, no grid.
    y, h_new = pl.pallas_call(
        kernel,
        out_shape=(
            jax.ShapeDtypeStruct((seq_len, output_size), jnp.float32),
            jax.ShapeDtypeStruct((num_layers, hidden_size), jnp.float32),
        ),
        in_specs=[vmem] * 6,
        out_specs=(vmem, vmem),
        input_output_aliases={1: 1},   # h0 buffer reused for h_new
    )(x, h0, w_ih0, w_deep, w_outb, b)
    return y, h_new


def init_params(key, input_size, output_size, hidden_size, num_layers):
    """Raw (unpacked) parameters — same layout the pure-JAX reference consumes."""
    ks = jax.random.split(key, 6)
    scale = 0.1
    w_ih0 = scale * jax.random.normal(ks[0], (input_size, hidden_size), jnp.float32)
    n_rest = max(num_layers - 1, 1)
    w_ih_rest = scale * jax.random.normal(
        ks[1], (n_rest, hidden_size, hidden_size), jnp.float32)
    if num_layers == 1:
        w_ih_rest = jnp.zeros_like(w_ih_rest)   # unused
    w_hh = scale * jax.random.normal(
        ks[2], (num_layers, hidden_size, hidden_size), jnp.float32)
    b = scale * jax.random.normal(ks[3], (num_layers, hidden_size), jnp.float32)
    w_out = scale * jax.random.normal(ks[4], (hidden_size, output_size), jnp.float32)
    b_out = scale * jax.random.normal(ks[5], (1, output_size), jnp.float32)
    return w_ih0, w_ih_rest, w_hh, b, w_out, b_out


def pack_params(w_ih0, w_ih_rest, w_hh, b, w_out, b_out):
    """Consolidate per-layer weights into few arrays (fewer tiny kernel DMAs)."""
    num_layers, hidden_size, _ = w_hh.shape
    # w_deep[l] = [w_ih[l]; w_hh[l]] stacked along the contraction (row) axis.
    # Layer 0's input->hidden slice is unused inside the kernel (kept zero).
    ih_parts = [jnp.zeros((1, hidden_size, hidden_size), jnp.float32)]
    if num_layers > 1:
        ih_parts.append(w_ih_rest[: num_layers - 1])
    rows_ih = jnp.concatenate(ih_parts, axis=0)            # [L, H, H]
    w_deep = jnp.concatenate([rows_ih, w_hh], axis=1)      # [L, 2H, H]
    w_outb = jnp.concatenate([w_out, b_out], axis=0)       # [H+1, Out]
    return w_ih0, w_deep, w_outb, b


def reference_forward(x, h0, w_ih0, w_ih_rest, w_hh, b, w_out, b_out, num_layers):
    """Pure-JAX reference (time-major) with pinned matmul precision."""
    P = jax.lax.Precision.HIGHEST
    seq_len = x.shape[0]
    hs = [h0[l:l + 1] for l in range(num_layers)]
    ys = []
    for t in range(seq_len):
        inp = x[t:t + 1]
        for l in range(num_layers):
            wx = w_ih0 if l == 0 else w_ih_rest[l - 1]
            hs[l] = jnp.tanh(jnp.dot(inp, wx, precision=P)
                             + jnp.dot(hs[l], w_hh[l], precision=P)
                             + b[l:l + 1])
            inp = hs[l]
        ys.append(jnp.dot(inp, w_out, precision=P) + b_out)
    return jnp.concatenate(ys, 0), jnp.concatenate(hs, 0)


if __name__ == "__main__":
    # Hyperparams implied by ModelBase.__init__
    input_size, output_size, hidden_size, num_layers = 32, 16, 32, 2
    seq_len = 8

    key = jax.random.PRNGKey(0)
    k_x, k_h, k_p = jax.random.split(key, 3)
    x = jax.random.normal(k_x, (seq_len, input_size), jnp.float32)
    h0 = jax.random.normal(k_h, (num_layers, hidden_size), jnp.float32)

    raw = init_params(k_p, input_size, output_size, hidden_size, num_layers)
    w_ih0, w_deep, w_outb, b = pack_params(*raw)

    y, h_new = model_forward(x, h0, w_ih0, w_deep, w_outb, b,
                             num_layers=num_layers)
    jax.block_until_ready((y, h_new))

    y_ref, h_ref = reference_forward(x, h0, *raw, num_layers=num_layers)
    assert y.shape == (seq_len, output_size)
    assert h_new.shape == (num_layers, hidden_size)
    assert jnp.allclose(y, y_ref, atol=2e-5), "output mismatch"
    assert jnp.allclose(h_new, h_ref, atol=2e-5), "hidden state mismatch"

    print("KERNEL_OK")
</pallas_src>

<mosaic_0001>
module attributes {stable_mosaic.version = 11 : i64} {
  func.func @kernel(%arg0: memref<8x32xf32, #tpu.memory_space<vmem>>, %arg1: memref<2x32xf32, #tpu.memory_space<vmem>>, %arg2: memref<32x32xf32, #tpu.memory_space<vmem>>, %arg3: memref<2x64x32xf32, #tpu.memory_space<vmem>>, %arg4: memref<33x16xf32, #tpu.memory_space<vmem>>, %arg5: memref<2x32xf32, #tpu.memory_space<vmem>>, %arg6: memref<8x16xf32, #tpu.memory_space<vmem>>, %arg7: memref<2x32xf32, #tpu.memory_space<vmem>>) attributes {dimension_semantics = [], scalar_prefetch = 0 : i64, scratch_operands = 0 : i64, tpu.core_type = #tpu.core_type<tc>} {
    %c0 = arith.constant 0 : index
    %c0_0 = arith.constant 0 : index
    %0 = vector.load %arg5[%c0, %c0_0] : memref<2x32xf32, #tpu.memory_space<vmem>>, vector<2x32xf32>
    %c0_1 = arith.constant 0 : index
    %c0_2 = arith.constant 0 : index
    %c0_3 = arith.constant 0 : index
    %1 = vector.load %arg3[%c0_1, %c0_2, %c0_3] : memref<2x64x32xf32, #tpu.memory_space<vmem>>, vector<1x64x32xf32>
    %2 = vector.shape_cast %1 : vector<1x64x32xf32> to vector<64x32xf32>
    %3 = vector.extract_strided_slice %2 {offsets = [32, 0], sizes = [32, 32], strides = [1, 1]} : vector<64x32xf32> to vector<32x32xf32>
    %c1 = arith.constant 1 : index
    %c0_4 = arith.constant 0 : index
    %c0_5 = arith.constant 0 : index
    %4 = vector.load %arg3[%c1, %c0_4, %c0_5] : memref<2x64x32xf32, #tpu.memory_space<vmem>>, vector<1x64x32xf32>
    %5 = vector.shape_cast %4 : vector<1x64x32xf32> to vector<64x32xf32>
    %c0_6 = arith.constant 0 : index
    %c0_7 = arith.constant 0 : index
    %6 = vector.load %arg1[%c0_6, %c0_7] : memref<2x32xf32, #tpu.memory_space<vmem>>, vector<1x32xf32>
    %c1_8 = arith.constant 1 : index
    %c0_9 = arith.constant 0 : index
    %7 = vector.load %arg1[%c1_8, %c0_9] : memref<2x32xf32, #tpu.memory_space<vmem>>, vector<1x32xf32>
    %c0_10 = arith.constant 0 : index
    %c0_11 = arith.constant 0 : index
    %8 = vector.load %arg0[%c0_10, %c0_11] : memref<8x32xf32, #tpu.memory_space<vmem>>, vector<8x32xf32>
    %c0_12 = arith.constant 0 : index
    %c0_13 = arith.constant 0 : index
    %9 = vector.load %arg2[%c0_12, %c0_13] : memref<32x32xf32, #tpu.memory_space<vmem>>, vector<32x32xf32>
    %cst = arith.constant dense<0.000000e+00> : vector<8x32xf32>
    %10 = tpu.matmul %8, %9, %cst {dimension_numbers = #tpu.dot_dimension_numbers<[1], [0], [0], [1], [0, 0, 1, 1], [], []>, precision = #tpu.contract_precision<fp32>} : vector<8x32xf32>, vector<32x32xf32>, vector<8x32xf32> -> vector<8x32xf32>
    %11 = vector.extract_strided_slice %0 {offsets = [0, 0], sizes = [1, 32], strides = [1, 1]} : vector<2x32xf32> to vector<1x32xf32>
    %12 = vector.broadcast %11 : vector<1x32xf32> to vector<8x32xf32>
    %13 = arith.addf %10, %12 : vector<8x32xf32>
    %14 = vector.extract_strided_slice %13 {offsets = [0, 0], sizes = [1, 32], strides = [1, 1]} : vector<8x32xf32> to vector<1x32xf32>
    %cst_14 = arith.constant dense<0.000000e+00> : vector<1x32xf32>
    %15 = tpu.matmul %6, %3, %cst_14 {dimension_numbers = #tpu.dot_dimension_numbers<[1], [0], [0], [1], [0, 0, 1, 1], [], []>, precision = #tpu.contract_precision<fp32>} : vector<1x32xf32>, vector<32x32xf32>, vector<1x32xf32> -> vector<1x32xf32>
    %16 = arith.addf %14, %15 : vector<1x32xf32>
    %17 = math.tanh %16 : vector<1x32xf32>
    %18 = vector.extract_strided_slice %13 {offsets = [1, 0], sizes = [1, 32], strides = [1, 1]} : vector<8x32xf32> to vector<1x32xf32>
    %cst_15 = arith.constant dense<0.000000e+00> : vector<1x32xf32>
    %19 = tpu.matmul %17, %3, %cst_15 {dimension_numbers = #tpu.dot_dimension_numbers<[1], [0], [0], [1], [0, 0, 1, 1], [], []>, precision = #tpu.contract_precision<fp32>} : vector<1x32xf32>, vector<32x32xf32>, vector<1x32xf32> -> vector<1x32xf32>
    %20 = arith.addf %18, %19 : vector<1x32xf32>
    %21 = math.tanh %20 : vector<1x32xf32>
    %22 = tpu.concatenate %17, %7 in 1 : vector<1x32xf32>, vector<1x32xf32> -> vector<1x64xf32>
    %cst_16 = arith.constant dense<0.000000e+00> : vector<1x32xf32>
    %23 = tpu.matmul %22, %5, %cst_16 {dimension_numbers = #tpu.dot_dimension_numbers<[1], [0], [0], [1], [0, 0, 1, 1], [], []>, precision = #tpu.contract_precision<fp32>} : vector<1x64xf32>, vector<64x32xf32>, vector<1x32xf32> -> vector<1x32xf32>
    %24 = vector.extract_strided_slice %0 {offsets = [1, 0], sizes = [1, 32], strides = [1, 1]} : vector<2x32xf32> to vector<1x32xf32>
    %25 = arith.addf %23, %24 : vector<1x32xf32>
    %26 = math.tanh %25 : vector<1x32xf32>
    %27 = vector.extract_strided_slice %13 {offsets = [2, 0], sizes = [1, 32], strides = [1, 1]} : vector<8x32xf32> to vector<1x32xf32>
    %cst_17 = arith.constant dense<0.000000e+00> : vector<1x32xf32>
    %28 = tpu.matmul %21, %3, %cst_17 {dimension_numbers = #tpu.dot_dimension_numbers<[1], [0], [0], [1], [0, 0, 1, 1], [], []>, precision = #tpu.contract_precision<fp32>} : vector<1x32xf32>, vector<32x32xf32>, vector<1x32xf32> -> vector<1x32xf32>
    %29 = arith.addf %27, %28 : vector<1x32xf32>
    %30 = math.tanh %29 : vector<1x32xf32>
    %31 = tpu.concatenate %21, %26 in 1 : vector<1x32xf32>, vector<1x32xf32> -> vector<1x64xf32>
    %cst_18 = arith.constant dense<0.000000e+00> : vector<1x32xf32>
    %32 = tpu.matmul %31, %5, %cst_18 {dimension_numbers = #tpu.dot_dimension_numbers<[1], [0], [0], [1], [0, 0, 1, 1], [], []>, precision = #tpu.contract_precision<fp32>} : vector<1x64xf32>, vector<64x32xf32>, vector<1x32xf32> -> vector<1x32xf32>
    %33 = vector.extract_strided_slice %0 {offsets = [1, 0], sizes = [1, 32], strides = [1, 1]} : vector<2x32xf32> to vector<1x32xf32>
    %34 = arith.addf %32, %33 : vector<1x32xf32>
    %35 = math.tanh %34 : vector<1x32xf32>
    %36 = vector.extract_strided_slice %13 {offsets = [3, 0], sizes = [1, 32], strides = [1, 1]} : vector<8x32xf32> to vector<1x32xf32>
    %cst_19 = arith.constant dense<0.000000e+00> : vector<1x32xf32>
    %37 = tpu.matmul %30, %3, %cst_19 {dimension_numbers = #tpu.dot_dimension_numbers<[1], [0], [0], [1], [0, 0, 1, 1], [], []>, precision = #tpu.contract_precision<fp32>} : vector<1x32xf32>, vector<32x32xf32>, vector<1x32xf32> -> vector<1x32xf32>
    %38 = arith.addf %36, %37 : vector<1x32xf32>
    %39 = math.tanh %38 : vector<1x32xf32>
    %40 = tpu.concatenate %30, %35 in 1 : vector<1x32xf32>, vector<1x32xf32> -> vector<1x64xf32>
    %cst_20 = arith.constant dense<0.000000e+00> : vector<1x32xf32>
    %41 = tpu.matmul %40, %5, %cst_20 {dimension_numbers = #tpu.dot_dimension_numbers<[1], [0], [0], [1], [0, 0, 1, 1], [], []>, precision = #tpu.contract_precision<fp32>} : vector<1x64xf32>, vector<64x32xf32>, vector<1x32xf32> -> vector<1x32xf32>
    %42 = vector.extract_strided_slice %0 {offsets = [1, 0], sizes = [1, 32], strides = [1, 1]} : vector<2x32xf32> to vector<1x32xf32>
    %43 = arith.addf %41, %42 : vector<1x32xf32>
    %44 = math.tanh %43 : vector<1x32xf32>
    %45 = vector.extract_strided_slice %13 {offsets = [4, 0], sizes = [1, 32], strides = [1, 1]} : vector<8x32xf32> to vector<1x32xf32>
    %cst_21 = arith.constant dense<0.000000e+00> : vector<1x32xf32>
    %46 = tpu.matmul %39, %3, %cst_21 {dimension_numbers = #tpu.dot_dimension_numbers<[1], [0], [0], [1], [0, 0, 1, 1], [], []>, precision = #tpu.contract_precision<fp32>} : vector<1x32xf32>, vector<32x32xf32>, vector<1x32xf32> -> vector<1x32xf32>
    %47 = arith.addf %45, %46 : vector<1x32xf32>
    %48 = math.tanh %47 : vector<1x32xf32>
    %49 = tpu.concatenate %39, %44 in 1 : vector<1x32xf32>, vector<1x32xf32> -> vector<1x64xf32>
    %cst_22 = arith.constant dense<0.000000e+00> : vector<1x32xf32>
    %50 = tpu.matmul %49, %5, %cst_22 {dimension_numbers = #tpu.dot_dimension_numbers<[1], [0], [0], [1], [0, 0, 1, 1], [], []>, precision = #tpu.contract_precision<fp32>} : vector<1x64xf32>, vector<64x32xf32>, vector<1x32xf32> -> vector<1x32xf32>
    %51 = vector.extract_strided_slice %0 {offsets = [1, 0], sizes = [1, 32], strides = [1, 1]} : vector<2x32xf32> to vector<1x32xf32>
    %52 = arith.addf %50, %51 : vector<1x32xf32>
    %53 = math.tanh %52 : vector<1x32xf32>
    %54 = vector.extract_strided_slice %13 {offsets = [5, 0], sizes = [1, 32], strides = [1, 1]} : vector<8x32xf32> to vector<1x32xf32>
    %cst_23 = arith.constant dense<0.000000e+00> : vector<1x32xf32>
    %55 = tpu.matmul %48, %3, %cst_23 {dimension_numbers = #tpu.dot_dimension_numbers<[1], [0], [0], [1], [0, 0, 1, 1], [], []>, precision = #tpu.contract_precision<fp32>} : vector<1x32xf32>, vector<32x32xf32>, vector<1x32xf32> -> vector<1x32xf32>
    %56 = arith.addf %54, %55 : vector<1x32xf32>
    %57 = math.tanh %56 : vector<1x32xf32>
    %58 = tpu.concatenate %48, %53 in 1 : vector<1x32xf32>, vector<1x32xf32> -> vector<1x64xf32>
    %cst_24 = arith.constant dense<0.000000e+00> : vector<1x32xf32>
    %59 = tpu.matmul %58, %5, %cst_24 {dimension_numbers = #tpu.dot_dimension_numbers<[1], [0], [0], [1], [0, 0, 1, 1], [], []>, precision = #tpu.contract_precision<fp32>} : vector<1x64xf32>, vector<64x32xf32>, vector<1x32xf32> -> vector<1x32xf32>
    %60 = vector.extract_strided_slice %0 {offsets = [1, 0], sizes = [1, 32], strides = [1, 1]} : vector<2x32xf32> to vector<1x32xf32>
    %61 = arith.addf %59, %60 : vector<1x32xf32>
    %62 = math.tanh %61 : vector<1x32xf32>
    %63 = vector.extract_strided_slice %13 {offsets = [6, 0], sizes = [1, 32], strides = [1, 1]} : vector<8x32xf32> to vector<1x32xf32>
    %cst_25 = arith.constant dense<0.000000e+00> : vector<1x32xf32>
    %64 = tpu.matmul %57, %3, %cst_25 {dimension_numbers = #tpu.dot_dimension_numbers<[1], [0], [0], [1], [0, 0, 1, 1], [], []>, precision = #tpu.contract_precision<fp32>} : vector<1x32xf32>, vector<32x32xf32>, vector<1x32xf32> -> vector<1x32xf32>
    %65 = arith.addf %63, %64 : vector<1x32xf32>
    %66 = math.tanh %65 : vector<1x32xf32>
    %67 = tpu.concatenate %57, %62 in 1 : vector<1x32xf32>, vector<1x32xf32> -> vector<1x64xf32>
    %cst_26 = arith.constant dense<0.000000e+00> : vector<1x32xf32>
    %68 = tpu.matmul %67, %5, %cst_26 {dimension_numbers = #tpu.dot_dimension_numbers<[1], [0], [0], [1], [0, 0, 1, 1], [], []>, precision = #tpu.contract_precision<fp32>} : vector<1x64xf32>, vector<64x32xf32>, vector<1x32xf32> -> vector<1x32xf32>
    %69 = vector.extract_strided_slice %0 {offsets = [1, 0], sizes = [1, 32], strides = [1, 1]} : vector<2x32xf32> to vector<1x32xf32>
    %70 = arith.addf %68, %69 : vector<1x32xf32>
    %71 = math.tanh %70 : vector<1x32xf32>
    %72 = vector.extract_strided_slice %13 {offsets = [7, 0], sizes = [1, 32], strides = [1, 1]} : vector<8x32xf32> to vector<1x32xf32>
    %cst_27 = arith.constant dense<0.000000e+00> : vector<1x32xf32>
    %73 = tpu.matmul %66, %3, %cst_27 {dimension_numbers = #tpu.dot_dimension_numbers<[1], [0], [0], [1], [0, 0, 1, 1], [], []>, precision = #tpu.contract_precision<fp32>} : vector<1x32xf32>, vector<32x32xf32>, vector<1x32xf32> -> vector<1x32xf32>
    %74 = arith.addf %72, %73 : vector<1x32xf32>
    %75 = math.tanh %74 : vector<1x32xf32>
    %76 = tpu.concatenate %66, %71 in 1 : vector<1x32xf32>, vector<1x32xf32> -> vector<1x64xf32>
    %cst_28 = arith.constant dense<0.000000e+00> : vector<1x32xf32>
    %77 = tpu.matmul %76, %5, %cst_28 {dimension_numbers = #tpu.dot_dimension_numbers<[1], [0], [0], [1], [0, 0, 1, 1], [], []>, precision = #tpu.contract_precision<fp32>} : vector<1x64xf32>, vector<64x32xf32>, vector<1x32xf32> -> vector<1x32xf32>
    %78 = vector.extract_strided_slice %0 {offsets = [1, 0], sizes = [1, 32], strides = [1, 1]} : vector<2x32xf32> to vector<1x32xf32>
    %79 = arith.addf %77, %78 : vector<1x32xf32>
    %80 = math.tanh %79 : vector<1x32xf32>
    %81 = tpu.concatenate %75, %80 in 1 : vector<1x32xf32>, vector<1x32xf32> -> vector<1x64xf32>
    %cst_29 = arith.constant dense<0.000000e+00> : vector<1x32xf32>
    %82 = tpu.matmul %81, %5, %cst_29 {dimension_numbers = #tpu.dot_dimension_numbers<[1], [0], [0], [1], [0, 0, 1, 1], [], []>, precision = #tpu.contract_precision<fp32>} : vector<1x64xf32>, vector<64x32xf32>, vector<1x32xf32> -> vector<1x32xf32>
    %83 = vector.extract_strided_slice %0 {offsets = [1, 0], sizes = [1, 32], strides = [1, 1]} : vector<2x32xf32> to vector<1x32xf32>
    %84 = arith.addf %82, %83 : vector<1x32xf32>
    %85 = math.tanh %84 : vector<1x32xf32>
    %86 = tpu.concatenate %26, %35, %44, %53, %62, %71, %80, %85 in 0 : vector<1x32xf32>, vector<1x32xf32>, vector<1x32xf32>, vector<1x32xf32>, vector<1x32xf32>, vector<1x32xf32>, vector<1x32xf32>, vector<1x32xf32> -> vector<8x32xf32>
    %c0_30 = arith.constant 0 : index
    %c0_31 = arith.constant 0 : index
    %87 = vector.load %arg4[%c0_30, %c0_31] : memref<33x16xf32, #tpu.memory_space<vmem>>, vector<33x16xf32>
    %88 = vector.extract_strided_slice %87 {offsets = [0, 0], sizes = [32, 16], strides = [1, 1]} : vector<33x16xf32> to vector<32x16xf32>
    %cst_32 = arith.constant dense<0.000000e+00> : vector<8x16xf32>
    %89 = tpu.matmul %86, %88, %cst_32 {dimension_numbers = #tpu.dot_dimension_numbers<[1], [0], [0], [1], [0, 0, 1, 1], [], []>, precision = #tpu.contract_precision<fp32>} : vector<8x32xf32>, vector<32x16xf32>, vector<8x16xf32> -> vector<8x16xf32>
    %90 = vector.extract_strided_slice %87 {offsets = [32, 0], sizes = [1, 16], strides = [1, 1]} : vector<33x16xf32> to vector<1x16xf32>
    %91 = vector.broadcast %90 : vector<1x16xf32> to vector<8x16xf32>
    %92 = arith.addf %89, %91 : vector<8x16xf32>
    %c0_33 = arith.constant 0 : index
    %c0_34 = arith.constant 0 : index
    %93 = vector.load %arg6[%c0_33, %c0_34] : memref<8x16xf32, #tpu.memory_space<vmem>>, vector<8x16xf32>
    tpu.vector_store %arg6[%c0_33, %c0_34], %92 {strides = array<i32>} : memref<8x16xf32, #tpu.memory_space<vmem>>, vector<8x16xf32>,
    %94 = tpu.concatenate %75, %85 in 0 : vector<1x32xf32>, vector<1x32xf32> -> vector<2x32xf32>
    %c0_35 = arith.constant 0 : index
    %c0_36 = arith.constant 0 : index
    %95 = vector.load %arg7[%c0_35, %c0_36] : memref<2x32xf32, #tpu.memory_space<vmem>>, vector<2x32xf32>
    tpu.vector_store %arg7[%c0_35, %c0_36], %94 {strides = array<i32>} : memref<2x32xf32, #tpu.memory_space<vmem>>, vector<2x32xf32>,
    return
  }
}

</mosaic_0001>

<llo_original>
// kernel: model_forward.1
$region0: #{model_forward.1}
  #allocation0 [shape = 'u32[]', space=smem, size = 0x4, offset = 0x4, fixed_abs, tag = 'smem constant byte address 0x4 - core index']
  #allocation1 [shape = 'u32[144,128]{1,0:T(1,128)}', space=vmem, size = 0x12000, scoped, tag = 'internal scratch']
  %s0 = inlined_call_operand.vmem [shape: f32[8,32], index: 0, kind: input, shape index: {}]
  %s1 = inlined_call_operand.hbm [shape: f32[2,32], index: 1, kind: input, shape index: {}, may-alias: {1,7}]
  %s2 = inlined_call_operand.vmem [shape: f32[32,32], index: 2, kind: input, shape index: {}]
  %s3 = inlined_call_operand.vmem [shape: f32[2,64,32], index: 3, kind: input, shape index: {}]
  %s4 = inlined_call_operand.vmem [shape: f32[33,16], index: 4, kind: input, shape index: {}]
  %s5 = inlined_call_operand.vmem [shape: f32[2,32], index: 5, kind: input, shape index: {}]
  %s6 = inlined_call_operand.hbm [shape: f32[8,16], index: 6, kind: output, shape index: {0}]
  %s7 = inlined_call_operand.hbm [shape: f32[2,32], index: 7, kind: output, shape index: {1}, may-alias: {1,7}]
  %8 = xla_tuple %s6, %s7
  %s9 = sld [smem:[#allocation0]]
  $region46: #{model_forward.1} parent=0
    _
  %s11 = ssub.s32 1, %s9
  %s12 = scalar_select 0, %s11, %s9
  $region1: #{model_forward.1} parent=0
    #allocation2 [shape = 'u8[1024]{0}', space=vmem, size = 0x400, scoped, tag = 'input window, operand 1, single buffered']
    #allocation3 [shape = 's32[1]{0}', space=sflag, size = 0x4, scoped, tag = 'scoped memory for model_forward.1']
    #allocation4 [shape = 's32[1]{0}', space=sflag, size = 0x4, scoped, tag = 'scoped memory for model_forward.1']
    #allocation5 [shape = 'u8[4096]{0}', space=vmem, size = 0x1000, scoped, tag = 'output window, operand 0, single buffered']
    #allocation6 [shape = 'u8[1024]{0}', space=vmem, size = 0x400, scoped, tag = 'output window, operand 1, single buffered']
    #allocation7 [shape = 's32[1]{0}', space=sflag, size = 0x4, scoped, tag = 'scoped memory for model_forward.1']
    %13 = vsyncpa [#allocation3], 0
    %14 = vsyncpa [#allocation4], 0
    %15 = vsyncpa [#allocation7], 0
    // Predicated region
    $region2: #{model_forward.1} parent=1 // pred_check
      _
    $region3: #{model_forward.1} parent=1 // pred_check_branch
      %17 = sbr.rel (0) target = $region5
    $region4: #{model_forward.1} parent=1 // pred_region
      _
    $region5: #{model_forward.1} parent=1 // pred_fallthru
      _
    // Predicated region
    $region6: #{model_forward.1} parent=1 // pred_check
      _
    $region7: #{model_forward.1} parent=1 // pred_check_branch
      %19 = sbr.rel (0) target = $region9
    $region8: #{model_forward.1} parent=1 // pred_region
      %s21 = ssub.s32 32, 32
      %22 = vsyncadd [#allocation3], %s21
      %s24 = sshll.u32 [#allocation2], 4
      %s25 = int_to_ptr.vmem [resolvable:$true] %s24
      %27 = dma.hbm_to_vmem [thread:$0]  %s1, 32, %s25, [#allocation3]
    $region9: #{model_forward.1} parent=1 // pred_fallthru
      _
    // Predicated region
    $region10: #{model_forward.1} parent=1 // pred_check
      _
    $region11: #{model_forward.1} parent=1 // pred_check_branch
      %29 = sbr.rel (0) target = $region13
    $region12: #{model_forward.1} parent=1 // pred_region
      _
    $region13: #{model_forward.1} parent=1 // pred_fallthru
      _
    // Predicated region
    $region14: #{model_forward.1} parent=1 // pred_check
      _
    $region15: #{model_forward.1} parent=1 // pred_check_branch
      %31 = sbr.rel (0) target = $region17
    $region16: #{model_forward.1} parent=1 // pred_region
      _
    $region17: #{model_forward.1} parent=1 // pred_fallthru
      _
    // Predicated region
    $region18: #{model_forward.1} parent=1 // pred_check
      _
    $region19: #{model_forward.1} parent=1 // pred_check_branch
      %33 = sbr.rel (0) target = $region21
    $region20: #{model_forward.1} parent=1 // pred_region
      _
    $region21: #{model_forward.1} parent=1 // pred_fallthru
      _
    // Predicated region
    $region22: #{model_forward.1} parent=1 // pred_check
      _
    $region23: #{model_forward.1} parent=1 // pred_check_branch
      %35 = sbr.rel (0) target = $region25
    $region24: #{model_forward.1} parent=1 // pred_region
      _
    $region25: #{model_forward.1} parent=1 // pred_fallthru
      _
    // Predicated region
    $region26: #{model_forward.1} parent=1 // pred_check
      _
    $region27: #{model_forward.1} parent=1 // pred_check_branch
      %37 = sbr.rel (0) target = $region29
    $region28: #{model_forward.1} parent=1 // pred_region
      %38 = dma.done [#allocation3], 32
    $region29: #{model_forward.1} parent=1 // pred_fallthru
      _
    %v39 = vld [vmem:[%s5] sm:$0x3]
    %v40 = vld [vmem:[%s3 + $0x20] sm:$0xff]
    %v41 = vld [vmem:[%s3 + $0x28] sm:$0xff]
    %v42 = vld [vmem:[%s3 + $0x30] sm:$0xff]
    %v43 = vld [vmem:[%s3 + $0x38] sm:$0xff]
    %s44 = scalar_lea.vmem %s3, 64
    %v45 = vld [vmem:[%s44] sm:$0xff]
    %v46 = vld [vmem:[%s44 + $0x8] sm:$0xff]
    %v47 = vld [vmem:[%s44 + $0x10] sm:$0xff]
    %v48 = vld [vmem:[%s44 + $0x18] sm:$0xff]
    %v49 = vld [vmem:[%s44 + $0x20] sm:$0xff]
    %v50 = vld [vmem:[%s44 + $0x28] sm:$0xff]
    %v51 = vld [vmem:[%s44 + $0x30] sm:$0xff]
    %v52 = vld [vmem:[%s44 + $0x38] sm:$0xff]
    %v53 = vld [vmem:[#allocation2] sm:$0x1]
    %v54 = vld [vmem:[#allocation2 + $0x1] sm:$0x1]
    %v55 = vld [vmem:[%s0] sm:$0xff]
    %v56 = vld [vmem:[%s2] sm:$0xff]
    %v57 = vld [vmem:[%s2 + $0x8] sm:$0xff]
    %v58 = vld [vmem:[%s2 + $0x10] sm:$0xff]
    %v59 = vld [vmem:[%s2 + $0x18] sm:$0xff]
    %v60 = vlaneseq
    %v61 = vshrl.u32 %v60, 7
    %v62 = vsub.s32 0, %v61
    %v63 = vrot.slane %v39, %v62
    %vm64 = vcmask 261120
    %v66 = vsel %vm64, %v55, 0
    %68 = vmatprep.subr.mxu0 0.0
    %69 = vmatpush1.msra.mxu0 0.0
    %70 = vmatprep.subr.mxu0 0.0
    %71 = vmatpush1.msra.mxu0 0.0
    %72 = vmatprep.subr.mxu0 0.0
    %73 = vmatpush1.msra.mxu0 0.0
    %74 = vmatprep.subr.mxu0 0.0
    %75 = vmatpush1.msra.mxu0 0.0
    %76 = vmatprep.subr.mxu0 0.0
    %77 = vmatpush1.msra.mxu0 0.0
    %78 = vmatprep.subr.mxu0 0.0
    %79 = vmatpush1.msra.mxu0 0.0
    %80 = vmatprep.subr.mxu0 0.0
    %81 = vmatpush1.msra.mxu0 0.0
    %82 = vmatprep.subr.mxu0 0.0
    %83 = vmatpush1.msra.mxu0 0.0
    %84 = vmatprep.subr.mxu0 0.0
    %85 = vmatpush1.msra.mxu0 0.0
    %86 = vmatprep.subr.mxu0 0.0
    %87 = vmatpush1.msra.mxu0 0.0
    %88 = vmatprep.subr.mxu0 0.0
    %89 = vmatpush1.msra.mxu0 0.0
    %90 = vmatprep.subr.mxu0 0.0
    %91 = vmatpush1.msra.mxu0 0.0
    %92 = vmatprep.subr.mxu0 0.0
    %v93 = vand.u32 %v59, 4294901760
    %94 = vmatpush1.msra.mxu0 %v93
    %95 = vmatprep.subr.mxu0 0.0
    %v96 = vand.u32 %v58, 4294901760
    %97 = vmatpush1.msra.mxu0 %v96
    %98 = vmatprep.subr.mxu0 0.0
    %v99 = vand.u32 %v57, 4294901760
    %100 = vmatpush1.msra.mxu0 %v99
    %101 = vmatprep.subr.mxu0 0.0
    %v102 = vand.u32 %v56, 4294901760
    %103 = vmatpush1.msra.mxu0 %v102
    %104 = vmatprep.subr.mxu0 0.0
    %105 = vmatpush2.msra.mxu0 0.0
    %106 = vmatprep.subr.mxu0 0.0
    %107 = vmatpush2.msra.mxu0 0.0
    %108 = vmatprep.subr.mxu0 0.0
    %109 = vmatpush2.msra.mxu0 0.0
    %110 = vmatprep.subr.mxu0 0.0
    %111 = vmatpush2.msra.mxu0 0.0
    %112 = vmatprep.subr.mxu0 0.0
    %113 = vmatpush2.msra.mxu0 0.0
    %114 = vmatprep.subr.mxu0 0.0
    %115 = vmatpush2.msra.mxu0 0.0
    %116 = vmatprep.subr.mxu0 0.0
    %117 = vmatpush2.msra.mxu0 0.0
    %118 = vmatprep.subr.mxu0 0.0
    %119 = vmatpush2.msra.mxu0 0.0
    %120 = vmatprep.subr.mxu0 0.0
    %121 = vmatpush2.msra.mxu0 0.0
    %122 = vmatprep.subr.mxu0 0.0
    %123 = vmatpush2.msra.mxu0 0.0
    %124 = vmatprep.subr.mxu0 0.0
    %125 = vmatpush2.msra.mxu0 0.0
    %126 = vmatprep.subr.mxu0 0.0
    %127 = vmatpush2.msra.mxu0 0.0
    %128 = vmatprep.subr.mxu0 0.0
    %129 = vmatpush2.msra.mxu0 0.0
    %130 = vmatprep.subr.mxu0 0.0
    %131 = vmatpush2.msra.mxu0 0.0
    %132 = vmatprep.subr.mxu0 0.0
    %133 = vmatpush2.msra.mxu0 0.0
    %134 = vmatprep.subr.mxu0 0.0
    %135 = vmatpush2.msra.mxu0 0.0
    %136 = vmatprep.mubr.f32.mxu0 0.0
    %v137 = vand.u32 %v66, 4294901760
    %v138 = vsub.f32 %v66, %v137
    %v139 = vand.u32 %v138, 4294901760
    %v140 = vsub.f32 %v138, %v139
    %v141 = vand.u32 %v140, 4294901760
    %142 = vmatmul.mubr.f32.gmra.mxu0 %v141
    %v143 = vpop.f32.mrf.mxu0
    %v144 = vadd.f32 %v63, %v143
    %v145 = vpop.f32.mrf.mxu0
    %146 = vdwg.mxu0
    %147 = vmatprep.subr.mxu0 0.0
    %148 = vmatpush1.msra.mxu0 0.0
    %149 = vmatprep.subr.mxu0 0.0
    %150 = vmatpush1.msra.mxu0 0.0
    %151 = vmatprep.subr.mxu0 0.0
    %152 = vmatpush1.msra.mxu0 0.0
    %153 = vmatprep.subr.mxu0 0.0
    %154 = vmatpush1.msra.mxu0 0.0
    %155 = vmatprep.subr.mxu0 0.0
    %156 = vmatpush1.msra.mxu0 0.0
    %157 = vmatprep.subr.mxu0 0.0
    %158 = vmatpush1.msra.mxu0 0.0
    %159 = vmatprep.subr.mxu0 0.0
    %160 = vmatpush1.msra.mxu0 0.0
    %161 = vmatprep.subr.mxu0 0.0
    %162 = vmatpush1.msra.mxu0 0.0
    %163 = vmatprep.subr.mxu0 0.0
    %164 = vmatpush1.msra.mxu0 0.0
    %165 = vmatprep.subr.mxu0 0.0
    %166 = vmatpush1.msra.mxu0 0.0
    %167 = vmatprep.subr.mxu0 0.0
    %168 = vmatpush1.msra.mxu0 0.0
    %169 = vmatprep.subr.mxu0 0.0
    %170 = vmatpush1.msra.mxu0 0.0
    %171 = vmatprep.subr.mxu0 0.0
    %v172 = vand.u32 %v59, 4294901760
    %v173 = vsub.f32 %v59, %v172
    %v174 = vand.u32 %v173, 4294901760
    %v175 = vsub.f32 %v173, %v174
    %v176 = vand.u32 %v175, 4294901760
    %177 = vmatpush1.msra.mxu0 %v176
    %178 = vmatprep.subr.mxu0 0.0
    %v179 = vand.u32 %v58, 4294901760
    %v180 = vsub.f32 %v58, %v179
    %v181 = vand.u32 %v180, 4294901760
    %v182 = vsub.f32 %v180, %v181
    %v183 = vand.u32 %v182, 4294901760
    %184 = vmatpush1.msra.mxu0 %v183
    %185 = vmatprep.subr.mxu0 0.0
    %v186 = vand.u32 %v57, 4294901760
    %v187 = vsub.f32 %v57, %v186
    %v188 = vand.u32 %v187, 4294901760
    %v189 = vsub.f32 %v187, %v188
    %v190 = vand.u32 %v189, 4294901760
    %191 = vmatpush1.msra.mxu0 %v190
    %192 = vmatprep.subr.mxu0 0.0
    %v193 = vand.u32 %v56, 4294901760
    %v194 = vsub.f32 %v56, %v193
    %v195 = vand.u32 %v194, 4294901760
    %v196 = vsub.f32 %v194, %v195
    %v197 = vand.u32 %v196, 4294901760
    %198 = vmatpush1.msra.mxu0 %v197
    %199 = vmatprep.subr.mxu0 0.0
    %200 = vmatpush2.msra.mxu0 0.0
    %201 = vmatprep.subr.mxu0 0.0
    %202 = vmatpush2.msra.mxu0 0.0
    %203 = vmatprep.subr.mxu0 0.0
    %204 = vmatpush2.msra.mxu0 0.0
    %205 = vmatprep.subr.mxu0 0.0
    %206 = vmatpush2.msra.mxu0 0.0
    %207 = vmatprep.subr.mxu0 0.0
    %208 = vmatpush2.msra.mxu0 0.0
    %209 = vmatprep.subr.mxu0 0.0
    %210 = vmatpush2.msra.mxu0 0.0
    %211 = vmatprep.subr.mxu0 0.0
    %212 = vmatpush2.msra.mxu0 0.0
    %213 = vmatprep.subr.mxu0 0.0
    %214 = vmatpush2.msra.mxu0 0.0
    %215 = vmatprep.subr.mxu0 0.0
    %216 = vmatpush2.msra.mxu0 0.0
    %217 = vmatprep.subr.mxu0 0.0
    %218 = vmatpush2.msra.mxu0 0.0
    %219 = vmatprep.subr.mxu0 0.0
    %220 = vmatpush2.msra.mxu0 0.0
    %221 = vmatprep.subr.mxu0 0.0
    %222 = vmatpush2.msra.mxu0 0.0
    %223 = vmatprep.subr.mxu0 0.0
    %224 = vmatpush2.msra.mxu0 0.0
    %225 = vmatprep.subr.mxu0 0.0
    %226 = vmatpush2.msra.mxu0 0.0
    %227 = vmatprep.subr.mxu0 0.0
    %228 = vmatpush2.msra.mxu0 0.0
    %229 = vmatprep.subr.mxu0 0.0
    %230 = vmatpush2.msra.mxu0 0.0
    %231 = vmatprep.mubr.f32.mxu0 0.0
    %v232 = vand.u32 %v66, 4294901760
    %233 = vmatmul.mubr.f32.gmra.mxu0 %v232
    %v234 = vpop.f32.mrf.mxu0
    %v235 = vadd.f32 %v144, %v234
    %v236 = vpop.f32.mrf.mxu0
    %237 = vdwg.mxu0
    %238 = vmatprep.subr.mxu0 0.0
    %239 = vmatpush1.msra.mxu0 0.0
    %240 = vmatprep.subr.mxu0 0.0
    %241 = vmatpush1.msra.mxu0 0.0
    %242 = vmatprep.subr.mxu0 0.0
    %243 = vmatpush1.msra.mxu0 0.0
    %244 = vmatprep.subr.mxu0 0.0
    %245 = vmatpush1.msra.mxu0 0.0
    %246 = vmatprep.subr.mxu0 0.0
    %247 = vmatpush1.msra.mxu0 0.0
    %248 = vmatprep.subr.mxu0 0.0
    %249 = vmatpush1.msra.mxu0 0.0
    %250 = vmatprep.subr.mxu0 0.0
    %251 = vmatpush1.msra.mxu0 0.0
    %252 = vmatprep.subr.mxu0 0.0
    %253 = vmatpush1.msra.mxu0 0.0
    %254 = vmatprep.subr.mxu0 0.0
    %255 = vmatpush1.msra.mxu0 0.0
    %256 = vmatprep.subr.mxu0 0.0
    %257 = vmatpush1.msra.mxu0 0.0
    %258 = vmatprep.subr.mxu0 0.0
    %259 = vmatpush1.msra.mxu0 0.0
    %260 = vmatprep.subr.mxu0 0.0
    %261 = vmatpush1.msra.mxu0 0.0
    %262 = vmatprep.subr.mxu0 0.0
    %v263 = vand.u32 %v59, 4294901760
    %v264 = vsub.f32 %v59, %v263
    %265 = vmatpush1.msra.mxu0 %v264
    %266 = vmatprep.subr.mxu0 0.0
    %v267 = vand.u32 %v58, 4294901760
    %v268 = vsub.f32 %v58, %v267
    %269 = vmatpush1.msra.mxu0 %v268
    %270 = vmatprep.subr.mxu0 0.0
    %v271 = vand.u32 %v57, 4294901760
    %v272 = vsub.f32 %v57, %v271
    %273 = vmatpush1.msra.mxu0 %v272
    %274 = vmatprep.subr.mxu0 0.0
    %v275 = vand.u32 %v56, 4294901760
    %v276 = vsub.f32 %v56, %v275
    %277 = vmatpush1.msra.mxu0 %v276
    %278 = vmatprep.subr.mxu0 0.0
    %279 = vmatpush2.msra.mxu0 0.0
    %280 = vmatprep.subr.mxu0 0.0
    %281 = vmatpush2.msra.mxu0 0.0
    %282 = vmatprep.subr.mxu0 0.0
    %283 = vmatpush2.msra.mxu0 0.0
    %284 = vmatprep.subr.mxu0 0.0
    %285 = vmatpush2.msra.mxu0 0.0
    %286 = vmatprep.subr.mxu0 0.0
    %287 = vmatpush2.msra.mxu0 0.0
    %288 = vmatprep.subr.mxu0 0.0
    %289 = vmatpush2.msra.mxu0 0.0
    %290 = vmatprep.subr.mxu0 0.0
    %291 = vmatpush2.msra.mxu0 0.0
    %292 = vmatprep.subr.mxu0 0.0
    %293 = vmatpush2.msra.mxu0 0.0
    %294 = vmatprep.subr.mxu0 0.0
    %295 = vmatpush2.msra.mxu0 0.0
    %296 = vmatprep.subr.mxu0 0.0
    %297 = vmatpush2.msra.mxu0 0.0
    %298 = vmatprep.subr.mxu0 0.0
    %299 = vmatpush2.msra.mxu0 0.0
    %300 = vmatprep.subr.mxu0 0.0
    %301 = vmatpush2.msra.mxu0 0.0
    %302 = vmatprep.subr.mxu0 0.0
    %303 = vmatpush2.msra.mxu0 0.0
    %304 = vmatprep.subr.mxu0 0.0
    %305 = vmatpush2.msra.mxu0 0.0
    %306 = vmatprep.subr.mxu0 0.0
    %307 = vmatpush2.msra.mxu0 0.0
    %308 = vmatprep.subr.mxu0 0.0
    %309 = vmatpush2.msra.mxu0 0.0
    %310 = vmatprep.mubr.f32.mxu0 0.0
    %v311 = vand.u32 %v66, 4294901760
    %v312 = vsub.f32 %v66, %v311
    %313 = vmatmul.mubr.f32.gmra.mxu0 %v312
    %v314 = vpop.f32.mrf.mxu0
    %v315 = vadd.f32 %v235, %v314
    %v316 = vpop.f32.mrf.mxu0
    %317 = vdwg.mxu0
    %318 = vmatprep.subr.mxu0 0.0
    %319 = vmatpush1.msra.mxu0 0.0
    %320 = vmatprep.subr.mxu0 0.0
    %321 = vmatpush1.msra.mxu0 0.0
    %322 = vmatprep.subr.mxu0 0.0
    %323 = vmatpush1.msra.mxu0 0.0
    %324 = vmatprep.subr.mxu0 0.0
    %325 = vmatpush1.msra.mxu0 0.0
    %326 = vmatprep.subr.mxu0 0.0
    %327 = vmatpush1.msra.mxu0 0.0
    %328 = vmatprep.subr.mxu0 0.0
    %329 = vmatpush1.msra.mxu0 0.0
    %330 = vmatprep.subr.mxu0 0.0
    %331 = vmatpush1.msra.mxu0 0.0
    %332 = vmatprep.subr.mxu0 0.0
    %333 = vmatpush1.msra.mxu0 0.0
    %334 = vmatprep.subr.mxu0 0.0
    %335 = vmatpush1.msra.mxu0 0.0
    %336 = vmatprep.subr.mxu0 0.0
    %337 = vmatpush1.msra.mxu0 0.0
    %338 = vmatprep.subr.mxu0 0.0
    %339 = vmatpush1.msra.mxu0 0.0
    %340 = vmatprep.subr.mxu0 0.0
    %341 = vmatpush1.msra.mxu0 0.0
    %342 = vmatprep.subr.mxu0 0.0
    %v343 = vand.u32 %v59, 4294901760
    %344 = vmatpush1.msra.mxu0 %v343
    %345 = vmatprep.subr.mxu0 0.0
    %v346 = vand.u32 %v58, 4294901760
    %347 = vmatpush1.msra.mxu0 %v346
    %348 = vmatprep.subr.mxu0 0.0
    %v349 = vand.u32 %v57, 4294901760
    %350 = vmatpush1.msra.mxu0 %v349
    %351 = vmatprep.subr.mxu0 0.0
    %v352 = vand.u32 %v56, 4294901760
    %353 = vmatpush1.msra.mxu0 %v352
    %354 = vmatprep.subr.mxu0 0.0
    %355 = vmatpush2.msra.mxu0 0.0
    %356 = vmatprep.subr.mxu0 0.0
    %357 = vmatpush2.msra.mxu0 0.0
    %358 = vmatprep.subr.mxu0 0.0
    %359 = vmatpush2.msra.mxu0 0.0
    %360 = vmatprep.subr.mxu0 0.0
    %361 = vmatpush2.msra.mxu0 0.0
    %362 = vmatprep.subr.mxu0 0.0
    %363 = vmatpush2.msra.mxu0 0.0
    %364 = vmatprep.subr.mxu0 0.0
    %365 = vmatpush2.msra.mxu0 0.0
    %366 = vmatprep.subr.mxu0 0.0
    %367 = vmatpush2.msra.mxu0 0.0
    %368 = vmatprep.subr.mxu0 0.0
    %369 = vmatpush2.msra.mxu0 0.0
    %370 = vmatprep.subr.mxu0 0.0
    %371 = vmatpush2.msra.mxu0 0.0
    %372 = vmatprep.subr.mxu0 0.0
    %373 = vmatpush2.msra.mxu0 0.0
    %374 = vmatprep.subr.mxu0 0.0
    %375 = vmatpush2.msra.mxu0 0.0
    %376 = vmatprep.subr.mxu0 0.0
    %377 = vmatpush2.msra.mxu0 0.0
    %378 = vmatprep.subr.mxu0 0.0
    %379 = vmatpush2.msra.mxu0 0.0
    %380 = vmatprep.subr.mxu0 0.0
    %381 = vmatpush2.msra.mxu0 0.0
    %382 = vmatprep.subr.mxu0 0.0
    %383 = vmatpush2.msra.mxu0 0.0
    %384 = vmatprep.subr.mxu0 0.0
    %385 = vmatpush2.msra.mxu0 0.0
    %386 = vmatprep.mubr.f32.mxu0 0.0
    %v387 = vand.u32 %v66, 4294901760
    %v388 = vsub.f32 %v66, %v387
    %v389 = vand.u32 %v388, 4294901760
    %390 = vmatmul.mubr.f32.gmra.mxu0 %v389
    %v391 = vpop.f32.mrf.mxu0
    %v392 = vadd.f32 %v315, %v391
    %v393 = vpop.f32.mrf.mxu0
    %394 = vdwg.mxu0
    %395 = vmatprep.subr.mxu0 0.0
    %396 = vmatpush1.msra.mxu0 0.0
    %397 = vmatprep.subr.mxu0 0.0
    %398 = vmatpush1.msra.mxu0 0.0
    %399 = vmatprep.subr.mxu0 0.0
    %400 = vmatpush1.msra.mxu0 0.0
    %401 = vmatprep.subr.mxu0 0.0
    %402 = vmatpush1.msra.mxu0 0.0
    %403 = vmatprep.subr.mxu0 0.0
    %404 = vmatpush1.msra.mxu0 0.0
    %405 = vmatprep.subr.mxu0 0.0
    %406 = vmatpush1.msra.mxu0 0.0
    %407 = vmatprep.subr.mxu0 0.0
    %408 = vmatpush1.msra.mxu0 0.0
    %409 = vmatprep.subr.mxu0 0.0
    %410 = vmatpush1.msra.mxu0 0.0
    %411 = vmatprep.subr.mxu0 0.0
    %412 = vmatpush1.msra.mxu0 0.0
    %413 = vmatprep.subr.mxu0 0.0
    %414 = vmatpush1.msra.mxu0 0.0
    %415 = vmatprep.subr.mxu0 0.0
    %416 = vmatpush1.msra.mxu0 0.0
    %417 = vmatprep.subr.mxu0 0.0
    %418 = vmatpush1.msra.mxu0 0.0
    %419 = vmatprep.subr.mxu0 0.0
    %v420 = vand.u32 %v59, 4294901760
    %v421 = vsub.f32 %v59, %v420
    %v422 = vand.u32 %v421, 4294901760
    %423 = vmatpush1.msra.mxu0 %v422
    %424 = vmatprep.subr.mxu0 0.0
    %v425 = vand.u32 %v58, 4294901760
    %v426 = vsub.f32 %v58, %v425
    %v427 = vand.u32 %v426, 4294901760
    %428 = vmatpush1.msra.mxu0 %v427
    %429 = vmatprep.subr.mxu0 0.0
    %v430 = vand.u32 %v57, 4294901760
    %v431 = vsub.f32 %v57, %v430
    %v432 = vand.u32 %v431, 4294901760
    %433 = vmatpush1.msra.mxu0 %v432
    %434 = vmatprep.subr.mxu0 0.0
    %v435 = vand.u32 %v56, 4294901760
    %v436 = vsub.f32 %v56, %v435
    %v437 = vand.u32 %v436, 4294901760
    %438 = vmatpush1.msra.mxu0 %v437
    %439 = vmatprep.subr.mxu0 0.0
    %440 = vmatpush2.msra.mxu0 0.0
    %441 = vmatprep.subr.mxu0 0.0
    %442 = vmatpush2.msra.mxu0 0.0
    %443 = vmatprep.subr.mxu0 0.0
    %444 = vmatpush2.msra.mxu0 0.0
    %445 = vmatprep.subr.mxu0 0.0
    %446 = vmatpush2.msra.mxu0 0.0
    %447 = vmatprep.subr.mxu0 0.0
    %448 = vmatpush2.msra.mxu0 0.0
    %449 = vmatprep.subr.mxu0 0.0
    %450 = vmatpush2.msra.mxu0 0.0
    %451 = vmatprep.subr.mxu0 0.0
    %452 = vmatpush2.msra.mxu0 0.0
    %453 = vmatprep.subr.mxu0 0.0
    %454 = vmatpush2.msra.mxu0 0.0
    %455 = vmatprep.subr.mxu0 0.0
    %456 = vmatpush2.msra.mxu0 0.0
    %457 = vmatprep.subr.mxu0 0.0
    %458 = vmatpush2.msra.mxu0 0.0
    %459 = vmatprep.subr.mxu0 0.0
    %460 = vmatpush2.msra.mxu0 0.0
    %461 = vmatprep.subr.mxu0 0.0
    %462 = vmatpush2.msra.mxu0 0.0
    %463 = vmatprep.subr.mxu0 0.0
    %464 = vmatpush2.msra.mxu0 0.0
    %465 = vmatprep.subr.mxu0 0.0
    %466 = vmatpush2.msra.mxu0 0.0
    %467 = vmatprep.subr.mxu0 0.0
    %468 = vmatpush2.msra.mxu0 0.0
    %469 = vmatprep.subr.mxu0 0.0
    %470 = vmatpush2.msra.mxu0 0.0
    %471 = vmatprep.mubr.f32.mxu0 0.0
    %v472 = vand.u32 %v66, 4294901760
    %473 = vmatmul.mubr.f32.gmra.mxu0 %v472
    %v474 = vpop.f32.mrf.mxu0
    %v475 = vadd.f32 %v392, %v474
    %v476 = vpop.f32.mrf.mxu0
    %477 = vdwg.mxu0
    %478 = vmatprep.subr.mxu0 0.0
    %479 = vmatpush1.msra.mxu0 0.0
    %480 = vmatprep.subr.mxu0 0.0
    %481 = vmatpush1.msra.mxu0 0.0
    %482 = vmatprep.subr.mxu0 0.0
    %483 = vmatpush1.msra.mxu0 0.0
    %484 = vmatprep.subr.mxu0 0.0
    %485 = vmatpush1.msra.mxu0 0.0
    %486 = vmatprep.subr.mxu0 0.0
    %487 = vmatpush1.msra.mxu0 0.0
    %488 = vmatprep.subr.mxu0 0.0
    %489 = vmatpush1.msra.mxu0 0.0
    %490 = vmatprep.subr.mxu0 0.0
    %491 = vmatpush1.msra.mxu0 0.0
    %492 = vmatprep.subr.mxu0 0.0
    %493 = vmatpush1.msra.mxu0 0.0
    %494 = vmatprep.subr.mxu0 0.0
    %495 = vmatpush1.msra.mxu0 0.0
    %496 = vmatprep.subr.mxu0 0.0
    %497 = vmatpush1.msra.mxu0 0.0
    %498 = vmatprep.subr.mxu0 0.0
    %499 = vmatpush1.msra.mxu0 0.0
    %500 = vmatprep.subr.mxu0 0.0
    %501 = vmatpush1.msra.mxu0 0.0
    %502 = vmatprep.subr.mxu0 0.0
    %v503 = vand.u32 %v59, 4294901760
    %504 = vmatpush1.msra.mxu0 %v503
    %505 = vmatprep.subr.mxu0 0.0
    %v506 = vand.u32 %v58, 4294901760
    %507 = vmatpush1.msra.mxu0 %v506
    %508 = vmatprep.subr.mxu0 0.0
    %v509 = vand.u32 %v57, 4294901760
    %510 = vmatpush1.msra.mxu0 %v509
    %511 = vmatprep.subr.mxu0 0.0
    %v512 = vand.u32 %v56, 4294901760
    %513 = vmatpush1.msra.mxu0 %v512
    %514 = vmatprep.subr.mxu0 0.0
    %515 = vmatpush2.msra.mxu0 0.0
    %516 = vmatprep.subr.mxu0 0.0
    %517 = vmatpush2.msra.mxu0 0.0
    %518 = vmatprep.subr.mxu0 0.0
    %519 = vmatpush2.msra.mxu0 0.0
    %520 = vmatprep.subr.mxu0 0.0
    %521 = vmatpush2.msra.mxu0 0.0
    %522 = vmatprep.subr.mxu0 0.0
    %523 = vmatpush2.msra.mxu0 0.0
    %524 = vmatprep.subr.mxu0 0.0
    %525 = vmatpush2.msra.mxu0 0.0
    %526 = vmatprep.subr.mxu0 0.0
    %527 = vmatpush2.msra.mxu0 0.0
    %528 = vmatprep.subr.mxu0 0.0
    %529 = vmatpush2.msra.mxu0 0.0
    %530 = vmatprep.subr.mxu0 0.0
    %531 = vmatpush2.msra.mxu0 0.0
    %532 = vmatprep.subr.mxu0 0.0
    %533 = vmatpush2.msra.mxu0 0.0
    %534 = vmatprep.subr.mxu0 0.0
    %535 = vmatpush2.msra.mxu0 0.0
    %536 = vmatprep.subr.mxu0 0.0
    %537 = vmatpush2.msra.mxu0 0.0
    %538 = vmatprep.subr.mxu0 0.0
    %539 = vmatpush2.msra.mxu0 0.0
    %540 = vmatprep.subr.mxu0 0.0
    %541 = vmatpush2.msra.mxu0 0.0
    %542 = vmatprep.subr.mxu0 0.0
    %543 = vmatpush2.msra.mxu0 0.0
    %544 = vmatprep.subr.mxu0 0.0
    %545 = vmatpush2.msra.mxu0 0.0
    %546 = vmatprep.mubr.f32.mxu0 0.0
    %v547 = vand.u32 %v66, 4294901760
    %548 = vmatmul.mubr.f32.gmra.mxu0 %v547
    %v549 = vpop.f32.mrf.mxu0
    %v550 = vadd.f32 %v475, %v549
    %v551 = vpop.f32.mrf.mxu0
    %552 = vdwg.mxu0
    %v554 = vsel %vm64, %v53, 0
    %556 = vmatprep.subr.mxu0 0.0
    %557 = vmatpush1.msra.mxu0 0.0
    %558 = vmatprep.subr.mxu0 0.0
    %559 = vmatpush1.msra.mxu0 0.0
    %560 = vmatprep.subr.mxu0 0.0
    %561 = vmatpush1.msra.mxu0 0.0
    %562 = vmatprep.subr.mxu0 0.0
    %563 = vmatpush1.msra.mxu0 0.0
    %564 = vmatprep.subr.mxu0 0.0
    %565 = vmatpush1.msra.mxu0 0.0
    %566 = vmatprep.subr.mxu0 0.0
    %567 = vmatpush1.msra.mxu0 0.0
    %568 = vmatprep.subr.mxu0 0.0
    %569 = vmatpush1.msra.mxu0 0.0
    %570 = vmatprep.subr.mxu0 0.0
    %571 = vmatpush1.msra.mxu0 0.0
    %572 = vmatprep.subr.mxu0 0.0
    %573 = vmatpush1.msra.mxu0 0.0
    %574 = vmatprep.subr.mxu0 0.0
    %575 = vmatpush1.msra.mxu0 0.0
    %576 = vmatprep.subr.mxu0 0.0
    %577 = vmatpush1.msra.mxu0 0.0
    %578 = vmatprep.subr.mxu0 0.0
    %579 = vmatpush1.msra.mxu0 0.0
    %580 = vmatprep.subr.mxu0 0.0
    %v581 = vand.u32 %v43, 4294901760
    %582 = vmatpush1.msra.mxu0 %v581
    %583 = vmatprep.subr.mxu0 0.0
    %v584 = vand.u32 %v42, 4294901760
    %585 = vmatpush1.msra.mxu0 %v584
    %586 = vmatprep.subr.mxu0 0.0
    %v587 = vand.u32 %v41, 4294901760
    %588 = vmatpush1.msra.mxu0 %v587
    %589 = vmatprep.subr.mxu0 0.0
    %v590 = vand.u32 %v40, 4294901760
    %591 = vmatpush1.msra.mxu0 %v590
    %592 = vmatprep.subr.mxu0 0.0
    %593 = vmatpush2.msra.mxu0 0.0
    %594 = vmatprep.subr.mxu0 0.0
    %595 = vmatpush2.msra.mxu0 0.0
    %596 = vmatprep.subr.mxu0 0.0
    %597 = vmatpush2.msra.mxu0 0.0
    %598 = vmatprep.subr.mxu0 0.0
    %599 = vmatpush2.msra.mxu0 0.0
    %600 = vmatprep.subr.mxu0 0.0
    %601 = vmatpush2.msra.mxu0 0.0
    %602 = vmatprep.subr.mxu0 0.0
    %603 = vmatpush2.msra.mxu0 0.0
    %604 = vmatprep.subr.mxu0 0.0
    %605 = vmatpush2.msra.mxu0 0.0
    %606 = vmatprep.subr.mxu0 0.0
    %607 = vmatpush2.msra.mxu0 0.0
    %608 = vmatprep.subr.mxu0 0.0
    %609 = vmatpush2.msra.mxu0 0.0
    %610 = vmatprep.subr.mxu0 0.0
    %611 = vmatpush2.msra.mxu0 0.0
    %612 = vmatprep.subr.mxu0 0.0
    %613 = vmatpush2.msra.mxu0 0.0
    %614 = vmatprep.subr.mxu0 0.0
    %615 = vmatpush2.msra.mxu0 0.0
    %616 = vmatprep.subr.mxu0 0.0
    %617 = vmatpush2.msra.mxu0 0.0
    %618 = vmatprep.subr.mxu0 0.0
    %619 = vmatpush2.msra.mxu0 0.0
    %620 = vmatprep.subr.mxu0 0.0
    %621 = vmatpush2.msra.mxu0 0.0
    %622 = vmatprep.subr.mxu0 0.0
    %623 = vmatpush2.msra.mxu0 0.0
    %624 = vmatprep.mubr.f32.mxu0 0.0
    %v625 = vand.u32 %v554, 4294901760
    %v626 = vsub.f32 %v554, %v625
    %v627 = vand.u32 %v626, 4294901760
    %v628 = vsub.f32 %v626, %v627
    %v629 = vand.u32 %v628, 4294901760
    %630 = vmatmul.mubr.f32.gmra.mxu0 %v629
    %v631 = vpop.f32.mrf.mxu0
    %v632 = vadd.f32 0.0, %v631
    %v633 = vpop.f32.mrf.mxu0
    %634 = vdwg.mxu0
    %635 = vmatprep.subr.mxu0 0.0
    %636 = vmatpush1.msra.mxu0 0.0
    %637 = vmatprep.subr.mxu0 0.0
    %638 = vmatpush1.msra.mxu0 0.0
    %639 = vmatprep.subr.mxu0 0.0
    %640 = vmatpush1.msra.mxu0 0.0
    %641 = vmatprep.subr.mxu0 0.0
    %642 = vmatpush1.msra.mxu0 0.0
    %643 = vmatprep.subr.mxu0 0.0
    %644 = vmatpush1.msra.mxu0 0.0
    %645 = vmatprep.subr.mxu0 0.0
    %646 = vmatpush1.msra.mxu0 0.0
    %647 = vmatprep.subr.mxu0 0.0
    %648 = vmatpush1.msra.mxu0 0.0
    %649 = vmatprep.subr.mxu0 0.0
    %650 = vmatpush1.msra.mxu0 0.0
    %651 = vmatprep.subr.mxu0 0.0
    %652 = vmatpush1.msra.mxu0 0.0
    %653 = vmatprep.subr.mxu0 0.0
    %654 = vmatpush1.msra.mxu0 0.0
    %655 = vmatprep.subr.mxu0 0.0
    %656 = vmatpush1.msra.mxu0 0.0
    %657 = vmatprep.subr.mxu0 0.0
    %658 = vmatpush1.msra.mxu0 0.0
    %659 = vmatprep.subr.mxu0 0.0
    %v660 = vand.u32 %v43, 4294901760
    %v661 = vsub.f32 %v43, %v660
    %v662 = vand.u32 %v661, 4294901760
    %v663 = vsub.f32 %v661, %v662
    %v664 = vand.u32 %v663, 4294901760
    %665 = vmatpush1.msra.mxu0 %v664
    %666 = vmatprep.subr.mxu0 0.0
    %v667 = vand.u32 %v42, 4294901760
    %v668 = vsub.f32 %v42, %v667
    %v669 = vand.u32 %v668, 4294901760
    %v670 = vsub.f32 %v668, %v669
    %v671 = vand.u32 %v670, 4294901760
    %672 = vmatpush1.msra.mxu0 %v671
    %673 = vmatprep.subr.mxu0 0.0
    %v674 = vand.u32 %v41, 4294901760
    %v675 = vsub.f32 %v41, %v674
    %v676 = vand.u32 %v675, 4294901760
    %v677 = vsub.f32 %v675, %v676
    %v678 = vand.u32 %v677, 4294901760
    %679 = vmatpush1.msra.mxu0 %v678
    %680 = vmatprep.subr.mxu0 0.0
    %v681 = vand.u32 %v40, 4294901760
    %v682 = vsub.f32 %v40, %v681
    %v683 = vand.u32 %v682, 4294901760
    %v684 = vsub.f32 %v682, %v683
    %v685 = vand.u32 %v684, 4294901760
    %686 = vmatpush1.msra.mxu0 %v685
    %687 = vmatprep.subr.mxu0 0.0
    %688 = vmatpush2.msra.mxu0 0.0
    %689 = vmatprep.subr.mxu0 0.0
    %690 = vmatpush2.msra.mxu0 0.0
    %691 = vmatprep.subr.mxu0 0.0
    %692 = vmatpush2.msra.mxu0 0.0
    %693 = vmatprep.subr.mxu0 0.0
    %694 = vmatpush2.msra.mxu0 0.0
    %695 = vmatprep.subr.mxu0 0.0
    %696 = vmatpush2.msra.mxu0 0.0
    %697 = vmatprep.subr.mxu0 0.0
    %698 = vmatpush2.msra.mxu0 0.0
    %699 = vmatprep.subr.mxu0 0.0
    %700 = vmatpush2.msra.mxu0 0.0
    %701 = vmatprep.subr.mxu0 0.0
    %702 = vmatpush2.msra.mxu0 0.0
    %703 = vmatprep.subr.mxu0 0.0
    %704 = vmatpush2.msra.mxu0 0.0
    %705 = vmatprep.subr.mxu0 0.0
    %706 = vmatpush2.msra.mxu0 0.0
    %707 = vmatprep.subr.mxu0 0.0
    %708 = vmatpush2.msra.mxu0 0.0
    %709 = vmatprep.subr.mxu0 0.0
    %710 = vmatpush2.msra.mxu0 0.0
    %711 = vmatprep.subr.mxu0 0.0
    %712 = vmatpush2.msra.mxu0 0.0
    %713 = vmatprep.subr.mxu0 0.0
    %714 = vmatpush2.msra.mxu0 0.0
    %715 = vmatprep.subr.mxu0 0.0
    %716 = vmatpush2.msra.mxu0 0.0
    %717 = vmatprep.subr.mxu0 0.0
    %718 = vmatpush2.msra.mxu0 0.0
    %719 = vmatprep.mubr.f32.mxu0 0.0
    %v720 = vand.u32 %v554, 4294901760
    %721 = vmatmul.mubr.f32.gmra.mxu0 %v720
    %v722 = vpop.f32.mrf.mxu0
    %v723 = vadd.f32 %v632, %v722
    %v724 = vpop.f32.mrf.mxu0
    %725 = vdwg.mxu0
    %726 = vmatprep.subr.mxu0 0.0
    %727 = vmatpush1.msra.mxu0 0.0
    %728 = vmatprep.subr.mxu0 0.0
    %729 = vmatpush1.msra.mxu0 0.0
    %730 = vmatprep.subr.mxu0 0.0
    %731 = vmatpush1.msra.mxu0 0.0
    %732 = vmatprep.subr.mxu0 0.0
    %733 = vmatpush1.msra.mxu0 0.0
    %734 = vmatprep.subr.mxu0 0.0
    %735 = vmatpush1.msra.mxu0 0.0
    %736 = vmatprep.subr.mxu0 0.0
    %737 = vmatpush1.msra.mxu0 0.0
    %738 = vmatprep.subr.mxu0 0.0
    %739 = vmatpush1.msra.mxu0 0.0
    %740 = vmatprep.subr.mxu0 0.0
    %741 = vmatpush1.msra.mxu0 0.0
    %742 = vmatprep.subr.mxu0 0.0
    %743 = vmatpush1.msra.mxu0 0.0
    %744 = vmatprep.subr.mxu0 0.0
    %745 = vmatpush1.msra.mxu0 0.0
    %746 = vmatprep.subr.mxu0 0.0
    %747 = vmatpush1.msra.mxu0 0.0
    %748 = vmatprep.subr.mxu0 0.0
    %749 = vmatpush1.msra.mxu0 0.0
    %750 = vmatprep.subr.mxu0 0.0
    %v751 = vand.u32 %v43, 4294901760
    %v752 = vsub.f32 %v43, %v751
    %753 = vmatpush1.msra.mxu0 %v752
    %754 = vmatprep.subr.mxu0 0.0
    %v755 = vand.u32 %v42, 4294901760
    %v756 = vsub.f32 %v42, %v755
    %757 = vmatpush1.msra.mxu0 %v756
    %758 = vmatprep.subr.mxu0 0.0
    %v759 = vand.u32 %v41, 4294901760
    %v760 = vsub.f32 %v41, %v759
    %761 = vmatpush1.msra.mxu0 %v760
    %762 = vmatprep.subr.mxu0 0.0
    %v763 = vand.u32 %v40, 4294901760
    %v764 = vsub.f32 %v40, %v763
    %765 = vmatpush1.msra.mxu0 %v764
    %766 = vmatprep.subr.mxu0 0.0
    %767 = vmatpush2.msra.mxu0 0.0
    %768 = vmatprep.subr.mxu0 0.0
    %769 = vmatpush2.msra.mxu0 0.0
    %770 = vmatprep.subr.mxu0 0.0
    %771 = vmatpush2.msra.mxu0 0.0
    %772 = vmatprep.subr.mxu0 0.0
    %773 = vmatpush2.msra.mxu0 0.0
    %774 = vmatprep.subr.mxu0 0.0
    %775 = vmatpush2.msra.mxu0 0.0
    %776 = vmatprep.subr.mxu0 0.0
    %777 = vmatpush2.msra.mxu0 0.0
    %778 = vmatprep.subr.mxu0 0.0
    %779 = vmatpush2.msra.mxu0 0.0
    %780 = vmatprep.subr.mxu0 0.0
    %781 = vmatpush2.msra.mxu0 0.0
    %782 = vmatprep.subr.mxu0 0.0
    %783 = vmatpush2.msra.mxu0 0.0
    %784 = vmatprep.subr.mxu0 0.0
    %785 = vmatpush2.msra.mxu0 0.0
    %786 = vmatprep.subr.mxu0 0.0
    %787 = vmatpush2.msra.mxu0 0.0
    %788 = vmatprep.subr.mxu0 0.0
    %789 = vmatpush2.msra.mxu0 0.0
    %790 = vmatprep.subr.mxu0 0.0
    %791 = vmatpush2.msra.mxu0 0.0
    %792 = vmatprep.subr.mxu0 0.0
    %793 = vmatpush2.msra.mxu0 0.0
    %794 = vmatprep.subr.mxu0 0.0
    %795 = vmatpush2.msra.mxu0 0.0
    %796 = vmatprep.subr.mxu0 0.0
    %797 = vmatpush2.msra.mxu0 0.0
    %798 = vmatprep.mubr.f32.mxu0 0.0
    %v799 = vand.u32 %v554, 4294901760
    %v800 = vsub.f32 %v554, %v799
    %801 = vmatmul.mubr.f32.gmra.mxu0 %v800
    %v802 = vpop.f32.mrf.mxu0
    %v803 = vadd.f32 %v723, %v802
    %v804 = vpop.f32.mrf.mxu0
    %805 = vdwg.mxu0
    %806 = vmatprep.subr.mxu0 0.0
    %807 = vmatpush1.msra.mxu0 0.0
    %808 = vmatprep.subr.mxu0 0.0
    %809 = vmatpush1.msra.mxu0 0.0
    %810 = vmatprep.subr.mxu0 0.0
    %811 = vmatpush1.msra.mxu0 0.0
    %812 = vmatprep.subr.mxu0 0.0
    %813 = vmatpush1.msra.mxu0 0.0
    %814 = vmatprep.subr.mxu0 0.0
    %815 = vmatpush1.msra.mxu0 0.0
    %816 = vmatprep.subr.mxu0 0.0
    %817 = vmatpush1.msra.mxu0 0.0
    %818 = vmatprep.subr.mxu0 0.0
    %819 = vmatpush1.msra.mxu0 0.0
    %820 = vmatprep.subr.mxu0 0.0
    %821 = vmatpush1.msra.mxu0 0.0
    %822 = vmatprep.subr.mxu0 0.0
    %823 = vmatpush1.msra.mxu0 0.0
    %824 = vmatprep.subr.mxu0 0.0
    %825 = vmatpush1.msra.mxu0 0.0
    %826 = vmatprep.subr.mxu0 0.0
    %827 = vmatpush1.msra.mxu0 0.0
    %828 = vmatprep.subr.mxu0 0.0
    %829 = vmatpush1.msra.mxu0 0.0
    %830 = vmatprep.subr.mxu0 0.0
    %v831 = vand.u32 %v43, 4294901760
    %832 = vmatpush1.msra.mxu0 %v831
    %833 = vmatprep.subr.mxu0 0.0
    %v834 = vand.u32 %v42, 4294901760
    %835 = vmatpush1.msra.mxu0 %v834
    %836 = vmatprep.subr.mxu0 0.0
    %v837 = vand.u32 %v41, 4294901760
    %838 = vmatpush1.msra.mxu0 %v837
    %839 = vmatprep.subr.mxu0 0.0
    %v840 = vand.u32 %v40, 4294901760
    %841 = vmatpush1.msra.mxu0 %v840
    %842 = vmatprep.subr.mxu0 0.0
    %843 = vmatpush2.msra.mxu0 0.0
    %844 = vmatprep.subr.mxu0 0.0
    %845 = vmatpush2.msra.mxu0 0.0
    %846 = vmatprep.subr.mxu0 0.0
    %847 = vmatpush2.msra.mxu0 0.0
    %848 = vmatprep.subr.mxu0 0.0
    %849 = vmatpush2.msra.mxu0 0.0
    %850 = vmatprep.subr.mxu0 0.0
    %851 = vmatpush2.msra.mxu0 0.0
    %852 = vmatprep.subr.mxu0 0.0
    %853 = vmatpush2.msra.mxu0 0.0
    %854 = vmatprep.subr.mxu0 0.0
    %855 = vmatpush2.msra.mxu0 0.0
    %856 = vmatprep.subr.mxu0 0.0
    %857 = vmatpush2.msra.mxu0 0.0
    %858 = vmatprep.subr.mxu0 0.0
    %859 = vmatpush2.msra.mxu0 0.0
    %860 = vmatprep.subr.mxu0 0.0
    %861 = vmatpush2.msra.mxu0 0.0
    %862 = vmatprep.subr.mxu0 0.0
    %863 = vmatpush2.msra.mxu0 0.0
    %864 = vmatprep.subr.mxu0 0.0
    %865 = vmatpush2.msra.mxu0 0.0
    %866 = vmatprep.subr.mxu0 0.0
    %867 = vmatpush2.msra.mxu0 0.0
    %868 = vmatprep.subr.mxu0 0.0
    %869 = vmatpush2.msra.mxu0 0.0
    %870 = vmatprep.subr.mxu0 0.0
    %871 = vmatpush2.msra.mxu0 0.0
    %872 = vmatprep.subr.mxu0 0.0
    %873 = vmatpush2.msra.mxu0 0.0
    %874 = vmatprep.mubr.f32.mxu0 0.0
    %v875 = vand.u32 %v554, 4294901760
    %v876 = vsub.f32 %v554, %v875
    %v877 = vand.u32 %v876, 4294901760
    %878 = vmatmul.mubr.f32.gmra.mxu0 %v877
    %v879 = vpop.f32.mrf.mxu0
    %v880 = vadd.f32 %v803, %v879
    %v881 = vpop.f32.mrf.mxu0
    %882 = vdwg.mxu0
    %883 = vmatprep.subr.mxu0 0.0
    %884 = vmatpush1.msra.mxu0 0.0
    %885 = vmatprep.subr.mxu0 0.0
    %886 = vmatpush1.msra.mxu0 0.0
    %887 = vmatprep.subr.mxu0 0.0
    %888 = vmatpush1.msra.mxu0 0.0
    %889 = vmatprep.subr.mxu0 0.0
    %890 = vmatpush1.msra.mxu0 0.0
    %891 = vmatprep.subr.mxu0 0.0
    %892 = vmatpush1.msra.mxu0 0.0
    %893 = vmatprep.subr.mxu0 0.0
    %894 = vmatpush1.msra.mxu0 0.0
    %895 = vmatprep.subr.mxu0 0.0
    %896 = vmatpush1.msra.mxu0 0.0
    %897 = vmatprep.subr.mxu0 0.0
    %898 = vmatpush1.msra.mxu0 0.0
    %899 = vmatprep.subr.mxu0 0.0
    %900 = vmatpush1.msra.mxu0 0.0
    %901 = vmatprep.subr.mxu0 0.0
    %902 = vmatpush1.msra.mxu0 0.0
    %903 = vmatprep.subr.mxu0 0.0
    %904 = vmatpush1.msra.mxu0 0.0
    %905 = vmatprep.subr.mxu0 0.0
    %906 = vmatpush1.msra.mxu0 0.0
    %907 = vmatprep.subr.mxu0 0.0
    %v908 = vand.u32 %v43, 4294901760
    %v909 = vsub.f32 %v43, %v908
    %v910 = vand.u32 %v909, 4294901760
    %911 = vmatpush1.msra.mxu0 %v910
    %912 = vmatprep.subr.mxu0 0.0
    %v913 = vand.u32 %v42, 4294901760
    %v914 = vsub.f32 %v42, %v913
    %v915 = vand.u32 %v914, 4294901760
    %916 = vmatpush1.msra.mxu0 %v915
    %917 = vmatprep.subr.mxu0 0.0
    %v918 = vand.u32 %v41, 4294901760
    %v919 = vsub.f32 %v41, %v918
    %v920 = vand.u32 %v919, 4294901760
    %921 = vmatpush1.msra.mxu0 %v920
    %922 = vmatprep.subr.mxu0 0.0
    %v923 = vand.u32 %v40, 4294901760
    %v924 = vsub.f32 %v40, %v923
    %v925 = vand.u32 %v924, 4294901760
    %926 = vmatpush1.msra.mxu0 %v925
    %927 = vmatprep.subr.mxu0 0.0
    %928 = vmatpush2.msra.mxu0 0.0
    %929 = vmatprep.subr.mxu0 0.0
    %930 = vmatpush2.msra.mxu0 0.0
    %931 = vmatprep.subr.mxu0 0.0
    %932 = vmatpush2.msra.mxu0 0.0
    %933 = vmatprep.subr.mxu0 0.0
    %934 = vmatpush2.msra.mxu0 0.0
    %935 = vmatprep.subr.mxu0 0.0
    %936 = vmatpush2.msra.mxu0 0.0
    %937 = vmatprep.subr.mxu0 0.0
    %938 = vmatpush2.msra.mxu0 0.0
    %939 = vmatprep.subr.mxu0 0.0
    %940 = vmatpush2.msra.mxu0 0.0
    %941 = vmatprep.subr.mxu0 0.0
    %942 = vmatpush2.msra.mxu0 0.0
    %943 = vmatprep.subr.mxu0 0.0
    %944 = vmatpush2.msra.mxu0 0.0
    %945 = vmatprep.subr.mxu0 0.0
    %946 = vmatpush2.msra.mxu0 0.0
    %947 = vmatprep.subr.mxu0 0.0
    %948 = vmatpush2.msra.mxu0 0.0
    %949 = vmatprep.subr.mxu0 0.0
    %950 = vmatpush2.msra.mxu0 0.0
    %951 = vmatprep.subr.mxu0 0.0
    %952 = vmatpush2.msra.mxu0 0.0
    %953 = vmatprep.subr.mxu0 0.0
    %954 = vmatpush2.msra.mxu0 0.0
    %955 = vmatprep.subr.mxu0 0.0
    %956 = vmatpush2.msra.mxu0 0.0
    %957 = vmatprep.subr.mxu0 0.0
    %958 = vmatpush2.msra.mxu0 0.0
    %959 = vmatprep.mubr.f32.mxu0 0.0
    %v960 = vand.u32 %v554, 4294901760
    %961 = vmatmul.mubr.f32.gmra.mxu0 %v960
    %v962 = vpop.f32.mrf.mxu0
    %v963 = vadd.f32 %v880, %v962
    %v964 = vpop.f32.mrf.mxu0
    %965 = vdwg.mxu0
    %966 = vmatprep.subr.mxu0 0.0
    %967 = vmatpush1.msra.mxu0 0.0
    %968 = vmatprep.subr.mxu0 0.0
    %969 = vmatpush1.msra.mxu0 0.0
    %970 = vmatprep.subr.mxu0 0.0
    %971 = vmatpush1.msra.mxu0 0.0
    %972 = vmatprep.subr.mxu0 0.0
    %973 = vmatpush1.msra.mxu0 0.0
    %974 = vmatprep.subr.mxu0 0.0
    %975 = vmatpush1.msra.mxu0 0.0
    %976 = vmatprep.subr.mxu0 0.0
    %977 = vmatpush1.msra.mxu0 0.0
    %978 = vmatprep.subr.mxu0 0.0
    %979 = vmatpush1.msra.mxu0 0.0
    %980 = vmatprep.subr.mxu0 0.0
    %981 = vmatpush1.msra.mxu0 0.0
    %982 = vmatprep.subr.mxu0 0.0
    %983 = vmatpush1.msra.mxu0 0.0
    %984 = vmatprep.subr.mxu0 0.0
    %985 = vmatpush1.msra.mxu0 0.0
    %986 = vmatprep.subr.mxu0 0.0
    %987 = vmatpush1.msra.mxu0 0.0
    %988 = vmatprep.subr.mxu0 0.0
    %989 = vmatpush1.msra.mxu0 0.0
    %990 = vmatprep.subr.mxu0 0.0
    %v991 = vand.u32 %v43, 4294901760
    %992 = vmatpush1.msra.mxu0 %v991
    %993 = vmatprep.subr.mxu0 0.0
    %v994 = vand.u32 %v42, 4294901760
    %995 = vmatpush1.msra.mxu0 %v994
    %996 = vmatprep.subr.mxu0 0.0
    %v997 = vand.u32 %v41, 4294901760
    %998 = vmatpush1.msra.mxu0 %v997
    %999 = vmatprep.subr.mxu0 0.0
    %v1000 = vand.u32 %v40, 4294901760
    %1001 = vmatpush1.msra.mxu0 %v1000
    %1002 = vmatprep.subr.mxu0 0.0
    %1003 = vmatpush2.msra.mxu0 0.0
    %1004 = vmatprep.subr.mxu0 0.0
    %1005 = vmatpush2.msra.mxu0 0.0
    %1006 = vmatprep.subr.mxu0 0.0
    %1007 = vmatpush2.msra.mxu0 0.0
    %1008 = vmatprep.subr.mxu0 0.0
    %1009 = vmatpush2.msra.mxu0 0.0
    %1010 = vmatprep.subr.mxu0 0.0
    %1011 = vmatpush2.msra.mxu0 0.0
    %1012 = vmatprep.subr.mxu0 0.0
    %1013 = vmatpush2.msra.mxu0 0.0
    %1014 = vmatprep.subr.mxu0 0.0
    %1015 = vmatpush2.msra.mxu0 0.0
    %1016 = vmatprep.subr.mxu0 0.0
    %1017 = vmatpush2.msra.mxu0 0.0
    %1018 = vmatprep.subr.mxu0 0.0
    %1019 = vmatpush2.msra.mxu0 0.0
    %1020 = vmatprep.subr.mxu0 0.0
    %1021 = vmatpush2.msra.mxu0 0.0
    %1022 = vmatprep.subr.mxu0 0.0
    %1023 = vmatpush2.msra.mxu0 0.0
    %1024 = vmatprep.subr.mxu0 0.0
    %1025 = vmatpush2.msra.mxu0 0.0
    %1026 = vmatprep.subr.mxu0 0.0
    %1027 = vmatpush2.msra.mxu0 0.0
    %1028 = vmatprep.subr.mxu0 0.0
    %1029 = vmatpush2.msra.mxu0 0.0
    %1030 = vmatprep.subr.mxu0 0.0
    %1031 = vmatpush2.msra.mxu0 0.0
    %1032 = vmatprep.subr.mxu0 0.0
    %1033 = vmatpush2.msra.mxu0 0.0
    %1034 = vmatprep.mubr.f32.mxu0 0.0
    %v1035 = vand.u32 %v554, 4294901760
    %1036 = vmatmul.mubr.f32.gmra.mxu0 %v1035
    %v1037 = vpop.f32.mrf.mxu0
    %v1038 = vadd.f32 %v963, %v1037
    %v1039 = vpop.f32.mrf.mxu0
    %1040 = vdwg.mxu0
    %v1041 = vadd.f32 %v550, %v1038
    %v1042 = vtanh.pop %v1041
    %v1044 = vsel %vm64, %v1042, 0
    %1046 = vmatprep.subr.mxu0 0.0
    %1047 = vmatpush1.msra.mxu0 0.0
    %1048 = vmatprep.subr.mxu0 0.0
    %1049 = vmatpush1.msra.mxu0 0.0
    %1050 = vmatprep.subr.mxu0 0.0
    %1051 = vmatpush1.msra.mxu0 0.0
    %1052 = vmatprep.subr.mxu0 0.0
    %1053 = vmatpush1.msra.mxu0 0.0
    %1054 = vmatprep.subr.mxu0 0.0
    %1055 = vmatpush1.msra.mxu0 0.0
    %1056 = vmatprep.subr.mxu0 0.0
    %1057 = vmatpush1.msra.mxu0 0.0
    %1058 = vmatprep.subr.mxu0 0.0
    %1059 = vmatpush1.msra.mxu0 0.0
    %1060 = vmatprep.subr.mxu0 0.0
    %1061 = vmatpush1.msra.mxu0 0.0
    %1062 = vmatprep.subr.mxu0 0.0
    %1063 = vmatpush1.msra.mxu0 0.0
    %1064 = vmatprep.subr.mxu0 0.0
    %1065 = vmatpush1.msra.mxu0 0.0
    %1066 = vmatprep.subr.mxu0 0.0
    %1067 = vmatpush1.msra.mxu0 0.0
    %1068 = vmatprep.subr.mxu0 0.0
    %1069 = vmatpush1.msra.mxu0 0.0
    %1070 = vmatprep.subr.mxu0 0.0
    %v1071 = vand.u32 %v43, 4294901760
    %1072 = vmatpush1.msra.mxu0 %v1071
    %1073 = vmatprep.subr.mxu0 0.0
    %v1074 = vand.u32 %v42, 4294901760
    %1075 = vmatpush1.msra.mxu0 %v1074
    %1076 = vmatprep.subr.mxu0 0.0
    %v1077 = vand.u32 %v41, 4294901760
    %1078 = vmatpush1.msra.mxu0 %v1077
    %1079 = vmatprep.subr.mxu0 0.0
    %v1080 = vand.u32 %v40, 4294901760
    %1081 = vmatpush1.msra.mxu0 %v1080
    %1082 = vmatprep.subr.mxu0 0.0
    %1083 = vmatpush2.msra.mxu0 0.0
    %1084 = vmatprep.subr.mxu0 0.0
    %1085 = vmatpush2.msra.mxu0 0.0
    %1086 = vmatprep.subr.mxu0 0.0
    %1087 = vmatpush2.msra.mxu0 0.0
    %1088 = vmatprep.subr.mxu0 0.0
    %1089 = vmatpush2.msra.mxu0 0.0
    %1090 = vmatprep.subr.mxu0 0.0
    %1091 = vmatpush2.msra.mxu0 0.0
    %1092 = vmatprep.subr.mxu0 0.0
    %1093 = vmatpush2.msra.mxu0 0.0
    %1094 = vmatprep.subr.mxu0 0.0
    %1095 = vmatpush2.msra.mxu0 0.0
    %1096 = vmatprep.subr.mxu0 0.0
    %1097 = vmatpush2.msra.mxu0 0.0
    %1098 = vmatprep.subr.mxu0 0.0
    %1099 = vmatpush2.msra.mxu0 0.0
    %1100 = vmatprep.subr.mxu0 0.0
    %1101 = vmatpush2.msra.mxu0 0.0
    %1102 = vmatprep.subr.mxu0 0.0
    %1103 = vmatpush2.msra.mxu0 0.0
    %1104 = vmatprep.subr.mxu0 0.0
    %1105 = vmatpush2.msra.mxu0 0.0
    %1106 = vmatprep.subr.mxu0 0.0
    %1107 = vmatpush2.msra.mxu0 0.0
    %1108 = vmatprep.subr.mxu0 0.0
    %1109 = vmatpush2.msra.mxu0 0.0
    %1110 = vmatprep.subr.mxu0 0.0
    %1111 = vmatpush2.msra.mxu0 0.0
    %1112 = vmatprep.subr.mxu0 0.0
    %1113 = vmatpush2.msra.mxu0 0.0
    %1114 = vmatprep.mubr.f32.mxu0 0.0
    %v1115 = vand.u32 %v1044, 4294901760
    %v1116 = vsub.f32 %v1044, %v1115
    %v1117 = vand.u32 %v1116, 4294901760
    %v1118 = vsub.f32 %v1116, %v1117
    %v1119 = vand.u32 %v1118, 4294901760
    %1120 = vmatmul.mubr.f32.gmra.mxu0 %v1119
    %v1121 = vpop.f32.mrf.mxu0
    %v1122 = vadd.f32 0.0, %v1121
    %v1123 = vpop.f32.mrf.mxu0
    %1124 = vdwg.mxu0
    %1125 = vmatprep.subr.mxu0 0.0
    %1126 = vmatpush1.msra.mxu0 0.0
    %1127 = vmatprep.subr.mxu0 0.0
    %1128 = vmatpush1.msra.mxu0 0.0
    %1129 = vmatprep.subr.mxu0 0.0
    %1130 = vmatpush1.msra.mxu0 0.0
    %1131 = vmatprep.subr.mxu0 0.0
    %1132 = vmatpush1.msra.mxu0 0.0
    %1133 = vmatprep.subr.mxu0 0.0
    %1134 = vmatpush1.msra.mxu0 0.0
    %1135 = vmatprep.subr.mxu0 0.0
    %1136 = vmatpush1.msra.mxu0 0.0
    %1137 = vmatprep.subr.mxu0 0.0
    %1138 = vmatpush1.msra.mxu0 0.0
    %1139 = vmatprep.subr.mxu0 0.0
    %1140 = vmatpush1.msra.mxu0 0.0
    %1141 = vmatprep.subr.mxu0 0.0
    %1142 = vmatpush1.msra.mxu0 0.0
    %1143 = vmatprep.subr.mxu0 0.0
    %1144 = vmatpush1.msra.mxu0 0.0
    %1145 = vmatprep.subr.mxu0 0.0
    %1146 = vmatpush1.msra.mxu0 0.0
    %1147 = vmatprep.subr.mxu0 0.0
    %1148 = vmatpush1.msra.mxu0 0.0
    %1149 = vmatprep.subr.mxu0 0.0
    %v1150 = vand.u32 %v43, 4294901760
    %v1151 = vsub.f32 %v43, %v1150
    %v1152 = vand.u32 %v1151, 4294901760
    %v1153 = vsub.f32 %v1151, %v1152
    %v1154 = vand.u32 %v1153, 4294901760
    %1155 = vmatpush1.msra.mxu0 %v1154
    %1156 = vmatprep.subr.mxu0 0.0
    %v1157 = vand.u32 %v42, 4294901760
    %v1158 = vsub.f32 %v42, %v1157
    %v1159 = vand.u32 %v1158, 4294901760
    %v1160 = vsub.f32 %v1158, %v1159
    %v1161 = vand.u32 %v1160, 4294901760
    %1162 = vmatpush1.msra.mxu0 %v1161
    %1163 = vmatprep.subr.mxu0 0.0
    %v1164 = vand.u32 %v41, 4294901760
    %v1165 = vsub.f32 %v41, %v1164
    %v1166 = vand.u32 %v1165, 4294901760
    %v1167 = vsub.f32 %v1165, %v1166
    %v1168 = vand.u32 %v1167, 4294901760
    %1169 = vmatpush1.msra.mxu0 %v1168
    %1170 = vmatprep.subr.mxu0 0.0
    %v1171 = vand.u32 %v40, 4294901760
    %v1172 = vsub.f32 %v40, %v1171
    %v1173 = vand.u32 %v1172, 4294901760
    %v1174 = vsub.f32 %v1172, %v1173
    %v1175 = vand.u32 %v1174, 4294901760
    %1176 = vmatpush1.msra.mxu0 %v1175
    %1177 = vmatprep.subr.mxu0 0.0
    %1178 = vmatpush2.msra.mxu0 0.0
    %1179 = vmatprep.subr.mxu0 0.0
    %1180 = vmatpush2.msra.mxu0 0.0
    %1181 = vmatprep.subr.mxu0 0.0
    %1182 = vmatpush2.msra.mxu0 0.0
    %1183 = vmatprep.subr.mxu0 0.0
    %1184 = vmatpush2.msra.mxu0 0.0
    %1185 = vmatprep.subr.mxu0 0.0
    %1186 = vmatpush2.msra.mxu0 0.0
    %1187 = vmatprep.subr.mxu0 0.0
    %1188 = vmatpush2.msra.mxu0 0.0
    %1189 = vmatprep.subr.mxu0 0.0
    %1190 = vmatpush2.msra.mxu0 0.0
    %1191 = vmatprep.subr.mxu0 0.0
    %1192 = vmatpush2.msra.mxu0 0.0
    %1193 = vmatprep.subr.mxu0 0.0
    %1194 = vmatpush2.msra.mxu0 0.0
    %1195 = vmatprep.subr.mxu0 0.0
    %1196 = vmatpush2.msra.mxu0 0.0
    %1197 = vmatprep.subr.mxu0 0.0
    %1198 = vmatpush2.msra.mxu0 0.0
    %1199 = vmatprep.subr.mxu0 0.0
    %1200 = vmatpush2.msra.mxu0 0.0
    %1201 = vmatprep.subr.mxu0 0.0
    %1202 = vmatpush2.msra.mxu0 0.0
    %1203 = vmatprep.subr.mxu0 0.0
    %1204 = vmatpush2.msra.mxu0 0.0
    %1205 = vmatprep.subr.mxu0 0.0
    %1206 = vmatpush2.msra.mxu0 0.0
    %1207 = vmatprep.subr.mxu0 0.0
    %1208 = vmatpush2.msra.mxu0 0.0
    %1209 = vmatprep.mubr.f32.mxu0 0.0
    %v1210 = vand.u32 %v1044, 4294901760
    %1211 = vmatmul.mubr.f32.gmra.mxu0 %v1210
    %v1212 = vpop.f32.mrf.mxu0
    %v1213 = vadd.f32 %v1122, %v1212
    %v1214 = vpop.f32.mrf.mxu0
    %1215 = vdwg.mxu0
    %1216 = vmatprep.subr.mxu0 0.0
    %1217 = vmatpush1.msra.mxu0 0.0
    %1218 = vmatprep.subr.mxu0 0.0
    %1219 = vmatpush1.msra.mxu0 0.0
    %1220 = vmatprep.subr.mxu0 0.0
    %1221 = vmatpush1.msra.mxu0 0.0
    %1222 = vmatprep.subr.mxu0 0.0
    %1223 = vmatpush1.msra.mxu0 0.0
    %1224 = vmatprep.subr.mxu0 0.0
    %1225 = vmatpush1.msra.mxu0 0.0
    %1226 = vmatprep.subr.mxu0 0.0
    %1227 = vmatpush1.msra.mxu0 0.0
    %1228 = vmatprep.subr.mxu0 0.0
    %1229 = vmatpush1.msra.mxu0 0.0
    %1230 = vmatprep.subr.mxu0 0.0
    %1231 = vmatpush1.msra.mxu0 0.0
    %1232 = vmatprep.subr.mxu0 0.0
    %1233 = vmatpush1.msra.mxu0 0.0
    %1234 = vmatprep.subr.mxu0 0.0
    %1235 = vmatpush1.msra.mxu0 0.0
    %1236 = vmatprep.subr.mxu0 0.0
    %1237 = vmatpush1.msra.mxu0 0.0
    %1238 = vmatprep.subr.mxu0 0.0
    %1239 = vmatpush1.msra.mxu0 0.0
    %1240 = vmatprep.subr.mxu0 0.0
    %v1241 = vand.u32 %v43, 4294901760
    %v1242 = vsub.f32 %v43, %v1241
    %1243 = vmatpush1.msra.mxu0 %v1242
    %1244 = vmatprep.subr.mxu0 0.0
    %v1245 = vand.u32 %v42, 4294901760
    %v1246 = vsub.f32 %v42, %v1245
    %1247 = vmatpush1.msra.mxu0 %v1246
    %1248 = vmatprep.subr.mxu0 0.0
    %v1249 = vand.u32 %v41, 4294901760
    %v1250 = vsub.f32 %v41, %v1249
    %1251 = vmatpush1.msra.mxu0 %v1250
    %1252 = vmatprep.subr.mxu0 0.0
    %v1253 = vand.u32 %v40, 4294901760
    %v1254 = vsub.f32 %v40, %v1253
    %1255 = vmatpush1.msra.mxu0 %v1254
    %1256 = vmatprep.subr.mxu0 0.0
    %1257 = vmatpush2.msra.mxu0 0.0
    %1258 = vmatprep.subr.mxu0 0.0
    %1259 = vmatpush2.msra.mxu0 0.0
    %1260 = vmatprep.subr.mxu0 0.0
    %1261 = vmatpush2.msra.mxu0 0.0
    %1262 = vmatprep.subr.mxu0 0.0
    %1263 = vmatpush2.msra.mxu0 0.0
    %1264 = vmatprep.subr.mxu0 0.0
    %1265 = vmatpush2.msra.mxu0 0.0
    %1266 = vmatprep.subr.mxu0 0.0
    %1267 = vmatpush2.msra.mxu0 0.0
    %1268 = vmatprep.subr.mxu0 0.0
    %1269 = vmatpush2.msra.mxu0 0.0
    %1270 = vmatprep.subr.mxu0 0.0
    %1271 = vmatpush2.msra.mxu0 0.0
    %1272 = vmatprep.subr.mxu0 0.0
    %1273 = vmatpush2.msra.mxu0 0.0
    %1274 = vmatprep.subr.mxu0 0.0
    %1275 = vmatpush2.msra.mxu0 0.0
    %1276 = vmatprep.subr.mxu0 0.0
    %1277 = vmatpush2.msra.mxu0 0.0
    %1278 = vmatprep.subr.mxu0 0.0
    %1279 = vmatpush2.msra.mxu0 0.0
    %1280 = vmatprep.subr.mxu0 0.0
    %1281 = vmatpush2.msra.mxu0 0.0
    %1282 = vmatprep.subr.mxu0 0.0
    %1283 = vmatpush2.msra.mxu0 0.0
    %1284 = vmatprep.subr.mxu0 0.0
    %1285 = vmatpush2.msra.mxu0 0.0
    %1286 = vmatprep.subr.mxu0 0.0
    %1287 = vmatpush2.msra.mxu0 0.0
    %1288 = vmatprep.mubr.f32.mxu0 0.0
    %v1289 = vand.u32 %v1044, 4294901760
    %v1290 = vsub.f32 %v1044, %v1289
    %1291 = vmatmul.mubr.f32.gmra.mxu0 %v1290
    %v1292 = vpop.f32.mrf.mxu0
    %v1293 = vadd.f32 %v1213, %v1292
    %v1294 = vpop.f32.mrf.mxu0
    %1295 = vdwg.mxu0
    %1296 = vmatprep.subr.mxu0 0.0
    %1297 = vmatpush1.msra.mxu0 0.0
    %1298 = vmatprep.subr.mxu0 0.0
    %1299 = vmatpush1.msra.mxu0 0.0
    %1300 = vmatprep.subr.mxu0 0.0
    %1301 = vmatpush1.msra.mxu0 0.0
    %1302 = vmatprep.subr.mxu0 0.0
    %1303 = vmatpush1.msra.mxu0 0.0
    %1304 = vmatprep.subr.mxu0 0.0
    %1305 = vmatpush1.msra.mxu0 0.0
    %1306 = vmatprep.subr.mxu0 0.0
    %1307 = vmatpush1.msra.mxu0 0.0
    %1308 = vmatprep.subr.mxu0 0.0
    %1309 = vmatpush1.msra.mxu0 0.0
    %1310 = vmatprep.subr.mxu0 0.0
    %1311 = vmatpush1.msra.mxu0 0.0
    %1312 = vmatprep.subr.mxu0 0.0
    %1313 = vmatpush1.msra.mxu0 0.0
    %1314 = vmatprep.subr.mxu0 0.0
    %1315 = vmatpush1.msra.mxu0 0.0
    %1316 = vmatprep.subr.mxu0 0.0
    %1317 = vmatpush1.msra.mxu0 0.0
    %1318 = vmatprep.subr.mxu0 0.0
    %1319 = vmatpush1.msra.mxu0 0.0
    %1320 = vmatprep.subr.mxu0 0.0
    %v1321 = vand.u32 %v43, 4294901760
    %1322 = vmatpush1.msra.mxu0 %v1321
    %1323 = vmatprep.subr.mxu0 0.0
    %v1324 = vand.u32 %v42, 4294901760
    %1325 = vmatpush1.msra.mxu0 %v1324
    %1326 = vmatprep.subr.mxu0 0.0
    %v1327 = vand.u32 %v41, 4294901760
    %1328 = vmatpush1.msra.mxu0 %v1327
    %1329 = vmatprep.subr.mxu0 0.0
    %v1330 = vand.u32 %v40, 4294901760
    %1331 = vmatpush1.msra.mxu0 %v1330
    %1332 = vmatprep.subr.mxu0 0.0
    %1333 = vmatpush2.msra.mxu0 0.0
    %1334 = vmatprep.subr.mxu0 0.0
    %1335 = vmatpush2.msra.mxu0 0.0
    %1336 = vmatprep.subr.mxu0 0.0
    %1337 = vmatpush2.msra.mxu0 0.0
    %1338 = vmatprep.subr.mxu0 0.0
    %1339 = vmatpush2.msra.mxu0 0.0
    %1340 = vmatprep.subr.mxu0 0.0
    %1341 = vmatpush2.msra.mxu0 0.0
    %1342 = vmatprep.subr.mxu0 0.0
    %1343 = vmatpush2.msra.mxu0 0.0
    %1344 = vmatprep.subr.mxu0 0.0
    %1345 = vmatpush2.msra.mxu0 0.0
    %1346 = vmatprep.subr.mxu0 0.0
    %1347 = vmatpush2.msra.mxu0 0.0
    %1348 = vmatprep.subr.mxu0 0.0
    %1349 = vmatpush2.msra.mxu0 0.0
    %1350 = vmatprep.subr.mxu0 0.0
    %1351 = vmatpush2.msra.mxu0 0.0
    %1352 = vmatprep.subr.mxu0 0.0
    %1353 = vmatpush2.msra.mxu0 0.0
    %1354 = vmatprep.subr.mxu0 0.0
    %1355 = vmatpush2.msra.mxu0 0.0
    %1356 = vmatprep.subr.mxu0 0.0
    %1357 = vmatpush2.msra.mxu0 0.0
    %1358 = vmatprep.subr.mxu0 0.0
    %1359 = vmatpush2.msra.mxu0 0.0
    %1360 = vmatprep.subr.mxu0 0.0
    %1361 = vmatpush2.msra.mxu0 0.0
    %1362 = vmatprep.subr.mxu0 0.0
    %1363 = vmatpush2.msra.mxu0 0.0
    %1364 = vmatprep.mubr.f32.mxu0 0.0
    %v1365 = vand.u32 %v1044, 4294901760
    %v1366 = vsub.f32 %v1044, %v1365
    %v1367 = vand.u32 %v1366, 4294901760
    %1368 = vmatmul.mubr.f32.gmra.mxu0 %v1367
    %v1369 = vpop.f32.mrf.mxu0
    %v1370 = vadd.f32 %v1293, %v1369
    %v1371 = vpop.f32.mrf.mxu0
    %1372 = vdwg.mxu0
    %1373 = vmatprep.subr.mxu0 0.0
    %1374 = vmatpush1.msra.mxu0 0.0
    %1375 = vmatprep.subr.mxu0 0.0
    %1376 = vmatpush1.msra.mxu0 0.0
    %1377 = vmatprep.subr.mxu0 0.0
    %1378 = vmatpush1.msra.mxu0 0.0
    %1379 = vmatprep.subr.mxu0 0.0
    %1380 = vmatpush1.msra.mxu0 0.0
    %1381 = vmatprep.subr.mxu0 0.0
    %1382 = vmatpush1.msra.mxu0 0.0
    %1383 = vmatprep.subr.mxu0 0.0
    %1384 = vmatpush1.msra.mxu0 0.0
    %1385 = vmatprep.subr.mxu0 0.0
    %1386 = vmatpush1.msra.mxu0 0.0
    %1387 = vmatprep.subr.mxu0 0.0
    %1388 = vmatpush1.msra.mxu0 0.0
    %1389 = vmatprep.subr.mxu0 0.0
    %1390 = vmatpush1.msra.mxu0 0.0
    %1391 = vmatprep.subr.mxu0 0.0
    %1392 = vmatpush1.msra.mxu0 0.0
    %1393 = vmatprep.subr.mxu0 0.0
    %1394 = vmatpush1.msra.mxu0 0.0
    %1395 = vmatprep.subr.mxu0 0.0
    %1396 = vmatpush1.msra.mxu0 0.0
    %1397 = vmatprep.subr.mxu0 0.0
    %v1398 = vand.u32 %v43, 4294901760
    %v1399 = vsub.f32 %v43, %v1398
    %v1400 = vand.u32 %v1399, 4294901760
    %1401 = vmatpush1.msra.mxu0 %v1400
    %1402 = vmatprep.subr.mxu0 0.0
    %v1403 = vand.u32 %v42, 4294901760
    %v1404 = vsub.f32 %v42, %v1403
    %v1405 = vand.u32 %v1404, 4294901760
    %1406 = vmatpush1.msra.mxu0 %v1405
    %1407 = vmatprep.subr.mxu0 0.0
    %v1408 = vand.u32 %v41, 4294901760
    %v1409 = vsub.f32 %v41, %v1408
    %v1410 = vand.u32 %v1409, 4294901760
    %1411 = vmatpush1.msra.mxu0 %v1410
    %1412 = vmatprep.subr.mxu0 0.0
    %v1413 = vand.u32 %v40, 4294901760
    %v1414 = vsub.f32 %v40, %v1413
    %v1415 = vand.u32 %v1414, 4294901760
    %1416 = vmatpush1.msra.mxu0 %v1415
    %1417 = vmatprep.subr.mxu0 0.0
    %1418 = vmatpush2.msra.mxu0 0.0
    %1419 = vmatprep.subr.mxu0 0.0
    %1420 = vmatpush2.msra.mxu0 0.0
    %1421 = vmatprep.subr.mxu0 0.0
    %1422 = vmatpush2.msra.mxu0 0.0
    %1423 = vmatprep.subr.mxu0 0.0
    %1424 = vmatpush2.msra.mxu0 0.0
    %1425 = vmatprep.subr.mxu0 0.0
    %1426 = vmatpush2.msra.mxu0 0.0
    %1427 = vmatprep.subr.mxu0 0.0
    %1428 = vmatpush2.msra.mxu0 0.0
    %1429 = vmatprep.subr.mxu0 0.0
    %1430 = vmatpush2.msra.mxu0 0.0
    %1431 = vmatprep.subr.mxu0 0.0
    %1432 = vmatpush2.msra.mxu0 0.0
    %1433 = vmatprep.subr.mxu0 0.0
    %1434 = vmatpush2.msra.mxu0 0.0
    %1435 = vmatprep.subr.mxu0 0.0
    %1436 = vmatpush2.msra.mxu0 0.0
    %1437 = vmatprep.subr.mxu0 0.0
    %1438 = vmatpush2.msra.mxu0 0.0
    %1439 = vmatprep.subr.mxu0 0.0
    %1440 = vmatpush2.msra.mxu0 0.0
    %1441 = vmatprep.subr.mxu0 0.0
    %1442 = vmatpush2.msra.mxu0 0.0
    %1443 = vmatprep.subr.mxu0 0.0
    %1444 = vmatpush2.msra.mxu0 0.0
    %1445 = vmatprep.subr.mxu0 0.0
    %1446 = vmatpush2.msra.mxu0 0.0
    %1447 = vmatprep.subr.mxu0 0.0
    %1448 = vmatpush2.msra.mxu0 0.0
    %1449 = vmatprep.mubr.f32.mxu0 0.0
    %v1450 = vand.u32 %v1044, 4294901760
    %1451 = vmatmul.mubr.f32.gmra.mxu0 %v1450
    %v1452 = vpop.f32.mrf.mxu0
    %v1453 = vadd.f32 %v1370, %v1452
    %v1454 = vpop.f32.mrf.mxu0
    %1455 = vdwg.mxu0
    %1456 = vmatprep.subr.mxu0 0.0
    %1457 = vmatpush1.msra.mxu0 0.0
    %1458 = vmatprep.subr.mxu0 0.0
    %1459 = vmatpush1.msra.mxu0 0.0
    %1460 = vmatprep.subr.mxu0 0.0
    %1461 = vmatpush1.msra.mxu0 0.0
    %1462 = vmatprep.subr.mxu0 0.0
    %1463 = vmatpush1.msra.mxu0 0.0
    %1464 = vmatprep.subr.mxu0 0.0
    %1465 = vmatpush1.msra.mxu0 0.0
    %1466 = vmatprep.subr.mxu0 0.0
    %1467 = vmatpush1.msra.mxu0 0.0
    %1468 = vmatprep.subr.mxu0 0.0
    %1469 = vmatpush1.msra.mxu0 0.0
    %1470 = vmatprep.subr.mxu0 0.0
    %1471 = vmatpush1.msra.mxu0 0.0
    %1472 = vmatprep.subr.mxu0 0.0
    %1473 = vmatpush1.msra.mxu0 0.0
    %1474 = vmatprep.subr.mxu0 0.0
    %1475 = vmatpush1.msra.mxu0 0.0
    %1476 = vmatprep.subr.mxu0 0.0
    %1477 = vmatpush1.msra.mxu0 0.0
    %1478 = vmatprep.subr.mxu0 0.0
    %1479 = vmatpush1.msra.mxu0 0.0
    %1480 = vmatprep.subr.mxu0 0.0
    %v1481 = vand.u32 %v43, 4294901760
    %1482 = vmatpush1.msra.mxu0 %v1481
    %1483 = vmatprep.subr.mxu0 0.0
    %v1484 = vand.u32 %v42, 4294901760
    %1485 = vmatpush1.msra.mxu0 %v1484
    %1486 = vmatprep.subr.mxu0 0.0
    %v1487 = vand.u32 %v41, 4294901760
    %1488 = vmatpush1.msra.mxu0 %v1487
    %1489 = vmatprep.subr.mxu0 0.0
    %v1490 = vand.u32 %v40, 4294901760
    %1491 = vmatpush1.msra.mxu0 %v1490
    %1492 = vmatprep.subr.mxu0 0.0
    %1493 = vmatpush2.msra.mxu0 0.0
    %1494 = vmatprep.subr.mxu0 0.0
    %1495 = vmatpush2.msra.mxu0 0.0
    %1496 = vmatprep.subr.mxu0 0.0
    %1497 = vmatpush2.msra.mxu0 0.0
    %1498 = vmatprep.subr.mxu0 0.0
    %1499 = vmatpush2.msra.mxu0 0.0
    %1500 = vmatprep.subr.mxu0 0.0
    %1501 = vmatpush2.msra.mxu0 0.0
    %1502 = vmatprep.subr.mxu0 0.0
    %1503 = vmatpush2.msra.mxu0 0.0
    %1504 = vmatprep.subr.mxu0 0.0
    %1505 = vmatpush2.msra.mxu0 0.0
    %1506 = vmatprep.subr.mxu0 0.0
    %1507 = vmatpush2.msra.mxu0 0.0
    %1508 = vmatprep.subr.mxu0 0.0
    %1509 = vmatpush2.msra.mxu0 0.0
    %1510 = vmatprep.subr.mxu0 0.0
    %1511 = vmatpush2.msra.mxu0 0.0
    %1512 = vmatprep.subr.mxu0 0.0
    %1513 = vmatpush2.msra.mxu0 0.0
    %1514 = vmatprep.subr.mxu0 0.0
    %1515 = vmatpush2.msra.mxu0 0.0
    %1516 = vmatprep.subr.mxu0 0.0
    %1517 = vmatpush2.msra.mxu0 0.0
    %1518 = vmatprep.subr.mxu0 0.0
    %1519 = vmatpush2.msra.mxu0 0.0
    %1520 = vmatprep.subr.mxu0 0.0
    %1521 = vmatpush2.msra.mxu0 0.0
    %1522 = vmatprep.subr.mxu0 0.0
    %1523 = vmatpush2.msra.mxu0 0.0
    %1524 = vmatprep.mubr.f32.mxu0 0.0
    %v1525 = vand.u32 %v1044, 4294901760
    %1526 = vmatmul.mubr.f32.gmra.mxu0 %v1525
    %v1527 = vpop.f32.mrf.mxu0
    %v1528 = vadd.f32 %v1453, %v1527
    %v1529 = vpop.f32.mrf.mxu0
    %1530 = vdwg.mxu0
    %v1532 = vrot.slane %v1528, 7
    %v1534 = vadd.f32 %v550, %v1532
    %v1535 = vtanh.pop %v1534
    %1537 = vrot.lane.b32.xlu0 %v54, 32
    %v1538 = vpop.permute.xlu0 %1537
    %v1540 = vsel %vm64, %v1042, %v1538
    %v1542 = vrot.slane %v39, 1
    %vm1544 = vcmask 523264
    %v1546 = vsel %vm1544, %v1540, 0
    %1548 = vmatprep.subr.mxu0 0.0
    %1549 = vmatpush1.msra.mxu0 0.0
    %1550 = vmatprep.subr.mxu0 0.0
    %1551 = vmatpush1.msra.mxu0 0.0
    %1552 = vmatprep.subr.mxu0 0.0
    %1553 = vmatpush1.msra.mxu0 0.0
    %1554 = vmatprep.subr.mxu0 0.0
    %1555 = vmatpush1.msra.mxu0 0.0
    %1556 = vmatprep.subr.mxu0 0.0
    %1557 = vmatpush1.msra.mxu0 0.0
    %1558 = vmatprep.subr.mxu0 0.0
    %1559 = vmatpush1.msra.mxu0 0.0
    %1560 = vmatprep.subr.mxu0 0.0
    %1561 = vmatpush1.msra.mxu0 0.0
    %1562 = vmatprep.subr.mxu0 0.0
    %1563 = vmatpush1.msra.mxu0 0.0
    %1564 = vmatprep.subr.mxu0 0.0
    %v1565 = vand.u32 %v52, 4294901760
    %1566 = vmatpush1.msra.mxu0 %v1565
    %1567 = vmatprep.subr.mxu0 0.0
    %v1568 = vand.u32 %v51, 4294901760
    %1569 = vmatpush1.msra.mxu0 %v1568
    %1570 = vmatprep.subr.mxu0 0.0
    %v1571 = vand.u32 %v50, 4294901760
    %1572 = vmatpush1.msra.mxu0 %v1571
    %1573 = vmatprep.subr.mxu0 0.0
    %v1574 = vand.u32 %v49, 4294901760
    %1575 = vmatpush1.msra.mxu0 %v1574
    %1576 = vmatprep.subr.mxu0 0.0
    %v1577 = vand.u32 %v48, 4294901760
    %1578 = vmatpush1.msra.mxu0 %v1577
    %1579 = vmatprep.subr.mxu0 0.0
    %v1580 = vand.u32 %v47, 4294901760
    %1581 = vmatpush1.msra.mxu0 %v1580
    %1582 = vmatprep.subr.mxu0 0.0
    %v1583 = vand.u32 %v46, 4294901760
    %1584 = vmatpush1.msra.mxu0 %v1583
    %1585 = vmatprep.subr.mxu0 0.0
    %v1586 = vand.u32 %v45, 4294901760
    %1587 = vmatpush1.msra.mxu0 %v1586
    %1588 = vmatprep.subr.mxu0 0.0
    %1589 = vmatpush2.msra.mxu0 0.0
    %1590 = vmatprep.subr.mxu0 0.0
    %1591 = vmatpush2.msra.mxu0 0.0
    %1592 = vmatprep.subr.mxu0 0.0
    %1593 = vmatpush2.msra.mxu0 0.0
    %1594 = vmatprep.subr.mxu0 0.0
    %1595 = vmatpush2.msra.mxu0 0.0
    %1596 = vmatprep.subr.mxu0 0.0
    %1597 = vmatpush2.msra.mxu0 0.0
    %1598 = vmatprep.subr.mxu0 0.0
    %1599 = vmatpush2.msra.mxu0 0.0
    %1600 = vmatprep.subr.mxu0 0.0
    %1601 = vmatpush2.msra.mxu0 0.0
    %1602 = vmatprep.subr.mxu0 0.0
    %1603 = vmatpush2.msra.mxu0 0.0
    %1604 = vmatprep.subr.mxu0 0.0
    %1605 = vmatpush2.msra.mxu0 0.0
    %1606 = vmatprep.subr.mxu0 0.0
    %1607 = vmatpush2.msra.mxu0 0.0
    %1608 = vmatprep.subr.mxu0 0.0
    %1609 = vmatpush2.msra.mxu0 0.0
    %1610 = vmatprep.subr.mxu0 0.0
    %1611 = vmatpush2.msra.mxu0 0.0
    %1612 = vmatprep.subr.mxu0 0.0
    %1613 = vmatpush2.msra.mxu0 0.0
    %1614 = vmatprep.subr.mxu0 0.0
    %1615 = vmatpush2.msra.mxu0 0.0
    %1616 = vmatprep.subr.mxu0 0.0
    %1617 = vmatpush2.msra.mxu0 0.0
    %1618 = vmatprep.subr.mxu0 0.0
    %1619 = vmatpush2.msra.mxu0 0.0
    %1620 = vmatprep.mubr.f32.mxu0 0.0
    %v1621 = vand.u32 %v1546, 4294901760
    %v1622 = vsub.f32 %v1546, %v1621
    %v1623 = vand.u32 %v1622, 4294901760
    %v1624 = vsub.f32 %v1622, %v1623
    %v1625 = vand.u32 %v1624, 4294901760
    %1626 = vmatmul.mubr.f32.gmra.mxu0 %v1625
    %v1627 = vpop.f32.mrf.mxu0
    %v1628 = vadd.f32 %v1542, %v1627
    %v1629 = vpop.f32.mrf.mxu0
    %1630 = vdwg.mxu0
    %1631 = vmatprep.subr.mxu0 0.0
    %1632 = vmatpush1.msra.mxu0 0.0
    %1633 = vmatprep.subr.mxu0 0.0
    %1634 = vmatpush1.msra.mxu0 0.0
    %1635 = vmatprep.subr.mxu0 0.0
    %1636 = vmatpush1.msra.mxu0 0.0
    %1637 = vmatprep.subr.mxu0 0.0
    %1638 = vmatpush1.msra.mxu0 0.0
    %1639 = vmatprep.subr.mxu0 0.0
    %1640 = vmatpush1.msra.mxu0 0.0
    %1641 = vmatprep.subr.mxu0 0.0
    %1642 = vmatpush1.msra.mxu0 0.0
    %1643 = vmatprep.subr.mxu0 0.0
    %1644 = vmatpush1.msra.mxu0 0.0
    %1645 = vmatprep.subr.mxu0 0.0
    %1646 = vmatpush1.msra.mxu0 0.0
    %1647 = vmatprep.subr.mxu0 0.0
    %v1648 = vand.u32 %v52, 4294901760
    %v1649 = vsub.f32 %v52, %v1648
    %v1650 = vand.u32 %v1649, 4294901760
    %v1651 = vsub.f32 %v1649, %v1650
    %v1652 = vand.u32 %v1651, 4294901760
    %1653 = vmatpush1.msra.mxu0 %v1652
    %1654 = vmatprep.subr.mxu0 0.0
    %v1655 = vand.u32 %v51, 4294901760
    %v1656 = vsub.f32 %v51, %v1655
    %v1657 = vand.u32 %v1656, 4294901760
    %v1658 = vsub.f32 %v1656, %v1657
    %v1659 = vand.u32 %v1658, 4294901760
    %1660 = vmatpush1.msra.mxu0 %v1659
    %1661 = vmatprep.subr.mxu0 0.0
    %v1662 = vand.u32 %v50, 4294901760
    %v1663 = vsub.f32 %v50, %v1662
    %v1664 = vand.u32 %v1663, 4294901760
    %v1665 = vsub.f32 %v1663, %v1664
    %v1666 = vand.u32 %v1665, 4294901760
    %1667 = vmatpush1.msra.mxu0 %v1666
    %1668 = vmatprep.subr.mxu0 0.0
    %v1669 = vand.u32 %v49, 4294901760
    %v1670 = vsub.f32 %v49, %v1669
    %v1671 = vand.u32 %v1670, 4294901760
    %v1672 = vsub.f32 %v1670, %v1671
    %v1673 = vand.u32 %v1672, 4294901760
    %1674 = vmatpush1.msra.mxu0 %v1673
    %1675 = vmatprep.subr.mxu0 0.0
    %v1676 = vand.u32 %v48, 4294901760
    %v1677 = vsub.f32 %v48, %v1676
    %v1678 = vand.u32 %v1677, 4294901760
    %v1679 = vsub.f32 %v1677, %v1678
    %v1680 = vand.u32 %v1679, 4294901760
    %1681 = vmatpush1.msra.mxu0 %v1680
    %1682 = vmatprep.subr.mxu0 0.0
    %v1683 = vand.u32 %v47, 4294901760
    %v1684 = vsub.f32 %v47, %v1683
    %v1685 = vand.u32 %v1684, 4294901760
    %v1686 = vsub.f32 %v1684, %v1685
    %v1687 = vand.u32 %v1686, 4294901760
    %1688 = vmatpush1.msra.mxu0 %v1687
    %1689 = vmatprep.subr.mxu0 0.0
    %v1690 = vand.u32 %v46, 4294901760
    %v1691 = vsub.f32 %v46, %v1690
    %v1692 = vand.u32 %v1691, 4294901760
    %v1693 = vsub.f32 %v1691, %v1692
    %v1694 = vand.u32 %v1693, 4294901760
    %1695 = vmatpush1.msra.mxu0 %v1694
    %1696 = vmatprep.subr.mxu0 0.0
    %v1697 = vand.u32 %v45, 4294901760
    %v1698 = vsub.f32 %v45, %v1697
    %v1699 = vand.u32 %v1698, 4294901760
    %v1700 = vsub.f32 %v1698, %v1699
    %v1701 = vand.u32 %v1700, 4294901760
    %1702 = vmatpush1.msra.mxu0 %v1701
    %1703 = vmatprep.subr.mxu0 0.0
    %1704 = vmatpush2.msra.mxu0 0.0
    %1705 = vmatprep.subr.mxu0 0.0
    %1706 = vmatpush2.msra.mxu0 0.0
    %1707 = vmatprep.subr.mxu0 0.0
    %1708 = vmatpush2.msra.mxu0 0.0
    %1709 = vmatprep.subr.mxu0 0.0
    %1710 = vmatpush2.msra.mxu0 0.0
    %1711 = vmatprep.subr.mxu0 0.0
    %1712 = vmatpush2.msra.mxu0 0.0
    %1713 = vmatprep.subr.mxu0 0.0
    %1714 = vmatpush2.msra.mxu0 0.0
    %1715 = vmatprep.subr.mxu0 0.0
    %1716 = vmatpush2.msra.mxu0 0.0
    %1717 = vmatprep.subr.mxu0 0.0
    %1718 = vmatpush2.msra.mxu0 0.0
    %1719 = vmatprep.subr.mxu0 0.0
    %1720 = vmatpush2.msra.mxu0 0.0
    %1721 = vmatprep.subr.mxu0 0.0
    %1722 = vmatpush2.msra.mxu0 0.0
    %1723 = vmatprep.subr.mxu0 0.0
    %1724 = vmatpush2.msra.mxu0 0.0
    %1725 = vmatprep.subr.mxu0 0.0
    %1726 = vmatpush2.msra.mxu0 0.0
    %1727 = vmatprep.subr.mxu0 0.0
    %1728 = vmatpush2.msra.mxu0 0.0
    %1729 = vmatprep.subr.mxu0 0.0
    %1730 = vmatpush2.msra.mxu0 0.0
    %1731 = vmatprep.subr.mxu0 0.0
    %1732 = vmatpush2.msra.mxu0 0.0
    %1733 = vmatprep.subr.mxu0 0.0
    %1734 = vmatpush2.msra.mxu0 0.0
    %1735 = vmatprep.mubr.f32.mxu0 0.0
    %v1736 = vand.u32 %v1546, 4294901760
    %1737 = vmatmul.mubr.f32.gmra.mxu0 %v1736
    %v1738 = vpop.f32.mrf.mxu0
    %v1739 = vadd.f32 %v1628, %v1738
    %v1740 = vpop.f32.mrf.mxu0
    %1741 = vdwg.mxu0
    %1742 = vmatprep.subr.mxu0 0.0
    %1743 = vmatpush1.msra.mxu0 0.0
    %1744 = vmatprep.subr.mxu0 0.0
    %1745 = vmatpush1.msra.mxu0 0.0
    %1746 = vmatprep.subr.mxu0 0.0
    %1747 = vmatpush1.msra.mxu0 0.0
    %1748 = vmatprep.subr.mxu0 0.0
    %1749 = vmatpush1.msra.mxu0 0.0
    %1750 = vmatprep.subr.mxu0 0.0
    %1751 = vmatpush1.msra.mxu0 0.0
    %1752 = vmatprep.subr.mxu0 0.0
    %1753 = vmatpush1.msra.mxu0 0.0
    %1754 = vmatprep.subr.mxu0 0.0
    %1755 = vmatpush1.msra.mxu0 0.0
    %1756 = vmatprep.subr.mxu0 0.0
    %1757 = vmatpush1.msra.mxu0 0.0
    %1758 = vmatprep.subr.mxu0 0.0
    %v1759 = vand.u32 %v52, 4294901760
    %v1760 = vsub.f32 %v52, %v1759
    %1761 = vmatpush1.msra.mxu0 %v1760
    %1762 = vmatprep.subr.mxu0 0.0
    %v1763 = vand.u32 %v51, 4294901760
    %v1764 = vsub.f32 %v51, %v1763
    %1765 = vmatpush1.msra.mxu0 %v1764
    %1766 = vmatprep.subr.mxu0 0.0
    %v1767 = vand.u32 %v50, 4294901760
    %v1768 = vsub.f32 %v50, %v1767
    %1769 = vmatpush1.msra.mxu0 %v1768
    %1770 = vmatprep.subr.mxu0 0.0
    %v1771 = vand.u32 %v49, 4294901760
    %v1772 = vsub.f32 %v49, %v1771
    %1773 = vmatpush1.msra.mxu0 %v1772
    %1774 = vmatprep.subr.mxu0 0.0
    %v1775 = vand.u32 %v48, 4294901760
    %v1776 = vsub.f32 %v48, %v1775
    %1777 = vmatpush1.msra.mxu0 %v1776
    %1778 = vmatprep.subr.mxu0 0.0
    %v1779 = vand.u32 %v47, 4294901760
    %v1780 = vsub.f32 %v47, %v1779
    %1781 = vmatpush1.msra.mxu0 %v1780
    %1782 = vmatprep.subr.mxu0 0.0
    %v1783 = vand.u32 %v46, 4294901760
    %v1784 = vsub.f32 %v46, %v1783
    %1785 = vmatpush1.msra.mxu0 %v1784
    %1786 = vmatprep.subr.mxu0 0.0
    %v1787 = vand.u32 %v45, 4294901760
    %v1788 = vsub.f32 %v45, %v1787
    %1789 = vmatpush1.msra.mxu0 %v1788
    %1790 = vmatprep.subr.mxu0 0.0
    %1791 = vmatpush2.msra.mxu0 0.0
    %1792 = vmatprep.subr.mxu0 0.0
    %1793 = vmatpush2.msra.mxu0 0.0
    %1794 = vmatprep.subr.mxu0 0.0
    %1795 = vmatpush2.msra.mxu0 0.0
    %1796 = vmatprep.subr.mxu0 0.0
    %1797 = vmatpush2.msra.mxu0 0.0
    %1798 = vmatprep.subr.mxu0 0.0
    %1799 = vmatpush2.msra.mxu0 0.0
    %1800 = vmatprep.subr.mxu0 0.0
    %1801 = vmatpush2.msra.mxu0 0.0
    %1802 = vmatprep.subr.mxu0 0.0
    %1803 = vmatpush2.msra.mxu0 0.0
    %1804 = vmatprep.subr.mxu0 0.0
    %1805 = vmatpush2.msra.mxu0 0.0
    %1806 = vmatprep.subr.mxu0 0.0
    %1807 = vmatpush2.msra.mxu0 0.0
    %1808 = vmatprep.subr.mxu0 0.0
    %1809 = vmatpush2.msra.mxu0 0.0
    %1810 = vmatprep.subr.mxu0 0.0
    %1811 = vmatpush2.msra.mxu0 0.0
    %1812 = vmatprep.subr.mxu0 0.0
    %1813 = vmatpush2.msra.mxu0 0.0
    %1814 = vmatprep.subr.mxu0 0.0
    %1815 = vmatpush2.msra.mxu0 0.0
    %1816 = vmatprep.subr.mxu0 0.0
    %1817 = vmatpush2.msra.mxu0 0.0
    %1818 = vmatprep.subr.mxu0 0.0
    %1819 = vmatpush2.msra.mxu0 0.0
    %1820 = vmatprep.subr.mxu0 0.0
    %1821 = vmatpush2.msra.mxu0 0.0
    %1822 = vmatprep.mubr.f32.mxu0 0.0
    %v1823 = vand.u32 %v1546, 4294901760
    %v1824 = vsub.f32 %v1546, %v1823
    %1825 = vmatmul.mubr.f32.gmra.mxu0 %v1824
    %v1826 = vpop.f32.mrf.mxu0
    %v1827 = vadd.f32 %v1739, %v1826
    %v1828 = vpop.f32.mrf.mxu0
    %1829 = vdwg.mxu0
    %1830 = vmatprep.subr.mxu0 0.0
    %1831 = vmatpush1.msra.mxu0 0.0
    %1832 = vmatprep.subr.mxu0 0.0
    %1833 = vmatpush1.msra.mxu0 0.0
    %1834 = vmatprep.subr.mxu0 0.0
    %1835 = vmatpush1.msra.mxu0 0.0
    %1836 = vmatprep.subr.mxu0 0.0
    %1837 = vmatpush1.msra.mxu0 0.0
    %1838 = vmatprep.subr.mxu0 0.0
    %1839 = vmatpush1.msra.mxu0 0.0
    %1840 = vmatprep.subr.mxu0 0.0
    %1841 = vmatpush1.msra.mxu0 0.0
    %1842 = vmatprep.subr.mxu0 0.0
    %1843 = vmatpush1.msra.mxu0 0.0
    %1844 = vmatprep.subr.mxu0 0.0
    %1845 = vmatpush1.msra.mxu0 0.0
    %1846 = vmatprep.subr.mxu0 0.0
    %v1847 = vand.u32 %v52, 4294901760
    %1848 = vmatpush1.msra.mxu0 %v1847
    %1849 = vmatprep.subr.mxu0 0.0
    %v1850 = vand.u32 %v51, 4294901760
    %1851 = vmatpush1.msra.mxu0 %v1850
    %1852 = vmatprep.subr.mxu0 0.0
    %v1853 = vand.u32 %v50, 4294901760
    %1854 = vmatpush1.msra.mxu0 %v1853
    %1855 = vmatprep.subr.mxu0 0.0
    %v1856 = vand.u32 %v49, 4294901760
    %1857 = vmatpush1.msra.mxu0 %v1856
    %1858 = vmatprep.subr.mxu0 0.0
    %v1859 = vand.u32 %v48, 4294901760
    %1860 = vmatpush1.msra.mxu0 %v1859
    %1861 = vmatprep.subr.mxu0 0.0
    %v1862 = vand.u32 %v47, 4294901760
    %1863 = vmatpush1.msra.mxu0 %v1862
    %1864 = vmatprep.subr.mxu0 0.0
    %v1865 = vand.u32 %v46, 4294901760
    %1866 = vmatpush1.msra.mxu0 %v1865
    %1867 = vmatprep.subr.mxu0 0.0
    %v1868 = vand.u32 %v45, 4294901760
    %1869 = vmatpush1.msra.mxu0 %v1868
    %1870 = vmatprep.subr.mxu0 0.0
    %1871 = vmatpush2.msra.mxu0 0.0
    %1872 = vmatprep.subr.mxu0 0.0
    %1873 = vmatpush2.msra.mxu0 0.0
    %1874 = vmatprep.subr.mxu0 0.0
    %1875 = vmatpush2.msra.mxu0 0.0
    %1876 = vmatprep.subr.mxu0 0.0
    %1877 = vmatpush2.msra.mxu0 0.0
    %1878 = vmatprep.subr.mxu0 0.0
    %1879 = vmatpush2.msra.mxu0 0.0
    %1880 = vmatprep.subr.mxu0 0.0
    %1881 = vmatpush2.msra.mxu0 0.0
    %1882 = vmatprep.subr.mxu0 0.0
    %1883 = vmatpush2.msra.mxu0 0.0
    %1884 = vmatprep.subr.mxu0 0.0
    %1885 = vmatpush2.msra.mxu0 0.0
    %1886 = vmatprep.subr.mxu0 0.0
    %1887 = vmatpush2.msra.mxu0 0.0
    %1888 = vmatprep.subr.mxu0 0.0
    %1889 = vmatpush2.msra.mxu0 0.0
    %1890 = vmatprep.subr.mxu0 0.0
    %1891 = vmatpush2.msra.mxu0 0.0
    %1892 = vmatprep.subr.mxu0 0.0
    %1893 = vmatpush2.msra.mxu0 0.0
    %1894 = vmatprep.subr.mxu0 0.0
    %1895 = vmatpush2.msra.mxu0 0.0
    %1896 = vmatprep.subr.mxu0 0.0
    %1897 = vmatpush2.msra.mxu0 0.0
    %1898 = vmatprep.subr.mxu0 0.0
    %1899 = vmatpush2.msra.mxu0 0.0
    %1900 = vmatprep.subr.mxu0 0.0
    %1901 = vmatpush2.msra.mxu0 0.0
    %1902 = vmatprep.mubr.f32.mxu0 0.0
    %v1903 = vand.u32 %v1546, 4294901760
    %v1904 = vsub.f32 %v1546, %v1903
    %v1905 = vand.u32 %v1904, 4294901760
    %1906 = vmatmul.mubr.f32.gmra.mxu0 %v1905
    %v1907 = vpop.f32.mrf.mxu0
    %v1908 = vadd.f32 %v1827, %v1907
    %v1909 = vpop.f32.mrf.mxu0
    %1910 = vdwg.mxu0
    %1911 = vmatprep.subr.mxu0 0.0
    %1912 = vmatpush1.msra.mxu0 0.0
    %1913 = vmatprep.subr.mxu0 0.0
    %1914 = vmatpush1.msra.mxu0 0.0
    %1915 = vmatprep.subr.mxu0 0.0
    %1916 = vmatpush1.msra.mxu0 0.0
    %1917 = vmatprep.subr.mxu0 0.0
    %1918 = vmatpush1.msra.mxu0 0.0
    %1919 = vmatprep.subr.mxu0 0.0
    %1920 = vmatpush1.msra.mxu0 0.0
    %1921 = vmatprep.subr.mxu0 0.0
    %1922 = vmatpush1.msra.mxu0 0.0
    %1923 = vmatprep.subr.mxu0 0.0
    %1924 = vmatpush1.msra.mxu0 0.0
    %1925 = vmatprep.subr.mxu0 0.0
    %1926 = vmatpush1.msra.mxu0 0.0
    %1927 = vmatprep.subr.mxu0 0.0
    %v1928 = vand.u32 %v52, 4294901760
    %v1929 = vsub.f32 %v52, %v1928
    %v1930 = vand.u32 %v1929, 4294901760
    %1931 = vmatpush1.msra.mxu0 %v1930
    %1932 = vmatprep.subr.mxu0 0.0
    %v1933 = vand.u32 %v51, 4294901760
    %v1934 = vsub.f32 %v51, %v1933
    %v1935 = vand.u32 %v1934, 4294901760
    %1936 = vmatpush1.msra.mxu0 %v1935
    %1937 = vmatprep.subr.mxu0 0.0
    %v1938 = vand.u32 %v50, 4294901760
    %v1939 = vsub.f32 %v50, %v1938
    %v1940 = vand.u32 %v1939, 4294901760
    %1941 = vmatpush1.msra.mxu0 %v1940
    %1942 = vmatprep.subr.mxu0 0.0
    %v1943 = vand.u32 %v49, 4294901760
    %v1944 = vsub.f32 %v49, %v1943
    %v1945 = vand.u32 %v1944, 4294901760
    %1946 = vmatpush1.msra.mxu0 %v1945
    %1947 = vmatprep.subr.mxu0 0.0
    %v1948 = vand.u32 %v48, 4294901760
    %v1949 = vsub.f32 %v48, %v1948
    %v1950 = vand.u32 %v1949, 4294901760
    %1951 = vmatpush1.msra.mxu0 %v1950
    %1952 = vmatprep.subr.mxu0 0.0
    %v1953 = vand.u32 %v47, 4294901760
    %v1954 = vsub.f32 %v47, %v1953
    %v1955 = vand.u32 %v1954, 4294901760
    %1956 = vmatpush1.msra.mxu0 %v1955
    %1957 = vmatprep.subr.mxu0 0.0
    %v1958 = vand.u32 %v46, 4294901760
    %v1959 = vsub.f32 %v46, %v1958
    %v1960 = vand.u32 %v1959, 4294901760
    %1961 = vmatpush1.msra.mxu0 %v1960
    %1962 = vmatprep.subr.mxu0 0.0
    %v1963 = vand.u32 %v45, 4294901760
    %v1964 = vsub.f32 %v45, %v1963
    %v1965 = vand.u32 %v1964, 4294901760
    %1966 = vmatpush1.msra.mxu0 %v1965
    %1967 = vmatprep.subr.mxu0 0.0
    %1968 = vmatpush2.msra.mxu0 0.0
    %1969 = vmatprep.subr.mxu0 0.0
    %1970 = vmatpush2.msra.mxu0 0.0
    %1971 = vmatprep.subr.mxu0 0.0
    %1972 = vmatpush2.msra.mxu0 0.0
    %1973 = vmatprep.subr.mxu0 0.0
    %1974 = vmatpush2.msra.mxu0 0.0
    %1975 = vmatprep.subr.mxu0 0.0
    %1976 = vmatpush2.msra.mxu0 0.0
    %1977 = vmatprep.subr.mxu0 0.0
    %1978 = vmatpush2.msra.mxu0 0.0
    %1979 = vmatprep.subr.mxu0 0.0
    %1980 = vmatpush2.msra.mxu0 0.0
    %1981 = vmatprep.subr.mxu0 0.0
    %1982 = vmatpush2.msra.mxu0 0.0
    %1983 = vmatprep.subr.mxu0 0.0
    %1984 = vmatpush2.msra.mxu0 0.0
    %1985 = vmatprep.subr.mxu0 0.0
    %1986 = vmatpush2.msra.mxu0 0.0
    %1987 = vmatprep.subr.mxu0 0.0
    %1988 = vmatpush2.msra.mxu0 0.0
    %1989 = vmatprep.subr.mxu0 0.0
    %1990 = vmatpush2.msra.mxu0 0.0
    %1991 = vmatprep.subr.mxu0 0.0
    %1992 = vmatpush2.msra.mxu0 0.0
    %1993 = vmatprep.subr.mxu0 0.0
    %1994 = vmatpush2.msra.mxu0 0.0
    %1995 = vmatprep.subr.mxu0 0.0
    %1996 = vmatpush2.msra.mxu0 0.0
    %1997 = vmatprep.subr.mxu0 0.0
    %1998 = vmatpush2.msra.mxu0 0.0
    %1999 = vmatprep.mubr.f32.mxu0 0.0
    %v2000 = vand.u32 %v1546, 4294901760
    %2001 = vmatmul.mubr.f32.gmra.mxu0 %v2000
    %v2002 = vpop.f32.mrf.mxu0
    %v2003 = vadd.f32 %v1908, %v2002
    %v2004 = vpop.f32.mrf.mxu0
    %2005 = vdwg.mxu0
    %2006 = vmatprep.subr.mxu0 0.0
    %2007 = vmatpush1.msra.mxu0 0.0
    %2008 = vmatprep.subr.mxu0 0.0
    %2009 = vmatpush1.msra.mxu0 0.0
    %2010 = vmatprep.subr.mxu0 0.0
    %2011 = vmatpush1.msra.mxu0 0.0
    %2012 = vmatprep.subr.mxu0 0.0
    %2013 = vmatpush1.msra.mxu0 0.0
    %2014 = vmatprep.subr.mxu0 0.0
    %2015 = vmatpush1.msra.mxu0 0.0
    %2016 = vmatprep.subr.mxu0 0.0
    %2017 = vmatpush1.msra.mxu0 0.0
    %2018 = vmatprep.subr.mxu0 0.0
    %2019 = vmatpush1.msra.mxu0 0.0
    %2020 = vmatprep.subr.mxu0 0.0
    %2021 = vmatpush1.msra.mxu0 0.0
    %2022 = vmatprep.subr.mxu0 0.0
    %v2023 = vand.u32 %v52, 4294901760
    %2024 = vmatpush1.msra.mxu0 %v2023
    %2025 = vmatprep.subr.mxu0 0.0
    %v2026 = vand.u32 %v51, 4294901760
    %2027 = vmatpush1.msra.mxu0 %v2026
    %2028 = vmatprep.subr.mxu0 0.0
    %v2029 = vand.u32 %v50, 4294901760
    %2030 = vmatpush1.msra.mxu0 %v2029
    %2031 = vmatprep.subr.mxu0 0.0
    %v2032 = vand.u32 %v49, 4294901760
    %2033 = vmatpush1.msra.mxu0 %v2032
    %2034 = vmatprep.subr.mxu0 0.0
    %v2035 = vand.u32 %v48, 4294901760
    %2036 = vmatpush1.msra.mxu0 %v2035
    %2037 = vmatprep.subr.mxu0 0.0
    %v2038 = vand.u32 %v47, 4294901760
    %2039 = vmatpush1.msra.mxu0 %v2038
    %2040 = vmatprep.subr.mxu0 0.0
    %v2041 = vand.u32 %v46, 4294901760
    %2042 = vmatpush1.msra.mxu0 %v2041
    %2043 = vmatprep.subr.mxu0 0.0
    %v2044 = vand.u32 %v45, 4294901760
    %2045 = vmatpush1.msra.mxu0 %v2044
    %2046 = vmatprep.subr.mxu0 0.0
    %2047 = vmatpush2.msra.mxu0 0.0
    %2048 = vmatprep.subr.mxu0 0.0
    %2049 = vmatpush2.msra.mxu0 0.0
    %2050 = vmatprep.subr.mxu0 0.0
    %2051 = vmatpush2.msra.mxu0 0.0
    %2052 = vmatprep.subr.mxu0 0.0
    %2053 = vmatpush2.msra.mxu0 0.0
    %2054 = vmatprep.subr.mxu0 0.0
    %2055 = vmatpush2.msra.mxu0 0.0
    %2056 = vmatprep.subr.mxu0 0.0
    %2057 = vmatpush2.msra.mxu0 0.0
    %2058 = vmatprep.subr.mxu0 0.0
    %2059 = vmatpush2.msra.mxu0 0.0
    %2060 = vmatprep.subr.mxu0 0.0
    %2061 = vmatpush2.msra.mxu0 0.0
    %2062 = vmatprep.subr.mxu0 0.0
    %2063 = vmatpush2.msra.mxu0 0.0
    %2064 = vmatprep.subr.mxu0 0.0
    %2065 = vmatpush2.msra.mxu0 0.0
    %2066 = vmatprep.subr.mxu0 0.0
    %2067 = vmatpush2.msra.mxu0 0.0
    %2068 = vmatprep.subr.mxu0 0.0
    %2069 = vmatpush2.msra.mxu0 0.0
    %2070 = vmatprep.subr.mxu0 0.0
    %2071 = vmatpush2.msra.mxu0 0.0
    %2072 = vmatprep.subr.mxu0 0.0
    %2073 = vmatpush2.msra.mxu0 0.0
    %2074 = vmatprep.subr.mxu0 0.0
    %2075 = vmatpush2.msra.mxu0 0.0
    %2076 = vmatprep.subr.mxu0 0.0
    %2077 = vmatpush2.msra.mxu0 0.0
    %2078 = vmatprep.mubr.f32.mxu0 0.0
    %v2079 = vand.u32 %v1546, 4294901760
    %2080 = vmatmul.mubr.f32.gmra.mxu0 %v2079
    %v2081 = vpop.f32.mrf.mxu0
    %v2082 = vadd.f32 %v2003, %v2081
    %v2083 = vpop.f32.mrf.mxu0
    %2084 = vdwg.mxu0
    %v2085 = vtanh.pop %v2082
    %v2087 = vrot.slane %v1535, 1
    %v2088 = vsel %vm64, %v2087, 0
    %2090 = vmatprep.subr.mxu0 0.0
    %2091 = vmatpush1.msra.mxu0 0.0
    %2092 = vmatprep.subr.mxu0 0.0
    %2093 = vmatpush1.msra.mxu0 0.0
    %2094 = vmatprep.subr.mxu0 0.0
    %2095 = vmatpush1.msra.mxu0 0.0
    %2096 = vmatprep.subr.mxu0 0.0
    %2097 = vmatpush1.msra.mxu0 0.0
    %2098 = vmatprep.subr.mxu0 0.0
    %2099 = vmatpush1.msra.mxu0 0.0
    %2100 = vmatprep.subr.mxu0 0.0
    %2101 = vmatpush1.msra.mxu0 0.0
    %2102 = vmatprep.subr.mxu0 0.0
    %2103 = vmatpush1.msra.mxu0 0.0
    %2104 = vmatprep.subr.mxu0 0.0
    %2105 = vmatpush1.msra.mxu0 0.0
    %2106 = vmatprep.subr.mxu0 0.0
    %2107 = vmatpush1.msra.mxu0 0.0
    %2108 = vmatprep.subr.mxu0 0.0
    %2109 = vmatpush1.msra.mxu0 0.0
    %2110 = vmatprep.subr.mxu0 0.0
    %2111 = vmatpush1.msra.mxu0 0.0
    %2112 = vmatprep.subr.mxu0 0.0
    %2113 = vmatpush1.msra.mxu0 0.0
    %2114 = vmatprep.subr.mxu0 0.0
    %v2115 = vand.u32 %v43, 4294901760
    %2116 = vmatpush1.msra.mxu0 %v2115
    %2117 = vmatprep.subr.mxu0 0.0
    %v2118 = vand.u32 %v42, 4294901760
    %2119 = vmatpush1.msra.mxu0 %v2118
    %2120 = vmatprep.subr.mxu0 0.0
    %v2121 = vand.u32 %v41, 4294901760
    %2122 = vmatpush1.msra.mxu0 %v2121
    %2123 = vmatprep.subr.mxu0 0.0
    %v2124 = vand.u32 %v40, 4294901760
    %2125 = vmatpush1.msra.mxu0 %v2124
    %2126 = vmatprep.subr.mxu0 0.0
    %2127 = vmatpush2.msra.mxu0 0.0
    %2128 = vmatprep.subr.mxu0 0.0
    %2129 = vmatpush2.msra.mxu0 0.0
    %2130 = vmatprep.subr.mxu0 0.0
    %2131 = vmatpush2.msra.mxu0 0.0
    %2132 = vmatprep.subr.mxu0 0.0
    %2133 = vmatpush2.msra.mxu0 0.0
    %2134 = vmatprep.subr.mxu0 0.0
    %2135 = vmatpush2.msra.mxu0 0.0
    %2136 = vmatprep.subr.mxu0 0.0
    %2137 = vmatpush2.msra.mxu0 0.0
    %2138 = vmatprep.subr.mxu0 0.0
    %2139 = vmatpush2.msra.mxu0 0.0
    %2140 = vmatprep.subr.mxu0 0.0
    %2141 = vmatpush2.msra.mxu0 0.0
    %2142 = vmatprep.subr.mxu0 0.0
    %2143 = vmatpush2.msra.mxu0 0.0
    %2144 = vmatprep.subr.mxu0 0.0
    %2145 = vmatpush2.msra.mxu0 0.0
    %2146 = vmatprep.subr.mxu0 0.0
    %2147 = vmatpush2.msra.mxu0 0.0
    %2148 = vmatprep.subr.mxu0 0.0
    %2149 = vmatpush2.msra.mxu0 0.0
    %2150 = vmatprep.subr.mxu0 0.0
    %2151 = vmatpush2.msra.mxu0 0.0
    %2152 = vmatprep.subr.mxu0 0.0
    %2153 = vmatpush2.msra.mxu0 0.0
    %2154 = vmatprep.subr.mxu0 0.0
    %2155 = vmatpush2.msra.mxu0 0.0
    %2156 = vmatprep.subr.mxu0 0.0
    %2157 = vmatpush2.msra.mxu0 0.0
    %2158 = vmatprep.mubr.f32.mxu0 0.0
    %v2159 = vand.u32 %v2088, 4294901760
    %v2160 = vsub.f32 %v2088, %v2159
    %v2161 = vand.u32 %v2160, 4294901760
    %v2162 = vsub.f32 %v2160, %v2161
    %v2163 = vand.u32 %v2162, 4294901760
    %2164 = vmatmul.mubr.f32.gmra.mxu0 %v2163
    %v2165 = vpop.f32.mrf.mxu0
    %v2166 = vadd.f32 0.0, %v2165
    %v2167 = vpop.f32.mrf.mxu0
    %2168 = vdwg.mxu0
    %2169 = vmatprep.subr.mxu0 0.0
    %2170 = vmatpush1.msra.mxu0 0.0
    %2171 = vmatprep.subr.mxu0 0.0
    %2172 = vmatpush1.msra.mxu0 0.0
    %2173 = vmatprep.subr.mxu0 0.0
    %2174 = vmatpush1.msra.mxu0 0.0
    %2175 = vmatprep.subr.mxu0 0.0
    %2176 = vmatpush1.msra.mxu0 0.0
    %2177 = vmatprep.subr.mxu0 0.0
    %2178 = vmatpush1.msra.mxu0 0.0
    %2179 = vmatprep.subr.mxu0 0.0
    %2180 = vmatpush1.msra.mxu0 0.0
    %2181 = vmatprep.subr.mxu0 0.0
    %2182 = vmatpush1.msra.mxu0 0.0
    %2183 = vmatprep.subr.mxu0 0.0
    %2184 = vmatpush1.msra.mxu0 0.0
    %2185 = vmatprep.subr.mxu0 0.0
    %2186 = vmatpush1.msra.mxu0 0.0
    %2187 = vmatprep.subr.mxu0 0.0
    %2188 = vmatpush1.msra.mxu0 0.0
    %2189 = vmatprep.subr.mxu0 0.0
    %2190 = vmatpush1.msra.mxu0 0.0
    %2191 = vmatprep.subr.mxu0 0.0
    %2192 = vmatpush1.msra.mxu0 0.0
    %2193 = vmatprep.subr.mxu0 0.0
    %v2194 = vand.u32 %v43, 4294901760
    %v2195 = vsub.f32 %v43, %v2194
    %v2196 = vand.u32 %v2195, 4294901760
    %v2197 = vsub.f32 %v2195, %v2196
    %v2198 = vand.u32 %v2197, 4294901760
    %2199 = vmatpush1.msra.mxu0 %v2198
    %2200 = vmatprep.subr.mxu0 0.0
    %v2201 = vand.u32 %v42, 4294901760
    %v2202 = vsub.f32 %v42, %v2201
    %v2203 = vand.u32 %v2202, 4294901760
    %v2204 = vsub.f32 %v2202, %v2203
    %v2205 = vand.u32 %v2204, 4294901760
    %2206 = vmatpush1.msra.mxu0 %v2205
    %2207 = vmatprep.subr.mxu0 0.0
    %v2208 = vand.u32 %v41, 4294901760
    %v2209 = vsub.f32 %v41, %v2208
    %v2210 = vand.u32 %v2209, 4294901760
    %v2211 = vsub.f32 %v2209, %v2210
    %v2212 = vand.u32 %v2211, 4294901760
    %2213 = vmatpush1.msra.mxu0 %v2212
    %2214 = vmatprep.subr.mxu0 0.0
    %v2215 = vand.u32 %v40, 4294901760
    %v2216 = vsub.f32 %v40, %v2215
    %v2217 = vand.u32 %v2216, 4294901760
    %v2218 = vsub.f32 %v2216, %v2217
    %v2219 = vand.u32 %v2218, 4294901760
    %2220 = vmatpush1.msra.mxu0 %v2219
    %2221 = vmatprep.subr.mxu0 0.0
    %2222 = vmatpush2.msra.mxu0 0.0
    %2223 = vmatprep.subr.mxu0 0.0
    %2224 = vmatpush2.msra.mxu0 0.0
    %2225 = vmatprep.subr.mxu0 0.0
    %2226 = vmatpush2.msra.mxu0 0.0
    %2227 = vmatprep.subr.mxu0 0.0
    %2228 = vmatpush2.msra.mxu0 0.0
    %2229 = vmatprep.subr.mxu0 0.0
    %2230 = vmatpush2.msra.mxu0 0.0
    %2231 = vmatprep.subr.mxu0 0.0
    %2232 = vmatpush2.msra.mxu0 0.0
    %2233 = vmatprep.subr.mxu0 0.0
    %2234 = vmatpush2.msra.mxu0 0.0
    %2235 = vmatprep.subr.mxu0 0.0
    %2236 = vmatpush2.msra.mxu0 0.0
    %2237 = vmatprep.subr.mxu0 0.0
    %2238 = vmatpush2.msra.mxu0 0.0
    %2239 = vmatprep.subr.mxu0 0.0
    %2240 = vmatpush2.msra.mxu0 0.0
    %2241 = vmatprep.subr.mxu0 0.0
    %2242 = vmatpush2.msra.mxu0 0.0
    %2243 = vmatprep.subr.mxu0 0.0
    %2244 = vmatpush2.msra.mxu0 0.0
    %2245 = vmatprep.subr.mxu0 0.0
    %2246 = vmatpush2.msra.mxu0 0.0
    %2247 = vmatprep.subr.mxu0 0.0
    %2248 = vmatpush2.msra.mxu0 0.0
    %2249 = vmatprep.subr.mxu0 0.0
    %2250 = vmatpush2.msra.mxu0 0.0
    %2251 = vmatprep.subr.mxu0 0.0
    %2252 = vmatpush2.msra.mxu0 0.0
    %2253 = vmatprep.mubr.f32.mxu0 0.0
    %v2254 = vand.u32 %v2088, 4294901760
    %2255 = vmatmul.mubr.f32.gmra.mxu0 %v2254
    %v2256 = vpop.f32.mrf.mxu0
    %v2257 = vadd.f32 %v2166, %v2256
    %v2258 = vpop.f32.mrf.mxu0
    %2259 = vdwg.mxu0
    %2260 = vmatprep.subr.mxu0 0.0
    %2261 = vmatpush1.msra.mxu0 0.0
    %2262 = vmatprep.subr.mxu0 0.0
    %2263 = vmatpush1.msra.mxu0 0.0
    %2264 = vmatprep.subr.mxu0 0.0
    %2265 = vmatpush1.msra.mxu0 0.0
    %2266 = vmatprep.subr.mxu0 0.0
    %2267 = vmatpush1.msra.mxu0 0.0
    %2268 = vmatprep.subr.mxu0 0.0
    %2269 = vmatpush1.msra.mxu0 0.0
    %2270 = vmatprep.subr.mxu0 0.0
    %2271 = vmatpush1.msra.mxu0 0.0
    %2272 = vmatprep.subr.mxu0 0.0
    %2273 = vmatpush1.msra.mxu0 0.0
    %2274 = vmatprep.subr.mxu0 0.0
    %2275 = vmatpush1.msra.mxu0 0.0
    %2276 = vmatprep.subr.mxu0 0.0
    %2277 = vmatpush1.msra.mxu0 0.0
    %2278 = vmatprep.subr.mxu0 0.0
    %2279 = vmatpush1.msra.mxu0 0.0
    %2280 = vmatprep.subr.mxu0 0.0
    %2281 = vmatpush1.msra.mxu0 0.0
    %2282 = vmatprep.subr.mxu0 0.0
    %2283 = vmatpush1.msra.mxu0 0.0
    %2284 = vmatprep.subr.mxu0 0.0
    %v2285 = vand.u32 %v43, 4294901760
    %v2286 = vsub.f32 %v43, %v2285
    %2287 = vmatpush1.msra.mxu0 %v2286
    %2288 = vmatprep.subr.mxu0 0.0
    %v2289 = vand.u32 %v42, 4294901760
    %v2290 = vsub.f32 %v42, %v2289
    %2291 = vmatpush1.msra.mxu0 %v2290
    %2292 = vmatprep.subr.mxu0 0.0
    %v2293 = vand.u32 %v41, 4294901760
    %v2294 = vsub.f32 %v41, %v2293
    %2295 = vmatpush1.msra.mxu0 %v2294
    %2296 = vmatprep.subr.mxu0 0.0
    %v2297 = vand.u32 %v40, 4294901760
    %v2298 = vsub.f32 %v40, %v2297
    %2299 = vmatpush1.msra.mxu0 %v2298
    %2300 = vmatprep.subr.mxu0 0.0
    %2301 = vmatpush2.msra.mxu0 0.0
    %2302 = vmatprep.subr.mxu0 0.0
    %2303 = vmatpush2.msra.mxu0 0.0
    %2304 = vmatprep.subr.mxu0 0.0
    %2305 = vmatpush2.msra.mxu0 0.0
    %2306 = vmatprep.subr.mxu0 0.0
    %2307 = vmatpush2.msra.mxu0 0.0
    %2308 = vmatprep.subr.mxu0 0.0
    %2309 = vmatpush2.msra.mxu0 0.0
    %2310 = vmatprep.subr.mxu0 0.0
    %2311 = vmatpush2.msra.mxu0 0.0
    %2312 = vmatprep.subr.mxu0 0.0
    %2313 = vmatpush2.msra.mxu0 0.0
    %2314 = vmatprep.subr.mxu0 0.0
    %2315 = vmatpush2.msra.mxu0 0.0
    %2316 = vmatprep.subr.mxu0 0.0
    %2317 = vmatpush2.msra.mxu0 0.0
    %2318 = vmatprep.subr.mxu0 0.0
    %2319 = vmatpush2.msra.mxu0 0.0
    %2320 = vmatprep.subr.mxu0 0.0
    %2321 = vmatpush2.msra.mxu0 0.0
    %2322 = vmatprep.subr.mxu0 0.0
    %2323 = vmatpush2.msra.mxu0 0.0
    %2324 = vmatprep.subr.mxu0 0.0
    %2325 = vmatpush2.msra.mxu0 0.0
    %2326 = vmatprep.subr.mxu0 0.0
    %2327 = vmatpush2.msra.mxu0 0.0
    %2328 = vmatprep.subr.mxu0 0.0
    %2329 = vmatpush2.msra.mxu0 0.0
    %2330 = vmatprep.subr.mxu0 0.0
    %2331 = vmatpush2.msra.mxu0 0.0
    %2332 = vmatprep.mubr.f32.mxu0 0.0
    %v2333 = vand.u32 %v2088, 4294901760
    %v2334 = vsub.f32 %v2088, %v2333
    %2335 = vmatmul.mubr.f32.gmra.mxu0 %v2334
    %v2336 = vpop.f32.mrf.mxu0
    %v2337 = vadd.f32 %v2257, %v2336
    %v2338 = vpop.f32.mrf.mxu0
    %2339 = vdwg.mxu0
    %2340 = vmatprep.subr.mxu0 0.0
    %2341 = vmatpush1.msra.mxu0 0.0
    %2342 = vmatprep.subr.mxu0 0.0
    %2343 = vmatpush1.msra.mxu0 0.0
    %2344 = vmatprep.subr.mxu0 0.0
    %2345 = vmatpush1.msra.mxu0 0.0
    %2346 = vmatprep.subr.mxu0 0.0
    %2347 = vmatpush1.msra.mxu0 0.0
    %2348 = vmatprep.subr.mxu0 0.0
    %2349 = vmatpush1.msra.mxu0 0.0
    %2350 = vmatprep.subr.mxu0 0.0
    %2351 = vmatpush1.msra.mxu0 0.0
    %2352 = vmatprep.subr.mxu0 0.0
    %2353 = vmatpush1.msra.mxu0 0.0
    %2354 = vmatprep.subr.mxu0 0.0
    %2355 = vmatpush1.msra.mxu0 0.0
    %2356 = vmatprep.subr.mxu0 0.0
    %2357 = vmatpush1.msra.mxu0 0.0
    %2358 = vmatprep.subr.mxu0 0.0
    %2359 = vmatpush1.msra.mxu0 0.0
    %2360 = vmatprep.subr.mxu0 0.0
    %2361 = vmatpush1.msra.mxu0 0.0
    %2362 = vmatprep.subr.mxu0 0.0
    %2363 = vmatpush1.msra.mxu0 0.0
    %2364 = vmatprep.subr.mxu0 0.0
    %v2365 = vand.u32 %v43, 4294901760
    %2366 = vmatpush1.msra.mxu0 %v2365
    %2367 = vmatprep.subr.mxu0 0.0
    %v2368 = vand.u32 %v42, 4294901760
    %2369 = vmatpush1.msra.mxu0 %v2368
    %2370 = vmatprep.subr.mxu0 0.0
    %v2371 = vand.u32 %v41, 4294901760
    %2372 = vmatpush1.msra.mxu0 %v2371
    %2373 = vmatprep.subr.mxu0 0.0
    %v2374 = vand.u32 %v40, 4294901760
    %2375 = vmatpush1.msra.mxu0 %v2374
    %2376 = vmatprep.subr.mxu0 0.0
    %2377 = vmatpush2.msra.mxu0 0.0
    %2378 = vmatprep.subr.mxu0 0.0
    %2379 = vmatpush2.msra.mxu0 0.0
    %2380 = vmatprep.subr.mxu0 0.0
    %2381 = vmatpush2.msra.mxu0 0.0
    %2382 = vmatprep.subr.mxu0 0.0
    %2383 = vmatpush2.msra.mxu0 0.0
    %2384 = vmatprep.subr.mxu0 0.0
    %2385 = vmatpush2.msra.mxu0 0.0
    %2386 = vmatprep.subr.mxu0 0.0
    %2387 = vmatpush2.msra.mxu0 0.0
    %2388 = vmatprep.subr.mxu0 0.0
    %2389 = vmatpush2.msra.mxu0 0.0
    %2390 = vmatprep.subr.mxu0 0.0
    %2391 = vmatpush2.msra.mxu0 0.0
    %2392 = vmatprep.subr.mxu0 0.0
    %2393 = vmatpush2.msra.mxu0 0.0
    %2394 = vmatprep.subr.mxu0 0.0
    %2395 = vmatpush2.msra.mxu0 0.0
    %2396 = vmatprep.subr.mxu0 0.0
    %2397 = vmatpush2.msra.mxu0 0.0
    %2398 = vmatprep.subr.mxu0 0.0
    %2399 = vmatpush2.msra.mxu0 0.0
    %2400 = vmatprep.subr.mxu0 0.0
    %2401 = vmatpush2.msra.mxu0 0.0
    %2402 = vmatprep.subr.mxu0 0.0
    %2403 = vmatpush2.msra.mxu0 0.0
    %2404 = vmatprep.subr.mxu0 0.0
    %2405 = vmatpush2.msra.mxu0 0.0
    %2406 = vmatprep.subr.mxu0 0.0
    %2407 = vmatpush2.msra.mxu0 0.0
    %2408 = vmatprep.mubr.f32.mxu0 0.0
    %v2409 = vand.u32 %v2088, 4294901760
    %v2410 = vsub.f32 %v2088, %v2409
    %v2411 = vand.u32 %v2410, 4294901760
    %2412 = vmatmul.mubr.f32.gmra.mxu0 %v2411
    %v2413 = vpop.f32.mrf.mxu0
    %v2414 = vadd.f32 %v2337, %v2413
    %v2415 = vpop.f32.mrf.mxu0
    %2416 = vdwg.mxu0
    %2417 = vmatprep.subr.mxu0 0.0
    %2418 = vmatpush1.msra.mxu0 0.0
    %2419 = vmatprep.subr.mxu0 0.0
    %2420 = vmatpush1.msra.mxu0 0.0
    %2421 = vmatprep.subr.mxu0 0.0
    %2422 = vmatpush1.msra.mxu0 0.0
    %2423 = vmatprep.subr.mxu0 0.0
    %2424 = vmatpush1.msra.mxu0 0.0
    %2425 = vmatprep.subr.mxu0 0.0
    %2426 = vmatpush1.msra.mxu0 0.0
    %2427 = vmatprep.subr.mxu0 0.0
    %2428 = vmatpush1.msra.mxu0 0.0
    %2429 = vmatprep.subr.mxu0 0.0
    %2430 = vmatpush1.msra.mxu0 0.0
    %2431 = vmatprep.subr.mxu0 0.0
    %2432 = vmatpush1.msra.mxu0 0.0
    %2433 = vmatprep.subr.mxu0 0.0
    %2434 = vmatpush1.msra.mxu0 0.0
    %2435 = vmatprep.subr.mxu0 0.0
    %2436 = vmatpush1.msra.mxu0 0.0
    %2437 = vmatprep.subr.mxu0 0.0
    %2438 = vmatpush1.msra.mxu0 0.0
    %2439 = vmatprep.subr.mxu0 0.0
    %2440 = vmatpush1.msra.mxu0 0.0
    %2441 = vmatprep.subr.mxu0 0.0
    %v2442 = vand.u32 %v43, 4294901760
    %v2443 = vsub.f32 %v43, %v2442
    %v2444 = vand.u32 %v2443, 4294901760
    %2445 = vmatpush1.msra.mxu0 %v2444
    %2446 = vmatprep.subr.mxu0 0.0
    %v2447 = vand.u32 %v42, 4294901760
    %v2448 = vsub.f32 %v42, %v2447
    %v2449 = vand.u32 %v2448, 4294901760
    %2450 = vmatpush1.msra.mxu0 %v2449
    %2451 = vmatprep.subr.mxu0 0.0
    %v2452 = vand.u32 %v41, 4294901760
    %v2453 = vsub.f32 %v41, %v2452
    %v2454 = vand.u32 %v2453, 4294901760
    %2455 = vmatpush1.msra.mxu0 %v2454
    %2456 = vmatprep.subr.mxu0 0.0
    %v2457 = vand.u32 %v40, 4294901760
    %v2458 = vsub.f32 %v40, %v2457
    %v2459 = vand.u32 %v2458, 4294901760
    %2460 = vmatpush1.msra.mxu0 %v2459
    %2461 = vmatprep.subr.mxu0 0.0
    %2462 = vmatpush2.msra.mxu0 0.0
    %2463 = vmatprep.subr.mxu0 0.0
    %2464 = vmatpush2.msra.mxu0 0.0
    %2465 = vmatprep.subr.mxu0 0.0
    %2466 = vmatpush2.msra.mxu0 0.0
    %2467 = vmatprep.subr.mxu0 0.0
    %2468 = vmatpush2.msra.mxu0 0.0
    %2469 = vmatprep.subr.mxu0 0.0
    %2470 = vmatpush2.msra.mxu0 0.0
    %2471 = vmatprep.subr.mxu0 0.0
    %2472 = vmatpush2.msra.mxu0 0.0
    %2473 = vmatprep.subr.mxu0 0.0
    %2474 = vmatpush2.msra.mxu0 0.0
    %2475 = vmatprep.subr.mxu0 0.0
    %2476 = vmatpush2.msra.mxu0 0.0
    %2477 = vmatprep.subr.mxu0 0.0
    %2478 = vmatpush2.msra.mxu0 0.0
    %2479 = vmatprep.subr.mxu0 0.0
    %2480 = vmatpush2.msra.mxu0 0.0
    %2481 = vmatprep.subr.mxu0 0.0
    %2482 = vmatpush2.msra.mxu0 0.0
    %2483 = vmatprep.subr.mxu0 0.0
    %2484 = vmatpush2.msra.mxu0 0.0
    %2485 = vmatprep.subr.mxu0 0.0
    %2486 = vmatpush2.msra.mxu0 0.0
    %2487 = vmatprep.subr.mxu0 0.0
    %2488 = vmatpush2.msra.mxu0 0.0
    %2489 = vmatprep.subr.mxu0 0.0
    %2490 = vmatpush2.msra.mxu0 0.0
    %2491 = vmatprep.subr.mxu0 0.0
    %2492 = vmatpush2.msra.mxu0 0.0
    %2493 = vmatprep.mubr.f32.mxu0 0.0
    %v2494 = vand.u32 %v2088, 4294901760
    %2495 = vmatmul.mubr.f32.gmra.mxu0 %v2494
    %v2496 = vpop.f32.mrf.mxu0
    %v2497 = vadd.f32 %v2414, %v2496
    %v2498 = vpop.f32.mrf.mxu0
    %2499 = vdwg.mxu0
    %2500 = vmatprep.subr.mxu0 0.0
    %2501 = vmatpush1.msra.mxu0 0.0
    %2502 = vmatprep.subr.mxu0 0.0
    %2503 = vmatpush1.msra.mxu0 0.0
    %2504 = vmatprep.subr.mxu0 0.0
    %2505 = vmatpush1.msra.mxu0 0.0
    %2506 = vmatprep.subr.mxu0 0.0
    %2507 = vmatpush1.msra.mxu0 0.0
    %2508 = vmatprep.subr.mxu0 0.0
    %2509 = vmatpush1.msra.mxu0 0.0
    %2510 = vmatprep.subr.mxu0 0.0
    %2511 = vmatpush1.msra.mxu0 0.0
    %2512 = vmatprep.subr.mxu0 0.0
    %2513 = vmatpush1.msra.mxu0 0.0
    %2514 = vmatprep.subr.mxu0 0.0
    %2515 = vmatpush1.msra.mxu0 0.0
    %2516 = vmatprep.subr.mxu0 0.0
    %2517 = vmatpush1.msra.mxu0 0.0
    %2518 = vmatprep.subr.mxu0 0.0
    %2519 = vmatpush1.msra.mxu0 0.0
    %2520 = vmatprep.subr.mxu0 0.0
    %2521 = vmatpush1.msra.mxu0 0.0
    %2522 = vmatprep.subr.mxu0 0.0
    %2523 = vmatpush1.msra.mxu0 0.0
    %2524 = vmatprep.subr.mxu0 0.0
    %v2525 = vand.u32 %v43, 4294901760
    %2526 = vmatpush1.msra.mxu0 %v2525
    %2527 = vmatprep.subr.mxu0 0.0
    %v2528 = vand.u32 %v42, 4294901760
    %2529 = vmatpush1.msra.mxu0 %v2528
    %2530 = vmatprep.subr.mxu0 0.0
    %v2531 = vand.u32 %v41, 4294901760
    %2532 = vmatpush1.msra.mxu0 %v2531
    %2533 = vmatprep.subr.mxu0 0.0
    %v2534 = vand.u32 %v40, 4294901760
    %2535 = vmatpush1.msra.mxu0 %v2534
    %2536 = vmatprep.subr.mxu0 0.0
    %2537 = vmatpush2.msra.mxu0 0.0
    %2538 = vmatprep.subr.mxu0 0.0
    %2539 = vmatpush2.msra.mxu0 0.0
    %2540 = vmatprep.subr.mxu0 0.0
    %2541 = vmatpush2.msra.mxu0 0.0
    %2542 = vmatprep.subr.mxu0 0.0
    %2543 = vmatpush2.msra.mxu0 0.0
    %2544 = vmatprep.subr.mxu0 0.0
    %2545 = vmatpush2.msra.mxu0 0.0
    %2546 = vmatprep.subr.mxu0 0.0
    %2547 = vmatpush2.msra.mxu0 0.0
    %2548 = vmatprep.subr.mxu0 0.0
    %2549 = vmatpush2.msra.mxu0 0.0
    %2550 = vmatprep.subr.mxu0 0.0
    %2551 = vmatpush2.msra.mxu0 0.0
    %2552 = vmatprep.subr.mxu0 0.0
    %2553 = vmatpush2.msra.mxu0 0.0
    %2554 = vmatprep.subr.mxu0 0.0
    %2555 = vmatpush2.msra.mxu0 0.0
    %2556 = vmatprep.subr.mxu0 0.0
    %2557 = vmatpush2.msra.mxu0 0.0
    %2558 = vmatprep.subr.mxu0 0.0
    %2559 = vmatpush2.msra.mxu0 0.0
    %2560 = vmatprep.subr.mxu0 0.0
    %2561 = vmatpush2.msra.mxu0 0.0
    %2562 = vmatprep.subr.mxu0 0.0
    %2563 = vmatpush2.msra.mxu0 0.0
    %2564 = vmatprep.subr.mxu0 0.0
    %2565 = vmatpush2.msra.mxu0 0.0
    %2566 = vmatprep.subr.mxu0 0.0
    %2567 = vmatpush2.msra.mxu0 0.0
    %2568 = vmatprep.mubr.f32.mxu0 0.0
    %v2569 = vand.u32 %v2088, 4294901760
    %2570 = vmatmul.mubr.f32.gmra.mxu0 %v2569
    %v2571 = vpop.f32.mrf.mxu0
    %v2572 = vadd.f32 %v2497, %v2571
    %v2573 = vpop.f32.mrf.mxu0
    %2574 = vdwg.mxu0
    %v2576 = vrot.slane %v2572, 6
    %v2578 = vadd.f32 %v550, %v2576
    %v2579 = vtanh.pop %v2578
    %v2581 = vrot.slane %v2085, 7
    %2582 = vrot.lane.b32.xlu0 %v2581, 32
    %v2583 = vpop.permute.xlu0 %2582
    %v2585 = vsel %vm64, %v1535, %v2583
    %v2587 = vrot.slane %v2585, 1
    %v2588 = vsel %vm1544, %v2587, 0
    %2590 = vmatprep.subr.mxu0 0.0
    %2591 = vmatpush1.msra.mxu0 0.0
    %2592 = vmatprep.subr.mxu0 0.0
    %2593 = vmatpush1.msra.mxu0 0.0
    %2594 = vmatprep.subr.mxu0 0.0
    %2595 = vmatpush1.msra.mxu0 0.0
    %2596 = vmatprep.subr.mxu0 0.0
    %2597 = vmatpush1.msra.mxu0 0.0
    %2598 = vmatprep.subr.mxu0 0.0
    %2599 = vmatpush1.msra.mxu0 0.0
    %2600 = vmatprep.subr.mxu0 0.0
    %2601 = vmatpush1.msra.mxu0 0.0
    %2602 = vmatprep.subr.mxu0 0.0
    %2603 = vmatpush1.msra.mxu0 0.0
    %2604 = vmatprep.subr.mxu0 0.0
    %2605 = vmatpush1.msra.mxu0 0.0
    %2606 = vmatprep.subr.mxu0 0.0
    %v2607 = vand.u32 %v52, 4294901760
    %2608 = vmatpush1.msra.mxu0 %v2607
    %2609 = vmatprep.subr.mxu0 0.0
    %v2610 = vand.u32 %v51, 4294901760
    %2611 = vmatpush1.msra.mxu0 %v2610
    %2612 = vmatprep.subr.mxu0 0.0
    %v2613 = vand.u32 %v50, 4294901760
    %2614 = vmatpush1.msra.mxu0 %v2613
    %2615 = vmatprep.subr.mxu0 0.0
    %v2616 = vand.u32 %v49, 4294901760
    %2617 = vmatpush1.msra.mxu0 %v2616
    %2618 = vmatprep.subr.mxu0 0.0
    %v2619 = vand.u32 %v48, 4294901760
    %2620 = vmatpush1.msra.mxu0 %v2619
    %2621 = vmatprep.subr.mxu0 0.0
    %v2622 = vand.u32 %v47, 4294901760
    %2623 = vmatpush1.msra.mxu0 %v2622
    %2624 = vmatprep.subr.mxu0 0.0
    %v2625 = vand.u32 %v46, 4294901760
    %2626 = vmatpush1.msra.mxu0 %v2625
    %2627 = vmatprep.subr.mxu0 0.0
    %v2628 = vand.u32 %v45, 4294901760
    %2629 = vmatpush1.msra.mxu0 %v2628
    %2630 = vmatprep.subr.mxu0 0.0
    %2631 = vmatpush2.msra.mxu0 0.0
    %2632 = vmatprep.subr.mxu0 0.0
    %2633 = vmatpush2.msra.mxu0 0.0
    %2634 = vmatprep.subr.mxu0 0.0
    %2635 = vmatpush2.msra.mxu0 0.0
    %2636 = vmatprep.subr.mxu0 0.0
    %2637 = vmatpush2.msra.mxu0 0.0
    %2638 = vmatprep.subr.mxu0 0.0
    %2639 = vmatpush2.msra.mxu0 0.0
    %2640 = vmatprep.subr.mxu0 0.0
    %2641 = vmatpush2.msra.mxu0 0.0
    %2642 = vmatprep.subr.mxu0 0.0
    %2643 = vmatpush2.msra.mxu0 0.0
    %2644 = vmatprep.subr.mxu0 0.0
    %2645 = vmatpush2.msra.mxu0 0.0
    %2646 = vmatprep.subr.mxu0 0.0
    %2647 = vmatpush2.msra.mxu0 0.0
    %2648 = vmatprep.subr.mxu0 0.0
    %2649 = vmatpush2.msra.mxu0 0.0
    %2650 = vmatprep.subr.mxu0 0.0
    %2651 = vmatpush2.msra.mxu0 0.0
    %2652 = vmatprep.subr.mxu0 0.0
    %2653 = vmatpush2.msra.mxu0 0.0
    %2654 = vmatprep.subr.mxu0 0.0
    %2655 = vmatpush2.msra.mxu0 0.0
    %2656 = vmatprep.subr.mxu0 0.0
    %2657 = vmatpush2.msra.mxu0 0.0
    %2658 = vmatprep.subr.mxu0 0.0
    %2659 = vmatpush2.msra.mxu0 0.0
    %2660 = vmatprep.subr.mxu0 0.0
    %2661 = vmatpush2.msra.mxu0 0.0
    %2662 = vmatprep.mubr.f32.mxu0 0.0
    %v2663 = vand.u32 %v2588, 4294901760
    %v2664 = vsub.f32 %v2588, %v2663
    %v2665 = vand.u32 %v2664, 4294901760
    %v2666 = vsub.f32 %v2664, %v2665
    %v2667 = vand.u32 %v2666, 4294901760
    %2668 = vmatmul.mubr.f32.gmra.mxu0 %v2667
    %v2669 = vpop.f32.mrf.mxu0
    %v2670 = vadd.f32 %v1542, %v2669
    %v2671 = vpop.f32.mrf.mxu0
    %2672 = vdwg.mxu0
    %2673 = vmatprep.subr.mxu0 0.0
    %2674 = vmatpush1.msra.mxu0 0.0
    %2675 = vmatprep.subr.mxu0 0.0
    %2676 = vmatpush1.msra.mxu0 0.0
    %2677 = vmatprep.subr.mxu0 0.0
    %2678 = vmatpush1.msra.mxu0 0.0
    %2679 = vmatprep.subr.mxu0 0.0
    %2680 = vmatpush1.msra.mxu0 0.0
    %2681 = vmatprep.subr.mxu0 0.0
    %2682 = vmatpush1.msra.mxu0 0.0
    %2683 = vmatprep.subr.mxu0 0.0
    %2684 = vmatpush1.msra.mxu0 0.0
    %2685 = vmatprep.subr.mxu0 0.0
    %2686 = vmatpush1.msra.mxu0 0.0
    %2687 = vmatprep.subr.mxu0 0.0
    %2688 = vmatpush1.msra.mxu0 0.0
    %2689 = vmatprep.subr.mxu0 0.0
    %v2690 = vand.u32 %v52, 4294901760
    %v2691 = vsub.f32 %v52, %v2690
    %v2692 = vand.u32 %v2691, 4294901760
    %v2693 = vsub.f32 %v2691, %v2692
    %v2694 = vand.u32 %v2693, 4294901760
    %2695 = vmatpush1.msra.mxu0 %v2694
    %2696 = vmatprep.subr.mxu0 0.0
    %v2697 = vand.u32 %v51, 4294901760
    %v2698 = vsub.f32 %v51, %v2697
    %v2699 = vand.u32 %v2698, 4294901760
    %v2700 = vsub.f32 %v2698, %v2699
    %v2701 = vand.u32 %v2700, 4294901760
    %2702 = vmatpush1.msra.mxu0 %v2701
    %2703 = vmatprep.subr.mxu0 0.0
    %v2704 = vand.u32 %v50, 4294901760
    %v2705 = vsub.f32 %v50, %v2704
    %v2706 = vand.u32 %v2705, 4294901760
    %v2707 = vsub.f32 %v2705, %v2706
    %v2708 = vand.u32 %v2707, 4294901760
    %2709 = vmatpush1.msra.mxu0 %v2708
    %2710 = vmatprep.subr.mxu0 0.0
    %v2711 = vand.u32 %v49, 4294901760
    %v2712 = vsub.f32 %v49, %v2711
    %v2713 = vand.u32 %v2712, 4294901760
    %v2714 = vsub.f32 %v2712, %v2713
    %v2715 = vand.u32 %v2714, 4294901760
    %2716 = vmatpush1.msra.mxu0 %v2715
    %2717 = vmatprep.subr.mxu0 0.0
    %v2718 = vand.u32 %v48, 4294901760
    %v2719 = vsub.f32 %v48, %v2718
    %v2720 = vand.u32 %v2719, 4294901760
    %v2721 = vsub.f32 %v2719, %v2720
    %v2722 = vand.u32 %v2721, 4294901760
    %2723 = vmatpush1.msra.mxu0 %v2722
    %2724 = vmatprep.subr.mxu0 0.0
    %v2725 = vand.u32 %v47, 4294901760
    %v2726 = vsub.f32 %v47, %v2725
    %v2727 = vand.u32 %v2726, 4294901760
    %v2728 = vsub.f32 %v2726, %v2727
    %v2729 = vand.u32 %v2728, 4294901760
    %2730 = vmatpush1.msra.mxu0 %v2729
    %2731 = vmatprep.subr.mxu0 0.0
    %v2732 = vand.u32 %v46, 4294901760
    %v2733 = vsub.f32 %v46, %v2732
    %v2734 = vand.u32 %v2733, 4294901760
    %v2735 = vsub.f32 %v2733, %v2734
    %v2736 = vand.u32 %v2735, 4294901760
    %2737 = vmatpush1.msra.mxu0 %v2736
    %2738 = vmatprep.subr.mxu0 0.0
    %v2739 = vand.u32 %v45, 4294901760
    %v2740 = vsub.f32 %v45, %v2739
    %v2741 = vand.u32 %v2740, 4294901760
    %v2742 = vsub.f32 %v2740, %v2741
    %v2743 = vand.u32 %v2742, 4294901760
    %2744 = vmatpush1.msra.mxu0 %v2743
    %2745 = vmatprep.subr.mxu0 0.0
    %2746 = vmatpush2.msra.mxu0 0.0
    %2747 = vmatprep.subr.mxu0 0.0
    %2748 = vmatpush2.msra.mxu0 0.0
    %2749 = vmatprep.subr.mxu0 0.0
    %2750 = vmatpush2.msra.mxu0 0.0
    %2751 = vmatprep.subr.mxu0 0.0
    %2752 = vmatpush2.msra.mxu0 0.0
    %2753 = vmatprep.subr.mxu0 0.0
    %2754 = vmatpush2.msra.mxu0 0.0
    %2755 = vmatprep.subr.mxu0 0.0
    %2756 = vmatpush2.msra.mxu0 0.0
    %2757 = vmatprep.subr.mxu0 0.0
    %2758 = vmatpush2.msra.mxu0 0.0
    %2759 = vmatprep.subr.mxu0 0.0
    %2760 = vmatpush2.msra.mxu0 0.0
    %2761 = vmatprep.subr.mxu0 0.0
    %2762 = vmatpush2.msra.mxu0 0.0
    %2763 = vmatprep.subr.mxu0 0.0
    %2764 = vmatpush2.msra.mxu0 0.0
    %2765 = vmatprep.subr.mxu0 0.0
    %2766 = vmatpush2.msra.mxu0 0.0
    %2767 = vmatprep.subr.mxu0 0.0
    %2768 = vmatpush2.msra.mxu0 0.0
    %2769 = vmatprep.subr.mxu0 0.0
    %2770 = vmatpush2.msra.mxu0 0.0
    %2771 = vmatprep.subr.mxu0 0.0
    %2772 = vmatpush2.msra.mxu0 0.0
    %2773 = vmatprep.subr.mxu0 0.0
    %2774 = vmatpush2.msra.mxu0 0.0
    %2775 = vmatprep.subr.mxu0 0.0
    %2776 = vmatpush2.msra.mxu0 0.0
    %2777 = vmatprep.mubr.f32.mxu0 0.0
    %v2778 = vand.u32 %v2588, 4294901760
    %2779 = vmatmul.mubr.f32.gmra.mxu0 %v2778
    %v2780 = vpop.f32.mrf.mxu0
    %v2781 = vadd.f32 %v2670, %v2780
    %v2782 = vpop.f32.mrf.mxu0
    %2783 = vdwg.mxu0
    %2784 = vmatprep.subr.mxu0 0.0
    %2785 = vmatpush1.msra.mxu0 0.0
    %2786 = vmatprep.subr.mxu0 0.0
    %2787 = vmatpush1.msra.mxu0 0.0
    %2788 = vmatprep.subr.mxu0 0.0
    %2789 = vmatpush1.msra.mxu0 0.0
    %2790 = vmatprep.subr.mxu0 0.0
    %2791 = vmatpush1.msra.mxu0 0.0
    %2792 = vmatprep.subr.mxu0 0.0
    %2793 = vmatpush1.msra.mxu0 0.0
    %2794 = vmatprep.subr.mxu0 0.0
    %2795 = vmatpush1.msra.mxu0 0.0
    %2796 = vmatprep.subr.mxu0 0.0
    %2797 = vmatpush1.msra.mxu0 0.0
    %2798 = vmatprep.subr.mxu0 0.0
    %2799 = vmatpush1.msra.mxu0 0.0
    %2800 = vmatprep.subr.mxu0 0.0
    %v2801 = vand.u32 %v52, 4294901760
    %v2802 = vsub.f32 %v52, %v2801
    %2803 = vmatpush1.msra.mxu0 %v2802
    %2804 = vmatprep.subr.mxu0 0.0
    %v2805 = vand.u32 %v51, 4294901760
    %v2806 = vsub.f32 %v51, %v2805
    %2807 = vmatpush1.msra.mxu0 %v2806
    %2808 = vmatprep.subr.mxu0 0.0
    %v2809 = vand.u32 %v50, 4294901760
    %v2810 = vsub.f32 %v50, %v2809
    %2811 = vmatpush1.msra.mxu0 %v2810
    %2812 = vmatprep.subr.mxu0 0.0
    %v2813 = vand.u32 %v49, 4294901760
    %v2814 = vsub.f32 %v49, %v2813
    %2815 = vmatpush1.msra.mxu0 %v2814
    %2816 = vmatprep.subr.mxu0 0.0
    %v2817 = vand.u32 %v48, 4294901760
    %v2818 = vsub.f32 %v48, %v2817
    %2819 = vmatpush1.msra.mxu0 %v2818
    %2820 = vmatprep.subr.mxu0 0.0
    %v2821 = vand.u32 %v47, 4294901760
    %v2822 = vsub.f32 %v47, %v2821
    %2823 = vmatpush1.msra.mxu0 %v2822
    %2824 = vmatprep.subr.mxu0 0.0
    %v2825 = vand.u32 %v46, 4294901760
    %v2826 = vsub.f32 %v46, %v2825
    %2827 = vmatpush1.msra.mxu0 %v2826
    %2828 = vmatprep.subr.mxu0 0.0
    %v2829 = vand.u32 %v45, 4294901760
    %v2830 = vsub.f32 %v45, %v2829
    %2831 = vmatpush1.msra.mxu0 %v2830
    %2832 = vmatprep.subr.mxu0 0.0
    %2833 = vmatpush2.msra.mxu0 0.0
    %2834 = vmatprep.subr.mxu0 0.0
    %2835 = vmatpush2.msra.mxu0 0.0
    %2836 = vmatprep.subr.mxu0 0.0
    %2837 = vmatpush2.msra.mxu0 0.0
    %2838 = vmatprep.subr.mxu0 0.0
    %2839 = vmatpush2.msra.mxu0 0.0
    %2840 = vmatprep.subr.mxu0 0.0
    %2841 = vmatpush2.msra.mxu0 0.0
    %2842 = vmatprep.subr.mxu0 0.0
    %2843 = vmatpush2.msra.mxu0 0.0
    %2844 = vmatprep.subr.mxu0 0.0
    %2845 = vmatpush2.msra.mxu0 0.0
    %2846 = vmatprep.subr.mxu0 0.0
    %2847 = vmatpush2.msra.mxu0 0.0
    %2848 = vmatprep.subr.mxu0 0.0
    %2849 = vmatpush2.msra.mxu0 0.0
    %2850 = vmatprep.subr.mxu0 0.0
    %2851 = vmatpush2.msra.mxu0 0.0
    %2852 = vmatprep.subr.mxu0 0.0
    %2853 = vmatpush2.msra.mxu0 0.0
    %2854 = vmatprep.subr.mxu0 0.0
    %2855 = vmatpush2.msra.mxu0 0.0
    %2856 = vmatprep.subr.mxu0 0.0
    %2857 = vmatpush2.msra.mxu0 0.0
    %2858 = vmatprep.subr.mxu0 0.0
    %2859 = vmatpush2.msra.mxu0 0.0
    %2860 = vmatprep.subr.mxu0 0.0
    %2861 = vmatpush2.msra.mxu0 0.0
    %2862 = vmatprep.subr.mxu0 0.0
    %2863 = vmatpush2.msra.mxu0 0.0
    %2864 = vmatprep.mubr.f32.mxu0 0.0
    %v2865 = vand.u32 %v2588, 4294901760
    %v2866 = vsub.f32 %v2588, %v2865
    %2867 = vmatmul.mubr.f32.gmra.mxu0 %v2866
    %v2868 = vpop.f32.mrf.mxu0
    %v2869 = vadd.f32 %v2781, %v2868
    %v2870 = vpop.f32.mrf.mxu0
    %2871 = vdwg.mxu0
    %2872 = vmatprep.subr.mxu0 0.0
    %2873 = vmatpush1.msra.mxu0 0.0
    %2874 = vmatprep.subr.mxu0 0.0
    %2875 = vmatpush1.msra.mxu0 0.0
    %2876 = vmatprep.subr.mxu0 0.0
    %2877 = vmatpush1.msra.mxu0 0.0
    %2878 = vmatprep.subr.mxu0 0.0
    %2879 = vmatpush1.msra.mxu0 0.0
    %2880 = vmatprep.subr.mxu0 0.0
    %2881 = vmatpush1.msra.mxu0 0.0
    %2882 = vmatprep.subr.mxu0 0.0
    %2883 = vmatpush1.msra.mxu0 0.0
    %2884 = vmatprep.subr.mxu0 0.0
    %2885 = vmatpush1.msra.mxu0 0.0
    %2886 = vmatprep.subr.mxu0 0.0
    %2887 = vmatpush1.msra.mxu0 0.0
    %2888 = vmatprep.subr.mxu0 0.0
    %v2889 = vand.u32 %v52, 4294901760
    %2890 = vmatpush1.msra.mxu0 %v2889
    %2891 = vmatprep.subr.mxu0 0.0
    %v2892 = vand.u32 %v51, 4294901760
    %2893 = vmatpush1.msra.mxu0 %v2892
    %2894 = vmatprep.subr.mxu0 0.0
    %v2895 = vand.u32 %v50, 4294901760
    %2896 = vmatpush1.msra.mxu0 %v2895
    %2897 = vmatprep.subr.mxu0 0.0
    %v2898 = vand.u32 %v49, 4294901760
    %2899 = vmatpush1.msra.mxu0 %v2898
    %2900 = vmatprep.subr.mxu0 0.0
    %v2901 = vand.u32 %v48, 4294901760
    %2902 = vmatpush1.msra.mxu0 %v2901
    %2903 = vmatprep.subr.mxu0 0.0
    %v2904 = vand.u32 %v47, 4294901760
    %2905 = vmatpush1.msra.mxu0 %v2904
    %2906 = vmatprep.subr.mxu0 0.0
    %v2907 = vand.u32 %v46, 4294901760
    %2908 = vmatpush1.msra.mxu0 %v2907
    %2909 = vmatprep.subr.mxu0 0.0
    %v2910 = vand.u32 %v45, 4294901760
    %2911 = vmatpush1.msra.mxu0 %v2910
    %2912 = vmatprep.subr.mxu0 0.0
    %2913 = vmatpush2.msra.mxu0 0.0
    %2914 = vmatprep.subr.mxu0 0.0
    %2915 = vmatpush2.msra.mxu0 0.0
    %2916 = vmatprep.subr.mxu0 0.0
    %2917 = vmatpush2.msra.mxu0 0.0
    %2918 = vmatprep.subr.mxu0 0.0
    %2919 = vmatpush2.msra.mxu0 0.0
    %2920 = vmatprep.subr.mxu0 0.0
    %2921 = vmatpush2.msra.mxu0 0.0
    %2922 = vmatprep.subr.mxu0 0.0
    %2923 = vmatpush2.msra.mxu0 0.0
    %2924 = vmatprep.subr.mxu0 0.0
    %2925 = vmatpush2.msra.mxu0 0.0
    %2926 = vmatprep.subr.mxu0 0.0
    %2927 = vmatpush2.msra.mxu0 0.0
    %2928 = vmatprep.subr.mxu0 0.0
    %2929 = vmatpush2.msra.mxu0 0.0
    %2930 = vmatprep.subr.mxu0 0.0
    %2931 = vmatpush2.msra.mxu0 0.0
    %2932 = vmatprep.subr.mxu0 0.0
    %2933 = vmatpush2.msra.mxu0 0.0
    %2934 = vmatprep.subr.mxu0 0.0
    %2935 = vmatpush2.msra.mxu0 0.0
    %2936 = vmatprep.subr.mxu0 0.0
    %2937 = vmatpush2.msra.mxu0 0.0
    %2938 = vmatprep.subr.mxu0 0.0
    %2939 = vmatpush2.msra.mxu0 0.0
    %2940 = vmatprep.subr.mxu0 0.0
    %2941 = vmatpush2.msra.mxu0 0.0
    %2942 = vmatprep.subr.mxu0 0.0
    %2943 = vmatpush2.msra.mxu0 0.0
    %2944 = vmatprep.mubr.f32.mxu0 0.0
    %v2945 = vand.u32 %v2588, 4294901760
    %v2946 = vsub.f32 %v2588, %v2945
    %v2947 = vand.u32 %v2946, 4294901760
    %2948 = vmatmul.mubr.f32.gmra.mxu0 %v2947
    %v2949 = vpop.f32.mrf.mxu0
    %v2950 = vadd.f32 %v2869, %v2949
    %v2951 = vpop.f32.mrf.mxu0
    %2952 = vdwg.mxu0
    %2953 = vmatprep.subr.mxu0 0.0
    %2954 = vmatpush1.msra.mxu0 0.0
    %2955 = vmatprep.subr.mxu0 0.0
    %2956 = vmatpush1.msra.mxu0 0.0
    %2957 = vmatprep.subr.mxu0 0.0
    %2958 = vmatpush1.msra.mxu0 0.0
    %2959 = vmatprep.subr.mxu0 0.0
    %2960 = vmatpush1.msra.mxu0 0.0
    %2961 = vmatprep.subr.mxu0 0.0
    %2962 = vmatpush1.msra.mxu0 0.0
    %2963 = vmatprep.subr.mxu0 0.0
    %2964 = vmatpush1.msra.mxu0 0.0
    %2965 = vmatprep.subr.mxu0 0.0
    %2966 = vmatpush1.msra.mxu0 0.0
    %2967 = vmatprep.subr.mxu0 0.0
    %2968 = vmatpush1.msra.mxu0 0.0
    %2969 = vmatprep.subr.mxu0 0.0
    %v2970 = vand.u32 %v52, 4294901760
    %v2971 = vsub.f32 %v52, %v2970
    %v2972 = vand.u32 %v2971, 4294901760
    %2973 = vmatpush1.msra.mxu0 %v2972
    %2974 = vmatprep.subr.mxu0 0.0
    %v2975 = vand.u32 %v51, 4294901760
    %v2976 = vsub.f32 %v51, %v2975
    %v2977 = vand.u32 %v2976, 4294901760
    %2978 = vmatpush1.msra.mxu0 %v2977
    %2979 = vmatprep.subr.mxu0 0.0
    %v2980 = vand.u32 %v50, 4294901760
    %v2981 = vsub.f32 %v50, %v2980
    %v2982 = vand.u32 %v2981, 4294901760
    %2983 = vmatpush1.msra.mxu0 %v2982
    %2984 = vmatprep.subr.mxu0 0.0
    %v2985 = vand.u32 %v49, 4294901760
    %v2986 = vsub.f32 %v49, %v2985
    %v2987 = vand.u32 %v2986, 4294901760
    %2988 = vmatpush1.msra.mxu0 %v2987
    %2989 = vmatprep.subr.mxu0 0.0
    %v2990 = vand.u32 %v48, 4294901760
    %v2991 = vsub.f32 %v48, %v2990
    %v2992 = vand.u32 %v2991, 4294901760
    %2993 = vmatpush1.msra.mxu0 %v2992
    %2994 = vmatprep.subr.mxu0 0.0
    %v2995 = vand.u32 %v47, 4294901760
    %v2996 = vsub.f32 %v47, %v2995
    %v2997 = vand.u32 %v2996, 4294901760
    %2998 = vmatpush1.msra.mxu0 %v2997
    %2999 = vmatprep.subr.mxu0 0.0
    %v3000 = vand.u32 %v46, 4294901760
    %v3001 = vsub.f32 %v46, %v3000
    %v3002 = vand.u32 %v3001, 4294901760
    %3003 = vmatpush1.msra.mxu0 %v3002
    %3004 = vmatprep.subr.mxu0 0.0
    %v3005 = vand.u32 %v45, 4294901760
    %v3006 = vsub.f32 %v45, %v3005
    %v3007 = vand.u32 %v3006, 4294901760
    %3008 = vmatpush1.msra.mxu0 %v3007
    %3009 = vmatprep.subr.mxu0 0.0
    %3010 = vmatpush2.msra.mxu0 0.0
    %3011 = vmatprep.subr.mxu0 0.0
    %3012 = vmatpush2.msra.mxu0 0.0
    %3013 = vmatprep.subr.mxu0 0.0
    %3014 = vmatpush2.msra.mxu0 0.0
    %3015 = vmatprep.subr.mxu0 0.0
    %3016 = vmatpush2.msra.mxu0 0.0
    %3017 = vmatprep.subr.mxu0 0.0
    %3018 = vmatpush2.msra.mxu0 0.0
    %3019 = vmatprep.subr.mxu0 0.0
    %3020 = vmatpush2.msra.mxu0 0.0
    %3021 = vmatprep.subr.mxu0 0.0
    %3022 = vmatpush2.msra.mxu0 0.0
    %3023 = vmatprep.subr.mxu0 0.0
    %3024 = vmatpush2.msra.mxu0 0.0
    %3025 = vmatprep.subr.mxu0 0.0
    %3026 = vmatpush2.msra.mxu0 0.0
    %3027 = vmatprep.subr.mxu0 0.0
    %3028 = vmatpush2.msra.mxu0 0.0
    %3029 = vmatprep.subr.mxu0 0.0
    %3030 = vmatpush2.msra.mxu0 0.0
    %3031 = vmatprep.subr.mxu0 0.0
    %3032 = vmatpush2.msra.mxu0 0.0
    %3033 = vmatprep.subr.mxu0 0.0
    %3034 = vmatpush2.msra.mxu0 0.0
    %3035 = vmatprep.subr.mxu0 0.0
    %3036 = vmatpush2.msra.mxu0 0.0
    %3037 = vmatprep.subr.mxu0 0.0
    %3038 = vmatpush2.msra.mxu0 0.0
    %3039 = vmatprep.subr.mxu0 0.0
    %3040 = vmatpush2.msra.mxu0 0.0
    %3041 = vmatprep.mubr.f32.mxu0 0.0
    %v3042 = vand.u32 %v2588, 4294901760
    %3043 = vmatmul.mubr.f32.gmra.mxu0 %v3042
    %v3044 = vpop.f32.mrf.mxu0
    %v3045 = vadd.f32 %v2950, %v3044
    %v3046 = vpop.f32.mrf.mxu0
    %3047 = vdwg.mxu0
    %3048 = vmatprep.subr.mxu0 0.0
    %3049 = vmatpush1.msra.mxu0 0.0
    %3050 = vmatprep.subr.mxu0 0.0
    %3051 = vmatpush1.msra.mxu0 0.0
    %3052 = vmatprep.subr.mxu0 0.0
    %3053 = vmatpush1.msra.mxu0 0.0
    %3054 = vmatprep.subr.mxu0 0.0
    %3055 = vmatpush1.msra.mxu0 0.0
    %3056 = vmatprep.subr.mxu0 0.0
    %3057 = vmatpush1.msra.mxu0 0.0
    %3058 = vmatprep.subr.mxu0 0.0
    %3059 = vmatpush1.msra.mxu0 0.0
    %3060 = vmatprep.subr.mxu0 0.0
    %3061 = vmatpush1.msra.mxu0 0.0
    %3062 = vmatprep.subr.mxu0 0.0
    %3063 = vmatpush1.msra.mxu0 0.0
    %3064 = vmatprep.subr.mxu0 0.0
    %v3065 = vand.u32 %v52, 4294901760
    %3066 = vmatpush1.msra.mxu0 %v3065
    %3067 = vmatprep.subr.mxu0 0.0
    %v3068 = vand.u32 %v51, 4294901760
    %3069 = vmatpush1.msra.mxu0 %v3068
    %3070 = vmatprep.subr.mxu0 0.0
    %v3071 = vand.u32 %v50, 4294901760
    %3072 = vmatpush1.msra.mxu0 %v3071
    %3073 = vmatprep.subr.mxu0 0.0
    %v3074 = vand.u32 %v49, 4294901760
    %3075 = vmatpush1.msra.mxu0 %v3074
    %3076 = vmatprep.subr.mxu0 0.0
    %v3077 = vand.u32 %v48, 4294901760
    %3078 = vmatpush1.msra.mxu0 %v3077
    %3079 = vmatprep.subr.mxu0 0.0
    %v3080 = vand.u32 %v47, 4294901760
    %3081 = vmatpush1.msra.mxu0 %v3080
    %3082 = vmatprep.subr.mxu0 0.0
    %v3083 = vand.u32 %v46, 4294901760
    %3084 = vmatpush1.msra.mxu0 %v3083
    %3085 = vmatprep.subr.mxu0 0.0
    %v3086 = vand.u32 %v45, 4294901760
    %3087 = vmatpush1.msra.mxu0 %v3086
    %3088 = vmatprep.subr.mxu0 0.0
    %3089 = vmatpush2.msra.mxu0 0.0
    %3090 = vmatprep.subr.mxu0 0.0
    %3091 = vmatpush2.msra.mxu0 0.0
    %3092 = vmatprep.subr.mxu0 0.0
    %3093 = vmatpush2.msra.mxu0 0.0
    %3094 = vmatprep.subr.mxu0 0.0
    %3095 = vmatpush2.msra.mxu0 0.0
    %3096 = vmatprep.subr.mxu0 0.0
    %3097 = vmatpush2.msra.mxu0 0.0
    %3098 = vmatprep.subr.mxu0 0.0
    %3099 = vmatpush2.msra.mxu0 0.0
    %3100 = vmatprep.subr.mxu0 0.0
    %3101 = vmatpush2.msra.mxu0 0.0
    %3102 = vmatprep.subr.mxu0 0.0
    %3103 = vmatpush2.msra.mxu0 0.0
    %3104 = vmatprep.subr.mxu0 0.0
    %3105 = vmatpush2.msra.mxu0 0.0
    %3106 = vmatprep.subr.mxu0 0.0
    %3107 = vmatpush2.msra.mxu0 0.0
    %3108 = vmatprep.subr.mxu0 0.0
    %3109 = vmatpush2.msra.mxu0 0.0
    %3110 = vmatprep.subr.mxu0 0.0
    %3111 = vmatpush2.msra.mxu0 0.0
    %3112 = vmatprep.subr.mxu0 0.0
    %3113 = vmatpush2.msra.mxu0 0.0
    %3114 = vmatprep.subr.mxu0 0.0
    %3115 = vmatpush2.msra.mxu0 0.0
    %3116 = vmatprep.subr.mxu0 0.0
    %3117 = vmatpush2.msra.mxu0 0.0
    %3118 = vmatprep.subr.mxu0 0.0
    %3119 = vmatpush2.msra.mxu0 0.0
    %3120 = vmatprep.mubr.f32.mxu0 0.0
    %v3121 = vand.u32 %v2588, 4294901760
    %3122 = vmatmul.mubr.f32.gmra.mxu0 %v3121
    %v3123 = vpop.f32.mrf.mxu0
    %v3124 = vadd.f32 %v3045, %v3123
    %v3125 = vpop.f32.mrf.mxu0
    %3126 = vdwg.mxu0
    %v3127 = vtanh.pop %v3124
    %v3129 = vrot.slane %v2579, 2
    %v3130 = vsel %vm64, %v3129, 0
    %3132 = vmatprep.subr.mxu0 0.0
    %3133 = vmatpush1.msra.mxu0 0.0
    %3134 = vmatprep.subr.mxu0 0.0
    %3135 = vmatpush1.msra.mxu0 0.0
    %3136 = vmatprep.subr.mxu0 0.0
    %3137 = vmatpush1.msra.mxu0 0.0
    %3138 = vmatprep.subr.mxu0 0.0
    %3139 = vmatpush1.msra.mxu0 0.0
    %3140 = vmatprep.subr.mxu0 0.0
    %3141 = vmatpush1.msra.mxu0 0.0
    %3142 = vmatprep.subr.mxu0 0.0
    %3143 = vmatpush1.msra.mxu0 0.0
    %3144 = vmatprep.subr.mxu0 0.0
    %3145 = vmatpush1.msra.mxu0 0.0
    %3146 = vmatprep.subr.mxu0 0.0
    %3147 = vmatpush1.msra.mxu0 0.0
    %3148 = vmatprep.subr.mxu0 0.0
    %3149 = vmatpush1.msra.mxu0 0.0
    %3150 = vmatprep.subr.mxu0 0.0
    %3151 = vmatpush1.msra.mxu0 0.0
    %3152 = vmatprep.subr.mxu0 0.0
    %3153 = vmatpush1.msra.mxu0 0.0
    %3154 = vmatprep.subr.mxu0 0.0
    %3155 = vmatpush1.msra.mxu0 0.0
    %3156 = vmatprep.subr.mxu0 0.0
    %v3157 = vand.u32 %v43, 4294901760
    %3158 = vmatpush1.msra.mxu0 %v3157
    %3159 = vmatprep.subr.mxu0 0.0
    %v3160 = vand.u32 %v42, 4294901760
    %3161 = vmatpush1.msra.mxu0 %v3160
    %3162 = vmatprep.subr.mxu0 0.0
    %v3163 = vand.u32 %v41, 4294901760
    %3164 = vmatpush1.msra.mxu0 %v3163
    %3165 = vmatprep.subr.mxu0 0.0
    %v3166 = vand.u32 %v40, 4294901760
    %3167 = vmatpush1.msra.mxu0 %v3166
    %3168 = vmatprep.subr.mxu0 0.0
    %3169 = vmatpush2.msra.mxu0 0.0
    %3170 = vmatprep.subr.mxu0 0.0
    %3171 = vmatpush2.msra.mxu0 0.0
    %3172 = vmatprep.subr.mxu0 0.0
    %3173 = vmatpush2.msra.mxu0 0.0
    %3174 = vmatprep.subr.mxu0 0.0
    %3175 = vmatpush2.msra.mxu0 0.0
    %3176 = vmatprep.subr.mxu0 0.0
    %3177 = vmatpush2.msra.mxu0 0.0
    %3178 = vmatprep.subr.mxu0 0.0
    %3179 = vmatpush2.msra.mxu0 0.0
    %3180 = vmatprep.subr.mxu0 0.0
    %3181 = vmatpush2.msra.mxu0 0.0
    %3182 = vmatprep.subr.mxu0 0.0
    %3183 = vmatpush2.msra.mxu0 0.0
    %3184 = vmatprep.subr.mxu0 0.0
    %3185 = vmatpush2.msra.mxu0 0.0
    %3186 = vmatprep.subr.mxu0 0.0
    %3187 = vmatpush2.msra.mxu0 0.0
    %3188 = vmatprep.subr.mxu0 0.0
    %3189 = vmatpush2.msra.mxu0 0.0
    %3190 = vmatprep.subr.mxu0 0.0
    %3191 = vmatpush2.msra.mxu0 0.0
    %3192 = vmatprep.subr.mxu0 0.0
    %3193 = vmatpush2.msra.mxu0 0.0
    %3194 = vmatprep.subr.mxu0 0.0
    %3195 = vmatpush2.msra.mxu0 0.0
    %3196 = vmatprep.subr.mxu0 0.0
    %3197 = vmatpush2.msra.mxu0 0.0
    %3198 = vmatprep.subr.mxu0 0.0
    %3199 = vmatpush2.msra.mxu0 0.0
    %3200 = vmatprep.mubr.f32.mxu0 0.0
    %v3201 = vand.u32 %v3130, 4294901760
    %v3202 = vsub.f32 %v3130, %v3201
    %v3203 = vand.u32 %v3202, 4294901760
    %v3204 = vsub.f32 %v3202, %v3203
    %v3205 = vand.u32 %v3204, 4294901760
    %3206 = vmatmul.mubr.f32.gmra.mxu0 %v3205
    %v3207 = vpop.f32.mrf.mxu0
    %v3208 = vadd.f32 0.0, %v3207
    %v3209 = vpop.f32.mrf.mxu0
    %3210 = vdwg.mxu0
    %3211 = vmatprep.subr.mxu0 0.0
    %3212 = vmatpush1.msra.mxu0 0.0
    %3213 = vmatprep.subr.mxu0 0.0
    %3214 = vmatpush1.msra.mxu0 0.0
    %3215 = vmatprep.subr.mxu0 0.0
    %3216 = vmatpush1.msra.mxu0 0.0
    %3217 = vmatprep.subr.mxu0 0.0
    %3218 = vmatpush1.msra.mxu0 0.0
    %3219 = vmatprep.subr.mxu0 0.0
    %3220 = vmatpush1.msra.mxu0 0.0
    %3221 = vmatprep.subr.mxu0 0.0
    %3222 = vmatpush1.msra.mxu0 0.0
    %3223 = vmatprep.subr.mxu0 0.0
    %3224 = vmatpush1.msra.mxu0 0.0
    %3225 = vmatprep.subr.mxu0 0.0
    %3226 = vmatpush1.msra.mxu0 0.0
    %3227 = vmatprep.subr.mxu0 0.0
    %3228 = vmatpush1.msra.mxu0 0.0
    %3229 = vmatprep.subr.mxu0 0.0
    %3230 = vmatpush1.msra.mxu0 0.0
    %3231 = vmatprep.subr.mxu0 0.0
    %3232 = vmatpush1.msra.mxu0 0.0
    %3233 = vmatprep.subr.mxu0 0.0
    %3234 = vmatpush1.msra.mxu0 0.0
    %3235 = vmatprep.subr.mxu0 0.0
    %v3236 = vand.u32 %v43, 4294901760
    %v3237 = vsub.f32 %v43, %v3236
    %v3238 = vand.u32 %v3237, 4294901760
    %v3239 = vsub.f32 %v3237, %v3238
    %v3240 = vand.u32 %v3239, 4294901760
    %3241 = vmatpush1.msra.mxu0 %v3240
    %3242 = vmatprep.subr.mxu0 0.0
    %v3243 = vand.u32 %v42, 4294901760
    %v3244 = vsub.f32 %v42, %v3243
    %v3245 = vand.u32 %v3244, 4294901760
    %v3246 = vsub.f32 %v3244, %v3245
    %v3247 = vand.u32 %v3246, 4294901760
    %3248 = vmatpush1.msra.mxu0 %v3247
    %3249 = vmatprep.subr.mxu0 0.0
    %v3250 = vand.u32 %v41, 4294901760
    %v3251 = vsub.f32 %v41, %v3250
    %v3252 = vand.u32 %v3251, 4294901760
    %v3253 = vsub.f32 %v3251, %v3252
    %v3254 = vand.u32 %v3253, 4294901760
    %3255 = vmatpush1.msra.mxu0 %v3254
    %3256 = vmatprep.subr.mxu0 0.0
    %v3257 = vand.u32 %v40, 4294901760
    %v3258 = vsub.f32 %v40, %v3257
    %v3259 = vand.u32 %v3258, 4294901760
    %v3260 = vsub.f32 %v3258, %v3259
    %v3261 = vand.u32 %v3260, 4294901760
    %3262 = vmatpush1.msra.mxu0 %v3261
    %3263 = vmatprep.subr.mxu0 0.0
    %3264 = vmatpush2.msra.mxu0 0.0
    %3265 = vmatprep.subr.mxu0 0.0
    %3266 = vmatpush2.msra.mxu0 0.0
    %3267 = vmatprep.subr.mxu0 0.0
    %3268 = vmatpush2.msra.mxu0 0.0
    %3269 = vmatprep.subr.mxu0 0.0
    %3270 = vmatpush2.msra.mxu0 0.0
    %3271 = vmatprep.subr.mxu0 0.0
    %3272 = vmatpush2.msra.mxu0 0.0
    %3273 = vmatprep.subr.mxu0 0.0
    %3274 = vmatpush2.msra.mxu0 0.0
    %3275 = vmatprep.subr.mxu0 0.0
    %3276 = vmatpush2.msra.mxu0 0.0
    %3277 = vmatprep.subr.mxu0 0.0
    %3278 = vmatpush2.msra.mxu0 0.0
    %3279 = vmatprep.subr.mxu0 0.0
    %3280 = vmatpush2.msra.mxu0 0.0
    %3281 = vmatprep.subr.mxu0 0.0
    %3282 = vmatpush2.msra.mxu0 0.0
    %3283 = vmatprep.subr.mxu0 0.0
    %3284 = vmatpush2.msra.mxu0 0.0
    %3285 = vmatprep.subr.mxu0 0.0
    %3286 = vmatpush2.msra.mxu0 0.0
    %3287 = vmatprep.subr.mxu0 0.0
    %3288 = vmatpush2.msra.mxu0 0.0
    %3289 = vmatprep.subr.mxu0 0.0
    %3290 = vmatpush2.msra.mxu0 0.0
    %3291 = vmatprep.subr.mxu0 0.0
    %3292 = vmatpush2.msra.mxu0 0.0
    %3293 = vmatprep.subr.mxu0 0.0
    %3294 = vmatpush2.msra.mxu0 0.0
    %3295 = vmatprep.mubr.f32.mxu0 0.0
    %v3296 = vand.u32 %v3130, 4294901760
    %3297 = vmatmul.mubr.f32.gmra.mxu0 %v3296
    %v3298 = vpop.f32.mrf.mxu0
    %v3299 = vadd.f32 %v3208, %v3298
    %v3300 = vpop.f32.mrf.mxu0
    %3301 = vdwg.mxu0
    %3302 = vmatprep.subr.mxu0 0.0
    %3303 = vmatpush1.msra.mxu0 0.0
    %3304 = vmatprep.subr.mxu0 0.0
    %3305 = vmatpush1.msra.mxu0 0.0
    %3306 = vmatprep.subr.mxu0 0.0
    %3307 = vmatpush1.msra.mxu0 0.0
    %3308 = vmatprep.subr.mxu0 0.0
    %3309 = vmatpush1.msra.mxu0 0.0
    %3310 = vmatprep.subr.mxu0 0.0
    %3311 = vmatpush1.msra.mxu0 0.0
    %3312 = vmatprep.subr.mxu0 0.0
    %3313 = vmatpush1.msra.mxu0 0.0
    %3314 = vmatprep.subr.mxu0 0.0
    %3315 = vmatpush1.msra.mxu0 0.0
    %3316 = vmatprep.subr.mxu0 0.0
    %3317 = vmatpush1.msra.mxu0 0.0
    %3318 = vmatprep.subr.mxu0 0.0
    %3319 = vmatpush1.msra.mxu0 0.0
    %3320 = vmatprep.subr.mxu0 0.0
    %3321 = vmatpush1.msra.mxu0 0.0
    %3322 = vmatprep.subr.mxu0 0.0
    %3323 = vmatpush1.msra.mxu0 0.0
    %3324 = vmatprep.subr.mxu0 0.0
    %3325 = vmatpush1.msra.mxu0 0.0
    %3326 = vmatprep.subr.mxu0 0.0
    %v3327 = vand.u32 %v43, 4294901760
    %v3328 = vsub.f32 %v43, %v3327
    %3329 = vmatpush1.msra.mxu0 %v3328
    %3330 = vmatprep.subr.mxu0 0.0
    %v3331 = vand.u32 %v42, 4294901760
    %v3332 = vsub.f32 %v42, %v3331
    %3333 = vmatpush1.msra.mxu0 %v3332
    %3334 = vmatprep.subr.mxu0 0.0
    %v3335 = vand.u32 %v41, 4294901760
    %v3336 = vsub.f32 %v41, %v3335
    %3337 = vmatpush1.msra.mxu0 %v3336
    %3338 = vmatprep.subr.mxu0 0.0
    %v3339 = vand.u32 %v40, 4294901760
    %v3340 = vsub.f32 %v40, %v3339
    %3341 = vmatpush1.msra.mxu0 %v3340
    %3342 = vmatprep.subr.mxu0 0.0
    %3343 = vmatpush2.msra.mxu0 0.0
    %3344 = vmatprep.subr.mxu0 0.0
    %3345 = vmatpush2.msra.mxu0 0.0
    %3346 = vmatprep.subr.mxu0 0.0
    %3347 = vmatpush2.msra.mxu0 0.0
    %3348 = vmatprep.subr.mxu0 0.0
    %3349 = vmatpush2.msra.mxu0 0.0
    %3350 = vmatprep.subr.mxu0 0.0
    %3351 = vmatpush2.msra.mxu0 0.0
    %3352 = vmatprep.subr.mxu0 0.0
    %3353 = vmatpush2.msra.mxu0 0.0
    %3354 = vmatprep.subr.mxu0 0.0
    %3355 = vmatpush2.msra.mxu0 0.0
    %3356 = vmatprep.subr.mxu0 0.0
    %3357 = vmatpush2.msra.mxu0 0.0
    %3358 = vmatprep.subr.mxu0 0.0
    %3359 = vmatpush2.msra.mxu0 0.0
    %3360 = vmatprep.subr.mxu0 0.0
    %3361 = vmatpush2.msra.mxu0 0.0
    %3362 = vmatprep.subr.mxu0 0.0
    %3363 = vmatpush2.msra.mxu0 0.0
    %3364 = vmatprep.subr.mxu0 0.0
    %3365 = vmatpush2.msra.mxu0 0.0
    %3366 = vmatprep.subr.mxu0 0.0
    %3367 = vmatpush2.msra.mxu0 0.0
    %3368 = vmatprep.subr.mxu0 0.0
    %3369 = vmatpush2.msra.mxu0 0.0
    %3370 = vmatprep.subr.mxu0 0.0
    %3371 = vmatpush2.msra.mxu0 0.0
    %3372 = vmatprep.subr.mxu0 0.0
    %3373 = vmatpush2.msra.mxu0 0.0
    %3374 = vmatprep.mubr.f32.mxu0 0.0
    %v3375 = vand.u32 %v3130, 4294901760
    %v3376 = vsub.f32 %v3130, %v3375
    %3377 = vmatmul.mubr.f32.gmra.mxu0 %v3376
    %v3378 = vpop.f32.mrf.mxu0
    %v3379 = vadd.f32 %v3299, %v3378
    %v3380 = vpop.f32.mrf.mxu0
    %3381 = vdwg.mxu0
    %3382 = vmatprep.subr.mxu0 0.0
    %3383 = vmatpush1.msra.mxu0 0.0
    %3384 = vmatprep.subr.mxu0 0.0
    %3385 = vmatpush1.msra.mxu0 0.0
    %3386 = vmatprep.subr.mxu0 0.0
    %3387 = vmatpush1.msra.mxu0 0.0
    %3388 = vmatprep.subr.mxu0 0.0
    %3389 = vmatpush1.msra.mxu0 0.0
    %3390 = vmatprep.subr.mxu0 0.0
    %3391 = vmatpush1.msra.mxu0 0.0
    %3392 = vmatprep.subr.mxu0 0.0
    %3393 = vmatpush1.msra.mxu0 0.0
    %3394 = vmatprep.subr.mxu0 0.0
    %3395 = vmatpush1.msra.mxu0 0.0
    %3396 = vmatprep.subr.mxu0 0.0
    %3397 = vmatpush1.msra.mxu0 0.0
    %3398 = vmatprep.subr.mxu0 0.0
    %3399 = vmatpush1.msra.mxu0 0.0
    %3400 = vmatprep.subr.mxu0 0.0
    %3401 = vmatpush1.msra.mxu0 0.0
    %3402 = vmatprep.subr.mxu0 0.0
    %3403 = vmatpush1.msra.mxu0 0.0
    %3404 = vmatprep.subr.mxu0 0.0
    %3405 = vmatpush1.msra.mxu0 0.0
    %3406 = vmatprep.subr.mxu0 0.0
    %v3407 = vand.u32 %v43, 4294901760
    %3408 = vmatpush1.msra.mxu0 %v3407
    %3409 = vmatprep.subr.mxu0 0.0
    %v3410 = vand.u32 %v42, 4294901760
    %3411 = vmatpush1.msra.mxu0 %v3410
    %3412 = vmatprep.subr.mxu0 0.0
    %v3413 = vand.u32 %v41, 4294901760
    %3414 = vmatpush1.msra.mxu0 %v3413
    %3415 = vmatprep.subr.mxu0 0.0
    %v3416 = vand.u32 %v40, 4294901760
    %3417 = vmatpush1.msra.mxu0 %v3416
    %3418 = vmatprep.subr.mxu0 0.0
    %3419 = vmatpush2.msra.mxu0 0.0
    %3420 = vmatprep.subr.mxu0 0.0
    %3421 = vmatpush2.msra.mxu0 0.0
    %3422 = vmatprep.subr.mxu0 0.0
    %3423 = vmatpush2.msra.mxu0 0.0
    %3424 = vmatprep.subr.mxu0 0.0
    %3425 = vmatpush2.msra.mxu0 0.0
    %3426 = vmatprep.subr.mxu0 0.0
    %3427 = vmatpush2.msra.mxu0 0.0
    %3428 = vmatprep.subr.mxu0 0.0
    %3429 = vmatpush2.msra.mxu0 0.0
    %3430 = vmatprep.subr.mxu0 0.0
    %3431 = vmatpush2.msra.mxu0 0.0
    %3432 = vmatprep.subr.mxu0 0.0
    %3433 = vmatpush2.msra.mxu0 0.0
    %3434 = vmatprep.subr.mxu0 0.0
    %3435 = vmatpush2.msra.mxu0 0.0
    %3436 = vmatprep.subr.mxu0 0.0
    %3437 = vmatpush2.msra.mxu0 0.0
    %3438 = vmatprep.subr.mxu0 0.0
    %3439 = vmatpush2.msra.mxu0 0.0
    %3440 = vmatprep.subr.mxu0 0.0
    %3441 = vmatpush2.msra.mxu0 0.0
    %3442 = vmatprep.subr.mxu0 0.0
    %3443 = vmatpush2.msra.mxu0 0.0
    %3444 = vmatprep.subr.mxu0 0.0
    %3445 = vmatpush2.msra.mxu0 0.0
    %3446 = vmatprep.subr.mxu0 0.0
    %3447 = vmatpush2.msra.mxu0 0.0
    %3448 = vmatprep.subr.mxu0 0.0
    %3449 = vmatpush2.msra.mxu0 0.0
    %3450 = vmatprep.mubr.f32.mxu0 0.0
    %v3451 = vand.u32 %v3130, 4294901760
    %v3452 = vsub.f32 %v3130, %v3451
    %v3453 = vand.u32 %v3452, 4294901760
    %3454 = vmatmul.mubr.f32.gmra.mxu0 %v3453
    %v3455 = vpop.f32.mrf.mxu0
    %v3456 = vadd.f32 %v3379, %v3455
    %v3457 = vpop.f32.mrf.mxu0
    %3458 = vdwg.mxu0
    %3459 = vmatprep.subr.mxu0 0.0
    %3460 = vmatpush1.msra.mxu0 0.0
    %3461 = vmatprep.subr.mxu0 0.0
    %3462 = vmatpush1.msra.mxu0 0.0
    %3463 = vmatprep.subr.mxu0 0.0
    %3464 = vmatpush1.msra.mxu0 0.0
    %3465 = vmatprep.subr.mxu0 0.0
    %3466 = vmatpush1.msra.mxu0 0.0
    %3467 = vmatprep.subr.mxu0 0.0
    %3468 = vmatpush1.msra.mxu0 0.0
    %3469 = vmatprep.subr.mxu0 0.0
    %3470 = vmatpush1.msra.mxu0 0.0
    %3471 = vmatprep.subr.mxu0 0.0
    %3472 = vmatpush1.msra.mxu0 0.0
    %3473 = vmatprep.subr.mxu0 0.0
    %3474 = vmatpush1.msra.mxu0 0.0
    %3475 = vmatprep.subr.mxu0 0.0
    %3476 = vmatpush1.msra.mxu0 0.0
    %3477 = vmatprep.subr.mxu0 0.0
    %3478 = vmatpush1.msra.mxu0 0.0
    %3479 = vmatprep.subr.mxu0 0.0
    %3480 = vmatpush1.msra.mxu0 0.0
    %3481 = vmatprep.subr.mxu0 0.0
    %3482 = vmatpush1.msra.mxu0 0.0
    %3483 = vmatprep.subr.mxu0 0.0
    %v3484 = vand.u32 %v43, 4294901760
    %v3485 = vsub.f32 %v43, %v3484
    %v3486 = vand.u32 %v3485, 4294901760
    %3487 = vmatpush1.msra.mxu0 %v3486
    %3488 = vmatprep.subr.mxu0 0.0
    %v3489 = vand.u32 %v42, 4294901760
    %v3490 = vsub.f32 %v42, %v3489
    %v3491 = vand.u32 %v3490, 4294901760
    %3492 = vmatpush1.msra.mxu0 %v3491
    %3493 = vmatprep.subr.mxu0 0.0
    %v3494 = vand.u32 %v41, 4294901760
    %v3495 = vsub.f32 %v41, %v3494
    %v3496 = vand.u32 %v3495, 4294901760
    %3497 = vmatpush1.msra.mxu0 %v3496
    %3498 = vmatprep.subr.mxu0 0.0
    %v3499 = vand.u32 %v40, 4294901760
    %v3500 = vsub.f32 %v40, %v3499
    %v3501 = vand.u32 %v3500, 4294901760
    %3502 = vmatpush1.msra.mxu0 %v3501
    %3503 = vmatprep.subr.mxu0 0.0
    %3504 = vmatpush2.msra.mxu0 0.0
    %3505 = vmatprep.subr.mxu0 0.0
    %3506 = vmatpush2.msra.mxu0 0.0
    %3507 = vmatprep.subr.mxu0 0.0
    %3508 = vmatpush2.msra.mxu0 0.0
    %3509 = vmatprep.subr.mxu0 0.0
    %3510 = vmatpush2.msra.mxu0 0.0
    %3511 = vmatprep.subr.mxu0 0.0
    %3512 = vmatpush2.msra.mxu0 0.0
    %3513 = vmatprep.subr.mxu0 0.0
    %3514 = vmatpush2.msra.mxu0 0.0
    %3515 = vmatprep.subr.mxu0 0.0
    %3516 = vmatpush2.msra.mxu0 0.0
    %3517 = vmatprep.subr.mxu0 0.0
    %3518 = vmatpush2.msra.mxu0 0.0
    %3519 = vmatprep.subr.mxu0 0.0
    %3520 = vmatpush2.msra.mxu0 0.0
    %3521 = vmatprep.subr.mxu0 0.0
    %3522 = vmatpush2.msra.mxu0 0.0
    %3523 = vmatprep.subr.mxu0 0.0
    %3524 = vmatpush2.msra.mxu0 0.0
    %3525 = vmatprep.subr.mxu0 0.0
    %3526 = vmatpush2.msra.mxu0 0.0
    %3527 = vmatprep.subr.mxu0 0.0
    %3528 = vmatpush2.msra.mxu0 0.0
    %3529 = vmatprep.subr.mxu0 0.0
    %3530 = vmatpush2.msra.mxu0 0.0
    %3531 = vmatprep.subr.mxu0 0.0
    %3532 = vmatpush2.msra.mxu0 0.0
    %3533 = vmatprep.subr.mxu0 0.0
    %3534 = vmatpush2.msra.mxu0 0.0
    %3535 = vmatprep.mubr.f32.mxu0 0.0
    %v3536 = vand.u32 %v3130, 4294901760
    %3537 = vmatmul.mubr.f32.gmra.mxu0 %v3536
    %v3538 = vpop.f32.mrf.mxu0
    %v3539 = vadd.f32 %v3456, %v3538
    %v3540 = vpop.f32.mrf.mxu0
    %3541 = vdwg.mxu0
    %3542 = vmatprep.subr.mxu0 0.0
    %3543 = vmatpush1.msra.mxu0 0.0
    %3544 = vmatprep.subr.mxu0 0.0
    %3545 = vmatpush1.msra.mxu0 0.0
    %3546 = vmatprep.subr.mxu0 0.0
    %3547 = vmatpush1.msra.mxu0 0.0
    %3548 = vmatprep.subr.mxu0 0.0
    %3549 = vmatpush1.msra.mxu0 0.0
    %3550 = vmatprep.subr.mxu0 0.0
    %3551 = vmatpush1.msra.mxu0 0.0
    %3552 = vmatprep.subr.mxu0 0.0
    %3553 = vmatpush1.msra.mxu0 0.0
    %3554 = vmatprep.subr.mxu0 0.0
    %3555 = vmatpush1.msra.mxu0 0.0
    %3556 = vmatprep.subr.mxu0 0.0
    %3557 = vmatpush1.msra.mxu0 0.0
    %3558 = vmatprep.subr.mxu0 0.0
    %3559 = vmatpush1.msra.mxu0 0.0
    %3560 = vmatprep.subr.mxu0 0.0
    %3561 = vmatpush1.msra.mxu0 0.0
    %3562 = vmatprep.subr.mxu0 0.0
    %3563 = vmatpush1.msra.mxu0 0.0
    %3564 = vmatprep.subr.mxu0 0.0
    %3565 = vmatpush1.msra.mxu0 0.0
    %3566 = vmatprep.subr.mxu0 0.0
    %v3567 = vand.u32 %v43, 4294901760
    %3568 = vmatpush1.msra.mxu0 %v3567
    %3569 = vmatprep.subr.mxu0 0.0
    %v3570 = vand.u32 %v42, 4294901760
    %3571 = vmatpush1.msra.mxu0 %v3570
    %3572 = vmatprep.subr.mxu0 0.0
    %v3573 = vand.u32 %v41, 4294901760
    %3574 = vmatpush1.msra.mxu0 %v3573
    %3575 = vmatprep.subr.mxu0 0.0
    %v3576 = vand.u32 %v40, 4294901760
    %3577 = vmatpush1.msra.mxu0 %v3576
    %3578 = vmatprep.subr.mxu0 0.0
    %3579 = vmatpush2.msra.mxu0 0.0
    %3580 = vmatprep.subr.mxu0 0.0
    %3581 = vmatpush2.msra.mxu0 0.0
    %3582 = vmatprep.subr.mxu0 0.0
    %3583 = vmatpush2.msra.mxu0 0.0
    %3584 = vmatprep.subr.mxu0 0.0
    %3585 = vmatpush2.msra.mxu0 0.0
    %3586 = vmatprep.subr.mxu0 0.0
    %3587 = vmatpush2.msra.mxu0 0.0
    %3588 = vmatprep.subr.mxu0 0.0
    %3589 = vmatpush2.msra.mxu0 0.0
    %3590 = vmatprep.subr.mxu0 0.0
    %3591 = vmatpush2.msra.mxu0 0.0
    %3592 = vmatprep.subr.mxu0 0.0
    %3593 = vmatpush2.msra.mxu0 0.0
    %3594 = vmatprep.subr.mxu0 0.0
    %3595 = vmatpush2.msra.mxu0 0.0
    %3596 = vmatprep.subr.mxu0 0.0
    %3597 = vmatpush2.msra.mxu0 0.0
    %3598 = vmatprep.subr.mxu0 0.0
    %3599 = vmatpush2.msra.mxu0 0.0
    %3600 = vmatprep.subr.mxu0 0.0
    %3601 = vmatpush2.msra.mxu0 0.0
    %3602 = vmatprep.subr.mxu0 0.0
    %3603 = vmatpush2.msra.mxu0 0.0
    %3604 = vmatprep.subr.mxu0 0.0
    %3605 = vmatpush2.msra.mxu0 0.0
    %3606 = vmatprep.subr.mxu0 0.0
    %3607 = vmatpush2.msra.mxu0 0.0
    %3608 = vmatprep.subr.mxu0 0.0
    %3609 = vmatpush2.msra.mxu0 0.0
    %3610 = vmatprep.mubr.f32.mxu0 0.0
    %v3611 = vand.u32 %v3130, 4294901760
    %3612 = vmatmul.mubr.f32.gmra.mxu0 %v3611
    %v3613 = vpop.f32.mrf.mxu0
    %v3614 = vadd.f32 %v3539, %v3613
    %v3615 = vpop.f32.mrf.mxu0
    %3616 = vdwg.mxu0
    %v3618 = vrot.slane %v3614, 5
    %v3620 = vadd.f32 %v550, %v3618
    %v3621 = vtanh.pop %v3620
    %v3623 = vrot.slane %v3127, 6
    %3624 = vrot.lane.b32.xlu0 %v3623, 32
    %v3625 = vpop.permute.xlu0 %3624
    %v3627 = vsel %vm64, %v2579, %v3625
    %v3629 = vrot.slane %v3627, 2
    %v3630 = vsel %vm1544, %v3629, 0
    %3632 = vmatprep.subr.mxu0 0.0
    %3633 = vmatpush1.msra.mxu0 0.0
    %3634 = vmatprep.subr.mxu0 0.0
    %3635 = vmatpush1.msra.mxu0 0.0
    %3636 = vmatprep.subr.mxu0 0.0
    %3637 = vmatpush1.msra.mxu0 0.0
    %3638 = vmatprep.subr.mxu0 0.0
    %3639 = vmatpush1.msra.mxu0 0.0
    %3640 = vmatprep.subr.mxu0 0.0
    %3641 = vmatpush1.msra.mxu0 0.0
    %3642 = vmatprep.subr.mxu0 0.0
    %3643 = vmatpush1.msra.mxu0 0.0
    %3644 = vmatprep.subr.mxu0 0.0
    %3645 = vmatpush1.msra.mxu0 0.0
    %3646 = vmatprep.subr.mxu0 0.0
    %3647 = vmatpush1.msra.mxu0 0.0
    %3648 = vmatprep.subr.mxu0 0.0
    %v3649 = vand.u32 %v52, 4294901760
    %3650 = vmatpush1.msra.mxu0 %v3649
    %3651 = vmatprep.subr.mxu0 0.0
    %v3652 = vand.u32 %v51, 4294901760
    %3653 = vmatpush1.msra.mxu0 %v3652
    %3654 = vmatprep.subr.mxu0 0.0
    %v3655 = vand.u32 %v50, 4294901760
    %3656 = vmatpush1.msra.mxu0 %v3655
    %3657 = vmatprep.subr.mxu0 0.0
    %v3658 = vand.u32 %v49, 4294901760
    %3659 = vmatpush1.msra.mxu0 %v3658
    %3660 = vmatprep.subr.mxu0 0.0
    %v3661 = vand.u32 %v48, 4294901760
    %3662 = vmatpush1.msra.mxu0 %v3661
    %3663 = vmatprep.subr.mxu0 0.0
    %v3664 = vand.u32 %v47, 4294901760
    %3665 = vmatpush1.msra.mxu0 %v3664
    %3666 = vmatprep.subr.mxu0 0.0
    %v3667 = vand.u32 %v46, 4294901760
    %3668 = vmatpush1.msra.mxu0 %v3667
    %3669 = vmatprep.subr.mxu0 0.0
    %v3670 = vand.u32 %v45, 4294901760
    %3671 = vmatpush1.msra.mxu0 %v3670
    %3672 = vmatprep.subr.mxu0 0.0
    %3673 = vmatpush2.msra.mxu0 0.0
    %3674 = vmatprep.subr.mxu0 0.0
    %3675 = vmatpush2.msra.mxu0 0.0
    %3676 = vmatprep.subr.mxu0 0.0
    %3677 = vmatpush2.msra.mxu0 0.0
    %3678 = vmatprep.subr.mxu0 0.0
    %3679 = vmatpush2.msra.mxu0 0.0
    %3680 = vmatprep.subr.mxu0 0.0
    %3681 = vmatpush2.msra.mxu0 0.0
    %3682 = vmatprep.subr.mxu0 0.0
    %3683 = vmatpush2.msra.mxu0 0.0
    %3684 = vmatprep.subr.mxu0 0.0
    %3685 = vmatpush2.msra.mxu0 0.0
    %3686 = vmatprep.subr.mxu0 0.0
    %3687 = vmatpush2.msra.mxu0 0.0
    %3688 = vmatprep.subr.mxu0 0.0
    %3689 = vmatpush2.msra.mxu0 0.0
    %3690 = vmatprep.subr.mxu0 0.0
    %3691 = vmatpush2.msra.mxu0 0.0
    %3692 = vmatprep.subr.mxu0 0.0
    %3693 = vmatpush2.msra.mxu0 0.0
    %3694 = vmatprep.subr.mxu0 0.0
    %3695 = vmatpush2.msra.mxu0 0.0
    %3696 = vmatprep.subr.mxu0 0.0
    %3697 = vmatpush2.msra.mxu0 0.0
    %3698 = vmatprep.subr.mxu0 0.0
    %3699 = vmatpush2.msra.mxu0 0.0
    %3700 = vmatprep.subr.mxu0 0.0
    %3701 = vmatpush2.msra.mxu0 0.0
    %3702 = vmatprep.subr.mxu0 0.0
    %3703 = vmatpush2.msra.mxu0 0.0
    %3704 = vmatprep.mubr.f32.mxu0 0.0
    %v3705 = vand.u32 %v3630, 4294901760
    %v3706 = vsub.f32 %v3630, %v3705
    %v3707 = vand.u32 %v3706, 4294901760
    %v3708 = vsub.f32 %v3706, %v3707
    %v3709 = vand.u32 %v3708, 4294901760
    %3710 = vmatmul.mubr.f32.gmra.mxu0 %v3709
    %v3711 = vpop.f32.mrf.mxu0
    %v3712 = vadd.f32 %v1542, %v3711
    %v3713 = vpop.f32.mrf.mxu0
    %3714 = vdwg.mxu0
    %3715 = vmatprep.subr.mxu0 0.0
    %3716 = vmatpush1.msra.mxu0 0.0
    %3717 = vmatprep.subr.mxu0 0.0
    %3718 = vmatpush1.msra.mxu0 0.0
    %3719 = vmatprep.subr.mxu0 0.0
    %3720 = vmatpush1.msra.mxu0 0.0
    %3721 = vmatprep.subr.mxu0 0.0
    %3722 = vmatpush1.msra.mxu0 0.0
    %3723 = vmatprep.subr.mxu0 0.0
    %3724 = vmatpush1.msra.mxu0 0.0
    %3725 = vmatprep.subr.mxu0 0.0
    %3726 = vmatpush1.msra.mxu0 0.0
    %3727 = vmatprep.subr.mxu0 0.0
    %3728 = vmatpush1.msra.mxu0 0.0
    %3729 = vmatprep.subr.mxu0 0.0
    %3730 = vmatpush1.msra.mxu0 0.0
    %3731 = vmatprep.subr.mxu0 0.0
    %v3732 = vand.u32 %v52, 4294901760
    %v3733 = vsub.f32 %v52, %v3732
    %v3734 = vand.u32 %v3733, 4294901760
    %v3735 = vsub.f32 %v3733, %v3734
    %v3736 = vand.u32 %v3735, 4294901760
    %3737 = vmatpush1.msra.mxu0 %v3736
    %3738 = vmatprep.subr.mxu0 0.0
    %v3739 = vand.u32 %v51, 4294901760
    %v3740 = vsub.f32 %v51, %v3739
    %v3741 = vand.u32 %v3740, 4294901760
    %v3742 = vsub.f32 %v3740, %v3741
    %v3743 = vand.u32 %v3742, 4294901760
    %3744 = vmatpush1.msra.mxu0 %v3743
    %3745 = vmatprep.subr.mxu0 0.0
    %v3746 = vand.u32 %v50, 4294901760
    %v3747 = vsub.f32 %v50, %v3746
    %v3748 = vand.u32 %v3747, 4294901760
    %v3749 = vsub.f32 %v3747, %v3748
    %v3750 = vand.u32 %v3749, 4294901760
    %3751 = vmatpush1.msra.mxu0 %v3750
    %3752 = vmatprep.subr.mxu0 0.0
    %v3753 = vand.u32 %v49, 4294901760
    %v3754 = vsub.f32 %v49, %v3753
    %v3755 = vand.u32 %v3754, 4294901760
    %v3756 = vsub.f32 %v3754, %v3755
    %v3757 = vand.u32 %v3756, 4294901760
    %3758 = vmatpush1.msra.mxu0 %v3757
    %3759 = vmatprep.subr.mxu0 0.0
    %v3760 = vand.u32 %v48, 4294901760
    %v3761 = vsub.f32 %v48, %v3760
    %v3762 = vand.u32 %v3761, 4294901760
    %v3763 = vsub.f32 %v3761, %v3762
    %v3764 = vand.u32 %v3763, 4294901760
    %3765 = vmatpush1.msra.mxu0 %v3764
    %3766 = vmatprep.subr.mxu0 0.0
    %v3767 = vand.u32 %v47, 4294901760
    %v3768 = vsub.f32 %v47, %v3767
    %v3769 = vand.u32 %v3768, 4294901760
    %v3770 = vsub.f32 %v3768, %v3769
    %v3771 = vand.u32 %v3770, 4294901760
    %3772 = vmatpush1.msra.mxu0 %v3771
    %3773 = vmatprep.subr.mxu0 0.0
    %v3774 = vand.u32 %v46, 4294901760
    %v3775 = vsub.f32 %v46, %v3774
    %v3776 = vand.u32 %v3775, 4294901760
    %v3777 = vsub.f32 %v3775, %v3776
    %v3778 = vand.u32 %v3777, 4294901760
    %3779 = vmatpush1.msra.mxu0 %v3778
    %3780 = vmatprep.subr.mxu0 0.0
    %v3781 = vand.u32 %v45, 4294901760
    %v3782 = vsub.f32 %v45, %v3781
    %v3783 = vand.u32 %v3782, 4294901760
    %v3784 = vsub.f32 %v3782, %v3783
    %v3785 = vand.u32 %v3784, 4294901760
    %3786 = vmatpush1.msra.mxu0 %v3785
    %3787 = vmatprep.subr.mxu0 0.0
    %3788 = vmatpush2.msra.mxu0 0.0
    %3789 = vmatprep.subr.mxu0 0.0
    %3790 = vmatpush2.msra.mxu0 0.0
    %3791 = vmatprep.subr.mxu0 0.0
    %3792 = vmatpush2.msra.mxu0 0.0
    %3793 = vmatprep.subr.mxu0 0.0
    %3794 = vmatpush2.msra.mxu0 0.0
    %3795 = vmatprep.subr.mxu0 0.0
    %3796 = vmatpush2.msra.mxu0 0.0
    %3797 = vmatprep.subr.mxu0 0.0
    %3798 = vmatpush2.msra.mxu0 0.0
    %3799 = vmatprep.subr.mxu0 0.0
    %3800 = vmatpush2.msra.mxu0 0.0
    %3801 = vmatprep.subr.mxu0 0.0
    %3802 = vmatpush2.msra.mxu0 0.0
    %3803 = vmatprep.subr.mxu0 0.0
    %3804 = vmatpush2.msra.mxu0 0.0
    %3805 = vmatprep.subr.mxu0 0.0
    %3806 = vmatpush2.msra.mxu0 0.0
    %3807 = vmatprep.subr.mxu0 0.0
    %3808 = vmatpush2.msra.mxu0 0.0
    %3809 = vmatprep.subr.mxu0 0.0
    %3810 = vmatpush2.msra.mxu0 0.0
    %3811 = vmatprep.subr.mxu0 0.0
    %3812 = vmatpush2.msra.mxu0 0.0
    %3813 = vmatprep.subr.mxu0 0.0
    %3814 = vmatpush2.msra.mxu0 0.0
    %3815 = vmatprep.subr.mxu0 0.0
    %3816 = vmatpush2.msra.mxu0 0.0
    %3817 = vmatprep.subr.mxu0 0.0
    %3818 = vmatpush2.msra.mxu0 0.0
    %3819 = vmatprep.mubr.f32.mxu0 0.0
    %v3820 = vand.u32 %v3630, 4294901760
    %3821 = vmatmul.mubr.f32.gmra.mxu0 %v3820
    %v3822 = vpop.f32.mrf.mxu0
    %v3823 = vadd.f32 %v3712, %v3822
    %v3824 = vpop.f32.mrf.mxu0
    %3825 = vdwg.mxu0
    %3826 = vmatprep.subr.mxu0 0.0
    %3827 = vmatpush1.msra.mxu0 0.0
    %3828 = vmatprep.subr.mxu0 0.0
    %3829 = vmatpush1.msra.mxu0 0.0
    %3830 = vmatprep.subr.mxu0 0.0
    %3831 = vmatpush1.msra.mxu0 0.0
    %3832 = vmatprep.subr.mxu0 0.0
    %3833 = vmatpush1.msra.mxu0 0.0
    %3834 = vmatprep.subr.mxu0 0.0
    %3835 = vmatpush1.msra.mxu0 0.0
    %3836 = vmatprep.subr.mxu0 0.0
    %3837 = vmatpush1.msra.mxu0 0.0
    %3838 = vmatprep.subr.mxu0 0.0
    %3839 = vmatpush1.msra.mxu0 0.0
    %3840 = vmatprep.subr.mxu0 0.0
    %3841 = vmatpush1.msra.mxu0 0.0
    %3842 = vmatprep.subr.mxu0 0.0
    %v3843 = vand.u32 %v52, 4294901760
    %v3844 = vsub.f32 %v52, %v3843
    %3845 = vmatpush1.msra.mxu0 %v3844
    %3846 = vmatprep.subr.mxu0 0.0
    %v3847 = vand.u32 %v51, 4294901760
    %v3848 = vsub.f32 %v51, %v3847
    %3849 = vmatpush1.msra.mxu0 %v3848
    %3850 = vmatprep.subr.mxu0 0.0
    %v3851 = vand.u32 %v50, 4294901760
    %v3852 = vsub.f32 %v50, %v3851
    %3853 = vmatpush1.msra.mxu0 %v3852
    %3854 = vmatprep.subr.mxu0 0.0
    %v3855 = vand.u32 %v49, 4294901760
    %v3856 = vsub.f32 %v49, %v3855
    %3857 = vmatpush1.msra.mxu0 %v3856
    %3858 = vmatprep.subr.mxu0 0.0
    %v3859 = vand.u32 %v48, 4294901760
    %v3860 = vsub.f32 %v48, %v3859
    %3861 = vmatpush1.msra.mxu0 %v3860
    %3862 = vmatprep.subr.mxu0 0.0
    %v3863 = vand.u32 %v47, 4294901760
    %v3864 = vsub.f32 %v47, %v3863
    %3865 = vmatpush1.msra.mxu0 %v3864
    %3866 = vmatprep.subr.mxu0 0.0
    %v3867 = vand.u32 %v46, 4294901760
    %v3868 = vsub.f32 %v46, %v3867
    %3869 = vmatpush1.msra.mxu0 %v3868
    %3870 = vmatprep.subr.mxu0 0.0
    %v3871 = vand.u32 %v45, 4294901760
    %v3872 = vsub.f32 %v45, %v3871
    %3873 = vmatpush1.msra.mxu0 %v3872
    %3874 = vmatprep.subr.mxu0 0.0
    %3875 = vmatpush2.msra.mxu0 0.0
    %3876 = vmatprep.subr.mxu0 0.0
    %3877 = vmatpush2.msra.mxu0 0.0
    %3878 = vmatprep.subr.mxu0 0.0
    %3879 = vmatpush2.msra.mxu0 0.0
    %3880 = vmatprep.subr.mxu0 0.0
    %3881 = vmatpush2.msra.mxu0 0.0
    %3882 = vmatprep.subr.mxu0 0.0
    %3883 = vmatpush2.msra.mxu0 0.0
    %3884 = vmatprep.subr.mxu0 0.0
    %3885 = vmatpush2.msra.mxu0 0.0
    %3886 = vmatprep.subr.mxu0 0.0
    %3887 = vmatpush2.msra.mxu0 0.0
    %3888 = vmatprep.subr.mxu0 0.0
    %3889 = vmatpush2.msra.mxu0 0.0
    %3890 = vmatprep.subr.mxu0 0.0
    %3891 = vmatpush2.msra.mxu0 0.0
    %3892 = vmatprep.subr.mxu0 0.0
    %3893 = vmatpush2.msra.mxu0 0.0
    %3894 = vmatprep.subr.mxu0 0.0
    %3895 = vmatpush2.msra.mxu0 0.0
    %3896 = vmatprep.subr.mxu0 0.0
    %3897 = vmatpush2.msra.mxu0 0.0
    %3898 = vmatprep.subr.mxu0 0.0
    %3899 = vmatpush2.msra.mxu0 0.0
    %3900 = vmatprep.subr.mxu0 0.0
    %3901 = vmatpush2.msra.mxu0 0.0
    %3902 = vmatprep.subr.mxu0 0.0
    %3903 = vmatpush2.msra.mxu0 0.0
    %3904 = vmatprep.subr.mxu0 0.0
    %3905 = vmatpush2.msra.mxu0 0.0
    %3906 = vmatprep.mubr.f32.mxu0 0.0
    %v3907 = vand.u32 %v3630, 4294901760
    %v3908 = vsub.f32 %v3630, %v3907
    %3909 = vmatmul.mubr.f32.gmra.mxu0 %v3908
    %v3910 = vpop.f32.mrf.mxu0
    %v3911 = vadd.f32 %v3823, %v3910
    %v3912 = vpop.f32.mrf.mxu0
    %3913 = vdwg.mxu0
    %3914 = vmatprep.subr.mxu0 0.0
    %3915 = vmatpush1.msra.mxu0 0.0
    %3916 = vmatprep.subr.mxu0 0.0
    %3917 = vmatpush1.msra.mxu0 0.0
    %3918 = vmatprep.subr.mxu0 0.0
    %3919 = vmatpush1.msra.mxu0 0.0
    %3920 = vmatprep.subr.mxu0 0.0
    %3921 = vmatpush1.msra.mxu0 0.0
    %3922 = vmatprep.subr.mxu0 0.0
    %3923 = vmatpush1.msra.mxu0 0.0
    %3924 = vmatprep.subr.mxu0 0.0
    %3925 = vmatpush1.msra.mxu0 0.0
    %3926 = vmatprep.subr.mxu0 0.0
    %3927 = vmatpush1.msra.mxu0 0.0
    %3928 = vmatprep.subr.mxu0 0.0
    %3929 = vmatpush1.msra.mxu0 0.0
    %3930 = vmatprep.subr.mxu0 0.0
    %v3931 = vand.u32 %v52, 4294901760
    %3932 = vmatpush1.msra.mxu0 %v3931
    %3933 = vmatprep.subr.mxu0 0.0
    %v3934 = vand.u32 %v51, 4294901760
    %3935 = vmatpush1.msra.mxu0 %v3934
    %3936 = vmatprep.subr.mxu0 0.0
    %v3937 = vand.u32 %v50, 4294901760
    %3938 = vmatpush1.msra.mxu0 %v3937
    %3939 = vmatprep.subr.mxu0 0.0
    %v3940 = vand.u32 %v49, 4294901760
    %3941 = vmatpush1.msra.mxu0 %v3940
    %3942 = vmatprep.subr.mxu0 0.0
    %v3943 = vand.u32 %v48, 4294901760
    %3944 = vmatpush1.msra.mxu0 %v3943
    %3945 = vmatprep.subr.mxu0 0.0
    %v3946 = vand.u32 %v47, 4294901760
    %3947 = vmatpush1.msra.mxu0 %v3946
    %3948 = vmatprep.subr.mxu0 0.0
    %v3949 = vand.u32 %v46, 4294901760
    %3950 = vmatpush1.msra.mxu0 %v3949
    %3951 = vmatprep.subr.mxu0 0.0
    %v3952 = vand.u32 %v45, 4294901760
    %3953 = vmatpush1.msra.mxu0 %v3952
    %3954 = vmatprep.subr.mxu0 0.0
    %3955 = vmatpush2.msra.mxu0 0.0
    %3956 = vmatprep.subr.mxu0 0.0
    %3957 = vmatpush2.msra.mxu0 0.0
    %3958 = vmatprep.subr.mxu0 0.0
    %3959 = vmatpush2.msra.mxu0 0.0
    %3960 = vmatprep.subr.mxu0 0.0
    %3961 = vmatpush2.msra.mxu0 0.0
    %3962 = vmatprep.subr.mxu0 0.0
    %3963 = vmatpush2.msra.mxu0 0.0
    %3964 = vmatprep.subr.mxu0 0.0
    %3965 = vmatpush2.msra.mxu0 0.0
    %3966 = vmatprep.subr.mxu0 0.0
    %3967 = vmatpush2.msra.mxu0 0.0
    %3968 = vmatprep.subr.mxu0 0.0
    %3969 = vmatpush2.msra.mxu0 0.0
    %3970 = vmatprep.subr.mxu0 0.0
    %3971 = vmatpush2.msra.mxu0 0.0
    %3972 = vmatprep.subr.mxu0 0.0
    %3973 = vmatpush2.msra.mxu0 0.0
    %3974 = vmatprep.subr.mxu0 0.0
    %3975 = vmatpush2.msra.mxu0 0.0
    %3976 = vmatprep.subr.mxu0 0.0
    %3977 = vmatpush2.msra.mxu0 0.0
    %3978 = vmatprep.subr.mxu0 0.0
    %3979 = vmatpush2.msra.mxu0 0.0
    %3980 = vmatprep.subr.mxu0 0.0
    %3981 = vmatpush2.msra.mxu0 0.0
    %3982 = vmatprep.subr.mxu0 0.0
    %3983 = vmatpush2.msra.mxu0 0.0
    %3984 = vmatprep.subr.mxu0 0.0
    %3985 = vmatpush2.msra.mxu0 0.0
    %3986 = vmatprep.mubr.f32.mxu0 0.0
    %v3987 = vand.u32 %v3630, 4294901760
    %v3988 = vsub.f32 %v3630, %v3987
    %v3989 = vand.u32 %v3988, 4294901760
    %3990 = vmatmul.mubr.f32.gmra.mxu0 %v3989
    %v3991 = vpop.f32.mrf.mxu0
    %v3992 = vadd.f32 %v3911, %v3991
    %v3993 = vpop.f32.mrf.mxu0
    %3994 = vdwg.mxu0
    %3995 = vmatprep.subr.mxu0 0.0
    %3996 = vmatpush1.msra.mxu0 0.0
    %3997 = vmatprep.subr.mxu0 0.0
    %3998 = vmatpush1.msra.mxu0 0.0
    %3999 = vmatprep.subr.mxu0 0.0
    %4000 = vmatpush1.msra.mxu0 0.0
    %4001 = vmatprep.subr.mxu0 0.0
    %4002 = vmatpush1.msra.mxu0 0.0
    %4003 = vmatprep.subr.mxu0 0.0
    %4004 = vmatpush1.msra.mxu0 0.0
    %4005 = vmatprep.subr.mxu0 0.0
    %4006 = vmatpush1.msra.mxu0 0.0
    %4007 = vmatprep.subr.mxu0 0.0
    %4008 = vmatpush1.msra.mxu0 0.0
    %4009 = vmatprep.subr.mxu0 0.0
    %4010 = vmatpush1.msra.mxu0 0.0
    %4011 = vmatprep.subr.mxu0 0.0
    %v4012 = vand.u32 %v52, 4294901760
    %v4013 = vsub.f32 %v52, %v4012
    %v4014 = vand.u32 %v4013, 4294901760
    %4015 = vmatpush1.msra.mxu0 %v4014
    %4016 = vmatprep.subr.mxu0 0.0
    %v4017 = vand.u32 %v51, 4294901760
    %v4018 = vsub.f32 %v51, %v4017
    %v4019 = vand.u32 %v4018, 4294901760
    %4020 = vmatpush1.msra.mxu0 %v4019
    %4021 = vmatprep.subr.mxu0 0.0
    %v4022 = vand.u32 %v50, 4294901760
    %v4023 = vsub.f32 %v50, %v4022
    %v4024 = vand.u32 %v4023, 4294901760
    %4025 = vmatpush1.msra.mxu0 %v4024
    %4026 = vmatprep.subr.mxu0 0.0
    %v4027 = vand.u32 %v49, 4294901760
    %v4028 = vsub.f32 %v49, %v4027
    %v4029 = vand.u32 %v4028, 4294901760
    %4030 = vmatpush1.msra.mxu0 %v4029
    %4031 = vmatprep.subr.mxu0 0.0
    %v4032 = vand.u32 %v48, 4294901760
    %v4033 = vsub.f32 %v48, %v4032
    %v4034 = vand.u32 %v4033, 4294901760
    %4035 = vmatpush1.msra.mxu0 %v4034
    %4036 = vmatprep.subr.mxu0 0.0
    %v4037 = vand.u32 %v47, 4294901760
    %v4038 = vsub.f32 %v47, %v4037
    %v4039 = vand.u32 %v4038, 4294901760
    %4040 = vmatpush1.msra.mxu0 %v4039
    %4041 = vmatprep.subr.mxu0 0.0
    %v4042 = vand.u32 %v46, 4294901760
    %v4043 = vsub.f32 %v46, %v4042
    %v4044 = vand.u32 %v4043, 4294901760
    %4045 = vmatpush1.msra.mxu0 %v4044
    %4046 = vmatprep.subr.mxu0 0.0
    %v4047 = vand.u32 %v45, 4294901760
    %v4048 = vsub.f32 %v45, %v4047
    %v4049 = vand.u32 %v4048, 4294901760
    %4050 = vmatpush1.msra.mxu0 %v4049
    %4051 = vmatprep.subr.mxu0 0.0
    %4052 = vmatpush2.msra.mxu0 0.0
    %4053 = vmatprep.subr.mxu0 0.0
    %4054 = vmatpush2.msra.mxu0 0.0
    %4055 = vmatprep.subr.mxu0 0.0
    %4056 = vmatpush2.msra.mxu0 0.0
    %4057 = vmatprep.subr.mxu0 0.0
    %4058 = vmatpush2.msra.mxu0 0.0
    %4059 = vmatprep.subr.mxu0 0.0
    %4060 = vmatpush2.msra.mxu0 0.0
    %4061 = vmatprep.subr.mxu0 0.0
    %4062 = vmatpush2.msra.mxu0 0.0
    %4063 = vmatprep.subr.mxu0 0.0
    %4064 = vmatpush2.msra.mxu0 0.0
    %4065 = vmatprep.subr.mxu0 0.0
    %4066 = vmatpush2.msra.mxu0 0.0
    %4067 = vmatprep.subr.mxu0 0.0
    %4068 = vmatpush2.msra.mxu0 0.0
    %4069 = vmatprep.subr.mxu0 0.0
    %4070 = vmatpush2.msra.mxu0 0.0
    %4071 = vmatprep.subr.mxu0 0.0
    %4072 = vmatpush2.msra.mxu0 0.0
    %4073 = vmatprep.subr.mxu0 0.0
    %4074 = vmatpush2.msra.mxu0 0.0
    %4075 = vmatprep.subr.mxu0 0.0
    %4076 = vmatpush2.msra.mxu0 0.0
    %4077 = vmatprep.subr.mxu0 0.0
    %4078 = vmatpush2.msra.mxu0 0.0
    %4079 = vmatprep.subr.mxu0 0.0
    %4080 = vmatpush2.msra.mxu0 0.0
    %4081 = vmatprep.subr.mxu0 0.0
    %4082 = vmatpush2.msra.mxu0 0.0
    %4083 = vmatprep.mubr.f32.mxu0 0.0
    %v4084 = vand.u32 %v3630, 4294901760
    %4085 = vmatmul.mubr.f32.gmra.mxu0 %v4084
    %v4086 = vpop.f32.mrf.mxu0
    %v4087 = vadd.f32 %v3992, %v4086
    %v4088 = vpop.f32.mrf.mxu0
    %4089 = vdwg.mxu0
    %4090 = vmatprep.subr.mxu0 0.0
    %4091 = vmatpush1.msra.mxu0 0.0
    %4092 = vmatprep.subr.mxu0 0.0
    %4093 = vmatpush1.msra.mxu0 0.0
    %4094 = vmatprep.subr.mxu0 0.0
    %4095 = vmatpush1.msra.mxu0 0.0
    %4096 = vmatprep.subr.mxu0 0.0
    %4097 = vmatpush1.msra.mxu0 0.0
    %4098 = vmatprep.subr.mxu0 0.0
    %4099 = vmatpush1.msra.mxu0 0.0
    %4100 = vmatprep.subr.mxu0 0.0
    %4101 = vmatpush1.msra.mxu0 0.0
    %4102 = vmatprep.subr.mxu0 0.0
    %4103 = vmatpush1.msra.mxu0 0.0
    %4104 = vmatprep.subr.mxu0 0.0
    %4105 = vmatpush1.msra.mxu0 0.0
    %4106 = vmatprep.subr.mxu0 0.0
    %v4107 = vand.u32 %v52, 4294901760
    %4108 = vmatpush1.msra.mxu0 %v4107
    %4109 = vmatprep.subr.mxu0 0.0
    %v4110 = vand.u32 %v51, 4294901760
    %4111 = vmatpush1.msra.mxu0 %v4110
    %4112 = vmatprep.subr.mxu0 0.0
    %v4113 = vand.u32 %v50, 4294901760
    %4114 = vmatpush1.msra.mxu0 %v4113
    %4115 = vmatprep.subr.mxu0 0.0
    %v4116 = vand.u32 %v49, 4294901760
    %4117 = vmatpush1.msra.mxu0 %v4116
    %4118 = vmatprep.subr.mxu0 0.0
    %v4119 = vand.u32 %v48, 4294901760
    %4120 = vmatpush1.msra.mxu0 %v4119
    %4121 = vmatprep.subr.mxu0 0.0
    %v4122 = vand.u32 %v47, 4294901760
    %4123 = vmatpush1.msra.mxu0 %v4122
    %4124 = vmatprep.subr.mxu0 0.0
    %v4125 = vand.u32 %v46, 4294901760
    %4126 = vmatpush1.msra.mxu0 %v4125
    %4127 = vmatprep.subr.mxu0 0.0
    %v4128 = vand.u32 %v45, 4294901760
    %4129 = vmatpush1.msra.mxu0 %v4128
    %4130 = vmatprep.subr.mxu0 0.0
    %4131 = vmatpush2.msra.mxu0 0.0
    %4132 = vmatprep.subr.mxu0 0.0
    %4133 = vmatpush2.msra.mxu0 0.0
    %4134 = vmatprep.subr.mxu0 0.0
    %4135 = vmatpush2.msra.mxu0 0.0
    %4136 = vmatprep.subr.mxu0 0.0
    %4137 = vmatpush2.msra.mxu0 0.0
    %4138 = vmatprep.subr.mxu0 0.0
    %4139 = vmatpush2.msra.mxu0 0.0
    %4140 = vmatprep.subr.mxu0 0.0
    %4141 = vmatpush2.msra.mxu0 0.0
    %4142 = vmatprep.subr.mxu0 0.0
    %4143 = vmatpush2.msra.mxu0 0.0
    %4144 = vmatprep.subr.mxu0 0.0
    %4145 = vmatpush2.msra.mxu0 0.0
    %4146 = vmatprep.subr.mxu0 0.0
    %4147 = vmatpush2.msra.mxu0 0.0
    %4148 = vmatprep.subr.mxu0 0.0
    %4149 = vmatpush2.msra.mxu0 0.0
    %4150 = vmatprep.subr.mxu0 0.0
    %4151 = vmatpush2.msra.mxu0 0.0
    %4152 = vmatprep.subr.mxu0 0.0
    %4153 = vmatpush2.msra.mxu0 0.0
    %4154 = vmatprep.subr.mxu0 0.0
    %4155 = vmatpush2.msra.mxu0 0.0
    %4156 = vmatprep.subr.mxu0 0.0
    %4157 = vmatpush2.msra.mxu0 0.0
    %4158 = vmatprep.subr.mxu0 0.0
    %4159 = vmatpush2.msra.mxu0 0.0
    %4160 = vmatprep.subr.mxu0 0.0
    %4161 = vmatpush2.msra.mxu0 0.0
    %4162 = vmatprep.mubr.f32.mxu0 0.0
    %v4163 = vand.u32 %v3630, 4294901760
    %4164 = vmatmul.mubr.f32.gmra.mxu0 %v4163
    %v4165 = vpop.f32.mrf.mxu0
    %v4166 = vadd.f32 %v4087, %v4165
    %v4167 = vpop.f32.mrf.mxu0
    %4168 = vdwg.mxu0
    %v4169 = vtanh.pop %v4166
    %v4171 = vrot.slane %v3621, 3
    %v4172 = vsel %vm64, %v4171, 0
    %4174 = vmatprep.subr.mxu0 0.0
    %4175 = vmatpush1.msra.mxu0 0.0
    %4176 = vmatprep.subr.mxu0 0.0
    %4177 = vmatpush1.msra.mxu0 0.0
    %4178 = vmatprep.subr.mxu0 0.0
    %4179 = vmatpush1.msra.mxu0 0.0
    %4180 = vmatprep.subr.mxu0 0.0
    %4181 = vmatpush1.msra.mxu0 0.0
    %4182 = vmatprep.subr.mxu0 0.0
    %4183 = vmatpush1.msra.mxu0 0.0
    %4184 = vmatprep.subr.mxu0 0.0
    %4185 = vmatpush1.msra.mxu0 0.0
    %4186 = vmatprep.subr.mxu0 0.0
    %4187 = vmatpush1.msra.mxu0 0.0
    %4188 = vmatprep.subr.mxu0 0.0
    %4189 = vmatpush1.msra.mxu0 0.0
    %4190 = vmatprep.subr.mxu0 0.0
    %4191 = vmatpush1.msra.mxu0 0.0
    %4192 = vmatprep.subr.mxu0 0.0
    %4193 = vmatpush1.msra.mxu0 0.0
    %4194 = vmatprep.subr.mxu0 0.0
    %4195 = vmatpush1.msra.mxu0 0.0
    %4196 = vmatprep.subr.mxu0 0.0
    %4197 = vmatpush1.msra.mxu0 0.0
    %4198 = vmatprep.subr.mxu0 0.0
    %v4199 = vand.u32 %v43, 4294901760
    %4200 = vmatpush1.msra.mxu0 %v4199
    %4201 = vmatprep.subr.mxu0 0.0
    %v4202 = vand.u32 %v42, 4294901760
    %4203 = vmatpush1.msra.mxu0 %v4202
    %4204 = vmatprep.subr.mxu0 0.0
    %v4205 = vand.u32 %v41, 4294901760
    %4206 = vmatpush1.msra.mxu0 %v4205
    %4207 = vmatprep.subr.mxu0 0.0
    %v4208 = vand.u32 %v40, 4294901760
    %4209 = vmatpush1.msra.mxu0 %v4208
    %4210 = vmatprep.subr.mxu0 0.0
    %4211 = vmatpush2.msra.mxu0 0.0
    %4212 = vmatprep.subr.mxu0 0.0
    %4213 = vmatpush2.msra.mxu0 0.0
    %4214 = vmatprep.subr.mxu0 0.0
    %4215 = vmatpush2.msra.mxu0 0.0
    %4216 = vmatprep.subr.mxu0 0.0
    %4217 = vmatpush2.msra.mxu0 0.0
    %4218 = vmatprep.subr.mxu0 0.0
    %4219 = vmatpush2.msra.mxu0 0.0
    %4220 = vmatprep.subr.mxu0 0.0
    %4221 = vmatpush2.msra.mxu0 0.0
    %4222 = vmatprep.subr.mxu0 0.0
    %4223 = vmatpush2.msra.mxu0 0.0
    %4224 = vmatprep.subr.mxu0 0.0
    %4225 = vmatpush2.msra.mxu0 0.0
    %4226 = vmatprep.subr.mxu0 0.0
    %4227 = vmatpush2.msra.mxu0 0.0
    %4228 = vmatprep.subr.mxu0 0.0
    %4229 = vmatpush2.msra.mxu0 0.0
    %4230 = vmatprep.subr.mxu0 0.0
    %4231 = vmatpush2.msra.mxu0 0.0
    %4232 = vmatprep.subr.mxu0 0.0
    %4233 = vmatpush2.msra.mxu0 0.0
    %4234 = vmatprep.subr.mxu0 0.0
    %4235 = vmatpush2.msra.mxu0 0.0
    %4236 = vmatprep.subr.mxu0 0.0
    %4237 = vmatpush2.msra.mxu0 0.0
    %4238 = vmatprep.subr.mxu0 0.0
    %4239 = vmatpush2.msra.mxu0 0.0
    %4240 = vmatprep.subr.mxu0 0.0
    %4241 = vmatpush2.msra.mxu0 0.0
    %4242 = vmatprep.mubr.f32.mxu0 0.0
    %v4243 = vand.u32 %v4172, 4294901760
    %v4244 = vsub.f32 %v4172, %v4243
    %v4245 = vand.u32 %v4244, 4294901760
    %v4246 = vsub.f32 %v4244, %v4245
    %v4247 = vand.u32 %v4246, 4294901760
    %4248 = vmatmul.mubr.f32.gmra.mxu0 %v4247
    %v4249 = vpop.f32.mrf.mxu0
    %v4250 = vadd.f32 0.0, %v4249
    %v4251 = vpop.f32.mrf.mxu0
    %4252 = vdwg.mxu0
    %4253 = vmatprep.subr.mxu0 0.0
    %4254 = vmatpush1.msra.mxu0 0.0
    %4255 = vmatprep.subr.mxu0 0.0
    %4256 = vmatpush1.msra.mxu0 0.0
    %4257 = vmatprep.subr.mxu0 0.0
    %4258 = vmatpush1.msra.mxu0 0.0
    %4259 = vmatprep.subr.mxu0 0.0
    %4260 = vmatpush1.msra.mxu0 0.0
    %4261 = vmatprep.subr.mxu0 0.0
    %4262 = vmatpush1.msra.mxu0 0.0
    %4263 = vmatprep.subr.mxu0 0.0
    %4264 = vmatpush1.msra.mxu0 0.0
    %4265 = vmatprep.subr.mxu0 0.0
    %4266 = vmatpush1.msra.mxu0 0.0
    %4267 = vmatprep.subr.mxu0 0.0
    %4268 = vmatpush1.msra.mxu0 0.0
    %4269 = vmatprep.subr.mxu0 0.0
    %4270 = vmatpush1.msra.mxu0 0.0
    %4271 = vmatprep.subr.mxu0 0.0
    %4272 = vmatpush1.msra.mxu0 0.0
    %4273 = vmatprep.subr.mxu0 0.0
    %4274 = vmatpush1.msra.mxu0 0.0
    %4275 = vmatprep.subr.mxu0 0.0
    %4276 = vmatpush1.msra.mxu0 0.0
    %4277 = vmatprep.subr.mxu0 0.0
    %v4278 = vand.u32 %v43, 4294901760
    %v4279 = vsub.f32 %v43, %v4278
    %v4280 = vand.u32 %v4279, 4294901760
    %v4281 = vsub.f32 %v4279, %v4280
    %v4282 = vand.u32 %v4281, 4294901760
    %4283 = vmatpush1.msra.mxu0 %v4282
    %4284 = vmatprep.subr.mxu0 0.0
    %v4285 = vand.u32 %v42, 4294901760
    %v4286 = vsub.f32 %v42, %v4285
    %v4287 = vand.u32 %v4286, 4294901760
    %v4288 = vsub.f32 %v4286, %v4287
    %v4289 = vand.u32 %v4288, 4294901760
    %4290 = vmatpush1.msra.mxu0 %v4289
    %4291 = vmatprep.subr.mxu0 0.0
    %v4292 = vand.u32 %v41, 4294901760
    %v4293 = vsub.f32 %v41, %v4292
    %v4294 = vand.u32 %v4293, 4294901760
    %v4295 = vsub.f32 %v4293, %v4294
    %v4296 = vand.u32 %v4295, 4294901760
    %4297 = vmatpush1.msra.mxu0 %v4296
    %4298 = vmatprep.subr.mxu0 0.0
    %v4299 = vand.u32 %v40, 4294901760
    %v4300 = vsub.f32 %v40, %v4299
    %v4301 = vand.u32 %v4300, 4294901760
    %v4302 = vsub.f32 %v4300, %v4301
    %v4303 = vand.u32 %v4302, 4294901760
    %4304 = vmatpush1.msra.mxu0 %v4303
    %4305 = vmatprep.subr.mxu0 0.0
    %4306 = vmatpush2.msra.mxu0 0.0
    %4307 = vmatprep.subr.mxu0 0.0
    %4308 = vmatpush2.msra.mxu0 0.0
    %4309 = vmatprep.subr.mxu0 0.0
    %4310 = vmatpush2.msra.mxu0 0.0
    %4311 = vmatprep.subr.mxu0 0.0
    %4312 = vmatpush2.msra.mxu0 0.0
    %4313 = vmatprep.subr.mxu0 0.0
    %4314 = vmatpush2.msra.mxu0 0.0
    %4315 = vmatprep.subr.mxu0 0.0
    %4316 = vmatpush2.msra.mxu0 0.0
    %4317 = vmatprep.subr.mxu0 0.0
    %4318 = vmatpush2.msra.mxu0 0.0
    %4319 = vmatprep.subr.mxu0 0.0
    %4320 = vmatpush2.msra.mxu0 0.0
    %4321 = vmatprep.subr.mxu0 0.0
    %4322 = vmatpush2.msra.mxu0 0.0
    %4323 = vmatprep.subr.mxu0 0.0
    %4324 = vmatpush2.msra.mxu0 0.0
    %4325 = vmatprep.subr.mxu0 0.0
    %4326 = vmatpush2.msra.mxu0 0.0
    %4327 = vmatprep.subr.mxu0 0.0
    %4328 = vmatpush2.msra.mxu0 0.0
    %4329 = vmatprep.subr.mxu0 0.0
    %4330 = vmatpush2.msra.mxu0 0.0
    %4331 = vmatprep.subr.mxu0 0.0
    %4332 = vmatpush2.msra.mxu0 0.0
    %4333 = vmatprep.subr.mxu0 0.0
    %4334 = vmatpush2.msra.mxu0 0.0
    %4335 = vmatprep.subr.mxu0 0.0
    %4336 = vmatpush2.msra.mxu0 0.0
    %4337 = vmatprep.mubr.f32.mxu0 0.0
    %v4338 = vand.u32 %v4172, 4294901760
    %4339 = vmatmul.mubr.f32.gmra.mxu0 %v4338
    %v4340 = vpop.f32.mrf.mxu0
    %v4341 = vadd.f32 %v4250, %v4340
    %v4342 = vpop.f32.mrf.mxu0
    %4343 = vdwg.mxu0
    %4344 = vmatprep.subr.mxu0 0.0
    %4345 = vmatpush1.msra.mxu0 0.0
    %4346 = vmatprep.subr.mxu0 0.0
    %4347 = vmatpush1.msra.mxu0 0.0
    %4348 = vmatprep.subr.mxu0 0.0
    %4349 = vmatpush1.msra.mxu0 0.0
    %4350 = vmatprep.subr.mxu0 0.0
    %4351 = vmatpush1.msra.mxu0 0.0
    %4352 = vmatprep.subr.mxu0 0.0
    %4353 = vmatpush1.msra.mxu0 0.0
    %4354 = vmatprep.subr.mxu0 0.0
    %4355 = vmatpush1.msra.mxu0 0.0
    %4356 = vmatprep.subr.mxu0 0.0
    %4357 = vmatpush1.msra.mxu0 0.0
    %4358 = vmatprep.subr.mxu0 0.0
    %4359 = vmatpush1.msra.mxu0 0.0
    %4360 = vmatprep.subr.mxu0 0.0
    %4361 = vmatpush1.msra.mxu0 0.0
    %4362 = vmatprep.subr.mxu0 0.0
    %4363 = vmatpush1.msra.mxu0 0.0
    %4364 = vmatprep.subr.mxu0 0.0
    %4365 = vmatpush1.msra.mxu0 0.0
    %4366 = vmatprep.subr.mxu0 0.0
    %4367 = vmatpush1.msra.mxu0 0.0
    %4368 = vmatprep.subr.mxu0 0.0
    %v4369 = vand.u32 %v43, 4294901760
    %v4370 = vsub.f32 %v43, %v4369
    %4371 = vmatpush1.msra.mxu0 %v4370
    %4372 = vmatprep.subr.mxu0 0.0
    %v4373 = vand.u32 %v42, 4294901760
    %v4374 = vsub.f32 %v42, %v4373
    %4375 = vmatpush1.msra.mxu0 %v4374
    %4376 = vmatprep.subr.mxu0 0.0
    %v4377 = vand.u32 %v41, 4294901760
    %v4378 = vsub.f32 %v41, %v4377
    %4379 = vmatpush1.msra.mxu0 %v4378
    %4380 = vmatprep.subr.mxu0 0.0
    %v4381 = vand.u32 %v40, 4294901760
    %v4382 = vsub.f32 %v40, %v4381
    %4383 = vmatpush1.msra.mxu0 %v4382
    %4384 = vmatprep.subr.mxu0 0.0
    %4385 = vmatpush2.msra.mxu0 0.0
    %4386 = vmatprep.subr.mxu0 0.0
    %4387 = vmatpush2.msra.mxu0 0.0
    %4388 = vmatprep.subr.mxu0 0.0
    %4389 = vmatpush2.msra.mxu0 0.0
    %4390 = vmatprep.subr.mxu0 0.0
    %4391 = vmatpush2.msra.mxu0 0.0
    %4392 = vmatprep.subr.mxu0 0.0
    %4393 = vmatpush2.msra.mxu0 0.0
    %4394 = vmatprep.subr.mxu0 0.0
    %4395 = vmatpush2.msra.mxu0 0.0
    %4396 = vmatprep.subr.mxu0 0.0
    %4397 = vmatpush2.msra.mxu0 0.0
    %4398 = vmatprep.subr.mxu0 0.0
    %4399 = vmatpush2.msra.mxu0 0.0
    %4400 = vmatprep.subr.mxu0 0.0
    %4401 = vmatpush2.msra.mxu0 0.0
    %4402 = vmatprep.subr.mxu0 0.0
    %4403 = vmatpush2.msra.mxu0 0.0
    %4404 = vmatprep.subr.mxu0 0.0
    %4405 = vmatpush2.msra.mxu0 0.0
    %4406 = vmatprep.subr.mxu0 0.0
    %4407 = vmatpush2.msra.mxu0 0.0
    %4408 = vmatprep.subr.mxu0 0.0
    %4409 = vmatpush2.msra.mxu0 0.0
    %4410 = vmatprep.subr.mxu0 0.0
    %4411 = vmatpush2.msra.mxu0 0.0
    %4412 = vmatprep.subr.mxu0 0.0
    %4413 = vmatpush2.msra.mxu0 0.0
    %4414 = vmatprep.subr.mxu0 0.0
    %4415 = vmatpush2.msra.mxu0 0.0
    %4416 = vmatprep.mubr.f32.mxu0 0.0
    %v4417 = vand.u32 %v4172, 4294901760
    %v4418 = vsub.f32 %v4172, %v4417
    %4419 = vmatmul.mubr.f32.gmra.mxu0 %v4418
    %v4420 = vpop.f32.mrf.mxu0
    %v4421 = vadd.f32 %v4341, %v4420
    %v4422 = vpop.f32.mrf.mxu0
    %4423 = vdwg.mxu0
    %4424 = vmatprep.subr.mxu0 0.0
    %4425 = vmatpush1.msra.mxu0 0.0
    %4426 = vmatprep.subr.mxu0 0.0
    %4427 = vmatpush1.msra.mxu0 0.0
    %4428 = vmatprep.subr.mxu0 0.0
    %4429 = vmatpush1.msra.mxu0 0.0
    %4430 = vmatprep.subr.mxu0 0.0
    %4431 = vmatpush1.msra.mxu0 0.0
    %4432 = vmatprep.subr.mxu0 0.0
    %4433 = vmatpush1.msra.mxu0 0.0
    %4434 = vmatprep.subr.mxu0 0.0
    %4435 = vmatpush1.msra.mxu0 0.0
    %4436 = vmatprep.subr.mxu0 0.0
    %4437 = vmatpush1.msra.mxu0 0.0
    %4438 = vmatprep.subr.mxu0 0.0
    %4439 = vmatpush1.msra.mxu0 0.0
    %4440 = vmatprep.subr.mxu0 0.0
    %4441 = vmatpush1.msra.mxu0 0.0
    %4442 = vmatprep.subr.mxu0 0.0
    %4443 = vmatpush1.msra.mxu0 0.0
    %4444 = vmatprep.subr.mxu0 0.0
    %4445 = vmatpush1.msra.mxu0 0.0
    %4446 = vmatprep.subr.mxu0 0.0
    %4447 = vmatpush1.msra.mxu0 0.0
    %4448 = vmatprep.subr.mxu0 0.0
    %v4449 = vand.u32 %v43, 4294901760
    %4450 = vmatpush1.msra.mxu0 %v4449
    %4451 = vmatprep.subr.mxu0 0.0
    %v4452 = vand.u32 %v42, 4294901760
    %4453 = vmatpush1.msra.mxu0 %v4452
    %4454 = vmatprep.subr.mxu0 0.0
    %v4455 = vand.u32 %v41, 4294901760
    %4456 = vmatpush1.msra.mxu0 %v4455
    %4457 = vmatprep.subr.mxu0 0.0
    %v4458 = vand.u32 %v40, 4294901760
    %4459 = vmatpush1.msra.mxu0 %v4458
    %4460 = vmatprep.subr.mxu0 0.0
    %4461 = vmatpush2.msra.mxu0 0.0
    %4462 = vmatprep.subr.mxu0 0.0
    %4463 = vmatpush2.msra.mxu0 0.0
    %4464 = vmatprep.subr.mxu0 0.0
    %4465 = vmatpush2.msra.mxu0 0.0
    %4466 = vmatprep.subr.mxu0 0.0
    %4467 = vmatpush2.msra.mxu0 0.0
    %4468 = vmatprep.subr.mxu0 0.0
    %4469 = vmatpush2.msra.mxu0 0.0
    %4470 = vmatprep.subr.mxu0 0.0
    %4471 = vmatpush2.msra.mxu0 0.0
    %4472 = vmatprep.subr.mxu0 0.0
    %4473 = vmatpush2.msra.mxu0 0.0
    %4474 = vmatprep.subr.mxu0 0.0
    %4475 = vmatpush2.msra.mxu0 0.0
    %4476 = vmatprep.subr.mxu0 0.0
    %4477 = vmatpush2.msra.mxu0 0.0
    %4478 = vmatprep.subr.mxu0 0.0
    %4479 = vmatpush2.msra.mxu0 0.0
    %4480 = vmatprep.subr.mxu0 0.0
    %4481 = vmatpush2.msra.mxu0 0.0
    %4482 = vmatprep.subr.mxu0 0.0
    %4483 = vmatpush2.msra.mxu0 0.0
    %4484 = vmatprep.subr.mxu0 0.0
    %4485 = vmatpush2.msra.mxu0 0.0
    %4486 = vmatprep.subr.mxu0 0.0
    %4487 = vmatpush2.msra.mxu0 0.0
    %4488 = vmatprep.subr.mxu0 0.0
    %4489 = vmatpush2.msra.mxu0 0.0
    %4490 = vmatprep.subr.mxu0 0.0
    %4491 = vmatpush2.msra.mxu0 0.0
    %4492 = vmatprep.mubr.f32.mxu0 0.0
    %v4493 = vand.u32 %v4172, 4294901760
    %v4494 = vsub.f32 %v4172, %v4493
    %v4495 = vand.u32 %v4494, 4294901760
    %4496 = vmatmul.mubr.f32.gmra.mxu0 %v4495
    %v4497 = vpop.f32.mrf.mxu0
    %v4498 = vadd.f32 %v4421, %v4497
    %v4499 = vpop.f32.mrf.mxu0
    %4500 = vdwg.mxu0
    %4501 = vmatprep.subr.mxu0 0.0
    %4502 = vmatpush1.msra.mxu0 0.0
    %4503 = vmatprep.subr.mxu0 0.0
    %4504 = vmatpush1.msra.mxu0 0.0
    %4505 = vmatprep.subr.mxu0 0.0
    %4506 = vmatpush1.msra.mxu0 0.0
    %4507 = vmatprep.subr.mxu0 0.0
    %4508 = vmatpush1.msra.mxu0 0.0
    %4509 = vmatprep.subr.mxu0 0.0
    %4510 = vmatpush1.msra.mxu0 0.0
    %4511 = vmatprep.subr.mxu0 0.0
    %4512 = vmatpush1.msra.mxu0 0.0
    %4513 = vmatprep.subr.mxu0 0.0
    %4514 = vmatpush1.msra.mxu0 0.0
    %4515 = vmatprep.subr.mxu0 0.0
    %4516 = vmatpush1.msra.mxu0 0.0
    %4517 = vmatprep.subr.mxu0 0.0
    %4518 = vmatpush1.msra.mxu0 0.0
    %4519 = vmatprep.subr.mxu0 0.0
    %4520 = vmatpush1.msra.mxu0 0.0
    %4521 = vmatprep.subr.mxu0 0.0
    %4522 = vmatpush1.msra.mxu0 0.0
    %4523 = vmatprep.subr.mxu0 0.0
    %4524 = vmatpush1.msra.mxu0 0.0
    %4525 = vmatprep.subr.mxu0 0.0
    %v4526 = vand.u32 %v43, 4294901760
    %v4527 = vsub.f32 %v43, %v4526
    %v4528 = vand.u32 %v4527, 4294901760
    %4529 = vmatpush1.msra.mxu0 %v4528
    %4530 = vmatprep.subr.mxu0 0.0
    %v4531 = vand.u32 %v42, 4294901760
    %v4532 = vsub.f32 %v42, %v4531
    %v4533 = vand.u32 %v4532, 4294901760
    %4534 = vmatpush1.msra.mxu0 %v4533
    %4535 = vmatprep.subr.mxu0 0.0
    %v4536 = vand.u32 %v41, 4294901760
    %v4537 = vsub.f32 %v41, %v4536
    %v4538 = vand.u32 %v4537, 4294901760
    %4539 = vmatpush1.msra.mxu0 %v4538
    %4540 = vmatprep.subr.mxu0 0.0
    %v4541 = vand.u32 %v40, 4294901760
    %v4542 = vsub.f32 %v40, %v4541
    %v4543 = vand.u32 %v4542, 4294901760
    %4544 = vmatpush1.msra.mxu0 %v4543
    %4545 = vmatprep.subr.mxu0 0.0
    %4546 = vmatpush2.msra.mxu0 0.0
    %4547 = vmatprep.subr.mxu0 0.0
    %4548 = vmatpush2.msra.mxu0 0.0
    %4549 = vmatprep.subr.mxu0 0.0
    %4550 = vmatpush2.msra.mxu0 0.0
    %4551 = vmatprep.subr.mxu0 0.0
    %4552 = vmatpush2.msra.mxu0 0.0
    %4553 = vmatprep.subr.mxu0 0.0
    %4554 = vmatpush2.msra.mxu0 0.0
    %4555 = vmatprep.subr.mxu0 0.0
    %4556 = vmatpush2.msra.mxu0 0.0
    %4557 = vmatprep.subr.mxu0 0.0
    %4558 = vmatpush2.msra.mxu0 0.0
    %4559 = vmatprep.subr.mxu0 0.0
    %4560 = vmatpush2.msra.mxu0 0.0
    %4561 = vmatprep.subr.mxu0 0.0
    %4562 = vmatpush2.msra.mxu0 0.0
    %4563 = vmatprep.subr.mxu0 0.0
    %4564 = vmatpush2.msra.mxu0 0.0
    %4565 = vmatprep.subr.mxu0 0.0
    %4566 = vmatpush2.msra.mxu0 0.0
    %4567 = vmatprep.subr.mxu0 0.0
    %4568 = vmatpush2.msra.mxu0 0.0
    %4569 = vmatprep.subr.mxu0 0.0
    %4570 = vmatpush2.msra.mxu0 0.0
    %4571 = vmatprep.subr.mxu0 0.0
    %4572 = vmatpush2.msra.mxu0 0.0
    %4573 = vmatprep.subr.mxu0 0.0
    %4574 = vmatpush2.msra.mxu0 0.0
    %4575 = vmatprep.subr.mxu0 0.0
    %4576 = vmatpush2.msra.mxu0 0.0
    %4577 = vmatprep.mubr.f32.mxu0 0.0
    %v4578 = vand.u32 %v4172, 4294901760
    %4579 = vmatmul.mubr.f32.gmra.mxu0 %v4578
    %v4580 = vpop.f32.mrf.mxu0
    %v4581 = vadd.f32 %v4498, %v4580
    %v4582 = vpop.f32.mrf.mxu0
    %4583 = vdwg.mxu0
    %4584 = vmatprep.subr.mxu0 0.0
    %4585 = vmatpush1.msra.mxu0 0.0
    %4586 = vmatprep.subr.mxu0 0.0
    %4587 = vmatpush1.msra.mxu0 0.0
    %4588 = vmatprep.subr.mxu0 0.0
    %4589 = vmatpush1.msra.mxu0 0.0
    %4590 = vmatprep.subr.mxu0 0.0
    %4591 = vmatpush1.msra.mxu0 0.0
    %4592 = vmatprep.subr.mxu0 0.0
    %4593 = vmatpush1.msra.mxu0 0.0
    %4594 = vmatprep.subr.mxu0 0.0
    %4595 = vmatpush1.msra.mxu0 0.0
    %4596 = vmatprep.subr.mxu0 0.0
    %4597 = vmatpush1.msra.mxu0 0.0
    %4598 = vmatprep.subr.mxu0 0.0
    %4599 = vmatpush1.msra.mxu0 0.0
    %4600 = vmatprep.subr.mxu0 0.0
    %4601 = vmatpush1.msra.mxu0 0.0
    %4602 = vmatprep.subr.mxu0 0.0
    %4603 = vmatpush1.msra.mxu0 0.0
    %4604 = vmatprep.subr.mxu0 0.0
    %4605 = vmatpush1.msra.mxu0 0.0
    %4606 = vmatprep.subr.mxu0 0.0
    %4607 = vmatpush1.msra.mxu0 0.0
    %4608 = vmatprep.subr.mxu0 0.0
    %v4609 = vand.u32 %v43, 4294901760
    %4610 = vmatpush1.msra.mxu0 %v4609
    %4611 = vmatprep.subr.mxu0 0.0
    %v4612 = vand.u32 %v42, 4294901760
    %4613 = vmatpush1.msra.mxu0 %v4612
    %4614 = vmatprep.subr.mxu0 0.0
    %v4615 = vand.u32 %v41, 4294901760
    %4616 = vmatpush1.msra.mxu0 %v4615
    %4617 = vmatprep.subr.mxu0 0.0
    %v4618 = vand.u32 %v40, 4294901760
    %4619 = vmatpush1.msra.mxu0 %v4618
    %4620 = vmatprep.subr.mxu0 0.0
    %4621 = vmatpush2.msra.mxu0 0.0
    %4622 = vmatprep.subr.mxu0 0.0
    %4623 = vmatpush2.msra.mxu0 0.0
    %4624 = vmatprep.subr.mxu0 0.0
    %4625 = vmatpush2.msra.mxu0 0.0
    %4626 = vmatprep.subr.mxu0 0.0
    %4627 = vmatpush2.msra.mxu0 0.0
    %4628 = vmatprep.subr.mxu0 0.0
    %4629 = vmatpush2.msra.mxu0 0.0
    %4630 = vmatprep.subr.mxu0 0.0
    %4631 = vmatpush2.msra.mxu0 0.0
    %4632 = vmatprep.subr.mxu0 0.0
    %4633 = vmatpush2.msra.mxu0 0.0
    %4634 = vmatprep.subr.mxu0 0.0
    %4635 = vmatpush2.msra.mxu0 0.0
    %4636 = vmatprep.subr.mxu0 0.0
    %4637 = vmatpush2.msra.mxu0 0.0
    %4638 = vmatprep.subr.mxu0 0.0
    %4639 = vmatpush2.msra.mxu0 0.0
    %4640 = vmatprep.subr.mxu0 0.0
    %4641 = vmatpush2.msra.mxu0 0.0
    %4642 = vmatprep.subr.mxu0 0.0
    %4643 = vmatpush2.msra.mxu0 0.0
    %4644 = vmatprep.subr.mxu0 0.0
    %4645 = vmatpush2.msra.mxu0 0.0
    %4646 = vmatprep.subr.mxu0 0.0
    %4647 = vmatpush2.msra.mxu0 0.0
    %4648 = vmatprep.subr.mxu0 0.0
    %4649 = vmatpush2.msra.mxu0 0.0
    %4650 = vmatprep.subr.mxu0 0.0
    %4651 = vmatpush2.msra.mxu0 0.0
    %4652 = vmatprep.mubr.f32.mxu0 0.0
    %v4653 = vand.u32 %v4172, 4294901760
    %4654 = vmatmul.mubr.f32.gmra.mxu0 %v4653
    %v4655 = vpop.f32.mrf.mxu0
    %v4656 = vadd.f32 %v4581, %v4655
    %v4657 = vpop.f32.mrf.mxu0
    %4658 = vdwg.mxu0
    %v4660 = vrot.slane %v4656, 4
    %v4662 = vadd.f32 %v550, %v4660
    %v4663 = vtanh.pop %v4662
    %v4665 = vrot.slane %v4169, 5
    %4666 = vrot.lane.b32.xlu0 %v4665, 32
    %v4667 = vpop.permute.xlu0 %4666
    %v4669 = vsel %vm64, %v3621, %v4667
    %v4671 = vrot.slane %v4669, 3
    %v4672 = vsel %vm1544, %v4671, 0
    %4674 = vmatprep.subr.mxu0 0.0
    %4675 = vmatpush1.msra.mxu0 0.0
    %4676 = vmatprep.subr.mxu0 0.0
    %4677 = vmatpush1.msra.mxu0 0.0
    %4678 = vmatprep.subr.mxu0 0.0
    %4679 = vmatpush1.msra.mxu0 0.0
    %4680 = vmatprep.subr.mxu0 0.0
    %4681 = vmatpush1.msra.mxu0 0.0
    %4682 = vmatprep.subr.mxu0 0.0
    %4683 = vmatpush1.msra.mxu0 0.0
    %4684 = vmatprep.subr.mxu0 0.0
    %4685 = vmatpush1.msra.mxu0 0.0
    %4686 = vmatprep.subr.mxu0 0.0
    %4687 = vmatpush1.msra.mxu0 0.0
    %4688 = vmatprep.subr.mxu0 0.0
    %4689 = vmatpush1.msra.mxu0 0.0
    %4690 = vmatprep.subr.mxu0 0.0
    %v4691 = vand.u32 %v52, 4294901760
    %4692 = vmatpush1.msra.mxu0 %v4691
    %4693 = vmatprep.subr.mxu0 0.0
    %v4694 = vand.u32 %v51, 4294901760
    %4695 = vmatpush1.msra.mxu0 %v4694
    %4696 = vmatprep.subr.mxu0 0.0
    %v4697 = vand.u32 %v50, 4294901760
    %4698 = vmatpush1.msra.mxu0 %v4697
    %4699 = vmatprep.subr.mxu0 0.0
    %v4700 = vand.u32 %v49, 4294901760
    %4701 = vmatpush1.msra.mxu0 %v4700
    %4702 = vmatprep.subr.mxu0 0.0
    %v4703 = vand.u32 %v48, 4294901760
    %4704 = vmatpush1.msra.mxu0 %v4703
    %4705 = vmatprep.subr.mxu0 0.0
    %v4706 = vand.u32 %v47, 4294901760
    %4707 = vmatpush1.msra.mxu0 %v4706
    %4708 = vmatprep.subr.mxu0 0.0
    %v4709 = vand.u32 %v46, 4294901760
    %4710 = vmatpush1.msra.mxu0 %v4709
    %4711 = vmatprep.subr.mxu0 0.0
    %v4712 = vand.u32 %v45, 4294901760
    %4713 = vmatpush1.msra.mxu0 %v4712
    %4714 = vmatprep.subr.mxu0 0.0
    %4715 = vmatpush2.msra.mxu0 0.0
    %4716 = vmatprep.subr.mxu0 0.0
    %4717 = vmatpush2.msra.mxu0 0.0
    %4718 = vmatprep.subr.mxu0 0.0
    %4719 = vmatpush2.msra.mxu0 0.0
    %4720 = vmatprep.subr.mxu0 0.0
    %4721 = vmatpush2.msra.mxu0 0.0
    %4722 = vmatprep.subr.mxu0 0.0
    %4723 = vmatpush2.msra.mxu0 0.0
    %4724 = vmatprep.subr.mxu0 0.0
    %4725 = vmatpush2.msra.mxu0 0.0
    %4726 = vmatprep.subr.mxu0 0.0
    %4727 = vmatpush2.msra.mxu0 0.0
    %4728 = vmatprep.subr.mxu0 0.0
    %4729 = vmatpush2.msra.mxu0 0.0
    %4730 = vmatprep.subr.mxu0 0.0
    %4731 = vmatpush2.msra.mxu0 0.0
    %4732 = vmatprep.subr.mxu0 0.0
    %4733 = vmatpush2.msra.mxu0 0.0
    %4734 = vmatprep.subr.mxu0 0.0
    %4735 = vmatpush2.msra.mxu0 0.0
    %4736 = vmatprep.subr.mxu0 0.0
    %4737 = vmatpush2.msra.mxu0 0.0
    %4738 = vmatprep.subr.mxu0 0.0
    %4739 = vmatpush2.msra.mxu0 0.0
    %4740 = vmatprep.subr.mxu0 0.0
    %4741 = vmatpush2.msra.mxu0 0.0
    %4742 = vmatprep.subr.mxu0 0.0
    %4743 = vmatpush2.msra.mxu0 0.0
    %4744 = vmatprep.subr.mxu0 0.0
    %4745 = vmatpush2.msra.mxu0 0.0
    %4746 = vmatprep.mubr.f32.mxu0 0.0
    %v4747 = vand.u32 %v4672, 4294901760
    %v4748 = vsub.f32 %v4672, %v4747
    %v4749 = vand.u32 %v4748, 4294901760
    %v4750 = vsub.f32 %v4748, %v4749
    %v4751 = vand.u32 %v4750, 4294901760
    %4752 = vmatmul.mubr.f32.gmra.mxu0 %v4751
    %v4753 = vpop.f32.mrf.mxu0
    %v4754 = vadd.f32 %v1542, %v4753
    %v4755 = vpop.f32.mrf.mxu0
    %4756 = vdwg.mxu0
    %4757 = vmatprep.subr.mxu0 0.0
    %4758 = vmatpush1.msra.mxu0 0.0
    %4759 = vmatprep.subr.mxu0 0.0
    %4760 = vmatpush1.msra.mxu0 0.0
    %4761 = vmatprep.subr.mxu0 0.0
    %4762 = vmatpush1.msra.mxu0 0.0
    %4763 = vmatprep.subr.mxu0 0.0
    %4764 = vmatpush1.msra.mxu0 0.0
    %4765 = vmatprep.subr.mxu0 0.0
    %4766 = vmatpush1.msra.mxu0 0.0
    %4767 = vmatprep.subr.mxu0 0.0
    %4768 = vmatpush1.msra.mxu0 0.0
    %4769 = vmatprep.subr.mxu0 0.0
    %4770 = vmatpush1.msra.mxu0 0.0
    %4771 = vmatprep.subr.mxu0 0.0
    %4772 = vmatpush1.msra.mxu0 0.0
    %4773 = vmatprep.subr.mxu0 0.0
    %v4774 = vand.u32 %v52, 4294901760
    %v4775 = vsub.f32 %v52, %v4774
    %v4776 = vand.u32 %v4775, 4294901760
    %v4777 = vsub.f32 %v4775, %v4776
    %v4778 = vand.u32 %v4777, 4294901760
    %4779 = vmatpush1.msra.mxu0 %v4778
    %4780 = vmatprep.subr.mxu0 0.0
    %v4781 = vand.u32 %v51, 4294901760
    %v4782 = vsub.f32 %v51, %v4781
    %v4783 = vand.u32 %v4782, 4294901760
    %v4784 = vsub.f32 %v4782, %v4783
    %v4785 = vand.u32 %v4784, 4294901760
    %4786 = vmatpush1.msra.mxu0 %v4785
    %4787 = vmatprep.subr.mxu0 0.0
    %v4788 = vand.u32 %v50, 4294901760
    %v4789 = vsub.f32 %v50, %v4788
    %v4790 = vand.u32 %v4789, 4294901760
    %v4791 = vsub.f32 %v4789, %v4790
    %v4792 = vand.u32 %v4791, 4294901760
    %4793 = vmatpush1.msra.mxu0 %v4792
    %4794 = vmatprep.subr.mxu0 0.0
    %v4795 = vand.u32 %v49, 4294901760
    %v4796 = vsub.f32 %v49, %v4795
    %v4797 = vand.u32 %v4796, 4294901760
    %v4798 = vsub.f32 %v4796, %v4797
    %v4799 = vand.u32 %v4798, 4294901760
    %4800 = vmatpush1.msra.mxu0 %v4799
    %4801 = vmatprep.subr.mxu0 0.0
    %v4802 = vand.u32 %v48, 4294901760
    %v4803 = vsub.f32 %v48, %v4802
    %v4804 = vand.u32 %v4803, 4294901760
    %v4805 = vsub.f32 %v4803, %v4804
    %v4806 = vand.u32 %v4805, 4294901760
    %4807 = vmatpush1.msra.mxu0 %v4806
    %4808 = vmatprep.subr.mxu0 0.0
    %v4809 = vand.u32 %v47, 4294901760
    %v4810 = vsub.f32 %v47, %v4809
    %v4811 = vand.u32 %v4810, 4294901760
    %v4812 = vsub.f32 %v4810, %v4811
    %v4813 = vand.u32 %v4812, 4294901760
    %4814 = vmatpush1.msra.mxu0 %v4813
    %4815 = vmatprep.subr.mxu0 0.0
    %v4816 = vand.u32 %v46, 4294901760
    %v4817 = vsub.f32 %v46, %v4816
    %v4818 = vand.u32 %v4817, 4294901760
    %v4819 = vsub.f32 %v4817, %v4818
    %v4820 = vand.u32 %v4819, 4294901760
    %4821 = vmatpush1.msra.mxu0 %v4820
    %4822 = vmatprep.subr.mxu0 0.0
    %v4823 = vand.u32 %v45, 4294901760
    %v4824 = vsub.f32 %v45, %v4823
    %v4825 = vand.u32 %v4824, 4294901760
    %v4826 = vsub.f32 %v4824, %v4825
    %v4827 = vand.u32 %v4826, 4294901760
    %4828 = vmatpush1.msra.mxu0 %v4827
    %4829 = vmatprep.subr.mxu0 0.0
    %4830 = vmatpush2.msra.mxu0 0.0
    %4831 = vmatprep.subr.mxu0 0.0
    %4832 = vmatpush2.msra.mxu0 0.0
    %4833 = vmatprep.subr.mxu0 0.0
    %4834 = vmatpush2.msra.mxu0 0.0
    %4835 = vmatprep.subr.mxu0 0.0
    %4836 = vmatpush2.msra.mxu0 0.0
    %4837 = vmatprep.subr.mxu0 0.0
    %4838 = vmatpush2.msra.mxu0 0.0
    %4839 = vmatprep.subr.mxu0 0.0
    %4840 = vmatpush2.msra.mxu0 0.0
    %4841 = vmatprep.subr.mxu0 0.0
    %4842 = vmatpush2.msra.mxu0 0.0
    %4843 = vmatprep.subr.mxu0 0.0
    %4844 = vmatpush2.msra.mxu0 0.0
    %4845 = vmatprep.subr.mxu0 0.0
    %4846 = vmatpush2.msra.mxu0 0.0
    %4847 = vmatprep.subr.mxu0 0.0
    %4848 = vmatpush2.msra.mxu0 0.0
    %4849 = vmatprep.subr.mxu0 0.0
    %4850 = vmatpush2.msra.mxu0 0.0
    %4851 = vmatprep.subr.mxu0 0.0
    %4852 = vmatpush2.msra.mxu0 0.0
    %4853 = vmatprep.subr.mxu0 0.0
    %4854 = vmatpush2.msra.mxu0 0.0
    %4855 = vmatprep.subr.mxu0 0.0
    %4856 = vmatpush2.msra.mxu0 0.0
    %4857 = vmatprep.subr.mxu0 0.0
    %4858 = vmatpush2.msra.mxu0 0.0
    %4859 = vmatprep.subr.mxu0 0.0
    %4860 = vmatpush2.msra.mxu0 0.0
    %4861 = vmatprep.mubr.f32.mxu0 0.0
    %v4862 = vand.u32 %v4672, 4294901760
    %4863 = vmatmul.mubr.f32.gmra.mxu0 %v4862
    %v4864 = vpop.f32.mrf.mxu0
    %v4865 = vadd.f32 %v4754, %v4864
    %v4866 = vpop.f32.mrf.mxu0
    %4867 = vdwg.mxu0
    %4868 = vmatprep.subr.mxu0 0.0
    %4869 = vmatpush1.msra.mxu0 0.0
    %4870 = vmatprep.subr.mxu0 0.0
    %4871 = vmatpush1.msra.mxu0 0.0
    %4872 = vmatprep.subr.mxu0 0.0
    %4873 = vmatpush1.msra.mxu0 0.0
    %4874 = vmatprep.subr.mxu0 0.0
    %4875 = vmatpush1.msra.mxu0 0.0
    %4876 = vmatprep.subr.mxu0 0.0
    %4877 = vmatpush1.msra.mxu0 0.0
    %4878 = vmatprep.subr.mxu0 0.0
    %4879 = vmatpush1.msra.mxu0 0.0
    %4880 = vmatprep.subr.mxu0 0.0
    %4881 = vmatpush1.msra.mxu0 0.0
    %4882 = vmatprep.subr.mxu0 0.0
    %4883 = vmatpush1.msra.mxu0 0.0
    %4884 = vmatprep.subr.mxu0 0.0
    %v4885 = vand.u32 %v52, 4294901760
    %v4886 = vsub.f32 %v52, %v4885
    %4887 = vmatpush1.msra.mxu0 %v4886
    %4888 = vmatprep.subr.mxu0 0.0
    %v4889 = vand.u32 %v51, 4294901760
    %v4890 = vsub.f32 %v51, %v4889
    %4891 = vmatpush1.msra.mxu0 %v4890
    %4892 = vmatprep.subr.mxu0 0.0
    %v4893 = vand.u32 %v50, 4294901760
    %v4894 = vsub.f32 %v50, %v4893
    %4895 = vmatpush1.msra.mxu0 %v4894
    %4896 = vmatprep.subr.mxu0 0.0
    %v4897 = vand.u32 %v49, 4294901760
    %v4898 = vsub.f32 %v49, %v4897
    %4899 = vmatpush1.msra.mxu0 %v4898
    %4900 = vmatprep.subr.mxu0 0.0
    %v4901 = vand.u32 %v48, 4294901760
    %v4902 = vsub.f32 %v48, %v4901
    %4903 = vmatpush1.msra.mxu0 %v4902
    %4904 = vmatprep.subr.mxu0 0.0
    %v4905 = vand.u32 %v47, 4294901760
    %v4906 = vsub.f32 %v47, %v4905
    %4907 = vmatpush1.msra.mxu0 %v4906
    %4908 = vmatprep.subr.mxu0 0.0
    %v4909 = vand.u32 %v46, 4294901760
    %v4910 = vsub.f32 %v46, %v4909
    %4911 = vmatpush1.msra.mxu0 %v4910
    %4912 = vmatprep.subr.mxu0 0.0
    %v4913 = vand.u32 %v45, 4294901760
    %v4914 = vsub.f32 %v45, %v4913
    %4915 = vmatpush1.msra.mxu0 %v4914
    %4916 = vmatprep.subr.mxu0 0.0
    %4917 = vmatpush2.msra.mxu0 0.0
    %4918 = vmatprep.subr.mxu0 0.0
    %4919 = vmatpush2.msra.mxu0 0.0
    %4920 = vmatprep.subr.mxu0 0.0
    %4921 = vmatpush2.msra.mxu0 0.0
    %4922 = vmatprep.subr.mxu0 0.0
    %4923 = vmatpush2.msra.mxu0 0.0
    %4924 = vmatprep.subr.mxu0 0.0
    %4925 = vmatpush2.msra.mxu0 0.0
    %4926 = vmatprep.subr.mxu0 0.0
    %4927 = vmatpush2.msra.mxu0 0.0
    %4928 = vmatprep.subr.mxu0 0.0
    %4929 = vmatpush2.msra.mxu0 0.0
    %4930 = vmatprep.subr.mxu0 0.0
    %4931 = vmatpush2.msra.mxu0 0.0
    %4932 = vmatprep.subr.mxu0 0.0
    %4933 = vmatpush2.msra.mxu0 0.0
    %4934 = vmatprep.subr.mxu0 0.0
    %4935 = vmatpush2.msra.mxu0 0.0
    %4936 = vmatprep.subr.mxu0 0.0
    %4937 = vmatpush2.msra.mxu0 0.0
    %4938 = vmatprep.subr.mxu0 0.0
    %4939 = vmatpush2.msra.mxu0 0.0
    %4940 = vmatprep.subr.mxu0 0.0
    %4941 = vmatpush2.msra.mxu0 0.0
    %4942 = vmatprep.subr.mxu0 0.0
    %4943 = vmatpush2.msra.mxu0 0.0
    %4944 = vmatprep.subr.mxu0 0.0
    %4945 = vmatpush2.msra.mxu0 0.0
    %4946 = vmatprep.subr.mxu0 0.0
    %4947 = vmatpush2.msra.mxu0 0.0
    %4948 = vmatprep.mubr.f32.mxu0 0.0
    %v4949 = vand.u32 %v4672, 4294901760
    %v4950 = vsub.f32 %v4672, %v4949
    %4951 = vmatmul.mubr.f32.gmra.mxu0 %v4950
    %v4952 = vpop.f32.mrf.mxu0
    %v4953 = vadd.f32 %v4865, %v4952
    %v4954 = vpop.f32.mrf.mxu0
    %4955 = vdwg.mxu0
    %4956 = vmatprep.subr.mxu0 0.0
    %4957 = vmatpush1.msra.mxu0 0.0
    %4958 = vmatprep.subr.mxu0 0.0
    %4959 = vmatpush1.msra.mxu0 0.0
    %4960 = vmatprep.subr.mxu0 0.0
    %4961 = vmatpush1.msra.mxu0 0.0
    %4962 = vmatprep.subr.mxu0 0.0
    %4963 = vmatpush1.msra.mxu0 0.0
    %4964 = vmatprep.subr.mxu0 0.0
    %4965 = vmatpush1.msra.mxu0 0.0
    %4966 = vmatprep.subr.mxu0 0.0
    %4967 = vmatpush1.msra.mxu0 0.0
    %4968 = vmatprep.subr.mxu0 0.0
    %4969 = vmatpush1.msra.mxu0 0.0
    %4970 = vmatprep.subr.mxu0 0.0
    %4971 = vmatpush1.msra.mxu0 0.0
    %4972 = vmatprep.subr.mxu0 0.0
    %v4973 = vand.u32 %v52, 4294901760
    %4974 = vmatpush1.msra.mxu0 %v4973
    %4975 = vmatprep.subr.mxu0 0.0
    %v4976 = vand.u32 %v51, 4294901760
    %4977 = vmatpush1.msra.mxu0 %v4976
    %4978 = vmatprep.subr.mxu0 0.0
    %v4979 = vand.u32 %v50, 4294901760
    %4980 = vmatpush1.msra.mxu0 %v4979
    %4981 = vmatprep.subr.mxu0 0.0
    %v4982 = vand.u32 %v49, 4294901760
    %4983 = vmatpush1.msra.mxu0 %v4982
    %4984 = vmatprep.subr.mxu0 0.0
    %v4985 = vand.u32 %v48, 4294901760
    %4986 = vmatpush1.msra.mxu0 %v4985
    %4987 = vmatprep.subr.mxu0 0.0
    %v4988 = vand.u32 %v47, 4294901760
    %4989 = vmatpush1.msra.mxu0 %v4988
    %4990 = vmatprep.subr.mxu0 0.0
    %v4991 = vand.u32 %v46, 4294901760
    %4992 = vmatpush1.msra.mxu0 %v4991
    %4993 = vmatprep.subr.mxu0 0.0
    %v4994 = vand.u32 %v45, 4294901760
    %4995 = vmatpush1.msra.mxu0 %v4994
    %4996 = vmatprep.subr.mxu0 0.0
    %4997 = vmatpush2.msra.mxu0 0.0
    %4998 = vmatprep.subr.mxu0 0.0
    %4999 = vmatpush2.msra.mxu0 0.0
    %5000 = vmatprep.subr.mxu0 0.0
    %5001 = vmatpush2.msra.mxu0 0.0
    %5002 = vmatprep.subr.mxu0 0.0
    %5003 = vmatpush2.msra.mxu0 0.0
    %5004 = vmatprep.subr.mxu0 0.0
    %5005 = vmatpush2.msra.mxu0 0.0
    %5006 = vmatprep.subr.mxu0 0.0
    %5007 = vmatpush2.msra.mxu0 0.0
    %5008 = vmatprep.subr.mxu0 0.0
    %5009 = vmatpush2.msra.mxu0 0.0
    %5010 = vmatprep.subr.mxu0 0.0
    %5011 = vmatpush2.msra.mxu0 0.0
    %5012 = vmatprep.subr.mxu0 0.0
    %5013 = vmatpush2.msra.mxu0 0.0
    %5014 = vmatprep.subr.mxu0 0.0
    %5015 = vmatpush2.msra.mxu0 0.0
    %5016 = vmatprep.subr.mxu0 0.0
    %5017 = vmatpush2.msra.mxu0 0.0
    %5018 = vmatprep.subr.mxu0 0.0
    %5019 = vmatpush2.msra.mxu0 0.0
    %5020 = vmatprep.subr.mxu0 0.0
    %5021 = vmatpush2.msra.mxu0 0.0
    %5022 = vmatprep.subr.mxu0 0.0
    %5023 = vmatpush2.msra.mxu0 0.0
    %5024 = vmatprep.subr.mxu0 0.0
    %5025 = vmatpush2.msra.mxu0 0.0
    %5026 = vmatprep.subr.mxu0 0.0
    %5027 = vmatpush2.msra.mxu0 0.0
    %5028 = vmatprep.mubr.f32.mxu0 0.0
    %v5029 = vand.u32 %v4672, 4294901760
    %v5030 = vsub.f32 %v4672, %v5029
    %v5031 = vand.u32 %v5030, 4294901760
    %5032 = vmatmul.mubr.f32.gmra.mxu0 %v5031
    %v5033 = vpop.f32.mrf.mxu0
    %v5034 = vadd.f32 %v4953, %v5033
    %v5035 = vpop.f32.mrf.mxu0
    %5036 = vdwg.mxu0
    %5037 = vmatprep.subr.mxu0 0.0
    %5038 = vmatpush1.msra.mxu0 0.0
    %5039 = vmatprep.subr.mxu0 0.0
    %5040 = vmatpush1.msra.mxu0 0.0
    %5041 = vmatprep.subr.mxu0 0.0
    %5042 = vmatpush1.msra.mxu0 0.0
    %5043 = vmatprep.subr.mxu0 0.0
    %5044 = vmatpush1.msra.mxu0 0.0
    %5045 = vmatprep.subr.mxu0 0.0
    %5046 = vmatpush1.msra.mxu0 0.0
    %5047 = vmatprep.subr.mxu0 0.0
    %5048 = vmatpush1.msra.mxu0 0.0
    %5049 = vmatprep.subr.mxu0 0.0
    %5050 = vmatpush1.msra.mxu0 0.0
    %5051 = vmatprep.subr.mxu0 0.0
    %5052 = vmatpush1.msra.mxu0 0.0
    %5053 = vmatprep.subr.mxu0 0.0
    %v5054 = vand.u32 %v52, 4294901760
    %v5055 = vsub.f32 %v52, %v5054
    %v5056 = vand.u32 %v5055, 4294901760
    %5057 = vmatpush1.msra.mxu0 %v5056
    %5058 = vmatprep.subr.mxu0 0.0
    %v5059 = vand.u32 %v51, 4294901760
    %v5060 = vsub.f32 %v51, %v5059
    %v5061 = vand.u32 %v5060, 4294901760
    %5062 = vmatpush1.msra.mxu0 %v5061
    %5063 = vmatprep.subr.mxu0 0.0
    %v5064 = vand.u32 %v50, 4294901760
    %v5065 = vsub.f32 %v50, %v5064
    %v5066 = vand.u32 %v5065, 4294901760
    %5067 = vmatpush1.msra.mxu0 %v5066
    %5068 = vmatprep.subr.mxu0 0.0
    %v5069 = vand.u32 %v49, 4294901760
    %v5070 = vsub.f32 %v49, %v5069
    %v5071 = vand.u32 %v5070, 4294901760
    %5072 = vmatpush1.msra.mxu0 %v5071
    %5073 = vmatprep.subr.mxu0 0.0
    %v5074 = vand.u32 %v48, 4294901760
    %v5075 = vsub.f32 %v48, %v5074
    %v5076 = vand.u32 %v5075, 4294901760
    %5077 = vmatpush1.msra.mxu0 %v5076
    %5078 = vmatprep.subr.mxu0 0.0
    %v5079 = vand.u32 %v47, 4294901760
    %v5080 = vsub.f32 %v47, %v5079
    %v5081 = vand.u32 %v5080, 4294901760
    %5082 = vmatpush1.msra.mxu0 %v5081
    %5083 = vmatprep.subr.mxu0 0.0
    %v5084 = vand.u32 %v46, 4294901760
    %v5085 = vsub.f32 %v46, %v5084
    %v5086 = vand.u32 %v5085, 4294901760
    %5087 = vmatpush1.msra.mxu0 %v5086
    %5088 = vmatprep.subr.mxu0 0.0
    %v5089 = vand.u32 %v45, 4294901760
    %v5090 = vsub.f32 %v45, %v5089
    %v5091 = vand.u32 %v5090, 4294901760
    %5092 = vmatpush1.msra.mxu0 %v5091
    %5093 = vmatprep.subr.mxu0 0.0
    %5094 = vmatpush2.msra.mxu0 0.0
    %5095 = vmatprep.subr.mxu0 0.0
    %5096 = vmatpush2.msra.mxu0 0.0
    %5097 = vmatprep.subr.mxu0 0.0
    %5098 = vmatpush2.msra.mxu0 0.0
    %5099 = vmatprep.subr.mxu0 0.0
    %5100 = vmatpush2.msra.mxu0 0.0
    %5101 = vmatprep.subr.mxu0 0.0
    %5102 = vmatpush2.msra.mxu0 0.0
    %5103 = vmatprep.subr.mxu0 0.0
    %5104 = vmatpush2.msra.mxu0 0.0
    %5105 = vmatprep.subr.mxu0 0.0
    %5106 = vmatpush2.msra.mxu0 0.0
    %5107 = vmatprep.subr.mxu0 0.0
    %5108 = vmatpush2.msra.mxu0 0.0
    %5109 = vmatprep.subr.mxu0 0.0
    %5110 = vmatpush2.msra.mxu0 0.0
    %5111 = vmatprep.subr.mxu0 0.0
    %5112 = vmatpush2.msra.mxu0 0.0
    %5113 = vmatprep.subr.mxu0 0.0
    %5114 = vmatpush2.msra.mxu0 0.0
    %5115 = vmatprep.subr.mxu0 0.0
    %5116 = vmatpush2.msra.mxu0 0.0
    %5117 = vmatprep.subr.mxu0 0.0
    %5118 = vmatpush2.msra.mxu0 0.0
    %5119 = vmatprep.subr.mxu0 0.0
    %5120 = vmatpush2.msra.mxu0 0.0
    %5121 = vmatprep.subr.mxu0 0.0
    %5122 = vmatpush2.msra.mxu0 0.0
    %5123 = vmatprep.subr.mxu0 0.0
    %5124 = vmatpush2.msra.mxu0 0.0
    %5125 = vmatprep.mubr.f32.mxu0 0.0
    %v5126 = vand.u32 %v4672, 4294901760
    %5127 = vmatmul.mubr.f32.gmra.mxu0 %v5126
    %v5128 = vpop.f32.mrf.mxu0
    %v5129 = vadd.f32 %v5034, %v5128
    %v5130 = vpop.f32.mrf.mxu0
    %5131 = vdwg.mxu0
    %5132 = vmatprep.subr.mxu0 0.0
    %5133 = vmatpush1.msra.mxu0 0.0
    %5134 = vmatprep.subr.mxu0 0.0
    %5135 = vmatpush1.msra.mxu0 0.0
    %5136 = vmatprep.subr.mxu0 0.0
    %5137 = vmatpush1.msra.mxu0 0.0
    %5138 = vmatprep.subr.mxu0 0.0
    %5139 = vmatpush1.msra.mxu0 0.0
    %5140 = vmatprep.subr.mxu0 0.0
    %5141 = vmatpush1.msra.mxu0 0.0
    %5142 = vmatprep.subr.mxu0 0.0
    %5143 = vmatpush1.msra.mxu0 0.0
    %5144 = vmatprep.subr.mxu0 0.0
    %5145 = vmatpush1.msra.mxu0 0.0
    %5146 = vmatprep.subr.mxu0 0.0
    %5147 = vmatpush1.msra.mxu0 0.0
    %5148 = vmatprep.subr.mxu0 0.0
    %v5149 = vand.u32 %v52, 4294901760
    %5150 = vmatpush1.msra.mxu0 %v5149
    %5151 = vmatprep.subr.mxu0 0.0
    %v5152 = vand.u32 %v51, 4294901760
    %5153 = vmatpush1.msra.mxu0 %v5152
    %5154 = vmatprep.subr.mxu0 0.0
    %v5155 = vand.u32 %v50, 4294901760
    %5156 = vmatpush1.msra.mxu0 %v5155
    %5157 = vmatprep.subr.mxu0 0.0
    %v5158 = vand.u32 %v49, 4294901760
    %5159 = vmatpush1.msra.mxu0 %v5158
    %5160 = vmatprep.subr.mxu0 0.0
    %v5161 = vand.u32 %v48, 4294901760
    %5162 = vmatpush1.msra.mxu0 %v5161
    %5163 = vmatprep.subr.mxu0 0.0
    %v5164 = vand.u32 %v47, 4294901760
    %5165 = vmatpush1.msra.mxu0 %v5164
    %5166 = vmatprep.subr.mxu0 0.0
    %v5167 = vand.u32 %v46, 4294901760
    %5168 = vmatpush1.msra.mxu0 %v5167
    %5169 = vmatprep.subr.mxu0 0.0
    %v5170 = vand.u32 %v45, 4294901760
    %5171 = vmatpush1.msra.mxu0 %v5170
    %5172 = vmatprep.subr.mxu0 0.0
    %5173 = vmatpush2.msra.mxu0 0.0
    %5174 = vmatprep.subr.mxu0 0.0
    %5175 = vmatpush2.msra.mxu0 0.0
    %5176 = vmatprep.subr.mxu0 0.0
    %5177 = vmatpush2.msra.mxu0 0.0
    %5178 = vmatprep.subr.mxu0 0.0
    %5179 = vmatpush2.msra.mxu0 0.0
    %5180 = vmatprep.subr.mxu0 0.0
    %5181 = vmatpush2.msra.mxu0 0.0
    %5182 = vmatprep.subr.mxu0 0.0
    %5183 = vmatpush2.msra.mxu0 0.0
    %5184 = vmatprep.subr.mxu0 0.0
    %5185 = vmatpush2.msra.mxu0 0.0
    %5186 = vmatprep.subr.mxu0 0.0
    %5187 = vmatpush2.msra.mxu0 0.0
    %5188 = vmatprep.subr.mxu0 0.0
    %5189 = vmatpush2.msra.mxu0 0.0
    %5190 = vmatprep.subr.mxu0 0.0
    %5191 = vmatpush2.msra.mxu0 0.0
    %5192 = vmatprep.subr.mxu0 0.0
    %5193 = vmatpush2.msra.mxu0 0.0
    %5194 = vmatprep.subr.mxu0 0.0
    %5195 = vmatpush2.msra.mxu0 0.0
    %5196 = vmatprep.subr.mxu0 0.0
    %5197 = vmatpush2.msra.mxu0 0.0
    %5198 = vmatprep.subr.mxu0 0.0
    %5199 = vmatpush2.msra.mxu0 0.0
    %5200 = vmatprep.subr.mxu0 0.0
    %5201 = vmatpush2.msra.mxu0 0.0
    %5202 = vmatprep.subr.mxu0 0.0
    %5203 = vmatpush2.msra.mxu0 0.0
    %5204 = vmatprep.mubr.f32.mxu0 0.0
    %v5205 = vand.u32 %v4672, 4294901760
    %5206 = vmatmul.mubr.f32.gmra.mxu0 %v5205
    %v5207 = vpop.f32.mrf.mxu0
    %v5208 = vadd.f32 %v5129, %v5207
    %v5209 = vpop.f32.mrf.mxu0
    %5210 = vdwg.mxu0
    %v5211 = vtanh.pop %v5208
    %v5213 = vrot.slane %v4663, 4
    %v5214 = vsel %vm64, %v5213, 0
    %5216 = vmatprep.subr.mxu0 0.0
    %5217 = vmatpush1.msra.mxu0 0.0
    %5218 = vmatprep.subr.mxu0 0.0
    %5219 = vmatpush1.msra.mxu0 0.0
    %5220 = vmatprep.subr.mxu0 0.0
    %5221 = vmatpush1.msra.mxu0 0.0
    %5222 = vmatprep.subr.mxu0 0.0
    %5223 = vmatpush1.msra.mxu0 0.0
    %5224 = vmatprep.subr.mxu0 0.0
    %5225 = vmatpush1.msra.mxu0 0.0
    %5226 = vmatprep.subr.mxu0 0.0
    %5227 = vmatpush1.msra.mxu0 0.0
    %5228 = vmatprep.subr.mxu0 0.0
    %5229 = vmatpush1.msra.mxu0 0.0
    %5230 = vmatprep.subr.mxu0 0.0
    %5231 = vmatpush1.msra.mxu0 0.0
    %5232 = vmatprep.subr.mxu0 0.0
    %5233 = vmatpush1.msra.mxu0 0.0
    %5234 = vmatprep.subr.mxu0 0.0
    %5235 = vmatpush1.msra.mxu0 0.0
    %5236 = vmatprep.subr.mxu0 0.0
    %5237 = vmatpush1.msra.mxu0 0.0
    %5238 = vmatprep.subr.mxu0 0.0
    %5239 = vmatpush1.msra.mxu0 0.0
    %5240 = vmatprep.subr.mxu0 0.0
    %v5241 = vand.u32 %v43, 4294901760
    %5242 = vmatpush1.msra.mxu0 %v5241
    %5243 = vmatprep.subr.mxu0 0.0
    %v5244 = vand.u32 %v42, 4294901760
    %5245 = vmatpush1.msra.mxu0 %v5244
    %5246 = vmatprep.subr.mxu0 0.0
    %v5247 = vand.u32 %v41, 4294901760
    %5248 = vmatpush1.msra.mxu0 %v5247
    %5249 = vmatprep.subr.mxu0 0.0
    %v5250 = vand.u32 %v40, 4294901760
    %5251 = vmatpush1.msra.mxu0 %v5250
    %5252 = vmatprep.subr.mxu0 0.0
    %5253 = vmatpush2.msra.mxu0 0.0
    %5254 = vmatprep.subr.mxu0 0.0
    %5255 = vmatpush2.msra.mxu0 0.0
    %5256 = vmatprep.subr.mxu0 0.0
    %5257 = vmatpush2.msra.mxu0 0.0
    %5258 = vmatprep.subr.mxu0 0.0
    %5259 = vmatpush2.msra.mxu0 0.0
    %5260 = vmatprep.subr.mxu0 0.0
    %5261 = vmatpush2.msra.mxu0 0.0
    %5262 = vmatprep.subr.mxu0 0.0
    %5263 = vmatpush2.msra.mxu0 0.0
    %5264 = vmatprep.subr.mxu0 0.0
    %5265 = vmatpush2.msra.mxu0 0.0
    %5266 = vmatprep.subr.mxu0 0.0
    %5267 = vmatpush2.msra.mxu0 0.0
    %5268 = vmatprep.subr.mxu0 0.0
    %5269 = vmatpush2.msra.mxu0 0.0
    %5270 = vmatprep.subr.mxu0 0.0
    %5271 = vmatpush2.msra.mxu0 0.0
    %5272 = vmatprep.subr.mxu0 0.0
    %5273 = vmatpush2.msra.mxu0 0.0
    %5274 = vmatprep.subr.mxu0 0.0
    %5275 = vmatpush2.msra.mxu0 0.0
    %5276 = vmatprep.subr.mxu0 0.0
    %5277 = vmatpush2.msra.mxu0 0.0
    %5278 = vmatprep.subr.mxu0 0.0
    %5279 = vmatpush2.msra.mxu0 0.0
    %5280 = vmatprep.subr.mxu0 0.0
    %5281 = vmatpush2.msra.mxu0 0.0
    %5282 = vmatprep.subr.mxu0 0.0
    %5283 = vmatpush2.msra.mxu0 0.0
    %5284 = vmatprep.mubr.f32.mxu0 0.0
    %v5285 = vand.u32 %v5214, 4294901760
    %v5286 = vsub.f32 %v5214, %v5285
    %v5287 = vand.u32 %v5286, 4294901760
    %v5288 = vsub.f32 %v5286, %v5287
    %v5289 = vand.u32 %v5288, 4294901760
    %5290 = vmatmul.mubr.f32.gmra.mxu0 %v5289
    %v5291 = vpop.f32.mrf.mxu0
    %v5292 = vadd.f32 0.0, %v5291
    %v5293 = vpop.f32.mrf.mxu0
    %5294 = vdwg.mxu0
    %5295 = vmatprep.subr.mxu0 0.0
    %5296 = vmatpush1.msra.mxu0 0.0
    %5297 = vmatprep.subr.mxu0 0.0
    %5298 = vmatpush1.msra.mxu0 0.0
    %5299 = vmatprep.subr.mxu0 0.0
    %5300 = vmatpush1.msra.mxu0 0.0
    %5301 = vmatprep.subr.mxu0 0.0
    %5302 = vmatpush1.msra.mxu0 0.0
    %5303 = vmatprep.subr.mxu0 0.0
    %5304 = vmatpush1.msra.mxu0 0.0
    %5305 = vmatprep.subr.mxu0 0.0
    %5306 = vmatpush1.msra.mxu0 0.0
    %5307 = vmatprep.subr.mxu0 0.0
    %5308 = vmatpush1.msra.mxu0 0.0
    %5309 = vmatprep.subr.mxu0 0.0
    %5310 = vmatpush1.msra.mxu0 0.0
    %5311 = vmatprep.subr.mxu0 0.0
    %5312 = vmatpush1.msra.mxu0 0.0
    %5313 = vmatprep.subr.mxu0 0.0
    %5314 = vmatpush1.msra.mxu0 0.0
    %5315 = vmatprep.subr.mxu0 0.0
    %5316 = vmatpush1.msra.mxu0 0.0
    %5317 = vmatprep.subr.mxu0 0.0
    %5318 = vmatpush1.msra.mxu0 0.0
    %5319 = vmatprep.subr.mxu0 0.0
    %v5320 = vand.u32 %v43, 4294901760
    %v5321 = vsub.f32 %v43, %v5320
    %v5322 = vand.u32 %v5321, 4294901760
    %v5323 = vsub.f32 %v5321, %v5322
    %v5324 = vand.u32 %v5323, 4294901760
    %5325 = vmatpush1.msra.mxu0 %v5324
    %5326 = vmatprep.subr.mxu0 0.0
    %v5327 = vand.u32 %v42, 4294901760
    %v5328 = vsub.f32 %v42, %v5327
    %v5329 = vand.u32 %v5328, 4294901760
    %v5330 = vsub.f32 %v5328, %v5329
    %v5331 = vand.u32 %v5330, 4294901760
    %5332 = vmatpush1.msra.mxu0 %v5331
    %5333 = vmatprep.subr.mxu0 0.0
    %v5334 = vand.u32 %v41, 4294901760
    %v5335 = vsub.f32 %v41, %v5334
    %v5336 = vand.u32 %v5335, 4294901760
    %v5337 = vsub.f32 %v5335, %v5336
    %v5338 = vand.u32 %v5337, 4294901760
    %5339 = vmatpush1.msra.mxu0 %v5338
    %5340 = vmatprep.subr.mxu0 0.0
    %v5341 = vand.u32 %v40, 4294901760
    %v5342 = vsub.f32 %v40, %v5341
    %v5343 = vand.u32 %v5342, 4294901760
    %v5344 = vsub.f32 %v5342, %v5343
    %v5345 = vand.u32 %v5344, 4294901760
    %5346 = vmatpush1.msra.mxu0 %v5345
    %5347 = vmatprep.subr.mxu0 0.0
    %5348 = vmatpush2.msra.mxu0 0.0
    %5349 = vmatprep.subr.mxu0 0.0
    %5350 = vmatpush2.msra.mxu0 0.0
    %5351 = vmatprep.subr.mxu0 0.0
    %5352 = vmatpush2.msra.mxu0 0.0
    %5353 = vmatprep.subr.mxu0 0.0
    %5354 = vmatpush2.msra.mxu0 0.0
    %5355 = vmatprep.subr.mxu0 0.0
    %5356 = vmatpush2.msra.mxu0 0.0
    %5357 = vmatprep.subr.mxu0 0.0
    %5358 = vmatpush2.msra.mxu0 0.0
    %5359 = vmatprep.subr.mxu0 0.0
    %5360 = vmatpush2.msra.mxu0 0.0
    %5361 = vmatprep.subr.mxu0 0.0
    %5362 = vmatpush2.msra.mxu0 0.0
    %5363 = vmatprep.subr.mxu0 0.0
    %5364 = vmatpush2.msra.mxu0 0.0
    %5365 = vmatprep.subr.mxu0 0.0
    %5366 = vmatpush2.msra.mxu0 0.0
    %5367 = vmatprep.subr.mxu0 0.0
    %5368 = vmatpush2.msra.mxu0 0.0
    %5369 = vmatprep.subr.mxu0 0.0
    %5370 = vmatpush2.msra.mxu0 0.0
    %5371 = vmatprep.subr.mxu0 0.0
    %5372 = vmatpush2.msra.mxu0 0.0
    %5373 = vmatprep.subr.mxu0 0.0
    %5374 = vmatpush2.msra.mxu0 0.0
    %5375 = vmatprep.subr.mxu0 0.0
    %5376 = vmatpush2.msra.mxu0 0.0
    %5377 = vmatprep.subr.mxu0 0.0
    %5378 = vmatpush2.msra.mxu0 0.0
    %5379 = vmatprep.mubr.f32.mxu0 0.0
    %v5380 = vand.u32 %v5214, 4294901760
    %5381 = vmatmul.mubr.f32.gmra.mxu0 %v5380
    %v5382 = vpop.f32.mrf.mxu0
    %v5383 = vadd.f32 %v5292, %v5382
    %v5384 = vpop.f32.mrf.mxu0
    %5385 = vdwg.mxu0
    %5386 = vmatprep.subr.mxu0 0.0
    %5387 = vmatpush1.msra.mxu0 0.0
    %5388 = vmatprep.subr.mxu0 0.0
    %5389 = vmatpush1.msra.mxu0 0.0
    %5390 = vmatprep.subr.mxu0 0.0
    %5391 = vmatpush1.msra.mxu0 0.0
    %5392 = vmatprep.subr.mxu0 0.0
    %5393 = vmatpush1.msra.mxu0 0.0
    %5394 = vmatprep.subr.mxu0 0.0
    %5395 = vmatpush1.msra.mxu0 0.0
    %5396 = vmatprep.subr.mxu0 0.0
    %5397 = vmatpush1.msra.mxu0 0.0
    %5398 = vmatprep.subr.mxu0 0.0
    %5399 = vmatpush1.msra.mxu0 0.0
    %5400 = vmatprep.subr.mxu0 0.0
    %5401 = vmatpush1.msra.mxu0 0.0
    %5402 = vmatprep.subr.mxu0 0.0
    %5403 = vmatpush1.msra.mxu0 0.0
    %5404 = vmatprep.subr.mxu0 0.0
    %5405 = vmatpush1.msra.mxu0 0.0
    %5406 = vmatprep.subr.mxu0 0.0
    %5407 = vmatpush1.msra.mxu0 0.0
    %5408 = vmatprep.subr.mxu0 0.0
    %5409 = vmatpush1.msra.mxu0 0.0
    %5410 = vmatprep.subr.mxu0 0.0
    %v5411 = vand.u32 %v43, 4294901760
    %v5412 = vsub.f32 %v43, %v5411
    %5413 = vmatpush1.msra.mxu0 %v5412
    %5414 = vmatprep.subr.mxu0 0.0
    %v5415 = vand.u32 %v42, 4294901760
    %v5416 = vsub.f32 %v42, %v5415
    %5417 = vmatpush1.msra.mxu0 %v5416
    %5418 = vmatprep.subr.mxu0 0.0
    %v5419 = vand.u32 %v41, 4294901760
    %v5420 = vsub.f32 %v41, %v5419
    %5421 = vmatpush1.msra.mxu0 %v5420
    %5422 = vmatprep.subr.mxu0 0.0
    %v5423 = vand.u32 %v40, 4294901760
    %v5424 = vsub.f32 %v40, %v5423
    %5425 = vmatpush1.msra.mxu0 %v5424
    %5426 = vmatprep.subr.mxu0 0.0
    %5427 = vmatpush2.msra.mxu0 0.0
    %5428 = vmatprep.subr.mxu0 0.0
    %5429 = vmatpush2.msra.mxu0 0.0
    %5430 = vmatprep.subr.mxu0 0.0
    %5431 = vmatpush2.msra.mxu0 0.0
    %5432 = vmatprep.subr.mxu0 0.0
    %5433 = vmatpush2.msra.mxu0 0.0
    %5434 = vmatprep.subr.mxu0 0.0
    %5435 = vmatpush2.msra.mxu0 0.0
    %5436 = vmatprep.subr.mxu0 0.0
    %5437 = vmatpush2.msra.mxu0 0.0
    %5438 = vmatprep.subr.mxu0 0.0
    %5439 = vmatpush2.msra.mxu0 0.0
    %5440 = vmatprep.subr.mxu0 0.0
    %5441 = vmatpush2.msra.mxu0 0.0
    %5442 = vmatprep.subr.mxu0 0.0
    %5443 = vmatpush2.msra.mxu0 0.0
    %5444 = vmatprep.subr.mxu0 0.0
    %5445 = vmatpush2.msra.mxu0 0.0
    %5446 = vmatprep.subr.mxu0 0.0
    %5447 = vmatpush2.msra.mxu0 0.0
    %5448 = vmatprep.subr.mxu0 0.0
    %5449 = vmatpush2.msra.mxu0 0.0
    %5450 = vmatprep.subr.mxu0 0.0
    %5451 = vmatpush2.msra.mxu0 0.0
    %5452 = vmatprep.subr.mxu0 0.0
    %5453 = vmatpush2.msra.mxu0 0.0
    %5454 = vmatprep.subr.mxu0 0.0
    %5455 = vmatpush2.msra.mxu0 0.0
    %5456 = vmatprep.subr.mxu0 0.0
    %5457 = vmatpush2.msra.mxu0 0.0
    %5458 = vmatprep.mubr.f32.mxu0 0.0
    %v5459 = vand.u32 %v5214, 4294901760
    %v5460 = vsub.f32 %v5214, %v5459
    %5461 = vmatmul.mubr.f32.gmra.mxu0 %v5460
    %v5462 = vpop.f32.mrf.mxu0
    %v5463 = vadd.f32 %v5383, %v5462
    %v5464 = vpop.f32.mrf.mxu0
    %5465 = vdwg.mxu0
    %5466 = vmatprep.subr.mxu0 0.0
    %5467 = vmatpush1.msra.mxu0 0.0
    %5468 = vmatprep.subr.mxu0 0.0
    %5469 = vmatpush1.msra.mxu0 0.0
    %5470 = vmatprep.subr.mxu0 0.0
    %5471 = vmatpush1.msra.mxu0 0.0
    %5472 = vmatprep.subr.mxu0 0.0
    %5473 = vmatpush1.msra.mxu0 0.0
    %5474 = vmatprep.subr.mxu0 0.0
    %5475 = vmatpush1.msra.mxu0 0.0
    %5476 = vmatprep.subr.mxu0 0.0
    %5477 = vmatpush1.msra.mxu0 0.0
    %5478 = vmatprep.subr.mxu0 0.0
    %5479 = vmatpush1.msra.mxu0 0.0
    %5480 = vmatprep.subr.mxu0 0.0
    %5481 = vmatpush1.msra.mxu0 0.0
    %5482 = vmatprep.subr.mxu0 0.0
    %5483 = vmatpush1.msra.mxu0 0.0
    %5484 = vmatprep.subr.mxu0 0.0
    %5485 = vmatpush1.msra.mxu0 0.0
    %5486 = vmatprep.subr.mxu0 0.0
    %5487 = vmatpush1.msra.mxu0 0.0
    %5488 = vmatprep.subr.mxu0 0.0
    %5489 = vmatpush1.msra.mxu0 0.0
    %5490 = vmatprep.subr.mxu0 0.0
    %v5491 = vand.u32 %v43, 4294901760
    %5492 = vmatpush1.msra.mxu0 %v5491
    %5493 = vmatprep.subr.mxu0 0.0
    %v5494 = vand.u32 %v42, 4294901760
    %5495 = vmatpush1.msra.mxu0 %v5494
    %5496 = vmatprep.subr.mxu0 0.0
    %v5497 = vand.u32 %v41, 4294901760
    %5498 = vmatpush1.msra.mxu0 %v5497
    %5499 = vmatprep.subr.mxu0 0.0
    %v5500 = vand.u32 %v40, 4294901760
    %5501 = vmatpush1.msra.mxu0 %v5500
    %5502 = vmatprep.subr.mxu0 0.0
    %5503 = vmatpush2.msra.mxu0 0.0
    %5504 = vmatprep.subr.mxu0 0.0
    %5505 = vmatpush2.msra.mxu0 0.0
    %5506 = vmatprep.subr.mxu0 0.0
    %5507 = vmatpush2.msra.mxu0 0.0
    %5508 = vmatprep.subr.mxu0 0.0
    %5509 = vmatpush2.msra.mxu0 0.0
    %5510 = vmatprep.subr.mxu0 0.0
    %5511 = vmatpush2.msra.mxu0 0.0
    %5512 = vmatprep.subr.mxu0 0.0
    %5513 = vmatpush2.msra.mxu0 0.0
    %5514 = vmatprep.subr.mxu0 0.0
    %5515 = vmatpush2.msra.mxu0 0.0
    %5516 = vmatprep.subr.mxu0 0.0
    %5517 = vmatpush2.msra.mxu0 0.0
    %5518 = vmatprep.subr.mxu0 0.0
    %5519 = vmatpush2.msra.mxu0 0.0
    %5520 = vmatprep.subr.mxu0 0.0
    %5521 = vmatpush2.msra.mxu0 0.0
    %5522 = vmatprep.subr.mxu0 0.0
    %5523 = vmatpush2.msra.mxu0 0.0
    %5524 = vmatprep.subr.mxu0 0.0
    %5525 = vmatpush2.msra.mxu0 0.0
    %5526 = vmatprep.subr.mxu0 0.0
    %5527 = vmatpush2.msra.mxu0 0.0
    %5528 = vmatprep.subr.mxu0 0.0
    %5529 = vmatpush2.msra.mxu0 0.0
    %5530 = vmatprep.subr.mxu0 0.0
    %5531 = vmatpush2.msra.mxu0 0.0
    %5532 = vmatprep.subr.mxu0 0.0
    %5533 = vmatpush2.msra.mxu0 0.0
    %5534 = vmatprep.mubr.f32.mxu0 0.0
    %v5535 = vand.u32 %v5214, 4294901760
    %v5536 = vsub.f32 %v5214, %v5535
    %v5537 = vand.u32 %v5536, 4294901760
    %5538 = vmatmul.mubr.f32.gmra.mxu0 %v5537
    %v5539 = vpop.f32.mrf.mxu0
    %v5540 = vadd.f32 %v5463, %v5539
    %v5541 = vpop.f32.mrf.mxu0
    %5542 = vdwg.mxu0
    %5543 = vmatprep.subr.mxu0 0.0
    %5544 = vmatpush1.msra.mxu0 0.0
    %5545 = vmatprep.subr.mxu0 0.0
    %5546 = vmatpush1.msra.mxu0 0.0
    %5547 = vmatprep.subr.mxu0 0.0
    %5548 = vmatpush1.msra.mxu0 0.0
    %5549 = vmatprep.subr.mxu0 0.0
    %5550 = vmatpush1.msra.mxu0 0.0
    %5551 = vmatprep.subr.mxu0 0.0
    %5552 = vmatpush1.msra.mxu0 0.0
    %5553 = vmatprep.subr.mxu0 0.0
    %5554 = vmatpush1.msra.mxu0 0.0
    %5555 = vmatprep.subr.mxu0 0.0
    %5556 = vmatpush1.msra.mxu0 0.0
    %5557 = vmatprep.subr.mxu0 0.0
    %5558 = vmatpush1.msra.mxu0 0.0
    %5559 = vmatprep.subr.mxu0 0.0
    %5560 = vmatpush1.msra.mxu0 0.0
    %5561 = vmatprep.subr.mxu0 0.0
    %5562 = vmatpush1.msra.mxu0 0.0
    %5563 = vmatprep.subr.mxu0 0.0
    %5564 = vmatpush1.msra.mxu0 0.0
    %5565 = vmatprep.subr.mxu0 0.0
    %5566 = vmatpush1.msra.mxu0 0.0
    %5567 = vmatprep.subr.mxu0 0.0
    %v5568 = vand.u32 %v43, 4294901760
    %v5569 = vsub.f32 %v43, %v5568
    %v5570 = vand.u32 %v5569, 4294901760
    %5571 = vmatpush1.msra.mxu0 %v5570
    %5572 = vmatprep.subr.mxu0 0.0
    %v5573 = vand.u32 %v42, 4294901760
    %v5574 = vsub.f32 %v42, %v5573
    %v5575 = vand.u32 %v5574, 4294901760
    %5576 = vmatpush1.msra.mxu0 %v5575
    %5577 = vmatprep.subr.mxu0 0.0
    %v5578 = vand.u32 %v41, 4294901760
    %v5579 = vsub.f32 %v41, %v5578
    %v5580 = vand.u32 %v5579, 4294901760
    %5581 = vmatpush1.msra.mxu0 %v5580
    %5582 = vmatprep.subr.mxu0 0.0
    %v5583 = vand.u32 %v40, 4294901760
    %v5584 = vsub.f32 %v40, %v5583
    %v5585 = vand.u32 %v5584, 4294901760
    %5586 = vmatpush1.msra.mxu0 %v5585
    %5587 = vmatprep.subr.mxu0 0.0
    %5588 = vmatpush2.msra.mxu0 0.0
    %5589 = vmatprep.subr.mxu0 0.0
    %5590 = vmatpush2.msra.mxu0 0.0
    %5591 = vmatprep.subr.mxu0 0.0
    %5592 = vmatpush2.msra.mxu0 0.0
    %5593 = vmatprep.subr.mxu0 0.0
    %5594 = vmatpush2.msra.mxu0 0.0
    %5595 = vmatprep.subr.mxu0 0.0
    %5596 = vmatpush2.msra.mxu0 0.0
    %5597 = vmatprep.subr.mxu0 0.0
    %5598 = vmatpush2.msra.mxu0 0.0
    %5599 = vmatprep.subr.mxu0 0.0
    %5600 = vmatpush2.msra.mxu0 0.0
    %5601 = vmatprep.subr.mxu0 0.0
    %5602 = vmatpush2.msra.mxu0 0.0
    %5603 = vmatprep.subr.mxu0 0.0
    %5604 = vmatpush2.msra.mxu0 0.0
    %5605 = vmatprep.subr.mxu0 0.0
    %5606 = vmatpush2.msra.mxu0 0.0
    %5607 = vmatprep.subr.mxu0 0.0
    %5608 = vmatpush2.msra.mxu0 0.0
    %5609 = vmatprep.subr.mxu0 0.0
    %5610 = vmatpush2.msra.mxu0 0.0
    %5611 = vmatprep.subr.mxu0 0.0
    %5612 = vmatpush2.msra.mxu0 0.0
    %5613 = vmatprep.subr.mxu0 0.0
    %5614 = vmatpush2.msra.mxu0 0.0
    %5615 = vmatprep.subr.mxu0 0.0
    %5616 = vmatpush2.msra.mxu0 0.0
    %5617 = vmatprep.subr.mxu0 0.0
    %5618 = vmatpush2.msra.mxu0 0.0
    %5619 = vmatprep.mubr.f32.mxu0 0.0
    %v5620 = vand.u32 %v5214, 4294901760
    %5621 = vmatmul.mubr.f32.gmra.mxu0 %v5620
    %v5622 = vpop.f32.mrf.mxu0
    %v5623 = vadd.f32 %v5540, %v5622
    %v5624 = vpop.f32.mrf.mxu0
    %5625 = vdwg.mxu0
    %5626 = vmatprep.subr.mxu0 0.0
    %5627 = vmatpush1.msra.mxu0 0.0
    %5628 = vmatprep.subr.mxu0 0.0
    %5629 = vmatpush1.msra.mxu0 0.0
    %5630 = vmatprep.subr.mxu0 0.0
    %5631 = vmatpush1.msra.mxu0 0.0
    %5632 = vmatprep.subr.mxu0 0.0
    %5633 = vmatpush1.msra.mxu0 0.0
    %5634 = vmatprep.subr.mxu0 0.0
    %5635 = vmatpush1.msra.mxu0 0.0
    %5636 = vmatprep.subr.mxu0 0.0
    %5637 = vmatpush1.msra.mxu0 0.0
    %5638 = vmatprep.subr.mxu0 0.0
    %5639 = vmatpush1.msra.mxu0 0.0
    %5640 = vmatprep.subr.mxu0 0.0
    %5641 = vmatpush1.msra.mxu0 0.0
    %5642 = vmatprep.subr.mxu0 0.0
    %5643 = vmatpush1.msra.mxu0 0.0
    %5644 = vmatprep.subr.mxu0 0.0
    %5645 = vmatpush1.msra.mxu0 0.0
    %5646 = vmatprep.subr.mxu0 0.0
    %5647 = vmatpush1.msra.mxu0 0.0
    %5648 = vmatprep.subr.mxu0 0.0
    %5649 = vmatpush1.msra.mxu0 0.0
    %5650 = vmatprep.subr.mxu0 0.0
    %v5651 = vand.u32 %v43, 4294901760
    %5652 = vmatpush1.msra.mxu0 %v5651
    %5653 = vmatprep.subr.mxu0 0.0
    %v5654 = vand.u32 %v42, 4294901760
    %5655 = vmatpush1.msra.mxu0 %v5654
    %5656 = vmatprep.subr.mxu0 0.0
    %v5657 = vand.u32 %v41, 4294901760
    %5658 = vmatpush1.msra.mxu0 %v5657
    %5659 = vmatprep.subr.mxu0 0.0
    %v5660 = vand.u32 %v40, 4294901760
    %5661 = vmatpush1.msra.mxu0 %v5660
    %5662 = vmatprep.subr.mxu0 0.0
    %5663 = vmatpush2.msra.mxu0 0.0
    %5664 = vmatprep.subr.mxu0 0.0
    %5665 = vmatpush2.msra.mxu0 0.0
    %5666 = vmatprep.subr.mxu0 0.0
    %5667 = vmatpush2.msra.mxu0 0.0
    %5668 = vmatprep.subr.mxu0 0.0
    %5669 = vmatpush2.msra.mxu0 0.0
    %5670 = vmatprep.subr.mxu0 0.0
    %5671 = vmatpush2.msra.mxu0 0.0
    %5672 = vmatprep.subr.mxu0 0.0
    %5673 = vmatpush2.msra.mxu0 0.0
    %5674 = vmatprep.subr.mxu0 0.0
    %5675 = vmatpush2.msra.mxu0 0.0
    %5676 = vmatprep.subr.mxu0 0.0
    %5677 = vmatpush2.msra.mxu0 0.0
    %5678 = vmatprep.subr.mxu0 0.0
    %5679 = vmatpush2.msra.mxu0 0.0
    %5680 = vmatprep.subr.mxu0 0.0
    %5681 = vmatpush2.msra.mxu0 0.0
    %5682 = vmatprep.subr.mxu0 0.0
    %5683 = vmatpush2.msra.mxu0 0.0
    %5684 = vmatprep.subr.mxu0 0.0
    %5685 = vmatpush2.msra.mxu0 0.0
    %5686 = vmatprep.subr.mxu0 0.0
    %5687 = vmatpush2.msra.mxu0 0.0
    %5688 = vmatprep.subr.mxu0 0.0
    %5689 = vmatpush2.msra.mxu0 0.0
    %5690 = vmatprep.subr.mxu0 0.0
    %5691 = vmatpush2.msra.mxu0 0.0
    %5692 = vmatprep.subr.mxu0 0.0
    %5693 = vmatpush2.msra.mxu0 0.0
    %5694 = vmatprep.mubr.f32.mxu0 0.0
    %v5695 = vand.u32 %v5214, 4294901760
    %5696 = vmatmul.mubr.f32.gmra.mxu0 %v5695
    %v5697 = vpop.f32.mrf.mxu0
    %v5698 = vadd.f32 %v5623, %v5697
    %v5699 = vpop.f32.mrf.mxu0
    %5700 = vdwg.mxu0
    %v5702 = vrot.slane %v5698, 3
    %v5704 = vadd.f32 %v550, %v5702
    %v5705 = vtanh.pop %v5704
    %v5707 = vrot.slane %v5211, 4
    %5708 = vrot.lane.b32.xlu0 %v5707, 32
    %v5709 = vpop.permute.xlu0 %5708
    %v5711 = vsel %vm64, %v4663, %v5709
    %v5713 = vrot.slane %v5711, 4
    %v5714 = vsel %vm1544, %v5713, 0
    %5716 = vmatprep.subr.mxu0 0.0
    %5717 = vmatpush1.msra.mxu0 0.0
    %5718 = vmatprep.subr.mxu0 0.0
    %5719 = vmatpush1.msra.mxu0 0.0
    %5720 = vmatprep.subr.mxu0 0.0
    %5721 = vmatpush1.msra.mxu0 0.0
    %5722 = vmatprep.subr.mxu0 0.0
    %5723 = vmatpush1.msra.mxu0 0.0
    %5724 = vmatprep.subr.mxu0 0.0
    %5725 = vmatpush1.msra.mxu0 0.0
    %5726 = vmatprep.subr.mxu0 0.0
    %5727 = vmatpush1.msra.mxu0 0.0
    %5728 = vmatprep.subr.mxu0 0.0
    %5729 = vmatpush1.msra.mxu0 0.0
    %5730 = vmatprep.subr.mxu0 0.0
    %5731 = vmatpush1.msra.mxu0 0.0
    %5732 = vmatprep.subr.mxu0 0.0
    %v5733 = vand.u32 %v52, 4294901760
    %5734 = vmatpush1.msra.mxu0 %v5733
    %5735 = vmatprep.subr.mxu0 0.0
    %v5736 = vand.u32 %v51, 4294901760
    %5737 = vmatpush1.msra.mxu0 %v5736
    %5738 = vmatprep.subr.mxu0 0.0
    %v5739 = vand.u32 %v50, 4294901760
    %5740 = vmatpush1.msra.mxu0 %v5739
    %5741 = vmatprep.subr.mxu0 0.0
    %v5742 = vand.u32 %v49, 4294901760
    %5743 = vmatpush1.msra.mxu0 %v5742
    %5744 = vmatprep.subr.mxu0 0.0
    %v5745 = vand.u32 %v48, 4294901760
    %5746 = vmatpush1.msra.mxu0 %v5745
    %5747 = vmatprep.subr.mxu0 0.0
    %v5748 = vand.u32 %v47, 4294901760
    %5749 = vmatpush1.msra.mxu0 %v5748
    %5750 = vmatprep.subr.mxu0 0.0
    %v5751 = vand.u32 %v46, 4294901760
    %5752 = vmatpush1.msra.mxu0 %v5751
    %5753 = vmatprep.subr.mxu0 0.0
    %v5754 = vand.u32 %v45, 4294901760
    %5755 = vmatpush1.msra.mxu0 %v5754
    %5756 = vmatprep.subr.mxu0 0.0
    %5757 = vmatpush2.msra.mxu0 0.0
    %5758 = vmatprep.subr.mxu0 0.0
    %5759 = vmatpush2.msra.mxu0 0.0
    %5760 = vmatprep.subr.mxu0 0.0
    %5761 = vmatpush2.msra.mxu0 0.0
    %5762 = vmatprep.subr.mxu0 0.0
    %5763 = vmatpush2.msra.mxu0 0.0
    %5764 = vmatprep.subr.mxu0 0.0
    %5765 = vmatpush2.msra.mxu0 0.0
    %5766 = vmatprep.subr.mxu0 0.0
    %5767 = vmatpush2.msra.mxu0 0.0
    %5768 = vmatprep.subr.mxu0 0.0
    %5769 = vmatpush2.msra.mxu0 0.0
    %5770 = vmatprep.subr.mxu0 0.0
    %5771 = vmatpush2.msra.mxu0 0.0
    %5772 = vmatprep.subr.mxu0 0.0
    %5773 = vmatpush2.msra.mxu0 0.0
    %5774 = vmatprep.subr.mxu0 0.0
    %5775 = vmatpush2.msra.mxu0 0.0
    %5776 = vmatprep.subr.mxu0 0.0
    %5777 = vmatpush2.msra.mxu0 0.0
    %5778 = vmatprep.subr.mxu0 0.0
    %5779 = vmatpush2.msra.mxu0 0.0
    %5780 = vmatprep.subr.mxu0 0.0
    %5781 = vmatpush2.msra.mxu0 0.0
    %5782 = vmatprep.subr.mxu0 0.0
    %5783 = vmatpush2.msra.mxu0 0.0
    %5784 = vmatprep.subr.mxu0 0.0
    %5785 = vmatpush2.msra.mxu0 0.0
    %5786 = vmatprep.subr.mxu0 0.0
    %5787 = vmatpush2.msra.mxu0 0.0
    %5788 = vmatprep.mubr.f32.mxu0 0.0
    %v5789 = vand.u32 %v5714, 4294901760
    %v5790 = vsub.f32 %v5714, %v5789
    %v5791 = vand.u32 %v5790, 4294901760
    %v5792 = vsub.f32 %v5790, %v5791
    %v5793 = vand.u32 %v5792, 4294901760
    %5794 = vmatmul.mubr.f32.gmra.mxu0 %v5793
    %v5795 = vpop.f32.mrf.mxu0
    %v5796 = vadd.f32 %v1542, %v5795
    %v5797 = vpop.f32.mrf.mxu0
    %5798 = vdwg.mxu0
    %5799 = vmatprep.subr.mxu0 0.0
    %5800 = vmatpush1.msra.mxu0 0.0
    %5801 = vmatprep.subr.mxu0 0.0
    %5802 = vmatpush1.msra.mxu0 0.0
    %5803 = vmatprep.subr.mxu0 0.0
    %5804 = vmatpush1.msra.mxu0 0.0
    %5805 = vmatprep.subr.mxu0 0.0
    %5806 = vmatpush1.msra.mxu0 0.0
    %5807 = vmatprep.subr.mxu0 0.0
    %5808 = vmatpush1.msra.mxu0 0.0
    %5809 = vmatprep.subr.mxu0 0.0
    %5810 = vmatpush1.msra.mxu0 0.0
    %5811 = vmatprep.subr.mxu0 0.0
    %5812 = vmatpush1.msra.mxu0 0.0
    %5813 = vmatprep.subr.mxu0 0.0
    %5814 = vmatpush1.msra.mxu0 0.0
    %5815 = vmatprep.subr.mxu0 0.0
    %v5816 = vand.u32 %v52, 4294901760
    %v5817 = vsub.f32 %v52, %v5816
    %v5818 = vand.u32 %v5817, 4294901760
    %v5819 = vsub.f32 %v5817, %v5818
    %v5820 = vand.u32 %v5819, 4294901760
    %5821 = vmatpush1.msra.mxu0 %v5820
    %5822 = vmatprep.subr.mxu0 0.0
    %v5823 = vand.u32 %v51, 4294901760
    %v5824 = vsub.f32 %v51, %v5823
    %v5825 = vand.u32 %v5824, 4294901760
    %v5826 = vsub.f32 %v5824, %v5825
    %v5827 = vand.u32 %v5826, 4294901760
    %5828 = vmatpush1.msra.mxu0 %v5827
    %5829 = vmatprep.subr.mxu0 0.0
    %v5830 = vand.u32 %v50, 4294901760
    %v5831 = vsub.f32 %v50, %v5830
    %v5832 = vand.u32 %v5831, 4294901760
    %v5833 = vsub.f32 %v5831, %v5832
    %v5834 = vand.u32 %v5833, 4294901760
    %5835 = vmatpush1.msra.mxu0 %v5834
    %5836 = vmatprep.subr.mxu0 0.0
    %v5837 = vand.u32 %v49, 4294901760
    %v5838 = vsub.f32 %v49, %v5837
    %v5839 = vand.u32 %v5838, 4294901760
    %v5840 = vsub.f32 %v5838, %v5839
    %v5841 = vand.u32 %v5840, 4294901760
    %5842 = vmatpush1.msra.mxu0 %v5841
    %5843 = vmatprep.subr.mxu0 0.0
    %v5844 = vand.u32 %v48, 4294901760
    %v5845 = vsub.f32 %v48, %v5844
    %v5846 = vand.u32 %v5845, 4294901760
    %v5847 = vsub.f32 %v5845, %v5846
    %v5848 = vand.u32 %v5847, 4294901760
    %5849 = vmatpush1.msra.mxu0 %v5848
    %5850 = vmatprep.subr.mxu0 0.0
    %v5851 = vand.u32 %v47, 4294901760
    %v5852 = vsub.f32 %v47, %v5851
    %v5853 = vand.u32 %v5852, 4294901760
    %v5854 = vsub.f32 %v5852, %v5853
    %v5855 = vand.u32 %v5854, 4294901760
    %5856 = vmatpush1.msra.mxu0 %v5855
    %5857 = vmatprep.subr.mxu0 0.0
    %v5858 = vand.u32 %v46, 4294901760
    %v5859 = vsub.f32 %v46, %v5858
    %v5860 = vand.u32 %v5859, 4294901760
    %v5861 = vsub.f32 %v5859, %v5860
    %v5862 = vand.u32 %v5861, 4294901760
    %5863 = vmatpush1.msra.mxu0 %v5862
    %5864 = vmatprep.subr.mxu0 0.0
    %v5865 = vand.u32 %v45, 4294901760
    %v5866 = vsub.f32 %v45, %v5865
    %v5867 = vand.u32 %v5866, 4294901760
    %v5868 = vsub.f32 %v5866, %v5867
    %v5869 = vand.u32 %v5868, 4294901760
    %5870 = vmatpush1.msra.mxu0 %v5869
    %5871 = vmatprep.subr.mxu0 0.0
    %5872 = vmatpush2.msra.mxu0 0.0
    %5873 = vmatprep.subr.mxu0 0.0
    %5874 = vmatpush2.msra.mxu0 0.0
    %5875 = vmatprep.subr.mxu0 0.0
    %5876 = vmatpush2.msra.mxu0 0.0
    %5877 = vmatprep.subr.mxu0 0.0
    %5878 = vmatpush2.msra.mxu0 0.0
    %5879 = vmatprep.subr.mxu0 0.0
    %5880 = vmatpush2.msra.mxu0 0.0
    %5881 = vmatprep.subr.mxu0 0.0
    %5882 = vmatpush2.msra.mxu0 0.0
    %5883 = vmatprep.subr.mxu0 0.0
    %5884 = vmatpush2.msra.mxu0 0.0
    %5885 = vmatprep.subr.mxu0 0.0
    %5886 = vmatpush2.msra.mxu0 0.0
    %5887 = vmatprep.subr.mxu0 0.0
    %5888 = vmatpush2.msra.mxu0 0.0
    %5889 = vmatprep.subr.mxu0 0.0
    %5890 = vmatpush2.msra.mxu0 0.0
    %5891 = vmatprep.subr.mxu0 0.0
    %5892 = vmatpush2.msra.mxu0 0.0
    %5893 = vmatprep.subr.mxu0 0.0
    %5894 = vmatpush2.msra.mxu0 0.0
    %5895 = vmatprep.subr.mxu0 0.0
    %5896 = vmatpush2.msra.mxu0 0.0
    %5897 = vmatprep.subr.mxu0 0.0
    %5898 = vmatpush2.msra.mxu0 0.0
    %5899 = vmatprep.subr.mxu0 0.0
    %5900 = vmatpush2.msra.mxu0 0.0
    %5901 = vmatprep.subr.mxu0 0.0
    %5902 = vmatpush2.msra.mxu0 0.0
    %5903 = vmatprep.mubr.f32.mxu0 0.0
    %v5904 = vand.u32 %v5714, 4294901760
    %5905 = vmatmul.mubr.f32.gmra.mxu0 %v5904
    %v5906 = vpop.f32.mrf.mxu0
    %v5907 = vadd.f32 %v5796, %v5906
    %v5908 = vpop.f32.mrf.mxu0
    %5909 = vdwg.mxu0
    %5910 = vmatprep.subr.mxu0 0.0
    %5911 = vmatpush1.msra.mxu0 0.0
    %5912 = vmatprep.subr.mxu0 0.0
    %5913 = vmatpush1.msra.mxu0 0.0
    %5914 = vmatprep.subr.mxu0 0.0
    %5915 = vmatpush1.msra.mxu0 0.0
    %5916 = vmatprep.subr.mxu0 0.0
    %5917 = vmatpush1.msra.mxu0 0.0
    %5918 = vmatprep.subr.mxu0 0.0
    %5919 = vmatpush1.msra.mxu0 0.0
    %5920 = vmatprep.subr.mxu0 0.0
    %5921 = vmatpush1.msra.mxu0 0.0
    %5922 = vmatprep.subr.mxu0 0.0
    %5923 = vmatpush1.msra.mxu0 0.0
    %5924 = vmatprep.subr.mxu0 0.0
    %5925 = vmatpush1.msra.mxu0 0.0
    %5926 = vmatprep.subr.mxu0 0.0
    %v5927 = vand.u32 %v52, 4294901760
    %v5928 = vsub.f32 %v52, %v5927
    %5929 = vmatpush1.msra.mxu0 %v5928
    %5930 = vmatprep.subr.mxu0 0.0
    %v5931 = vand.u32 %v51, 4294901760
    %v5932 = vsub.f32 %v51, %v5931
    %5933 = vmatpush1.msra.mxu0 %v5932
    %5934 = vmatprep.subr.mxu0 0.0
    %v5935 = vand.u32 %v50, 4294901760
    %v5936 = vsub.f32 %v50, %v5935
    %5937 = vmatpush1.msra.mxu0 %v5936
    %5938 = vmatprep.subr.mxu0 0.0
    %v5939 = vand.u32 %v49, 4294901760
    %v5940 = vsub.f32 %v49, %v5939
    %5941 = vmatpush1.msra.mxu0 %v5940
    %5942 = vmatprep.subr.mxu0 0.0
    %v5943 = vand.u32 %v48, 4294901760
    %v5944 = vsub.f32 %v48, %v5943
    %5945 = vmatpush1.msra.mxu0 %v5944
    %5946 = vmatprep.subr.mxu0 0.0
    %v5947 = vand.u32 %v47, 4294901760
    %v5948 = vsub.f32 %v47, %v5947
    %5949 = vmatpush1.msra.mxu0 %v5948
    %5950 = vmatprep.subr.mxu0 0.0
    %v5951 = vand.u32 %v46, 4294901760
    %v5952 = vsub.f32 %v46, %v5951
    %5953 = vmatpush1.msra.mxu0 %v5952
    %5954 = vmatprep.subr.mxu0 0.0
    %v5955 = vand.u32 %v45, 4294901760
    %v5956 = vsub.f32 %v45, %v5955
    %5957 = vmatpush1.msra.mxu0 %v5956
    %5958 = vmatprep.subr.mxu0 0.0
    %5959 = vmatpush2.msra.mxu0 0.0
    %5960 = vmatprep.subr.mxu0 0.0
    %5961 = vmatpush2.msra.mxu0 0.0
    %5962 = vmatprep.subr.mxu0 0.0
    %5963 = vmatpush2.msra.mxu0 0.0
    %5964 = vmatprep.subr.mxu0 0.0
    %5965 = vmatpush2.msra.mxu0 0.0
    %5966 = vmatprep.subr.mxu0 0.0
    %5967 = vmatpush2.msra.mxu0 0.0
    %5968 = vmatprep.subr.mxu0 0.0
    %5969 = vmatpush2.msra.mxu0 0.0
    %5970 = vmatprep.subr.mxu0 0.0
    %5971 = vmatpush2.msra.mxu0 0.0
    %5972 = vmatprep.subr.mxu0 0.0
    %5973 = vmatpush2.msra.mxu0 0.0
    %5974 = vmatprep.subr.mxu0 0.0
    %5975 = vmatpush2.msra.mxu0 0.0
    %5976 = vmatprep.subr.mxu0 0.0
    %5977 = vmatpush2.msra.mxu0 0.0
    %5978 = vmatprep.subr.mxu0 0.0
    %5979 = vmatpush2.msra.mxu0 0.0
    %5980 = vmatprep.subr.mxu0 0.0
    %5981 = vmatpush2.msra.mxu0 0.0
    %5982 = vmatprep.subr.mxu0 0.0
    %5983 = vmatpush2.msra.mxu0 0.0
    %5984 = vmatprep.subr.mxu0 0.0
    %5985 = vmatpush2.msra.mxu0 0.0
    %5986 = vmatprep.subr.mxu0 0.0
    %5987 = vmatpush2.msra.mxu0 0.0
    %5988 = vmatprep.subr.mxu0 0.0
    %5989 = vmatpush2.msra.mxu0 0.0
    %5990 = vmatprep.mubr.f32.mxu0 0.0
    %v5991 = vand.u32 %v5714, 4294901760
    %v5992 = vsub.f32 %v5714, %v5991
    %5993 = vmatmul.mubr.f32.gmra.mxu0 %v5992
    %v5994 = vpop.f32.mrf.mxu0
    %v5995 = vadd.f32 %v5907, %v5994
    %v5996 = vpop.f32.mrf.mxu0
    %5997 = vdwg.mxu0
    %5998 = vmatprep.subr.mxu0 0.0
    %5999 = vmatpush1.msra.mxu0 0.0
    %6000 = vmatprep.subr.mxu0 0.0
    %6001 = vmatpush1.msra.mxu0 0.0
    %6002 = vmatprep.subr.mxu0 0.0
    %6003 = vmatpush1.msra.mxu0 0.0
    %6004 = vmatprep.subr.mxu0 0.0
    %6005 = vmatpush1.msra.mxu0 0.0
    %6006 = vmatprep.subr.mxu0 0.0
    %6007 = vmatpush1.msra.mxu0 0.0
    %6008 = vmatprep.subr.mxu0 0.0
    %6009 = vmatpush1.msra.mxu0 0.0
    %6010 = vmatprep.subr.mxu0 0.0
    %6011 = vmatpush1.msra.mxu0 0.0
    %6012 = vmatprep.subr.mxu0 0.0
    %6013 = vmatpush1.msra.mxu0 0.0
    %6014 = vmatprep.subr.mxu0 0.0
    %v6015 = vand.u32 %v52, 4294901760
    %6016 = vmatpush1.msra.mxu0 %v6015
    %6017 = vmatprep.subr.mxu0 0.0
    %v6018 = vand.u32 %v51, 4294901760
    %6019 = vmatpush1.msra.mxu0 %v6018
    %6020 = vmatprep.subr.mxu0 0.0
    %v6021 = vand.u32 %v50, 4294901760
    %6022 = vmatpush1.msra.mxu0 %v6021
    %6023 = vmatprep.subr.mxu0 0.0
    %v6024 = vand.u32 %v49, 4294901760
    %6025 = vmatpush1.msra.mxu0 %v6024
    %6026 = vmatprep.subr.mxu0 0.0
    %v6027 = vand.u32 %v48, 4294901760
    %6028 = vmatpush1.msra.mxu0 %v6027
    %6029 = vmatprep.subr.mxu0 0.0
    %v6030 = vand.u32 %v47, 4294901760
    %6031 = vmatpush1.msra.mxu0 %v6030
    %6032 = vmatprep.subr.mxu0 0.0
    %v6033 = vand.u32 %v46, 4294901760
    %6034 = vmatpush1.msra.mxu0 %v6033
    %6035 = vmatprep.subr.mxu0 0.0
    %v6036 = vand.u32 %v45, 4294901760
    %6037 = vmatpush1.msra.mxu0 %v6036
    %6038 = vmatprep.subr.mxu0 0.0
    %6039 = vmatpush2.msra.mxu0 0.0
    %6040 = vmatprep.subr.mxu0 0.0
    %6041 = vmatpush2.msra.mxu0 0.0
    %6042 = vmatprep.subr.mxu0 0.0
    %6043 = vmatpush2.msra.mxu0 0.0
    %6044 = vmatprep.subr.mxu0 0.0
    %6045 = vmatpush2.msra.mxu0 0.0
    %6046 = vmatprep.subr.mxu0 0.0
    %6047 = vmatpush2.msra.mxu0 0.0
    %6048 = vmatprep.subr.mxu0 0.0
    %6049 = vmatpush2.msra.mxu0 0.0
    %6050 = vmatprep.subr.mxu0 0.0
    %6051 = vmatpush2.msra.mxu0 0.0
    %6052 = vmatprep.subr.mxu0 0.0
    %6053 = vmatpush2.msra.mxu0 0.0
    %6054 = vmatprep.subr.mxu0 0.0
    %6055 = vmatpush2.msra.mxu0 0.0
    %6056 = vmatprep.subr.mxu0 0.0
    %6057 = vmatpush2.msra.mxu0 0.0
    %6058 = vmatprep.subr.mxu0 0.0
    %6059 = vmatpush2.msra.mxu0 0.0
    %6060 = vmatprep.subr.mxu0 0.0
    %6061 = vmatpush2.msra.mxu0 0.0
    %6062 = vmatprep.subr.mxu0 0.0
    %6063 = vmatpush2.msra.mxu0 0.0
    %6064 = vmatprep.subr.mxu0 0.0
    %6065 = vmatpush2.msra.mxu0 0.0
    %6066 = vmatprep.subr.mxu0 0.0
    %6067 = vmatpush2.msra.mxu0 0.0
    %6068 = vmatprep.subr.mxu0 0.0
    %6069 = vmatpush2.msra.mxu0 0.0
    %6070 = vmatprep.mubr.f32.mxu0 0.0
    %v6071 = vand.u32 %v5714, 4294901760
    %v6072 = vsub.f32 %v5714, %v6071
    %v6073 = vand.u32 %v6072, 4294901760
    %6074 = vmatmul.mubr.f32.gmra.mxu0 %v6073
    %v6075 = vpop.f32.mrf.mxu0
    %v6076 = vadd.f32 %v5995, %v6075
    %v6077 = vpop.f32.mrf.mxu0
    %6078 = vdwg.mxu0
    %6079 = vmatprep.subr.mxu0 0.0
    %6080 = vmatpush1.msra.mxu0 0.0
    %6081 = vmatprep.subr.mxu0 0.0
    %6082 = vmatpush1.msra.mxu0 0.0
    %6083 = vmatprep.subr.mxu0 0.0
    %6084 = vmatpush1.msra.mxu0 0.0
    %6085 = vmatprep.subr.mxu0 0.0
    %6086 = vmatpush1.msra.mxu0 0.0
    %6087 = vmatprep.subr.mxu0 0.0
    %6088 = vmatpush1.msra.mxu0 0.0
    %6089 = vmatprep.subr.mxu0 0.0
    %6090 = vmatpush1.msra.mxu0 0.0
    %6091 = vmatprep.subr.mxu0 0.0
    %6092 = vmatpush1.msra.mxu0 0.0
    %6093 = vmatprep.subr.mxu0 0.0
    %6094 = vmatpush1.msra.mxu0 0.0
    %6095 = vmatprep.subr.mxu0 0.0
    %v6096 = vand.u32 %v52, 4294901760
    %v6097 = vsub.f32 %v52, %v6096
    %v6098 = vand.u32 %v6097, 4294901760
    %6099 = vmatpush1.msra.mxu0 %v6098
    %6100 = vmatprep.subr.mxu0 0.0
    %v6101 = vand.u32 %v51, 4294901760
    %v6102 = vsub.f32 %v51, %v6101
    %v6103 = vand.u32 %v6102, 4294901760
    %6104 = vmatpush1.msra.mxu0 %v6103
    %6105 = vmatprep.subr.mxu0 0.0
    %v6106 = vand.u32 %v50, 4294901760
    %v6107 = vsub.f32 %v50, %v6106
    %v6108 = vand.u32 %v6107, 4294901760
    %6109 = vmatpush1.msra.mxu0 %v6108
    %6110 = vmatprep.subr.mxu0 0.0
    %v6111 = vand.u32 %v49, 4294901760
    %v6112 = vsub.f32 %v49, %v6111
    %v6113 = vand.u32 %v6112, 4294901760
    %6114 = vmatpush1.msra.mxu0 %v6113
    %6115 = vmatprep.subr.mxu0 0.0
    %v6116 = vand.u32 %v48, 4294901760
    %v6117 = vsub.f32 %v48, %v6116
    %v6118 = vand.u32 %v6117, 4294901760
    %6119 = vmatpush1.msra.mxu0 %v6118
    %6120 = vmatprep.subr.mxu0 0.0
    %v6121 = vand.u32 %v47, 4294901760
    %v6122 = vsub.f32 %v47, %v6121
    %v6123 = vand.u32 %v6122, 4294901760
    %6124 = vmatpush1.msra.mxu0 %v6123
    %6125 = vmatprep.subr.mxu0 0.0
    %v6126 = vand.u32 %v46, 4294901760
    %v6127 = vsub.f32 %v46, %v6126
    %v6128 = vand.u32 %v6127, 4294901760
    %6129 = vmatpush1.msra.mxu0 %v6128
    %6130 = vmatprep.subr.mxu0 0.0
    %v6131 = vand.u32 %v45, 4294901760
    %v6132 = vsub.f32 %v45, %v6131
    %v6133 = vand.u32 %v6132, 4294901760
    %6134 = vmatpush1.msra.mxu0 %v6133
    %6135 = vmatprep.subr.mxu0 0.0
    %6136 = vmatpush2.msra.mxu0 0.0
    %6137 = vmatprep.subr.mxu0 0.0
    %6138 = vmatpush2.msra.mxu0 0.0
    %6139 = vmatprep.subr.mxu0 0.0
    %6140 = vmatpush2.msra.mxu0 0.0
    %6141 = vmatprep.subr.mxu0 0.0
    %6142 = vmatpush2.msra.mxu0 0.0
    %6143 = vmatprep.subr.mxu0 0.0
    %6144 = vmatpush2.msra.mxu0 0.0
    %6145 = vmatprep.subr.mxu0 0.0
    %6146 = vmatpush2.msra.mxu0 0.0
    %6147 = vmatprep.subr.mxu0 0.0
    %6148 = vmatpush2.msra.mxu0 0.0
    %6149 = vmatprep.subr.mxu0 0.0
    %6150 = vmatpush2.msra.mxu0 0.0
    %6151 = vmatprep.subr.mxu0 0.0
    %6152 = vmatpush2.msra.mxu0 0.0
    %6153 = vmatprep.subr.mxu0 0.0
    %6154 = vmatpush2.msra.mxu0 0.0
    %6155 = vmatprep.subr.mxu0 0.0
    %6156 = vmatpush2.msra.mxu0 0.0
    %6157 = vmatprep.subr.mxu0 0.0
    %6158 = vmatpush2.msra.mxu0 0.0
    %6159 = vmatprep.subr.mxu0 0.0
    %6160 = vmatpush2.msra.mxu0 0.0
    %6161 = vmatprep.subr.mxu0 0.0
    %6162 = vmatpush2.msra.mxu0 0.0
    %6163 = vmatprep.subr.mxu0 0.0
    %6164 = vmatpush2.msra.mxu0 0.0
    %6165 = vmatprep.subr.mxu0 0.0
    %6166 = vmatpush2.msra.mxu0 0.0
    %6167 = vmatprep.mubr.f32.mxu0 0.0
    %v6168 = vand.u32 %v5714, 4294901760
    %6169 = vmatmul.mubr.f32.gmra.mxu0 %v6168
    %v6170 = vpop.f32.mrf.mxu0
    %v6171 = vadd.f32 %v6076, %v6170
    %v6172 = vpop.f32.mrf.mxu0
    %6173 = vdwg.mxu0
    %6174 = vmatprep.subr.mxu0 0.0
    %6175 = vmatpush1.msra.mxu0 0.0
    %6176 = vmatprep.subr.mxu0 0.0
    %6177 = vmatpush1.msra.mxu0 0.0
    %6178 = vmatprep.subr.mxu0 0.0
    %6179 = vmatpush1.msra.mxu0 0.0
    %6180 = vmatprep.subr.mxu0 0.0
    %6181 = vmatpush1.msra.mxu0 0.0
    %6182 = vmatprep.subr.mxu0 0.0
    %6183 = vmatpush1.msra.mxu0 0.0
    %6184 = vmatprep.subr.mxu0 0.0
    %6185 = vmatpush1.msra.mxu0 0.0
    %6186 = vmatprep.subr.mxu0 0.0
    %6187 = vmatpush1.msra.mxu0 0.0
    %6188 = vmatprep.subr.mxu0 0.0
    %6189 = vmatpush1.msra.mxu0 0.0
    %6190 = vmatprep.subr.mxu0 0.0
    %v6191 = vand.u32 %v52, 4294901760
    %6192 = vmatpush1.msra.mxu0 %v6191
    %6193 = vmatprep.subr.mxu0 0.0
    %v6194 = vand.u32 %v51, 4294901760
    %6195 = vmatpush1.msra.mxu0 %v6194
    %6196 = vmatprep.subr.mxu0 0.0
    %v6197 = vand.u32 %v50, 4294901760
    %6198 = vmatpush1.msra.mxu0 %v6197
    %6199 = vmatprep.subr.mxu0 0.0
    %v6200 = vand.u32 %v49, 4294901760
    %6201 = vmatpush1.msra.mxu0 %v6200
    %6202 = vmatprep.subr.mxu0 0.0
    %v6203 = vand.u32 %v48, 4294901760
    %6204 = vmatpush1.msra.mxu0 %v6203
    %6205 = vmatprep.subr.mxu0 0.0
    %v6206 = vand.u32 %v47, 4294901760
    %6207 = vmatpush1.msra.mxu0 %v6206
    %6208 = vmatprep.subr.mxu0 0.0
    %v6209 = vand.u32 %v46, 4294901760
    %6210 = vmatpush1.msra.mxu0 %v6209
    %6211 = vmatprep.subr.mxu0 0.0
    %v6212 = vand.u32 %v45, 4294901760
    %6213 = vmatpush1.msra.mxu0 %v6212
    %6214 = vmatprep.subr.mxu0 0.0
    %6215 = vmatpush2.msra.mxu0 0.0
    %6216 = vmatprep.subr.mxu0 0.0
    %6217 = vmatpush2.msra.mxu0 0.0
    %6218 = vmatprep.subr.mxu0 0.0
    %6219 = vmatpush2.msra.mxu0 0.0
    %6220 = vmatprep.subr.mxu0 0.0
    %6221 = vmatpush2.msra.mxu0 0.0
    %6222 = vmatprep.subr.mxu0 0.0
    %6223 = vmatpush2.msra.mxu0 0.0
    %6224 = vmatprep.subr.mxu0 0.0
    %6225 = vmatpush2.msra.mxu0 0.0
    %6226 = vmatprep.subr.mxu0 0.0
    %6227 = vmatpush2.msra.mxu0 0.0
    %6228 = vmatprep.subr.mxu0 0.0
    %6229 = vmatpush2.msra.mxu0 0.0
    %6230 = vmatprep.subr.mxu0 0.0
    %6231 = vmatpush2.msra.mxu0 0.0
    %6232 = vmatprep.subr.mxu0 0.0
    %6233 = vmatpush2.msra.mxu0 0.0
    %6234 = vmatprep.subr.mxu0 0.0
    %6235 = vmatpush2.msra.mxu0 0.0
    %6236 = vmatprep.subr.mxu0 0.0
    %6237 = vmatpush2.msra.mxu0 0.0
    %6238 = vmatprep.subr.mxu0 0.0
    %6239 = vmatpush2.msra.mxu0 0.0
    %6240 = vmatprep.subr.mxu0 0.0
    %6241 = vmatpush2.msra.mxu0 0.0
    %6242 = vmatprep.subr.mxu0 0.0
    %6243 = vmatpush2.msra.mxu0 0.0
    %6244 = vmatprep.subr.mxu0 0.0
    %6245 = vmatpush2.msra.mxu0 0.0
    %6246 = vmatprep.mubr.f32.mxu0 0.0
    %v6247 = vand.u32 %v5714, 4294901760
    %6248 = vmatmul.mubr.f32.gmra.mxu0 %v6247
    %v6249 = vpop.f32.mrf.mxu0
    %v6250 = vadd.f32 %v6171, %v6249
    %v6251 = vpop.f32.mrf.mxu0
    %6252 = vdwg.mxu0
    %v6253 = vtanh.pop %v6250
    %v6255 = vrot.slane %v5705, 5
    %v6256 = vsel %vm64, %v6255, 0
    %6258 = vmatprep.subr.mxu0 0.0
    %6259 = vmatpush1.msra.mxu0 0.0
    %6260 = vmatprep.subr.mxu0 0.0
    %6261 = vmatpush1.msra.mxu0 0.0
    %6262 = vmatprep.subr.mxu0 0.0
    %6263 = vmatpush1.msra.mxu0 0.0
    %6264 = vmatprep.subr.mxu0 0.0
    %6265 = vmatpush1.msra.mxu0 0.0
    %6266 = vmatprep.subr.mxu0 0.0
    %6267 = vmatpush1.msra.mxu0 0.0
    %6268 = vmatprep.subr.mxu0 0.0
    %6269 = vmatpush1.msra.mxu0 0.0
    %6270 = vmatprep.subr.mxu0 0.0
    %6271 = vmatpush1.msra.mxu0 0.0
    %6272 = vmatprep.subr.mxu0 0.0
    %6273 = vmatpush1.msra.mxu0 0.0
    %6274 = vmatprep.subr.mxu0 0.0
    %6275 = vmatpush1.msra.mxu0 0.0
    %6276 = vmatprep.subr.mxu0 0.0
    %6277 = vmatpush1.msra.mxu0 0.0
    %6278 = vmatprep.subr.mxu0 0.0
    %6279 = vmatpush1.msra.mxu0 0.0
    %6280 = vmatprep.subr.mxu0 0.0
    %6281 = vmatpush1.msra.mxu0 0.0
    %6282 = vmatprep.subr.mxu0 0.0
    %v6283 = vand.u32 %v43, 4294901760
    %6284 = vmatpush1.msra.mxu0 %v6283
    %6285 = vmatprep.subr.mxu0 0.0
    %v6286 = vand.u32 %v42, 4294901760
    %6287 = vmatpush1.msra.mxu0 %v6286
    %6288 = vmatprep.subr.mxu0 0.0
    %v6289 = vand.u32 %v41, 4294901760
    %6290 = vmatpush1.msra.mxu0 %v6289
    %6291 = vmatprep.subr.mxu0 0.0
    %v6292 = vand.u32 %v40, 4294901760
    %6293 = vmatpush1.msra.mxu0 %v6292
    %6294 = vmatprep.subr.mxu0 0.0
    %6295 = vmatpush2.msra.mxu0 0.0
    %6296 = vmatprep.subr.mxu0 0.0
    %6297 = vmatpush2.msra.mxu0 0.0
    %6298 = vmatprep.subr.mxu0 0.0
    %6299 = vmatpush2.msra.mxu0 0.0
    %6300 = vmatprep.subr.mxu0 0.0
    %6301 = vmatpush2.msra.mxu0 0.0
    %6302 = vmatprep.subr.mxu0 0.0
    %6303 = vmatpush2.msra.mxu0 0.0
    %6304 = vmatprep.subr.mxu0 0.0
    %6305 = vmatpush2.msra.mxu0 0.0
    %6306 = vmatprep.subr.mxu0 0.0
    %6307 = vmatpush2.msra.mxu0 0.0
    %6308 = vmatprep.subr.mxu0 0.0
    %6309 = vmatpush2.msra.mxu0 0.0
    %6310 = vmatprep.subr.mxu0 0.0
    %6311 = vmatpush2.msra.mxu0 0.0
    %6312 = vmatprep.subr.mxu0 0.0
    %6313 = vmatpush2.msra.mxu0 0.0
    %6314 = vmatprep.subr.mxu0 0.0
    %6315 = vmatpush2.msra.mxu0 0.0
    %6316 = vmatprep.subr.mxu0 0.0
    %6317 = vmatpush2.msra.mxu0 0.0
    %6318 = vmatprep.subr.mxu0 0.0
    %6319 = vmatpush2.msra.mxu0 0.0
    %6320 = vmatprep.subr.mxu0 0.0
    %6321 = vmatpush2.msra.mxu0 0.0
    %6322 = vmatprep.subr.mxu0 0.0
    %6323 = vmatpush2.msra.mxu0 0.0
    %6324 = vmatprep.subr.mxu0 0.0
    %6325 = vmatpush2.msra.mxu0 0.0
    %6326 = vmatprep.mubr.f32.mxu0 0.0
    %v6327 = vand.u32 %v6256, 4294901760
    %v6328 = vsub.f32 %v6256, %v6327
    %v6329 = vand.u32 %v6328, 4294901760
    %v6330 = vsub.f32 %v6328, %v6329
    %v6331 = vand.u32 %v6330, 4294901760
    %6332 = vmatmul.mubr.f32.gmra.mxu0 %v6331
    %v6333 = vpop.f32.mrf.mxu0
    %v6334 = vadd.f32 0.0, %v6333
    %v6335 = vpop.f32.mrf.mxu0
    %6336 = vdwg.mxu0
    %6337 = vmatprep.subr.mxu0 0.0
    %6338 = vmatpush1.msra.mxu0 0.0
    %6339 = vmatprep.subr.mxu0 0.0
    %6340 = vmatpush1.msra.mxu0 0.0
    %6341 = vmatprep.subr.mxu0 0.0
    %6342 = vmatpush1.msra.mxu0 0.0
    %6343 = vmatprep.subr.mxu0 0.0
    %6344 = vmatpush1.msra.mxu0 0.0
    %6345 = vmatprep.subr.mxu0 0.0
    %6346 = vmatpush1.msra.mxu0 0.0
    %6347 = vmatprep.subr.mxu0 0.0
    %6348 = vmatpush1.msra.mxu0 0.0
    %6349 = vmatprep.subr.mxu0 0.0
    %6350 = vmatpush1.msra.mxu0 0.0
    %6351 = vmatprep.subr.mxu0 0.0
    %6352 = vmatpush1.msra.mxu0 0.0
    %6353 = vmatprep.subr.mxu0 0.0
    %6354 = vmatpush1.msra.mxu0 0.0
    %6355 = vmatprep.subr.mxu0 0.0
    %6356 = vmatpush1.msra.mxu0 0.0
    %6357 = vmatprep.subr.mxu0 0.0
    %6358 = vmatpush1.msra.mxu0 0.0
    %6359 = vmatprep.subr.mxu0 0.0
    %6360 = vmatpush1.msra.mxu0 0.0
    %6361 = vmatprep.subr.mxu0 0.0
    %v6362 = vand.u32 %v43, 4294901760
    %v6363 = vsub.f32 %v43, %v6362
    %v6364 = vand.u32 %v6363, 4294901760
    %v6365 = vsub.f32 %v6363, %v6364
    %v6366 = vand.u32 %v6365, 4294901760
    %6367 = vmatpush1.msra.mxu0 %v6366
    %6368 = vmatprep.subr.mxu0 0.0
    %v6369 = vand.u32 %v42, 4294901760
    %v6370 = vsub.f32 %v42, %v6369
    %v6371 = vand.u32 %v6370, 4294901760
    %v6372 = vsub.f32 %v6370, %v6371
    %v6373 = vand.u32 %v6372, 4294901760
    %6374 = vmatpush1.msra.mxu0 %v6373
    %6375 = vmatprep.subr.mxu0 0.0
    %v6376 = vand.u32 %v41, 4294901760
    %v6377 = vsub.f32 %v41, %v6376
    %v6378 = vand.u32 %v6377, 4294901760
    %v6379 = vsub.f32 %v6377, %v6378
    %v6380 = vand.u32 %v6379, 4294901760
    %6381 = vmatpush1.msra.mxu0 %v6380
    %6382 = vmatprep.subr.mxu0 0.0
    %v6383 = vand.u32 %v40, 4294901760
    %v6384 = vsub.f32 %v40, %v6383
    %v6385 = vand.u32 %v6384, 4294901760
    %v6386 = vsub.f32 %v6384, %v6385
    %v6387 = vand.u32 %v6386, 4294901760
    %6388 = vmatpush1.msra.mxu0 %v6387
    %6389 = vmatprep.subr.mxu0 0.0
    %6390 = vmatpush2.msra.mxu0 0.0
    %6391 = vmatprep.subr.mxu0 0.0
    %6392 = vmatpush2.msra.mxu0 0.0
    %6393 = vmatprep.subr.mxu0 0.0
    %6394 = vmatpush2.msra.mxu0 0.0
    %6395 = vmatprep.subr.mxu0 0.0
    %6396 = vmatpush2.msra.mxu0 0.0
    %6397 = vmatprep.subr.mxu0 0.0
    %6398 = vmatpush2.msra.mxu0 0.0
    %6399 = vmatprep.subr.mxu0 0.0
    %6400 = vmatpush2.msra.mxu0 0.0
    %6401 = vmatprep.subr.mxu0 0.0
    %6402 = vmatpush2.msra.mxu0 0.0
    %6403 = vmatprep.subr.mxu0 0.0
    %6404 = vmatpush2.msra.mxu0 0.0
    %6405 = vmatprep.subr.mxu0 0.0
    %6406 = vmatpush2.msra.mxu0 0.0
    %6407 = vmatprep.subr.mxu0 0.0
    %6408 = vmatpush2.msra.mxu0 0.0
    %6409 = vmatprep.subr.mxu0 0.0
    %6410 = vmatpush2.msra.mxu0 0.0
    %6411 = vmatprep.subr.mxu0 0.0
    %6412 = vmatpush2.msra.mxu0 0.0
    %6413 = vmatprep.subr.mxu0 0.0
    %6414 = vmatpush2.msra.mxu0 0.0
    %6415 = vmatprep.subr.mxu0 0.0
    %6416 = vmatpush2.msra.mxu0 0.0
    %6417 = vmatprep.subr.mxu0 0.0
    %6418 = vmatpush2.msra.mxu0 0.0
    %6419 = vmatprep.subr.mxu0 0.0
    %6420 = vmatpush2.msra.mxu0 0.0
    %6421 = vmatprep.mubr.f32.mxu0 0.0
    %v6422 = vand.u32 %v6256, 4294901760
    %6423 = vmatmul.mubr.f32.gmra.mxu0 %v6422
    %v6424 = vpop.f32.mrf.mxu0
    %v6425 = vadd.f32 %v6334, %v6424
    %v6426 = vpop.f32.mrf.mxu0
    %6427 = vdwg.mxu0
    %6428 = vmatprep.subr.mxu0 0.0
    %6429 = vmatpush1.msra.mxu0 0.0
    %6430 = vmatprep.subr.mxu0 0.0
    %6431 = vmatpush1.msra.mxu0 0.0
    %6432 = vmatprep.subr.mxu0 0.0
    %6433 = vmatpush1.msra.mxu0 0.0
    %6434 = vmatprep.subr.mxu0 0.0
    %6435 = vmatpush1.msra.mxu0 0.0
    %6436 = vmatprep.subr.mxu0 0.0
    %6437 = vmatpush1.msra.mxu0 0.0
    %6438 = vmatprep.subr.mxu0 0.0
    %6439 = vmatpush1.msra.mxu0 0.0
    %6440 = vmatprep.subr.mxu0 0.0
    %6441 = vmatpush1.msra.mxu0 0.0
    %6442 = vmatprep.subr.mxu0 0.0
    %6443 = vmatpush1.msra.mxu0 0.0
    %6444 = vmatprep.subr.mxu0 0.0
    %6445 = vmatpush1.msra.mxu0 0.0
    %6446 = vmatprep.subr.mxu0 0.0
    %6447 = vmatpush1.msra.mxu0 0.0
    %6448 = vmatprep.subr.mxu0 0.0
    %6449 = vmatpush1.msra.mxu0 0.0
    %6450 = vmatprep.subr.mxu0 0.0
    %6451 = vmatpush1.msra.mxu0 0.0
    %6452 = vmatprep.subr.mxu0 0.0
    %v6453 = vand.u32 %v43, 4294901760
    %v6454 = vsub.f32 %v43, %v6453
    %6455 = vmatpush1.msra.mxu0 %v6454
    %6456 = vmatprep.subr.mxu0 0.0
    %v6457 = vand.u32 %v42, 4294901760
    %v6458 = vsub.f32 %v42, %v6457
    %6459 = vmatpush1.msra.mxu0 %v6458
    %6460 = vmatprep.subr.mxu0 0.0
    %v6461 = vand.u32 %v41, 4294901760
    %v6462 = vsub.f32 %v41, %v6461
    %6463 = vmatpush1.msra.mxu0 %v6462
    %6464 = vmatprep.subr.mxu0 0.0
    %v6465 = vand.u32 %v40, 4294901760
    %v6466 = vsub.f32 %v40, %v6465
    %6467 = vmatpush1.msra.mxu0 %v6466
    %6468 = vmatprep.subr.mxu0 0.0
    %6469 = vmatpush2.msra.mxu0 0.0
    %6470 = vmatprep.subr.mxu0 0.0
    %6471 = vmatpush2.msra.mxu0 0.0
    %6472 = vmatprep.subr.mxu0 0.0
    %6473 = vmatpush2.msra.mxu0 0.0
    %6474 = vmatprep.subr.mxu0 0.0
    %6475 = vmatpush2.msra.mxu0 0.0
    %6476 = vmatprep.subr.mxu0 0.0
    %6477 = vmatpush2.msra.mxu0 0.0
    %6478 = vmatprep.subr.mxu0 0.0
    %6479 = vmatpush2.msra.mxu0 0.0
    %6480 = vmatprep.subr.mxu0 0.0
    %6481 = vmatpush2.msra.mxu0 0.0
    %6482 = vmatprep.subr.mxu0 0.0
    %6483 = vmatpush2.msra.mxu0 0.0
    %6484 = vmatprep.subr.mxu0 0.0
    %6485 = vmatpush2.msra.mxu0 0.0
    %6486 = vmatprep.subr.mxu0 0.0
    %6487 = vmatpush2.msra.mxu0 0.0
    %6488 = vmatprep.subr.mxu0 0.0
    %6489 = vmatpush2.msra.mxu0 0.0
    %6490 = vmatprep.subr.mxu0 0.0
    %6491 = vmatpush2.msra.mxu0 0.0
    %6492 = vmatprep.subr.mxu0 0.0
    %6493 = vmatpush2.msra.mxu0 0.0
    %6494 = vmatprep.subr.mxu0 0.0
    %6495 = vmatpush2.msra.mxu0 0.0
    %6496 = vmatprep.subr.mxu0 0.0
    %6497 = vmatpush2.msra.mxu0 0.0
    %6498 = vmatprep.subr.mxu0 0.0
    %6499 = vmatpush2.msra.mxu0 0.0
    %6500 = vmatprep.mubr.f32.mxu0 0.0
    %v6501 = vand.u32 %v6256, 4294901760
    %v6502 = vsub.f32 %v6256, %v6501
    %6503 = vmatmul.mubr.f32.gmra.mxu0 %v6502
    %v6504 = vpop.f32.mrf.mxu0
    %v6505 = vadd.f32 %v6425, %v6504
    %v6506 = vpop.f32.mrf.mxu0
    %6507 = vdwg.mxu0
    %6508 = vmatprep.subr.mxu0 0.0
    %6509 = vmatpush1.msra.mxu0 0.0
    %6510 = vmatprep.subr.mxu0 0.0
    %6511 = vmatpush1.msra.mxu0 0.0
    %6512 = vmatprep.subr.mxu0 0.0
    %6513 = vmatpush1.msra.mxu0 0.0
    %6514 = vmatprep.subr.mxu0 0.0
    %6515 = vmatpush1.msra.mxu0 0.0
    %6516 = vmatprep.subr.mxu0 0.0
    %6517 = vmatpush1.msra.mxu0 0.0
    %6518 = vmatprep.subr.mxu0 0.0
    %6519 = vmatpush1.msra.mxu0 0.0
    %6520 = vmatprep.subr.mxu0 0.0
    %6521 = vmatpush1.msra.mxu0 0.0
    %6522 = vmatprep.subr.mxu0 0.0
    %6523 = vmatpush1.msra.mxu0 0.0
    %6524 = vmatprep.subr.mxu0 0.0
    %6525 = vmatpush1.msra.mxu0 0.0
    %6526 = vmatprep.subr.mxu0 0.0
    %6527 = vmatpush1.msra.mxu0 0.0
    %6528 = vmatprep.subr.mxu0 0.0
    %6529 = vmatpush1.msra.mxu0 0.0
    %6530 = vmatprep.subr.mxu0 0.0
    %6531 = vmatpush1.msra.mxu0 0.0
    %6532 = vmatprep.subr.mxu0 0.0
    %v6533 = vand.u32 %v43, 4294901760
    %6534 = vmatpush1.msra.mxu0 %v6533
    %6535 = vmatprep.subr.mxu0 0.0
    %v6536 = vand.u32 %v42, 4294901760
    %6537 = vmatpush1.msra.mxu0 %v6536
    %6538 = vmatprep.subr.mxu0 0.0
    %v6539 = vand.u32 %v41, 4294901760
    %6540 = vmatpush1.msra.mxu0 %v6539
    %6541 = vmatprep.subr.mxu0 0.0
    %v6542 = vand.u32 %v40, 4294901760
    %6543 = vmatpush1.msra.mxu0 %v6542
    %6544 = vmatprep.subr.mxu0 0.0
    %6545 = vmatpush2.msra.mxu0 0.0
    %6546 = vmatprep.subr.mxu0 0.0
    %6547 = vmatpush2.msra.mxu0 0.0
    %6548 = vmatprep.subr.mxu0 0.0
    %6549 = vmatpush2.msra.mxu0 0.0
    %6550 = vmatprep.subr.mxu0 0.0
    %6551 = vmatpush2.msra.mxu0 0.0
    %6552 = vmatprep.subr.mxu0 0.0
    %6553 = vmatpush2.msra.mxu0 0.0
    %6554 = vmatprep.subr.mxu0 0.0
    %6555 = vmatpush2.msra.mxu0 0.0
    %6556 = vmatprep.subr.mxu0 0.0
    %6557 = vmatpush2.msra.mxu0 0.0
    %6558 = vmatprep.subr.mxu0 0.0
    %6559 = vmatpush2.msra.mxu0 0.0
    %6560 = vmatprep.subr.mxu0 0.0
    %6561 = vmatpush2.msra.mxu0 0.0
    %6562 = vmatprep.subr.mxu0 0.0
    %6563 = vmatpush2.msra.mxu0 0.0
    %6564 = vmatprep.subr.mxu0 0.0
    %6565 = vmatpush2.msra.mxu0 0.0
    %6566 = vmatprep.subr.mxu0 0.0
    %6567 = vmatpush2.msra.mxu0 0.0
    %6568 = vmatprep.subr.mxu0 0.0
    %6569 = vmatpush2.msra.mxu0 0.0
    %6570 = vmatprep.subr.mxu0 0.0
    %6571 = vmatpush2.msra.mxu0 0.0
    %6572 = vmatprep.subr.mxu0 0.0
    %6573 = vmatpush2.msra.mxu0 0.0
    %6574 = vmatprep.subr.mxu0 0.0
    %6575 = vmatpush2.msra.mxu0 0.0
    %6576 = vmatprep.mubr.f32.mxu0 0.0
    %v6577 = vand.u32 %v6256, 4294901760
    %v6578 = vsub.f32 %v6256, %v6577
    %v6579 = vand.u32 %v6578, 4294901760
    %6580 = vmatmul.mubr.f32.gmra.mxu0 %v6579
    %v6581 = vpop.f32.mrf.mxu0
    %v6582 = vadd.f32 %v6505, %v6581
    %v6583 = vpop.f32.mrf.mxu0
    %6584 = vdwg.mxu0
    %6585 = vmatprep.subr.mxu0 0.0
    %6586 = vmatpush1.msra.mxu0 0.0
    %6587 = vmatprep.subr.mxu0 0.0
    %6588 = vmatpush1.msra.mxu0 0.0
    %6589 = vmatprep.subr.mxu0 0.0
    %6590 = vmatpush1.msra.mxu0 0.0
    %6591 = vmatprep.subr.mxu0 0.0
    %6592 = vmatpush1.msra.mxu0 0.0
    %6593 = vmatprep.subr.mxu0 0.0
    %6594 = vmatpush1.msra.mxu0 0.0
    %6595 = vmatprep.subr.mxu0 0.0
    %6596 = vmatpush1.msra.mxu0 0.0
    %6597 = vmatprep.subr.mxu0 0.0
    %6598 = vmatpush1.msra.mxu0 0.0
    %6599 = vmatprep.subr.mxu0 0.0
    %6600 = vmatpush1.msra.mxu0 0.0
    %6601 = vmatprep.subr.mxu0 0.0
    %6602 = vmatpush1.msra.mxu0 0.0
    %6603 = vmatprep.subr.mxu0 0.0
    %6604 = vmatpush1.msra.mxu0 0.0
    %6605 = vmatprep.subr.mxu0 0.0
    %6606 = vmatpush1.msra.mxu0 0.0
    %6607 = vmatprep.subr.mxu0 0.0
    %6608 = vmatpush1.msra.mxu0 0.0
    %6609 = vmatprep.subr.mxu0 0.0
    %v6610 = vand.u32 %v43, 4294901760
    %v6611 = vsub.f32 %v43, %v6610
    %v6612 = vand.u32 %v6611, 4294901760
    %6613 = vmatpush1.msra.mxu0 %v6612
    %6614 = vmatprep.subr.mxu0 0.0
    %v6615 = vand.u32 %v42, 4294901760
    %v6616 = vsub.f32 %v42, %v6615
    %v6617 = vand.u32 %v6616, 4294901760
    %6618 = vmatpush1.msra.mxu0 %v6617
    %6619 = vmatprep.subr.mxu0 0.0
    %v6620 = vand.u32 %v41, 4294901760
    %v6621 = vsub.f32 %v41, %v6620
    %v6622 = vand.u32 %v6621, 4294901760
    %6623 = vmatpush1.msra.mxu0 %v6622
    %6624 = vmatprep.subr.mxu0 0.0
    %v6625 = vand.u32 %v40, 4294901760
    %v6626 = vsub.f32 %v40, %v6625
    %v6627 = vand.u32 %v6626, 4294901760
    %6628 = vmatpush1.msra.mxu0 %v6627
    %6629 = vmatprep.subr.mxu0 0.0
    %6630 = vmatpush2.msra.mxu0 0.0
    %6631 = vmatprep.subr.mxu0 0.0
    %6632 = vmatpush2.msra.mxu0 0.0
    %6633 = vmatprep.subr.mxu0 0.0
    %6634 = vmatpush2.msra.mxu0 0.0
    %6635 = vmatprep.subr.mxu0 0.0
    %6636 = vmatpush2.msra.mxu0 0.0
    %6637 = vmatprep.subr.mxu0 0.0
    %6638 = vmatpush2.msra.mxu0 0.0
    %6639 = vmatprep.subr.mxu0 0.0
    %6640 = vmatpush2.msra.mxu0 0.0
    %6641 = vmatprep.subr.mxu0 0.0
    %6642 = vmatpush2.msra.mxu0 0.0
    %6643 = vmatprep.subr.mxu0 0.0
    %6644 = vmatpush2.msra.mxu0 0.0
    %6645 = vmatprep.subr.mxu0 0.0
    %6646 = vmatpush2.msra.mxu0 0.0
    %6647 = vmatprep.subr.mxu0 0.0
    %6648 = vmatpush2.msra.mxu0 0.0
    %6649 = vmatprep.subr.mxu0 0.0
    %6650 = vmatpush2.msra.mxu0 0.0
    %6651 = vmatprep.subr.mxu0 0.0
    %6652 = vmatpush2.msra.mxu0 0.0
    %6653 = vmatprep.subr.mxu0 0.0
    %6654 = vmatpush2.msra.mxu0 0.0
    %6655 = vmatprep.subr.mxu0 0.0
    %6656 = vmatpush2.msra.mxu0 0.0
    %6657 = vmatprep.subr.mxu0 0.0
    %6658 = vmatpush2.msra.mxu0 0.0
    %6659 = vmatprep.subr.mxu0 0.0
    %6660 = vmatpush2.msra.mxu0 0.0
    %6661 = vmatprep.mubr.f32.mxu0 0.0
    %v6662 = vand.u32 %v6256, 4294901760
    %6663 = vmatmul.mubr.f32.gmra.mxu0 %v6662
    %v6664 = vpop.f32.mrf.mxu0
    %v6665 = vadd.f32 %v6582, %v6664
    %v6666 = vpop.f32.mrf.mxu0
    %6667 = vdwg.mxu0
    %6668 = vmatprep.subr.mxu0 0.0
    %6669 = vmatpush1.msra.mxu0 0.0
    %6670 = vmatprep.subr.mxu0 0.0
    %6671 = vmatpush1.msra.mxu0 0.0
    %6672 = vmatprep.subr.mxu0 0.0
    %6673 = vmatpush1.msra.mxu0 0.0
    %6674 = vmatprep.subr.mxu0 0.0
    %6675 = vmatpush1.msra.mxu0 0.0
    %6676 = vmatprep.subr.mxu0 0.0
    %6677 = vmatpush1.msra.mxu0 0.0
    %6678 = vmatprep.subr.mxu0 0.0
    %6679 = vmatpush1.msra.mxu0 0.0
    %6680 = vmatprep.subr.mxu0 0.0
    %6681 = vmatpush1.msra.mxu0 0.0
    %6682 = vmatprep.subr.mxu0 0.0
    %6683 = vmatpush1.msra.mxu0 0.0
    %6684 = vmatprep.subr.mxu0 0.0
    %6685 = vmatpush1.msra.mxu0 0.0
    %6686 = vmatprep.subr.mxu0 0.0
    %6687 = vmatpush1.msra.mxu0 0.0
    %6688 = vmatprep.subr.mxu0 0.0
    %6689 = vmatpush1.msra.mxu0 0.0
    %6690 = vmatprep.subr.mxu0 0.0
    %6691 = vmatpush1.msra.mxu0 0.0
    %6692 = vmatprep.subr.mxu0 0.0
    %v6693 = vand.u32 %v43, 4294901760
    %6694 = vmatpush1.msra.mxu0 %v6693
    %6695 = vmatprep.subr.mxu0 0.0
    %v6696 = vand.u32 %v42, 4294901760
    %6697 = vmatpush1.msra.mxu0 %v6696
    %6698 = vmatprep.subr.mxu0 0.0
    %v6699 = vand.u32 %v41, 4294901760
    %6700 = vmatpush1.msra.mxu0 %v6699
    %6701 = vmatprep.subr.mxu0 0.0
    %v6702 = vand.u32 %v40, 4294901760
    %6703 = vmatpush1.msra.mxu0 %v6702
    %6704 = vmatprep.subr.mxu0 0.0
    %6705 = vmatpush2.msra.mxu0 0.0
    %6706 = vmatprep.subr.mxu0 0.0
    %6707 = vmatpush2.msra.mxu0 0.0
    %6708 = vmatprep.subr.mxu0 0.0
    %6709 = vmatpush2.msra.mxu0 0.0
    %6710 = vmatprep.subr.mxu0 0.0
    %6711 = vmatpush2.msra.mxu0 0.0
    %6712 = vmatprep.subr.mxu0 0.0
    %6713 = vmatpush2.msra.mxu0 0.0
    %6714 = vmatprep.subr.mxu0 0.0
    %6715 = vmatpush2.msra.mxu0 0.0
    %6716 = vmatprep.subr.mxu0 0.0
    %6717 = vmatpush2.msra.mxu0 0.0
    %6718 = vmatprep.subr.mxu0 0.0
    %6719 = vmatpush2.msra.mxu0 0.0
    %6720 = vmatprep.subr.mxu0 0.0
    %6721 = vmatpush2.msra.mxu0 0.0
    %6722 = vmatprep.subr.mxu0 0.0
    %6723 = vmatpush2.msra.mxu0 0.0
    %6724 = vmatprep.subr.mxu0 0.0
    %6725 = vmatpush2.msra.mxu0 0.0
    %6726 = vmatprep.subr.mxu0 0.0
    %6727 = vmatpush2.msra.mxu0 0.0
    %6728 = vmatprep.subr.mxu0 0.0
    %6729 = vmatpush2.msra.mxu0 0.0
    %6730 = vmatprep.subr.mxu0 0.0
    %6731 = vmatpush2.msra.mxu0 0.0
    %6732 = vmatprep.subr.mxu0 0.0
    %6733 = vmatpush2.msra.mxu0 0.0
    %6734 = vmatprep.subr.mxu0 0.0
    %6735 = vmatpush2.msra.mxu0 0.0
    %6736 = vmatprep.mubr.f32.mxu0 0.0
    %v6737 = vand.u32 %v6256, 4294901760
    %6738 = vmatmul.mubr.f32.gmra.mxu0 %v6737
    %v6739 = vpop.f32.mrf.mxu0
    %v6740 = vadd.f32 %v6665, %v6739
    %v6741 = vpop.f32.mrf.mxu0
    %6742 = vdwg.mxu0
    %v6744 = vrot.slane %v6740, 2
    %v6746 = vadd.f32 %v550, %v6744
    %v6747 = vtanh.pop %v6746
    %v6749 = vrot.slane %v6253, 3
    %6750 = vrot.lane.b32.xlu0 %v6749, 32
    %v6751 = vpop.permute.xlu0 %6750
    %v6753 = vsel %vm64, %v5705, %v6751
    %v6755 = vrot.slane %v6753, 5
    %v6756 = vsel %vm1544, %v6755, 0
    %6758 = vmatprep.subr.mxu0 0.0
    %6759 = vmatpush1.msra.mxu0 0.0
    %6760 = vmatprep.subr.mxu0 0.0
    %6761 = vmatpush1.msra.mxu0 0.0
    %6762 = vmatprep.subr.mxu0 0.0
    %6763 = vmatpush1.msra.mxu0 0.0
    %6764 = vmatprep.subr.mxu0 0.0
    %6765 = vmatpush1.msra.mxu0 0.0
    %6766 = vmatprep.subr.mxu0 0.0
    %6767 = vmatpush1.msra.mxu0 0.0
    %6768 = vmatprep.subr.mxu0 0.0
    %6769 = vmatpush1.msra.mxu0 0.0
    %6770 = vmatprep.subr.mxu0 0.0
    %6771 = vmatpush1.msra.mxu0 0.0
    %6772 = vmatprep.subr.mxu0 0.0
    %6773 = vmatpush1.msra.mxu0 0.0
    %6774 = vmatprep.subr.mxu0 0.0
    %v6775 = vand.u32 %v52, 4294901760
    %6776 = vmatpush1.msra.mxu0 %v6775
    %6777 = vmatprep.subr.mxu0 0.0
    %v6778 = vand.u32 %v51, 4294901760
    %6779 = vmatpush1.msra.mxu0 %v6778
    %6780 = vmatprep.subr.mxu0 0.0
    %v6781 = vand.u32 %v50, 4294901760
    %6782 = vmatpush1.msra.mxu0 %v6781
    %6783 = vmatprep.subr.mxu0 0.0
    %v6784 = vand.u32 %v49, 4294901760
    %6785 = vmatpush1.msra.mxu0 %v6784
    %6786 = vmatprep.subr.mxu0 0.0
    %v6787 = vand.u32 %v48, 4294901760
    %6788 = vmatpush1.msra.mxu0 %v6787
    %6789 = vmatprep.subr.mxu0 0.0
    %v6790 = vand.u32 %v47, 4294901760
    %6791 = vmatpush1.msra.mxu0 %v6790
    %6792 = vmatprep.subr.mxu0 0.0
    %v6793 = vand.u32 %v46, 4294901760
    %6794 = vmatpush1.msra.mxu0 %v6793
    %6795 = vmatprep.subr.mxu0 0.0
    %v6796 = vand.u32 %v45, 4294901760
    %6797 = vmatpush1.msra.mxu0 %v6796
    %6798 = vmatprep.subr.mxu0 0.0
    %6799 = vmatpush2.msra.mxu0 0.0
    %6800 = vmatprep.subr.mxu0 0.0
    %6801 = vmatpush2.msra.mxu0 0.0
    %6802 = vmatprep.subr.mxu0 0.0
    %6803 = vmatpush2.msra.mxu0 0.0
    %6804 = vmatprep.subr.mxu0 0.0
    %6805 = vmatpush2.msra.mxu0 0.0
    %6806 = vmatprep.subr.mxu0 0.0
    %6807 = vmatpush2.msra.mxu0 0.0
    %6808 = vmatprep.subr.mxu0 0.0
    %6809 = vmatpush2.msra.mxu0 0.0
    %6810 = vmatprep.subr.mxu0 0.0
    %6811 = vmatpush2.msra.mxu0 0.0
    %6812 = vmatprep.subr.mxu0 0.0
    %6813 = vmatpush2.msra.mxu0 0.0
    %6814 = vmatprep.subr.mxu0 0.0
    %6815 = vmatpush2.msra.mxu0 0.0
    %6816 = vmatprep.subr.mxu0 0.0
    %6817 = vmatpush2.msra.mxu0 0.0
    %6818 = vmatprep.subr.mxu0 0.0
    %6819 = vmatpush2.msra.mxu0 0.0
    %6820 = vmatprep.subr.mxu0 0.0
    %6821 = vmatpush2.msra.mxu0 0.0
    %6822 = vmatprep.subr.mxu0 0.0
    %6823 = vmatpush2.msra.mxu0 0.0
    %6824 = vmatprep.subr.mxu0 0.0
    %6825 = vmatpush2.msra.mxu0 0.0
    %6826 = vmatprep.subr.mxu0 0.0
    %6827 = vmatpush2.msra.mxu0 0.0
    %6828 = vmatprep.subr.mxu0 0.0
    %6829 = vmatpush2.msra.mxu0 0.0
    %6830 = vmatprep.mubr.f32.mxu0 0.0
    %v6831 = vand.u32 %v6756, 4294901760
    %v6832 = vsub.f32 %v6756, %v6831
    %v6833 = vand.u32 %v6832, 4294901760
    %v6834 = vsub.f32 %v6832, %v6833
    %v6835 = vand.u32 %v6834, 4294901760
    %6836 = vmatmul.mubr.f32.gmra.mxu0 %v6835
    %v6837 = vpop.f32.mrf.mxu0
    %v6838 = vadd.f32 %v1542, %v6837
    %v6839 = vpop.f32.mrf.mxu0
    %6840 = vdwg.mxu0
    %6841 = vmatprep.subr.mxu0 0.0
    %6842 = vmatpush1.msra.mxu0 0.0
    %6843 = vmatprep.subr.mxu0 0.0
    %6844 = vmatpush1.msra.mxu0 0.0
    %6845 = vmatprep.subr.mxu0 0.0
    %6846 = vmatpush1.msra.mxu0 0.0
    %6847 = vmatprep.subr.mxu0 0.0
    %6848 = vmatpush1.msra.mxu0 0.0
    %6849 = vmatprep.subr.mxu0 0.0
    %6850 = vmatpush1.msra.mxu0 0.0
    %6851 = vmatprep.subr.mxu0 0.0
    %6852 = vmatpush1.msra.mxu0 0.0
    %6853 = vmatprep.subr.mxu0 0.0
    %6854 = vmatpush1.msra.mxu0 0.0
    %6855 = vmatprep.subr.mxu0 0.0
    %6856 = vmatpush1.msra.mxu0 0.0
    %6857 = vmatprep.subr.mxu0 0.0
    %v6858 = vand.u32 %v52, 4294901760
    %v6859 = vsub.f32 %v52, %v6858
    %v6860 = vand.u32 %v6859, 4294901760
    %v6861 = vsub.f32 %v6859, %v6860
    %v6862 = vand.u32 %v6861, 4294901760
    %6863 = vmatpush1.msra.mxu0 %v6862
    %6864 = vmatprep.subr.mxu0 0.0
    %v6865 = vand.u32 %v51, 4294901760
    %v6866 = vsub.f32 %v51, %v6865
    %v6867 = vand.u32 %v6866, 4294901760
    %v6868 = vsub.f32 %v6866, %v6867
    %v6869 = vand.u32 %v6868, 4294901760
    %6870 = vmatpush1.msra.mxu0 %v6869
    %6871 = vmatprep.subr.mxu0 0.0
    %v6872 = vand.u32 %v50, 4294901760
    %v6873 = vsub.f32 %v50, %v6872
    %v6874 = vand.u32 %v6873, 4294901760
    %v6875 = vsub.f32 %v6873, %v6874
    %v6876 = vand.u32 %v6875, 4294901760
    %6877 = vmatpush1.msra.mxu0 %v6876
    %6878 = vmatprep.subr.mxu0 0.0
    %v6879 = vand.u32 %v49, 4294901760
    %v6880 = vsub.f32 %v49, %v6879
    %v6881 = vand.u32 %v6880, 4294901760
    %v6882 = vsub.f32 %v6880, %v6881
    %v6883 = vand.u32 %v6882, 4294901760
    %6884 = vmatpush1.msra.mxu0 %v6883
    %6885 = vmatprep.subr.mxu0 0.0
    %v6886 = vand.u32 %v48, 4294901760
    %v6887 = vsub.f32 %v48, %v6886
    %v6888 = vand.u32 %v6887, 4294901760
    %v6889 = vsub.f32 %v6887, %v6888
    %v6890 = vand.u32 %v6889, 4294901760
    %6891 = vmatpush1.msra.mxu0 %v6890
    %6892 = vmatprep.subr.mxu0 0.0
    %v6893 = vand.u32 %v47, 4294901760
    %v6894 = vsub.f32 %v47, %v6893
    %v6895 = vand.u32 %v6894, 4294901760
    %v6896 = vsub.f32 %v6894, %v6895
    %v6897 = vand.u32 %v6896, 4294901760
    %6898 = vmatpush1.msra.mxu0 %v6897
    %6899 = vmatprep.subr.mxu0 0.0
    %v6900 = vand.u32 %v46, 4294901760
    %v6901 = vsub.f32 %v46, %v6900
    %v6902 = vand.u32 %v6901, 4294901760
    %v6903 = vsub.f32 %v6901, %v6902
    %v6904 = vand.u32 %v6903, 4294901760
    %6905 = vmatpush1.msra.mxu0 %v6904
    %6906 = vmatprep.subr.mxu0 0.0
    %v6907 = vand.u32 %v45, 4294901760
    %v6908 = vsub.f32 %v45, %v6907
    %v6909 = vand.u32 %v6908, 4294901760
    %v6910 = vsub.f32 %v6908, %v6909
    %v6911 = vand.u32 %v6910, 4294901760
    %6912 = vmatpush1.msra.mxu0 %v6911
    %6913 = vmatprep.subr.mxu0 0.0
    %6914 = vmatpush2.msra.mxu0 0.0
    %6915 = vmatprep.subr.mxu0 0.0
    %6916 = vmatpush2.msra.mxu0 0.0
    %6917 = vmatprep.subr.mxu0 0.0
    %6918 = vmatpush2.msra.mxu0 0.0
    %6919 = vmatprep.subr.mxu0 0.0
    %6920 = vmatpush2.msra.mxu0 0.0
    %6921 = vmatprep.subr.mxu0 0.0
    %6922 = vmatpush2.msra.mxu0 0.0
    %6923 = vmatprep.subr.mxu0 0.0
    %6924 = vmatpush2.msra.mxu0 0.0
    %6925 = vmatprep.subr.mxu0 0.0
    %6926 = vmatpush2.msra.mxu0 0.0
    %6927 = vmatprep.subr.mxu0 0.0
    %6928 = vmatpush2.msra.mxu0 0.0
    %6929 = vmatprep.subr.mxu0 0.0
    %6930 = vmatpush2.msra.mxu0 0.0
    %6931 = vmatprep.subr.mxu0 0.0
    %6932 = vmatpush2.msra.mxu0 0.0
    %6933 = vmatprep.subr.mxu0 0.0
    %6934 = vmatpush2.msra.mxu0 0.0
    %6935 = vmatprep.subr.mxu0 0.0
    %6936 = vmatpush2.msra.mxu0 0.0
    %6937 = vmatprep.subr.mxu0 0.0
    %6938 = vmatpush2.msra.mxu0 0.0
    %6939 = vmatprep.subr.mxu0 0.0
    %6940 = vmatpush2.msra.mxu0 0.0
    %6941 = vmatprep.subr.mxu0 0.0
    %6942 = vmatpush2.msra.mxu0 0.0
    %6943 = vmatprep.subr.mxu0 0.0
    %6944 = vmatpush2.msra.mxu0 0.0
    %6945 = vmatprep.mubr.f32.mxu0 0.0
    %v6946 = vand.u32 %v6756, 4294901760
    %6947 = vmatmul.mubr.f32.gmra.mxu0 %v6946
    %v6948 = vpop.f32.mrf.mxu0
    %v6949 = vadd.f32 %v6838, %v6948
    %v6950 = vpop.f32.mrf.mxu0
    %6951 = vdwg.mxu0
    %6952 = vmatprep.subr.mxu0 0.0
    %6953 = vmatpush1.msra.mxu0 0.0
    %6954 = vmatprep.subr.mxu0 0.0
    %6955 = vmatpush1.msra.mxu0 0.0
    %6956 = vmatprep.subr.mxu0 0.0
    %6957 = vmatpush1.msra.mxu0 0.0
    %6958 = vmatprep.subr.mxu0 0.0
    %6959 = vmatpush1.msra.mxu0 0.0
    %6960 = vmatprep.subr.mxu0 0.0
    %6961 = vmatpush1.msra.mxu0 0.0
    %6962 = vmatprep.subr.mxu0 0.0
    %6963 = vmatpush1.msra.mxu0 0.0
    %6964 = vmatprep.subr.mxu0 0.0
    %6965 = vmatpush1.msra.mxu0 0.0
    %6966 = vmatprep.subr.mxu0 0.0
    %6967 = vmatpush1.msra.mxu0 0.0
    %6968 = vmatprep.subr.mxu0 0.0
    %v6969 = vand.u32 %v52, 4294901760
    %v6970 = vsub.f32 %v52, %v6969
    %6971 = vmatpush1.msra.mxu0 %v6970
    %6972 = vmatprep.subr.mxu0 0.0
    %v6973 = vand.u32 %v51, 4294901760
    %v6974 = vsub.f32 %v51, %v6973
    %6975 = vmatpush1.msra.mxu0 %v6974
    %6976 = vmatprep.subr.mxu0 0.0
    %v6977 = vand.u32 %v50, 4294901760
    %v6978 = vsub.f32 %v50, %v6977
    %6979 = vmatpush1.msra.mxu0 %v6978
    %6980 = vmatprep.subr.mxu0 0.0
    %v6981 = vand.u32 %v49, 4294901760
    %v6982 = vsub.f32 %v49, %v6981
    %6983 = vmatpush1.msra.mxu0 %v6982
    %6984 = vmatprep.subr.mxu0 0.0
    %v6985 = vand.u32 %v48, 4294901760
    %v6986 = vsub.f32 %v48, %v6985
    %6987 = vmatpush1.msra.mxu0 %v6986
    %6988 = vmatprep.subr.mxu0 0.0
    %v6989 = vand.u32 %v47, 4294901760
    %v6990 = vsub.f32 %v47, %v6989
    %6991 = vmatpush1.msra.mxu0 %v6990
    %6992 = vmatprep.subr.mxu0 0.0
    %v6993 = vand.u32 %v46, 4294901760
    %v6994 = vsub.f32 %v46, %v6993
    %6995 = vmatpush1.msra.mxu0 %v6994
    %6996 = vmatprep.subr.mxu0 0.0
    %v6997 = vand.u32 %v45, 4294901760
    %v6998 = vsub.f32 %v45, %v6997
    %6999 = vmatpush1.msra.mxu0 %v6998
    %7000 = vmatprep.subr.mxu0 0.0
    %7001 = vmatpush2.msra.mxu0 0.0
    %7002 = vmatprep.subr.mxu0 0.0
    %7003 = vmatpush2.msra.mxu0 0.0
    %7004 = vmatprep.subr.mxu0 0.0
    %7005 = vmatpush2.msra.mxu0 0.0
    %7006 = vmatprep.subr.mxu0 0.0
    %7007 = vmatpush2.msra.mxu0 0.0
    %7008 = vmatprep.subr.mxu0 0.0
    %7009 = vmatpush2.msra.mxu0 0.0
    %7010 = vmatprep.subr.mxu0 0.0
    %7011 = vmatpush2.msra.mxu0 0.0
    %7012 = vmatprep.subr.mxu0 0.0
    %7013 = vmatpush2.msra.mxu0 0.0
    %7014 = vmatprep.subr.mxu0 0.0
    %7015 = vmatpush2.msra.mxu0 0.0
    %7016 = vmatprep.subr.mxu0 0.0
    %7017 = vmatpush2.msra.mxu0 0.0
    %7018 = vmatprep.subr.mxu0 0.0
    %7019 = vmatpush2.msra.mxu0 0.0
    %7020 = vmatprep.subr.mxu0 0.0
    %7021 = vmatpush2.msra.mxu0 0.0
    %7022 = vmatprep.subr.mxu0 0.0
    %7023 = vmatpush2.msra.mxu0 0.0
    %7024 = vmatprep.subr.mxu0 0.0
    %7025 = vmatpush2.msra.mxu0 0.0
    %7026 = vmatprep.subr.mxu0 0.0
    %7027 = vmatpush2.msra.mxu0 0.0
    %7028 = vmatprep.subr.mxu0 0.0
    %7029 = vmatpush2.msra.mxu0 0.0
    %7030 = vmatprep.subr.mxu0 0.0
    %7031 = vmatpush2.msra.mxu0 0.0
    %7032 = vmatprep.mubr.f32.mxu0 0.0
    %v7033 = vand.u32 %v6756, 4294901760
    %v7034 = vsub.f32 %v6756, %v7033
    %7035 = vmatmul.mubr.f32.gmra.mxu0 %v7034
    %v7036 = vpop.f32.mrf.mxu0
    %v7037 = vadd.f32 %v6949, %v7036
    %v7038 = vpop.f32.mrf.mxu0
    %7039 = vdwg.mxu0
    %7040 = vmatprep.subr.mxu0 0.0
    %7041 = vmatpush1.msra.mxu0 0.0
    %7042 = vmatprep.subr.mxu0 0.0
    %7043 = vmatpush1.msra.mxu0 0.0
    %7044 = vmatprep.subr.mxu0 0.0
    %7045 = vmatpush1.msra.mxu0 0.0
    %7046 = vmatprep.subr.mxu0 0.0
    %7047 = vmatpush1.msra.mxu0 0.0
    %7048 = vmatprep.subr.mxu0 0.0
    %7049 = vmatpush1.msra.mxu0 0.0
    %7050 = vmatprep.subr.mxu0 0.0
    %7051 = vmatpush1.msra.mxu0 0.0
    %7052 = vmatprep.subr.mxu0 0.0
    %7053 = vmatpush1.msra.mxu0 0.0
    %7054 = vmatprep.subr.mxu0 0.0
    %7055 = vmatpush1.msra.mxu0 0.0
    %7056 = vmatprep.subr.mxu0 0.0
    %v7057 = vand.u32 %v52, 4294901760
    %7058 = vmatpush1.msra.mxu0 %v7057
    %7059 = vmatprep.subr.mxu0 0.0
    %v7060 = vand.u32 %v51, 4294901760
    %7061 = vmatpush1.msra.mxu0 %v7060
    %7062 = vmatprep.subr.mxu0 0.0
    %v7063 = vand.u32 %v50, 4294901760
    %7064 = vmatpush1.msra.mxu0 %v7063
    %7065 = vmatprep.subr.mxu0 0.0
    %v7066 = vand.u32 %v49, 4294901760
    %7067 = vmatpush1.msra.mxu0 %v7066
    %7068 = vmatprep.subr.mxu0 0.0
    %v7069 = vand.u32 %v48, 4294901760
    %7070 = vmatpush1.msra.mxu0 %v7069
    %7071 = vmatprep.subr.mxu0 0.0
    %v7072 = vand.u32 %v47, 4294901760
    %7073 = vmatpush1.msra.mxu0 %v7072
    %7074 = vmatprep.subr.mxu0 0.0
    %v7075 = vand.u32 %v46, 4294901760
    %7076 = vmatpush1.msra.mxu0 %v7075
    %7077 = vmatprep.subr.mxu0 0.0
    %v7078 = vand.u32 %v45, 4294901760
    %7079 = vmatpush1.msra.mxu0 %v7078
    %7080 = vmatprep.subr.mxu0 0.0
    %7081 = vmatpush2.msra.mxu0 0.0
    %7082 = vmatprep.subr.mxu0 0.0
    %7083 = vmatpush2.msra.mxu0 0.0
    %7084 = vmatprep.subr.mxu0 0.0
    %7085 = vmatpush2.msra.mxu0 0.0
    %7086 = vmatprep.subr.mxu0 0.0
    %7087 = vmatpush2.msra.mxu0 0.0
    %7088 = vmatprep.subr.mxu0 0.0
    %7089 = vmatpush2.msra.mxu0 0.0
    %7090 = vmatprep.subr.mxu0 0.0
    %7091 = vmatpush2.msra.mxu0 0.0
    %7092 = vmatprep.subr.mxu0 0.0
    %7093 = vmatpush2.msra.mxu0 0.0
    %7094 = vmatprep.subr.mxu0 0.0
    %7095 = vmatpush2.msra.mxu0 0.0
    %7096 = vmatprep.subr.mxu0 0.0
    %7097 = vmatpush2.msra.mxu0 0.0
    %7098 = vmatprep.subr.mxu0 0.0
    %7099 = vmatpush2.msra.mxu0 0.0
    %7100 = vmatprep.subr.mxu0 0.0
    %7101 = vmatpush2.msra.mxu0 0.0
    %7102 = vmatprep.subr.mxu0 0.0
    %7103 = vmatpush2.msra.mxu0 0.0
    %7104 = vmatprep.subr.mxu0 0.0
    %7105 = vmatpush2.msra.mxu0 0.0
    %7106 = vmatprep.subr.mxu0 0.0
    %7107 = vmatpush2.msra.mxu0 0.0
    %7108 = vmatprep.subr.mxu0 0.0
    %7109 = vmatpush2.msra.mxu0 0.0
    %7110 = vmatprep.subr.mxu0 0.0
    %7111 = vmatpush2.msra.mxu0 0.0
    %7112 = vmatprep.mubr.f32.mxu0 0.0
    %v7113 = vand.u32 %v6756, 4294901760
    %v7114 = vsub.f32 %v6756, %v7113
    %v7115 = vand.u32 %v7114, 4294901760
    %7116 = vmatmul.mubr.f32.gmra.mxu0 %v7115
    %v7117 = vpop.f32.mrf.mxu0
    %v7118 = vadd.f32 %v7037, %v7117
    %v7119 = vpop.f32.mrf.mxu0
    %7120 = vdwg.mxu0
    %7121 = vmatprep.subr.mxu0 0.0
    %7122 = vmatpush1.msra.mxu0 0.0
    %7123 = vmatprep.subr.mxu0 0.0
    %7124 = vmatpush1.msra.mxu0 0.0
    %7125 = vmatprep.subr.mxu0 0.0
    %7126 = vmatpush1.msra.mxu0 0.0
    %7127 = vmatprep.subr.mxu0 0.0
    %7128 = vmatpush1.msra.mxu0 0.0
    %7129 = vmatprep.subr.mxu0 0.0
    %7130 = vmatpush1.msra.mxu0 0.0
    %7131 = vmatprep.subr.mxu0 0.0
    %7132 = vmatpush1.msra.mxu0 0.0
    %7133 = vmatprep.subr.mxu0 0.0
    %7134 = vmatpush1.msra.mxu0 0.0
    %7135 = vmatprep.subr.mxu0 0.0
    %7136 = vmatpush1.msra.mxu0 0.0
    %7137 = vmatprep.subr.mxu0 0.0
    %v7138 = vand.u32 %v52, 4294901760
    %v7139 = vsub.f32 %v52, %v7138
    %v7140 = vand.u32 %v7139, 4294901760
    %7141 = vmatpush1.msra.mxu0 %v7140
    %7142 = vmatprep.subr.mxu0 0.0
    %v7143 = vand.u32 %v51, 4294901760
    %v7144 = vsub.f32 %v51, %v7143
    %v7145 = vand.u32 %v7144, 4294901760
    %7146 = vmatpush1.msra.mxu0 %v7145
    %7147 = vmatprep.subr.mxu0 0.0
    %v7148 = vand.u32 %v50, 4294901760
    %v7149 = vsub.f32 %v50, %v7148
    %v7150 = vand.u32 %v7149, 4294901760
    %7151 = vmatpush1.msra.mxu0 %v7150
    %7152 = vmatprep.subr.mxu0 0.0
    %v7153 = vand.u32 %v49, 4294901760
    %v7154 = vsub.f32 %v49, %v7153
    %v7155 = vand.u32 %v7154, 4294901760
    %7156 = vmatpush1.msra.mxu0 %v7155
    %7157 = vmatprep.subr.mxu0 0.0
    %v7158 = vand.u32 %v48, 4294901760
    %v7159 = vsub.f32 %v48, %v7158
    %v7160 = vand.u32 %v7159, 4294901760
    %7161 = vmatpush1.msra.mxu0 %v7160
    %7162 = vmatprep.subr.mxu0 0.0
    %v7163 = vand.u32 %v47, 4294901760
    %v7164 = vsub.f32 %v47, %v7163
    %v7165 = vand.u32 %v7164, 4294901760
    %7166 = vmatpush1.msra.mxu0 %v7165
    %7167 = vmatprep.subr.mxu0 0.0
    %v7168 = vand.u32 %v46, 4294901760
    %v7169 = vsub.f32 %v46, %v7168
    %v7170 = vand.u32 %v7169, 4294901760
    %7171 = vmatpush1.msra.mxu0 %v7170
    %7172 = vmatprep.subr.mxu0 0.0
    %v7173 = vand.u32 %v45, 4294901760
    %v7174 = vsub.f32 %v45, %v7173
    %v7175 = vand.u32 %v7174, 4294901760
    %7176 = vmatpush1.msra.mxu0 %v7175
    %7177 = vmatprep.subr.mxu0 0.0
    %7178 = vmatpush2.msra.mxu0 0.0
    %7179 = vmatprep.subr.mxu0 0.0
    %7180 = vmatpush2.msra.mxu0 0.0
    %7181 = vmatprep.subr.mxu0 0.0
    %7182 = vmatpush2.msra.mxu0 0.0
    %7183 = vmatprep.subr.mxu0 0.0
    %7184 = vmatpush2.msra.mxu0 0.0
    %7185 = vmatprep.subr.mxu0 0.0
    %7186 = vmatpush2.msra.mxu0 0.0
    %7187 = vmatprep.subr.mxu0 0.0
    %7188 = vmatpush2.msra.mxu0 0.0
    %7189 = vmatprep.subr.mxu0 0.0
    %7190 = vmatpush2.msra.mxu0 0.0
    %7191 = vmatprep.subr.mxu0 0.0
    %7192 = vmatpush2.msra.mxu0 0.0
    %7193 = vmatprep.subr.mxu0 0.0
    %7194 = vmatpush2.msra.mxu0 0.0
    %7195 = vmatprep.subr.mxu0 0.0
    %7196 = vmatpush2.msra.mxu0 0.0
    %7197 = vmatprep.subr.mxu0 0.0
    %7198 = vmatpush2.msra.mxu0 0.0
    %7199 = vmatprep.subr.mxu0 0.0
    %7200 = vmatpush2.msra.mxu0 0.0
    %7201 = vmatprep.subr.mxu0 0.0
    %7202 = vmatpush2.msra.mxu0 0.0
    %7203 = vmatprep.subr.mxu0 0.0
    %7204 = vmatpush2.msra.mxu0 0.0
    %7205 = vmatprep.subr.mxu0 0.0
    %7206 = vmatpush2.msra.mxu0 0.0
    %7207 = vmatprep.subr.mxu0 0.0
    %7208 = vmatpush2.msra.mxu0 0.0
    %7209 = vmatprep.mubr.f32.mxu0 0.0
    %v7210 = vand.u32 %v6756, 4294901760
    %7211 = vmatmul.mubr.f32.gmra.mxu0 %v7210
    %v7212 = vpop.f32.mrf.mxu0
    %v7213 = vadd.f32 %v7118, %v7212
    %v7214 = vpop.f32.mrf.mxu0
    %7215 = vdwg.mxu0
    %7216 = vmatprep.subr.mxu0 0.0
    %7217 = vmatpush1.msra.mxu0 0.0
    %7218 = vmatprep.subr.mxu0 0.0
    %7219 = vmatpush1.msra.mxu0 0.0
    %7220 = vmatprep.subr.mxu0 0.0
    %7221 = vmatpush1.msra.mxu0 0.0
    %7222 = vmatprep.subr.mxu0 0.0
    %7223 = vmatpush1.msra.mxu0 0.0
    %7224 = vmatprep.subr.mxu0 0.0
    %7225 = vmatpush1.msra.mxu0 0.0
    %7226 = vmatprep.subr.mxu0 0.0
    %7227 = vmatpush1.msra.mxu0 0.0
    %7228 = vmatprep.subr.mxu0 0.0
    %7229 = vmatpush1.msra.mxu0 0.0
    %7230 = vmatprep.subr.mxu0 0.0
    %7231 = vmatpush1.msra.mxu0 0.0
    %7232 = vmatprep.subr.mxu0 0.0
    %v7233 = vand.u32 %v52, 4294901760
    %7234 = vmatpush1.msra.mxu0 %v7233
    %7235 = vmatprep.subr.mxu0 0.0
    %v7236 = vand.u32 %v51, 4294901760
    %7237 = vmatpush1.msra.mxu0 %v7236
    %7238 = vmatprep.subr.mxu0 0.0
    %v7239 = vand.u32 %v50, 4294901760
    %7240 = vmatpush1.msra.mxu0 %v7239
    %7241 = vmatprep.subr.mxu0 0.0
    %v7242 = vand.u32 %v49, 4294901760
    %7243 = vmatpush1.msra.mxu0 %v7242
    %7244 = vmatprep.subr.mxu0 0.0
    %v7245 = vand.u32 %v48, 4294901760
    %7246 = vmatpush1.msra.mxu0 %v7245
    %7247 = vmatprep.subr.mxu0 0.0
    %v7248 = vand.u32 %v47, 4294901760
    %7249 = vmatpush1.msra.mxu0 %v7248
    %7250 = vmatprep.subr.mxu0 0.0
    %v7251 = vand.u32 %v46, 4294901760
    %7252 = vmatpush1.msra.mxu0 %v7251
    %7253 = vmatprep.subr.mxu0 0.0
    %v7254 = vand.u32 %v45, 4294901760
    %7255 = vmatpush1.msra.mxu0 %v7254
    %7256 = vmatprep.subr.mxu0 0.0
    %7257 = vmatpush2.msra.mxu0 0.0
    %7258 = vmatprep.subr.mxu0 0.0
    %7259 = vmatpush2.msra.mxu0 0.0
    %7260 = vmatprep.subr.mxu0 0.0
    %7261 = vmatpush2.msra.mxu0 0.0
    %7262 = vmatprep.subr.mxu0 0.0
    %7263 = vmatpush2.msra.mxu0 0.0
    %7264 = vmatprep.subr.mxu0 0.0
    %7265 = vmatpush2.msra.mxu0 0.0
    %7266 = vmatprep.subr.mxu0 0.0
    %7267 = vmatpush2.msra.mxu0 0.0
    %7268 = vmatprep.subr.mxu0 0.0
    %7269 = vmatpush2.msra.mxu0 0.0
    %7270 = vmatprep.subr.mxu0 0.0
    %7271 = vmatpush2.msra.mxu0 0.0
    %7272 = vmatprep.subr.mxu0 0.0
    %7273 = vmatpush2.msra.mxu0 0.0
    %7274 = vmatprep.subr.mxu0 0.0
    %7275 = vmatpush2.msra.mxu0 0.0
    %7276 = vmatprep.subr.mxu0 0.0
    %7277 = vmatpush2.msra.mxu0 0.0
    %7278 = vmatprep.subr.mxu0 0.0
    %7279 = vmatpush2.msra.mxu0 0.0
    %7280 = vmatprep.subr.mxu0 0.0
    %7281 = vmatpush2.msra.mxu0 0.0
    %7282 = vmatprep.subr.mxu0 0.0
    %7283 = vmatpush2.msra.mxu0 0.0
    %7284 = vmatprep.subr.mxu0 0.0
    %7285 = vmatpush2.msra.mxu0 0.0
    %7286 = vmatprep.subr.mxu0 0.0
    %7287 = vmatpush2.msra.mxu0 0.0
    %7288 = vmatprep.mubr.f32.mxu0 0.0
    %v7289 = vand.u32 %v6756, 4294901760
    %7290 = vmatmul.mubr.f32.gmra.mxu0 %v7289
    %v7291 = vpop.f32.mrf.mxu0
    %v7292 = vadd.f32 %v7213, %v7291
    %v7293 = vpop.f32.mrf.mxu0
    %7294 = vdwg.mxu0
    %v7295 = vtanh.pop %v7292
    %v7297 = vrot.slane %v6747, 6
    %v7298 = vsel %vm64, %v7297, 0
    %7300 = vmatprep.subr.mxu0 0.0
    %7301 = vmatpush1.msra.mxu0 0.0
    %7302 = vmatprep.subr.mxu0 0.0
    %7303 = vmatpush1.msra.mxu0 0.0
    %7304 = vmatprep.subr.mxu0 0.0
    %7305 = vmatpush1.msra.mxu0 0.0
    %7306 = vmatprep.subr.mxu0 0.0
    %7307 = vmatpush1.msra.mxu0 0.0
    %7308 = vmatprep.subr.mxu0 0.0
    %7309 = vmatpush1.msra.mxu0 0.0
    %7310 = vmatprep.subr.mxu0 0.0
    %7311 = vmatpush1.msra.mxu0 0.0
    %7312 = vmatprep.subr.mxu0 0.0
    %7313 = vmatpush1.msra.mxu0 0.0
    %7314 = vmatprep.subr.mxu0 0.0
    %7315 = vmatpush1.msra.mxu0 0.0
    %7316 = vmatprep.subr.mxu0 0.0
    %7317 = vmatpush1.msra.mxu0 0.0
    %7318 = vmatprep.subr.mxu0 0.0
    %7319 = vmatpush1.msra.mxu0 0.0
    %7320 = vmatprep.subr.mxu0 0.0
    %7321 = vmatpush1.msra.mxu0 0.0
    %7322 = vmatprep.subr.mxu0 0.0
    %7323 = vmatpush1.msra.mxu0 0.0
    %7324 = vmatprep.subr.mxu0 0.0
    %v7325 = vand.u32 %v43, 4294901760
    %7326 = vmatpush1.msra.mxu0 %v7325
    %7327 = vmatprep.subr.mxu0 0.0
    %v7328 = vand.u32 %v42, 4294901760
    %7329 = vmatpush1.msra.mxu0 %v7328
    %7330 = vmatprep.subr.mxu0 0.0
    %v7331 = vand.u32 %v41, 4294901760
    %7332 = vmatpush1.msra.mxu0 %v7331
    %7333 = vmatprep.subr.mxu0 0.0
    %v7334 = vand.u32 %v40, 4294901760
    %7335 = vmatpush1.msra.mxu0 %v7334
    %7336 = vmatprep.subr.mxu0 0.0
    %7337 = vmatpush2.msra.mxu0 0.0
    %7338 = vmatprep.subr.mxu0 0.0
    %7339 = vmatpush2.msra.mxu0 0.0
    %7340 = vmatprep.subr.mxu0 0.0
    %7341 = vmatpush2.msra.mxu0 0.0
    %7342 = vmatprep.subr.mxu0 0.0
    %7343 = vmatpush2.msra.mxu0 0.0
    %7344 = vmatprep.subr.mxu0 0.0
    %7345 = vmatpush2.msra.mxu0 0.0
    %7346 = vmatprep.subr.mxu0 0.0
    %7347 = vmatpush2.msra.mxu0 0.0
    %7348 = vmatprep.subr.mxu0 0.0
    %7349 = vmatpush2.msra.mxu0 0.0
    %7350 = vmatprep.subr.mxu0 0.0
    %7351 = vmatpush2.msra.mxu0 0.0
    %7352 = vmatprep.subr.mxu0 0.0
    %7353 = vmatpush2.msra.mxu0 0.0
    %7354 = vmatprep.subr.mxu0 0.0
    %7355 = vmatpush2.msra.mxu0 0.0
    %7356 = vmatprep.subr.mxu0 0.0
    %7357 = vmatpush2.msra.mxu0 0.0
    %7358 = vmatprep.subr.mxu0 0.0
    %7359 = vmatpush2.msra.mxu0 0.0
    %7360 = vmatprep.subr.mxu0 0.0
    %7361 = vmatpush2.msra.mxu0 0.0
    %7362 = vmatprep.subr.mxu0 0.0
    %7363 = vmatpush2.msra.mxu0 0.0
    %7364 = vmatprep.subr.mxu0 0.0
    %7365 = vmatpush2.msra.mxu0 0.0
    %7366 = vmatprep.subr.mxu0 0.0
    %7367 = vmatpush2.msra.mxu0 0.0
    %7368 = vmatprep.mubr.f32.mxu0 0.0
    %v7369 = vand.u32 %v7298, 4294901760
    %v7370 = vsub.f32 %v7298, %v7369
    %v7371 = vand.u32 %v7370, 4294901760
    %v7372 = vsub.f32 %v7370, %v7371
    %v7373 = vand.u32 %v7372, 4294901760
    %7374 = vmatmul.mubr.f32.gmra.mxu0 %v7373
    %v7375 = vpop.f32.mrf.mxu0
    %v7376 = vadd.f32 0.0, %v7375
    %v7377 = vpop.f32.mrf.mxu0
    %7378 = vdwg.mxu0
    %7379 = vmatprep.subr.mxu0 0.0
    %7380 = vmatpush1.msra.mxu0 0.0
    %7381 = vmatprep.subr.mxu0 0.0
    %7382 = vmatpush1.msra.mxu0 0.0
    %7383 = vmatprep.subr.mxu0 0.0
    %7384 = vmatpush1.msra.mxu0 0.0
    %7385 = vmatprep.subr.mxu0 0.0
    %7386 = vmatpush1.msra.mxu0 0.0
    %7387 = vmatprep.subr.mxu0 0.0
    %7388 = vmatpush1.msra.mxu0 0.0
    %7389 = vmatprep.subr.mxu0 0.0
    %7390 = vmatpush1.msra.mxu0 0.0
    %7391 = vmatprep.subr.mxu0 0.0
    %7392 = vmatpush1.msra.mxu0 0.0
    %7393 = vmatprep.subr.mxu0 0.0
    %7394 = vmatpush1.msra.mxu0 0.0
    %7395 = vmatprep.subr.mxu0 0.0
    %7396 = vmatpush1.msra.mxu0 0.0
    %7397 = vmatprep.subr.mxu0 0.0
    %7398 = vmatpush1.msra.mxu0 0.0
    %7399 = vmatprep.subr.mxu0 0.0
    %7400 = vmatpush1.msra.mxu0 0.0
    %7401 = vmatprep.subr.mxu0 0.0
    %7402 = vmatpush1.msra.mxu0 0.0
    %7403 = vmatprep.subr.mxu0 0.0
    %v7404 = vand.u32 %v43, 4294901760
    %v7405 = vsub.f32 %v43, %v7404
    %v7406 = vand.u32 %v7405, 4294901760
    %v7407 = vsub.f32 %v7405, %v7406
    %v7408 = vand.u32 %v7407, 4294901760
    %7409 = vmatpush1.msra.mxu0 %v7408
    %7410 = vmatprep.subr.mxu0 0.0
    %v7411 = vand.u32 %v42, 4294901760
    %v7412 = vsub.f32 %v42, %v7411
    %v7413 = vand.u32 %v7412, 4294901760
    %v7414 = vsub.f32 %v7412, %v7413
    %v7415 = vand.u32 %v7414, 4294901760
    %7416 = vmatpush1.msra.mxu0 %v7415
    %7417 = vmatprep.subr.mxu0 0.0
    %v7418 = vand.u32 %v41, 4294901760
    %v7419 = vsub.f32 %v41, %v7418
    %v7420 = vand.u32 %v7419, 4294901760
    %v7421 = vsub.f32 %v7419, %v7420
    %v7422 = vand.u32 %v7421, 4294901760
    %7423 = vmatpush1.msra.mxu0 %v7422
    %7424 = vmatprep.subr.mxu0 0.0
    %v7425 = vand.u32 %v40, 4294901760
    %v7426 = vsub.f32 %v40, %v7425
    %v7427 = vand.u32 %v7426, 4294901760
    %v7428 = vsub.f32 %v7426, %v7427
    %v7429 = vand.u32 %v7428, 4294901760
    %7430 = vmatpush1.msra.mxu0 %v7429
    %7431 = vmatprep.subr.mxu0 0.0
    %7432 = vmatpush2.msra.mxu0 0.0
    %7433 = vmatprep.subr.mxu0 0.0
    %7434 = vmatpush2.msra.mxu0 0.0
    %7435 = vmatprep.subr.mxu0 0.0
    %7436 = vmatpush2.msra.mxu0 0.0
    %7437 = vmatprep.subr.mxu0 0.0
    %7438 = vmatpush2.msra.mxu0 0.0
    %7439 = vmatprep.subr.mxu0 0.0
    %7440 = vmatpush2.msra.mxu0 0.0
    %7441 = vmatprep.subr.mxu0 0.0
    %7442 = vmatpush2.msra.mxu0 0.0
    %7443 = vmatprep.subr.mxu0 0.0
    %7444 = vmatpush2.msra.mxu0 0.0
    %7445 = vmatprep.subr.mxu0 0.0
    %7446 = vmatpush2.msra.mxu0 0.0
    %7447 = vmatprep.subr.mxu0 0.0
    %7448 = vmatpush2.msra.mxu0 0.0
    %7449 = vmatprep.subr.mxu0 0.0
    %7450 = vmatpush2.msra.mxu0 0.0
    %7451 = vmatprep.subr.mxu0 0.0
    %7452 = vmatpush2.msra.mxu0 0.0
    %7453 = vmatprep.subr.mxu0 0.0
    %7454 = vmatpush2.msra.mxu0 0.0
    %7455 = vmatprep.subr.mxu0 0.0
    %7456 = vmatpush2.msra.mxu0 0.0
    %7457 = vmatprep.subr.mxu0 0.0
    %7458 = vmatpush2.msra.mxu0 0.0
    %7459 = vmatprep.subr.mxu0 0.0
    %7460 = vmatpush2.msra.mxu0 0.0
    %7461 = vmatprep.subr.mxu0 0.0
    %7462 = vmatpush2.msra.mxu0 0.0
    %7463 = vmatprep.mubr.f32.mxu0 0.0
    %v7464 = vand.u32 %v7298, 4294901760
    %7465 = vmatmul.mubr.f32.gmra.mxu0 %v7464
    %v7466 = vpop.f32.mrf.mxu0
    %v7467 = vadd.f32 %v7376, %v7466
    %v7468 = vpop.f32.mrf.mxu0
    %7469 = vdwg.mxu0
    %7470 = vmatprep.subr.mxu0 0.0
    %7471 = vmatpush1.msra.mxu0 0.0
    %7472 = vmatprep.subr.mxu0 0.0
    %7473 = vmatpush1.msra.mxu0 0.0
    %7474 = vmatprep.subr.mxu0 0.0
    %7475 = vmatpush1.msra.mxu0 0.0
    %7476 = vmatprep.subr.mxu0 0.0
    %7477 = vmatpush1.msra.mxu0 0.0
    %7478 = vmatprep.subr.mxu0 0.0
    %7479 = vmatpush1.msra.mxu0 0.0
    %7480 = vmatprep.subr.mxu0 0.0
    %7481 = vmatpush1.msra.mxu0 0.0
    %7482 = vmatprep.subr.mxu0 0.0
    %7483 = vmatpush1.msra.mxu0 0.0
    %7484 = vmatprep.subr.mxu0 0.0
    %7485 = vmatpush1.msra.mxu0 0.0
    %7486 = vmatprep.subr.mxu0 0.0
    %7487 = vmatpush1.msra.mxu0 0.0
    %7488 = vmatprep.subr.mxu0 0.0
    %7489 = vmatpush1.msra.mxu0 0.0
    %7490 = vmatprep.subr.mxu0 0.0
    %7491 = vmatpush1.msra.mxu0 0.0
    %7492 = vmatprep.subr.mxu0 0.0
    %7493 = vmatpush1.msra.mxu0 0.0
    %7494 = vmatprep.subr.mxu0 0.0
    %v7495 = vand.u32 %v43, 4294901760
    %v7496 = vsub.f32 %v43, %v7495
    %7497 = vmatpush1.msra.mxu0 %v7496
    %7498 = vmatprep.subr.mxu0 0.0
    %v7499 = vand.u32 %v42, 4294901760
    %v7500 = vsub.f32 %v42, %v7499
    %7501 = vmatpush1.msra.mxu0 %v7500
    %7502 = vmatprep.subr.mxu0 0.0
    %v7503 = vand.u32 %v41, 4294901760
    %v7504 = vsub.f32 %v41, %v7503
    %7505 = vmatpush1.msra.mxu0 %v7504
    %7506 = vmatprep.subr.mxu0 0.0
    %v7507 = vand.u32 %v40, 4294901760
    %v7508 = vsub.f32 %v40, %v7507
    %7509 = vmatpush1.msra.mxu0 %v7508
    %7510 = vmatprep.subr.mxu0 0.0
    %7511 = vmatpush2.msra.mxu0 0.0
    %7512 = vmatprep.subr.mxu0 0.0
    %7513 = vmatpush2.msra.mxu0 0.0
    %7514 = vmatprep.subr.mxu0 0.0
    %7515 = vmatpush2.msra.mxu0 0.0
    %7516 = vmatprep.subr.mxu0 0.0
    %7517 = vmatpush2.msra.mxu0 0.0
    %7518 = vmatprep.subr.mxu0 0.0
    %7519 = vmatpush2.msra.mxu0 0.0
    %7520 = vmatprep.subr.mxu0 0.0
    %7521 = vmatpush2.msra.mxu0 0.0
    %7522 = vmatprep.subr.mxu0 0.0
    %7523 = vmatpush2.msra.mxu0 0.0
    %7524 = vmatprep.subr.mxu0 0.0
    %7525 = vmatpush2.msra.mxu0 0.0
    %7526 = vmatprep.subr.mxu0 0.0
    %7527 = vmatpush2.msra.mxu0 0.0
    %7528 = vmatprep.subr.mxu0 0.0
    %7529 = vmatpush2.msra.mxu0 0.0
    %7530 = vmatprep.subr.mxu0 0.0
    %7531 = vmatpush2.msra.mxu0 0.0
    %7532 = vmatprep.subr.mxu0 0.0
    %7533 = vmatpush2.msra.mxu0 0.0
    %7534 = vmatprep.subr.mxu0 0.0
    %7535 = vmatpush2.msra.mxu0 0.0
    %7536 = vmatprep.subr.mxu0 0.0
    %7537 = vmatpush2.msra.mxu0 0.0
    %7538 = vmatprep.subr.mxu0 0.0
    %7539 = vmatpush2.msra.mxu0 0.0
    %7540 = vmatprep.subr.mxu0 0.0
    %7541 = vmatpush2.msra.mxu0 0.0
    %7542 = vmatprep.mubr.f32.mxu0 0.0
    %v7543 = vand.u32 %v7298, 4294901760
    %v7544 = vsub.f32 %v7298, %v7543
    %7545 = vmatmul.mubr.f32.gmra.mxu0 %v7544
    %v7546 = vpop.f32.mrf.mxu0
    %v7547 = vadd.f32 %v7467, %v7546
    %v7548 = vpop.f32.mrf.mxu0
    %7549 = vdwg.mxu0
    %7550 = vmatprep.subr.mxu0 0.0
    %7551 = vmatpush1.msra.mxu0 0.0
    %7552 = vmatprep.subr.mxu0 0.0
    %7553 = vmatpush1.msra.mxu0 0.0
    %7554 = vmatprep.subr.mxu0 0.0
    %7555 = vmatpush1.msra.mxu0 0.0
    %7556 = vmatprep.subr.mxu0 0.0
    %7557 = vmatpush1.msra.mxu0 0.0
    %7558 = vmatprep.subr.mxu0 0.0
    %7559 = vmatpush1.msra.mxu0 0.0
    %7560 = vmatprep.subr.mxu0 0.0
    %7561 = vmatpush1.msra.mxu0 0.0
    %7562 = vmatprep.subr.mxu0 0.0
    %7563 = vmatpush1.msra.mxu0 0.0
    %7564 = vmatprep.subr.mxu0 0.0
    %7565 = vmatpush1.msra.mxu0 0.0
    %7566 = vmatprep.subr.mxu0 0.0
    %7567 = vmatpush1.msra.mxu0 0.0
    %7568 = vmatprep.subr.mxu0 0.0
    %7569 = vmatpush1.msra.mxu0 0.0
    %7570 = vmatprep.subr.mxu0 0.0
    %7571 = vmatpush1.msra.mxu0 0.0
    %7572 = vmatprep.subr.mxu0 0.0
    %7573 = vmatpush1.msra.mxu0 0.0
    %7574 = vmatprep.subr.mxu0 0.0
    %v7575 = vand.u32 %v43, 4294901760
    %7576 = vmatpush1.msra.mxu0 %v7575
    %7577 = vmatprep.subr.mxu0 0.0
    %v7578 = vand.u32 %v42, 4294901760
    %7579 = vmatpush1.msra.mxu0 %v7578
    %7580 = vmatprep.subr.mxu0 0.0
    %v7581 = vand.u32 %v41, 4294901760
    %7582 = vmatpush1.msra.mxu0 %v7581
    %7583 = vmatprep.subr.mxu0 0.0
    %v7584 = vand.u32 %v40, 4294901760
    %7585 = vmatpush1.msra.mxu0 %v7584
    %7586 = vmatprep.subr.mxu0 0.0
    %7587 = vmatpush2.msra.mxu0 0.0
    %7588 = vmatprep.subr.mxu0 0.0
    %7589 = vmatpush2.msra.mxu0 0.0
    %7590 = vmatprep.subr.mxu0 0.0
    %7591 = vmatpush2.msra.mxu0 0.0
    %7592 = vmatprep.subr.mxu0 0.0
    %7593 = vmatpush2.msra.mxu0 0.0
    %7594 = vmatprep.subr.mxu0 0.0
    %7595 = vmatpush2.msra.mxu0 0.0
    %7596 = vmatprep.subr.mxu0 0.0
    %7597 = vmatpush2.msra.mxu0 0.0
    %7598 = vmatprep.subr.mxu0 0.0
    %7599 = vmatpush2.msra.mxu0 0.0
    %7600 = vmatprep.subr.mxu0 0.0
    %7601 = vmatpush2.msra.mxu0 0.0
    %7602 = vmatprep.subr.mxu0 0.0
    %7603 = vmatpush2.msra.mxu0 0.0
    %7604 = vmatprep.subr.mxu0 0.0
    %7605 = vmatpush2.msra.mxu0 0.0
    %7606 = vmatprep.subr.mxu0 0.0
    %7607 = vmatpush2.msra.mxu0 0.0
    %7608 = vmatprep.subr.mxu0 0.0
    %7609 = vmatpush2.msra.mxu0 0.0
    %7610 = vmatprep.subr.mxu0 0.0
    %7611 = vmatpush2.msra.mxu0 0.0
    %7612 = vmatprep.subr.mxu0 0.0
    %7613 = vmatpush2.msra.mxu0 0.0
    %7614 = vmatprep.subr.mxu0 0.0
    %7615 = vmatpush2.msra.mxu0 0.0
    %7616 = vmatprep.subr.mxu0 0.0
    %7617 = vmatpush2.msra.mxu0 0.0
    %7618 = vmatprep.mubr.f32.mxu0 0.0
    %v7619 = vand.u32 %v7298, 4294901760
    %v7620 = vsub.f32 %v7298, %v7619
    %v7621 = vand.u32 %v7620, 4294901760
    %7622 = vmatmul.mubr.f32.gmra.mxu0 %v7621
    %v7623 = vpop.f32.mrf.mxu0
    %v7624 = vadd.f32 %v7547, %v7623
    %v7625 = vpop.f32.mrf.mxu0
    %7626 = vdwg.mxu0
    %7627 = vmatprep.subr.mxu0 0.0
    %7628 = vmatpush1.msra.mxu0 0.0
    %7629 = vmatprep.subr.mxu0 0.0
    %7630 = vmatpush1.msra.mxu0 0.0
    %7631 = vmatprep.subr.mxu0 0.0
    %7632 = vmatpush1.msra.mxu0 0.0
    %7633 = vmatprep.subr.mxu0 0.0
    %7634 = vmatpush1.msra.mxu0 0.0
    %7635 = vmatprep.subr.mxu0 0.0
    %7636 = vmatpush1.msra.mxu0 0.0
    %7637 = vmatprep.subr.mxu0 0.0
    %7638 = vmatpush1.msra.mxu0 0.0
    %7639 = vmatprep.subr.mxu0 0.0
    %7640 = vmatpush1.msra.mxu0 0.0
    %7641 = vmatprep.subr.mxu0 0.0
    %7642 = vmatpush1.msra.mxu0 0.0
    %7643 = vmatprep.subr.mxu0 0.0
    %7644 = vmatpush1.msra.mxu0 0.0
    %7645 = vmatprep.subr.mxu0 0.0
    %7646 = vmatpush1.msra.mxu0 0.0
    %7647 = vmatprep.subr.mxu0 0.0
    %7648 = vmatpush1.msra.mxu0 0.0
    %7649 = vmatprep.subr.mxu0 0.0
    %7650 = vmatpush1.msra.mxu0 0.0
    %7651 = vmatprep.subr.mxu0 0.0
    %v7652 = vand.u32 %v43, 4294901760
    %v7653 = vsub.f32 %v43, %v7652
    %v7654 = vand.u32 %v7653, 4294901760
    %7655 = vmatpush1.msra.mxu0 %v7654
    %7656 = vmatprep.subr.mxu0 0.0
    %v7657 = vand.u32 %v42, 4294901760
    %v7658 = vsub.f32 %v42, %v7657
    %v7659 = vand.u32 %v7658, 4294901760
    %7660 = vmatpush1.msra.mxu0 %v7659
    %7661 = vmatprep.subr.mxu0 0.0
    %v7662 = vand.u32 %v41, 4294901760
    %v7663 = vsub.f32 %v41, %v7662
    %v7664 = vand.u32 %v7663, 4294901760
    %7665 = vmatpush1.msra.mxu0 %v7664
    %7666 = vmatprep.subr.mxu0 0.0
    %v7667 = vand.u32 %v40, 4294901760
    %v7668 = vsub.f32 %v40, %v7667
    %v7669 = vand.u32 %v7668, 4294901760
    %7670 = vmatpush1.msra.mxu0 %v7669
    %7671 = vmatprep.subr.mxu0 0.0
    %7672 = vmatpush2.msra.mxu0 0.0
    %7673 = vmatprep.subr.mxu0 0.0
    %7674 = vmatpush2.msra.mxu0 0.0
    %7675 = vmatprep.subr.mxu0 0.0
    %7676 = vmatpush2.msra.mxu0 0.0
    %7677 = vmatprep.subr.mxu0 0.0
    %7678 = vmatpush2.msra.mxu0 0.0
    %7679 = vmatprep.subr.mxu0 0.0
    %7680 = vmatpush2.msra.mxu0 0.0
    %7681 = vmatprep.subr.mxu0 0.0
    %7682 = vmatpush2.msra.mxu0 0.0
    %7683 = vmatprep.subr.mxu0 0.0
    %7684 = vmatpush2.msra.mxu0 0.0
    %7685 = vmatprep.subr.mxu0 0.0
    %7686 = vmatpush2.msra.mxu0 0.0
    %7687 = vmatprep.subr.mxu0 0.0
    %7688 = vmatpush2.msra.mxu0 0.0
    %7689 = vmatprep.subr.mxu0 0.0
    %7690 = vmatpush2.msra.mxu0 0.0
    %7691 = vmatprep.subr.mxu0 0.0
    %7692 = vmatpush2.msra.mxu0 0.0
    %7693 = vmatprep.subr.mxu0 0.0
    %7694 = vmatpush2.msra.mxu0 0.0
    %7695 = vmatprep.subr.mxu0 0.0
    %7696 = vmatpush2.msra.mxu0 0.0
    %7697 = vmatprep.subr.mxu0 0.0
    %7698 = vmatpush2.msra.mxu0 0.0
    %7699 = vmatprep.subr.mxu0 0.0
    %7700 = vmatpush2.msra.mxu0 0.0
    %7701 = vmatprep.subr.mxu0 0.0
    %7702 = vmatpush2.msra.mxu0 0.0
    %7703 = vmatprep.mubr.f32.mxu0 0.0
    %v7704 = vand.u32 %v7298, 4294901760
    %7705 = vmatmul.mubr.f32.gmra.mxu0 %v7704
    %v7706 = vpop.f32.mrf.mxu0
    %v7707 = vadd.f32 %v7624, %v7706
    %v7708 = vpop.f32.mrf.mxu0
    %7709 = vdwg.mxu0
    %7710 = vmatprep.subr.mxu0 0.0
    %7711 = vmatpush1.msra.mxu0 0.0
    %7712 = vmatprep.subr.mxu0 0.0
    %7713 = vmatpush1.msra.mxu0 0.0
    %7714 = vmatprep.subr.mxu0 0.0
    %7715 = vmatpush1.msra.mxu0 0.0
    %7716 = vmatprep.subr.mxu0 0.0
    %7717 = vmatpush1.msra.mxu0 0.0
    %7718 = vmatprep.subr.mxu0 0.0
    %7719 = vmatpush1.msra.mxu0 0.0
    %7720 = vmatprep.subr.mxu0 0.0
    %7721 = vmatpush1.msra.mxu0 0.0
    %7722 = vmatprep.subr.mxu0 0.0
    %7723 = vmatpush1.msra.mxu0 0.0
    %7724 = vmatprep.subr.mxu0 0.0
    %7725 = vmatpush1.msra.mxu0 0.0
    %7726 = vmatprep.subr.mxu0 0.0
    %7727 = vmatpush1.msra.mxu0 0.0
    %7728 = vmatprep.subr.mxu0 0.0
    %7729 = vmatpush1.msra.mxu0 0.0
    %7730 = vmatprep.subr.mxu0 0.0
    %7731 = vmatpush1.msra.mxu0 0.0
    %7732 = vmatprep.subr.mxu0 0.0
    %7733 = vmatpush1.msra.mxu0 0.0
    %7734 = vmatprep.subr.mxu0 0.0
    %v7735 = vand.u32 %v43, 4294901760
    %7736 = vmatpush1.msra.mxu0 %v7735
    %7737 = vmatprep.subr.mxu0 0.0
    %v7738 = vand.u32 %v42, 4294901760
    %7739 = vmatpush1.msra.mxu0 %v7738
    %7740 = vmatprep.subr.mxu0 0.0
    %v7741 = vand.u32 %v41, 4294901760
    %7742 = vmatpush1.msra.mxu0 %v7741
    %7743 = vmatprep.subr.mxu0 0.0
    %v7744 = vand.u32 %v40, 4294901760
    %7745 = vmatpush1.msra.mxu0 %v7744
    %7746 = vmatprep.subr.mxu0 0.0
    %7747 = vmatpush2.msra.mxu0 0.0
    %7748 = vmatprep.subr.mxu0 0.0
    %7749 = vmatpush2.msra.mxu0 0.0
    %7750 = vmatprep.subr.mxu0 0.0
    %7751 = vmatpush2.msra.mxu0 0.0
    %7752 = vmatprep.subr.mxu0 0.0
    %7753 = vmatpush2.msra.mxu0 0.0
    %7754 = vmatprep.subr.mxu0 0.0
    %7755 = vmatpush2.msra.mxu0 0.0
    %7756 = vmatprep.subr.mxu0 0.0
    %7757 = vmatpush2.msra.mxu0 0.0
    %7758 = vmatprep.subr.mxu0 0.0
    %7759 = vmatpush2.msra.mxu0 0.0
    %7760 = vmatprep.subr.mxu0 0.0
    %7761 = vmatpush2.msra.mxu0 0.0
    %7762 = vmatprep.subr.mxu0 0.0
    %7763 = vmatpush2.msra.mxu0 0.0
    %7764 = vmatprep.subr.mxu0 0.0
    %7765 = vmatpush2.msra.mxu0 0.0
    %7766 = vmatprep.subr.mxu0 0.0
    %7767 = vmatpush2.msra.mxu0 0.0
    %7768 = vmatprep.subr.mxu0 0.0
    %7769 = vmatpush2.msra.mxu0 0.0
    %7770 = vmatprep.subr.mxu0 0.0
    %7771 = vmatpush2.msra.mxu0 0.0
    %7772 = vmatprep.subr.mxu0 0.0
    %7773 = vmatpush2.msra.mxu0 0.0
    %7774 = vmatprep.subr.mxu0 0.0
    %7775 = vmatpush2.msra.mxu0 0.0
    %7776 = vmatprep.subr.mxu0 0.0
    %7777 = vmatpush2.msra.mxu0 0.0
    %7778 = vmatprep.mubr.f32.mxu0 0.0
    %v7779 = vand.u32 %v7298, 4294901760
    %7780 = vmatmul.mubr.f32.gmra.mxu0 %v7779
    %v7781 = vpop.f32.mrf.mxu0
    %v7782 = vadd.f32 %v7707, %v7781
    %v7783 = vpop.f32.mrf.mxu0
    %7784 = vdwg.mxu0
    %v7786 = vrot.slane %v7782, 1
    %v7788 = vadd.f32 %v550, %v7786
    %v7789 = vtanh.pop %v7788
    %v7791 = vrot.slane %v7295, 2
    %7792 = vrot.lane.b32.xlu0 %v7791, 32
    %v7793 = vpop.permute.xlu0 %7792
    %v7795 = vsel %vm64, %v6747, %v7793
    %v7797 = vrot.slane %v7795, 6
    %v7798 = vsel %vm1544, %v7797, 0
    %7800 = vmatprep.subr.mxu0 0.0
    %7801 = vmatpush1.msra.mxu0 0.0
    %7802 = vmatprep.subr.mxu0 0.0
    %7803 = vmatpush1.msra.mxu0 0.0
    %7804 = vmatprep.subr.mxu0 0.0
    %7805 = vmatpush1.msra.mxu0 0.0
    %7806 = vmatprep.subr.mxu0 0.0
    %7807 = vmatpush1.msra.mxu0 0.0
    %7808 = vmatprep.subr.mxu0 0.0
    %7809 = vmatpush1.msra.mxu0 0.0
    %7810 = vmatprep.subr.mxu0 0.0
    %7811 = vmatpush1.msra.mxu0 0.0
    %7812 = vmatprep.subr.mxu0 0.0
    %7813 = vmatpush1.msra.mxu0 0.0
    %7814 = vmatprep.subr.mxu0 0.0
    %7815 = vmatpush1.msra.mxu0 0.0
    %7816 = vmatprep.subr.mxu0 0.0
    %v7817 = vand.u32 %v52, 4294901760
    %7818 = vmatpush1.msra.mxu0 %v7817
    %7819 = vmatprep.subr.mxu0 0.0
    %v7820 = vand.u32 %v51, 4294901760
    %7821 = vmatpush1.msra.mxu0 %v7820
    %7822 = vmatprep.subr.mxu0 0.0
    %v7823 = vand.u32 %v50, 4294901760
    %7824 = vmatpush1.msra.mxu0 %v7823
    %7825 = vmatprep.subr.mxu0 0.0
    %v7826 = vand.u32 %v49, 4294901760
    %7827 = vmatpush1.msra.mxu0 %v7826
    %7828 = vmatprep.subr.mxu0 0.0
    %v7829 = vand.u32 %v48, 4294901760
    %7830 = vmatpush1.msra.mxu0 %v7829
    %7831 = vmatprep.subr.mxu0 0.0
    %v7832 = vand.u32 %v47, 4294901760
    %7833 = vmatpush1.msra.mxu0 %v7832
    %7834 = vmatprep.subr.mxu0 0.0
    %v7835 = vand.u32 %v46, 4294901760
    %7836 = vmatpush1.msra.mxu0 %v7835
    %7837 = vmatprep.subr.mxu0 0.0
    %v7838 = vand.u32 %v45, 4294901760
    %7839 = vmatpush1.msra.mxu0 %v7838
    %7840 = vmatprep.subr.mxu0 0.0
    %7841 = vmatpush2.msra.mxu0 0.0
    %7842 = vmatprep.subr.mxu0 0.0
    %7843 = vmatpush2.msra.mxu0 0.0
    %7844 = vmatprep.subr.mxu0 0.0
    %7845 = vmatpush2.msra.mxu0 0.0
    %7846 = vmatprep.subr.mxu0 0.0
    %7847 = vmatpush2.msra.mxu0 0.0
    %7848 = vmatprep.subr.mxu0 0.0
    %7849 = vmatpush2.msra.mxu0 0.0
    %7850 = vmatprep.subr.mxu0 0.0
    %7851 = vmatpush2.msra.mxu0 0.0
    %7852 = vmatprep.subr.mxu0 0.0
    %7853 = vmatpush2.msra.mxu0 0.0
    %7854 = vmatprep.subr.mxu0 0.0
    %7855 = vmatpush2.msra.mxu0 0.0
    %7856 = vmatprep.subr.mxu0 0.0
    %7857 = vmatpush2.msra.mxu0 0.0
    %7858 = vmatprep.subr.mxu0 0.0
    %7859 = vmatpush2.msra.mxu0 0.0
    %7860 = vmatprep.subr.mxu0 0.0
    %7861 = vmatpush2.msra.mxu0 0.0
    %7862 = vmatprep.subr.mxu0 0.0
    %7863 = vmatpush2.msra.mxu0 0.0
    %7864 = vmatprep.subr.mxu0 0.0
    %7865 = vmatpush2.msra.mxu0 0.0
    %7866 = vmatprep.subr.mxu0 0.0
    %7867 = vmatpush2.msra.mxu0 0.0
    %7868 = vmatprep.subr.mxu0 0.0
    %7869 = vmatpush2.msra.mxu0 0.0
    %7870 = vmatprep.subr.mxu0 0.0
    %7871 = vmatpush2.msra.mxu0 0.0
    %7872 = vmatprep.mubr.f32.mxu0 0.0
    %v7873 = vand.u32 %v7798, 4294901760
    %v7874 = vsub.f32 %v7798, %v7873
    %v7875 = vand.u32 %v7874, 4294901760
    %v7876 = vsub.f32 %v7874, %v7875
    %v7877 = vand.u32 %v7876, 4294901760
    %7878 = vmatmul.mubr.f32.gmra.mxu0 %v7877
    %v7879 = vpop.f32.mrf.mxu0
    %v7880 = vadd.f32 %v1542, %v7879
    %v7881 = vpop.f32.mrf.mxu0
    %7882 = vdwg.mxu0
    %7883 = vmatprep.subr.mxu0 0.0
    %7884 = vmatpush1.msra.mxu0 0.0
    %7885 = vmatprep.subr.mxu0 0.0
    %7886 = vmatpush1.msra.mxu0 0.0
    %7887 = vmatprep.subr.mxu0 0.0
    %7888 = vmatpush1.msra.mxu0 0.0
    %7889 = vmatprep.subr.mxu0 0.0
    %7890 = vmatpush1.msra.mxu0 0.0
    %7891 = vmatprep.subr.mxu0 0.0
    %7892 = vmatpush1.msra.mxu0 0.0
    %7893 = vmatprep.subr.mxu0 0.0
    %7894 = vmatpush1.msra.mxu0 0.0
    %7895 = vmatprep.subr.mxu0 0.0
    %7896 = vmatpush1.msra.mxu0 0.0
    %7897 = vmatprep.subr.mxu0 0.0
    %7898 = vmatpush1.msra.mxu0 0.0
    %7899 = vmatprep.subr.mxu0 0.0
    %v7900 = vand.u32 %v52, 4294901760
    %v7901 = vsub.f32 %v52, %v7900
    %v7902 = vand.u32 %v7901, 4294901760
    %v7903 = vsub.f32 %v7901, %v7902
    %v7904 = vand.u32 %v7903, 4294901760
    %7905 = vmatpush1.msra.mxu0 %v7904
    %7906 = vmatprep.subr.mxu0 0.0
    %v7907 = vand.u32 %v51, 4294901760
    %v7908 = vsub.f32 %v51, %v7907
    %v7909 = vand.u32 %v7908, 4294901760
    %v7910 = vsub.f32 %v7908, %v7909
    %v7911 = vand.u32 %v7910, 4294901760
    %7912 = vmatpush1.msra.mxu0 %v7911
    %7913 = vmatprep.subr.mxu0 0.0
    %v7914 = vand.u32 %v50, 4294901760
    %v7915 = vsub.f32 %v50, %v7914
    %v7916 = vand.u32 %v7915, 4294901760
    %v7917 = vsub.f32 %v7915, %v7916
    %v7918 = vand.u32 %v7917, 4294901760
    %7919 = vmatpush1.msra.mxu0 %v7918
    %7920 = vmatprep.subr.mxu0 0.0
    %v7921 = vand.u32 %v49, 4294901760
    %v7922 = vsub.f32 %v49, %v7921
    %v7923 = vand.u32 %v7922, 4294901760
    %v7924 = vsub.f32 %v7922, %v7923
    %v7925 = vand.u32 %v7924, 4294901760
    %7926 = vmatpush1.msra.mxu0 %v7925
    %7927 = vmatprep.subr.mxu0 0.0
    %v7928 = vand.u32 %v48, 4294901760
    %v7929 = vsub.f32 %v48, %v7928
    %v7930 = vand.u32 %v7929, 4294901760
    %v7931 = vsub.f32 %v7929, %v7930
    %v7932 = vand.u32 %v7931, 4294901760
    %7933 = vmatpush1.msra.mxu0 %v7932
    %7934 = vmatprep.subr.mxu0 0.0
    %v7935 = vand.u32 %v47, 4294901760
    %v7936 = vsub.f32 %v47, %v7935
    %v7937 = vand.u32 %v7936, 4294901760
    %v7938 = vsub.f32 %v7936, %v7937
    %v7939 = vand.u32 %v7938, 4294901760
    %7940 = vmatpush1.msra.mxu0 %v7939
    %7941 = vmatprep.subr.mxu0 0.0
    %v7942 = vand.u32 %v46, 4294901760
    %v7943 = vsub.f32 %v46, %v7942
    %v7944 = vand.u32 %v7943, 4294901760
    %v7945 = vsub.f32 %v7943, %v7944
    %v7946 = vand.u32 %v7945, 4294901760
    %7947 = vmatpush1.msra.mxu0 %v7946
    %7948 = vmatprep.subr.mxu0 0.0
    %v7949 = vand.u32 %v45, 4294901760
    %v7950 = vsub.f32 %v45, %v7949
    %v7951 = vand.u32 %v7950, 4294901760
    %v7952 = vsub.f32 %v7950, %v7951
    %v7953 = vand.u32 %v7952, 4294901760
    %7954 = vmatpush1.msra.mxu0 %v7953
    %7955 = vmatprep.subr.mxu0 0.0
    %7956 = vmatpush2.msra.mxu0 0.0
    %7957 = vmatprep.subr.mxu0 0.0
    %7958 = vmatpush2.msra.mxu0 0.0
    %7959 = vmatprep.subr.mxu0 0.0
    %7960 = vmatpush2.msra.mxu0 0.0
    %7961 = vmatprep.subr.mxu0 0.0
    %7962 = vmatpush2.msra.mxu0 0.0
    %7963 = vmatprep.subr.mxu0 0.0
    %7964 = vmatpush2.msra.mxu0 0.0
    %7965 = vmatprep.subr.mxu0 0.0
    %7966 = vmatpush2.msra.mxu0 0.0
    %7967 = vmatprep.subr.mxu0 0.0
    %7968 = vmatpush2.msra.mxu0 0.0
    %7969 = vmatprep.subr.mxu0 0.0
    %7970 = vmatpush2.msra.mxu0 0.0
    %7971 = vmatprep.subr.mxu0 0.0
    %7972 = vmatpush2.msra.mxu0 0.0
    %7973 = vmatprep.subr.mxu0 0.0
    %7974 = vmatpush2.msra.mxu0 0.0
    %7975 = vmatprep.subr.mxu0 0.0
    %7976 = vmatpush2.msra.mxu0 0.0
    %7977 = vmatprep.subr.mxu0 0.0
    %7978 = vmatpush2.msra.mxu0 0.0
    %7979 = vmatprep.subr.mxu0 0.0
    %7980 = vmatpush2.msra.mxu0 0.0
    %7981 = vmatprep.subr.mxu0 0.0
    %7982 = vmatpush2.msra.mxu0 0.0
    %7983 = vmatprep.subr.mxu0 0.0
    %7984 = vmatpush2.msra.mxu0 0.0
    %7985 = vmatprep.subr.mxu0 0.0
    %7986 = vmatpush2.msra.mxu0 0.0
    %7987 = vmatprep.mubr.f32.mxu0 0.0
    %v7988 = vand.u32 %v7798, 4294901760
    %7989 = vmatmul.mubr.f32.gmra.mxu0 %v7988
    %v7990 = vpop.f32.mrf.mxu0
    %v7991 = vadd.f32 %v7880, %v7990
    %v7992 = vpop.f32.mrf.mxu0
    %7993 = vdwg.mxu0
    %7994 = vmatprep.subr.mxu0 0.0
    %7995 = vmatpush1.msra.mxu0 0.0
    %7996 = vmatprep.subr.mxu0 0.0
    %7997 = vmatpush1.msra.mxu0 0.0
    %7998 = vmatprep.subr.mxu0 0.0
    %7999 = vmatpush1.msra.mxu0 0.0
    %8000 = vmatprep.subr.mxu0 0.0
    %8001 = vmatpush1.msra.mxu0 0.0
    %8002 = vmatprep.subr.mxu0 0.0
    %8003 = vmatpush1.msra.mxu0 0.0
    %8004 = vmatprep.subr.mxu0 0.0
    %8005 = vmatpush1.msra.mxu0 0.0
    %8006 = vmatprep.subr.mxu0 0.0
    %8007 = vmatpush1.msra.mxu0 0.0
    %8008 = vmatprep.subr.mxu0 0.0
    %8009 = vmatpush1.msra.mxu0 0.0
    %8010 = vmatprep.subr.mxu0 0.0
    %v8011 = vand.u32 %v52, 4294901760
    %v8012 = vsub.f32 %v52, %v8011
    %8013 = vmatpush1.msra.mxu0 %v8012
    %8014 = vmatprep.subr.mxu0 0.0
    %v8015 = vand.u32 %v51, 4294901760
    %v8016 = vsub.f32 %v51, %v8015
    %8017 = vmatpush1.msra.mxu0 %v8016
    %8018 = vmatprep.subr.mxu0 0.0
    %v8019 = vand.u32 %v50, 4294901760
    %v8020 = vsub.f32 %v50, %v8019
    %8021 = vmatpush1.msra.mxu0 %v8020
    %8022 = vmatprep.subr.mxu0 0.0
    %v8023 = vand.u32 %v49, 4294901760
    %v8024 = vsub.f32 %v49, %v8023
    %8025 = vmatpush1.msra.mxu0 %v8024
    %8026 = vmatprep.subr.mxu0 0.0
    %v8027 = vand.u32 %v48, 4294901760
    %v8028 = vsub.f32 %v48, %v8027
    %8029 = vmatpush1.msra.mxu0 %v8028
    %8030 = vmatprep.subr.mxu0 0.0
    %v8031 = vand.u32 %v47, 4294901760
    %v8032 = vsub.f32 %v47, %v8031
    %8033 = vmatpush1.msra.mxu0 %v8032
    %8034 = vmatprep.subr.mxu0 0.0
    %v8035 = vand.u32 %v46, 4294901760
    %v8036 = vsub.f32 %v46, %v8035
    %8037 = vmatpush1.msra.mxu0 %v8036
    %8038 = vmatprep.subr.mxu0 0.0
    %v8039 = vand.u32 %v45, 4294901760
    %v8040 = vsub.f32 %v45, %v8039
    %8041 = vmatpush1.msra.mxu0 %v8040
    %8042 = vmatprep.subr.mxu0 0.0
    %8043 = vmatpush2.msra.mxu0 0.0
    %8044 = vmatprep.subr.mxu0 0.0
    %8045 = vmatpush2.msra.mxu0 0.0
    %8046 = vmatprep.subr.mxu0 0.0
    %8047 = vmatpush2.msra.mxu0 0.0
    %8048 = vmatprep.subr.mxu0 0.0
    %8049 = vmatpush2.msra.mxu0 0.0
    %8050 = vmatprep.subr.mxu0 0.0
    %8051 = vmatpush2.msra.mxu0 0.0
    %8052 = vmatprep.subr.mxu0 0.0
    %8053 = vmatpush2.msra.mxu0 0.0
    %8054 = vmatprep.subr.mxu0 0.0
    %8055 = vmatpush2.msra.mxu0 0.0
    %8056 = vmatprep.subr.mxu0 0.0
    %8057 = vmatpush2.msra.mxu0 0.0
    %8058 = vmatprep.subr.mxu0 0.0
    %8059 = vmatpush2.msra.mxu0 0.0
    %8060 = vmatprep.subr.mxu0 0.0
    %8061 = vmatpush2.msra.mxu0 0.0
    %8062 = vmatprep.subr.mxu0 0.0
    %8063 = vmatpush2.msra.mxu0 0.0
    %8064 = vmatprep.subr.mxu0 0.0
    %8065 = vmatpush2.msra.mxu0 0.0
    %8066 = vmatprep.subr.mxu0 0.0
    %8067 = vmatpush2.msra.mxu0 0.0
    %8068 = vmatprep.subr.mxu0 0.0
    %8069 = vmatpush2.msra.mxu0 0.0
    %8070 = vmatprep.subr.mxu0 0.0
    %8071 = vmatpush2.msra.mxu0 0.0
    %8072 = vmatprep.subr.mxu0 0.0
    %8073 = vmatpush2.msra.mxu0 0.0
    %8074 = vmatprep.mubr.f32.mxu0 0.0
    %v8075 = vand.u32 %v7798, 4294901760
    %v8076 = vsub.f32 %v7798, %v8075
    %8077 = vmatmul.mubr.f32.gmra.mxu0 %v8076
    %v8078 = vpop.f32.mrf.mxu0
    %v8079 = vadd.f32 %v7991, %v8078
    %v8080 = vpop.f32.mrf.mxu0
    %8081 = vdwg.mxu0
    %8082 = vmatprep.subr.mxu0 0.0
    %8083 = vmatpush1.msra.mxu0 0.0
    %8084 = vmatprep.subr.mxu0 0.0
    %8085 = vmatpush1.msra.mxu0 0.0
    %8086 = vmatprep.subr.mxu0 0.0
    %8087 = vmatpush1.msra.mxu0 0.0
    %8088 = vmatprep.subr.mxu0 0.0
    %8089 = vmatpush1.msra.mxu0 0.0
    %8090 = vmatprep.subr.mxu0 0.0
    %8091 = vmatpush1.msra.mxu0 0.0
    %8092 = vmatprep.subr.mxu0 0.0
    %8093 = vmatpush1.msra.mxu0 0.0
    %8094 = vmatprep.subr.mxu0 0.0
    %8095 = vmatpush1.msra.mxu0 0.0
    %8096 = vmatprep.subr.mxu0 0.0
    %8097 = vmatpush1.msra.mxu0 0.0
    %8098 = vmatprep.subr.mxu0 0.0
    %v8099 = vand.u32 %v52, 4294901760
    %8100 = vmatpush1.msra.mxu0 %v8099
    %8101 = vmatprep.subr.mxu0 0.0
    %v8102 = vand.u32 %v51, 4294901760
    %8103 = vmatpush1.msra.mxu0 %v8102
    %8104 = vmatprep.subr.mxu0 0.0
    %v8105 = vand.u32 %v50, 4294901760
    %8106 = vmatpush1.msra.mxu0 %v8105
    %8107 = vmatprep.subr.mxu0 0.0
    %v8108 = vand.u32 %v49, 4294901760
    %8109 = vmatpush1.msra.mxu0 %v8108
    %8110 = vmatprep.subr.mxu0 0.0
    %v8111 = vand.u32 %v48, 4294901760
    %8112 = vmatpush1.msra.mxu0 %v8111
    %8113 = vmatprep.subr.mxu0 0.0
    %v8114 = vand.u32 %v47, 4294901760
    %8115 = vmatpush1.msra.mxu0 %v8114
    %8116 = vmatprep.subr.mxu0 0.0
    %v8117 = vand.u32 %v46, 4294901760
    %8118 = vmatpush1.msra.mxu0 %v8117
    %8119 = vmatprep.subr.mxu0 0.0
    %v8120 = vand.u32 %v45, 4294901760
    %8121 = vmatpush1.msra.mxu0 %v8120
    %8122 = vmatprep.subr.mxu0 0.0
    %8123 = vmatpush2.msra.mxu0 0.0
    %8124 = vmatprep.subr.mxu0 0.0
    %8125 = vmatpush2.msra.mxu0 0.0
    %8126 = vmatprep.subr.mxu0 0.0
    %8127 = vmatpush2.msra.mxu0 0.0
    %8128 = vmatprep.subr.mxu0 0.0
    %8129 = vmatpush2.msra.mxu0 0.0
    %8130 = vmatprep.subr.mxu0 0.0
    %8131 = vmatpush2.msra.mxu0 0.0
    %8132 = vmatprep.subr.mxu0 0.0
    %8133 = vmatpush2.msra.mxu0 0.0
    %8134 = vmatprep.subr.mxu0 0.0
    %8135 = vmatpush2.msra.mxu0 0.0
    %8136 = vmatprep.subr.mxu0 0.0
    %8137 = vmatpush2.msra.mxu0 0.0
    %8138 = vmatprep.subr.mxu0 0.0
    %8139 = vmatpush2.msra.mxu0 0.0
    %8140 = vmatprep.subr.mxu0 0.0
    %8141 = vmatpush2.msra.mxu0 0.0
    %8142 = vmatprep.subr.mxu0 0.0
    %8143 = vmatpush2.msra.mxu0 0.0
    %8144 = vmatprep.subr.mxu0 0.0
    %8145 = vmatpush2.msra.mxu0 0.0
    %8146 = vmatprep.subr.mxu0 0.0
    %8147 = vmatpush2.msra.mxu0 0.0
    %8148 = vmatprep.subr.mxu0 0.0
    %8149 = vmatpush2.msra.mxu0 0.0
    %8150 = vmatprep.subr.mxu0 0.0
    %8151 = vmatpush2.msra.mxu0 0.0
    %8152 = vmatprep.subr.mxu0 0.0
    %8153 = vmatpush2.msra.mxu0 0.0
    %8154 = vmatprep.mubr.f32.mxu0 0.0
    %v8155 = vand.u32 %v7798, 4294901760
    %v8156 = vsub.f32 %v7798, %v8155
    %v8157 = vand.u32 %v8156, 4294901760
    %8158 = vmatmul.mubr.f32.gmra.mxu0 %v8157
    %v8159 = vpop.f32.mrf.mxu0
    %v8160 = vadd.f32 %v8079, %v8159
    %v8161 = vpop.f32.mrf.mxu0
    %8162 = vdwg.mxu0
    %8163 = vmatprep.subr.mxu0 0.0
    %8164 = vmatpush1.msra.mxu0 0.0
    %8165 = vmatprep.subr.mxu0 0.0
    %8166 = vmatpush1.msra.mxu0 0.0
    %8167 = vmatprep.subr.mxu0 0.0
    %8168 = vmatpush1.msra.mxu0 0.0
    %8169 = vmatprep.subr.mxu0 0.0
    %8170 = vmatpush1.msra.mxu0 0.0
    %8171 = vmatprep.subr.mxu0 0.0
    %8172 = vmatpush1.msra.mxu0 0.0
    %8173 = vmatprep.subr.mxu0 0.0
    %8174 = vmatpush1.msra.mxu0 0.0
    %8175 = vmatprep.subr.mxu0 0.0
    %8176 = vmatpush1.msra.mxu0 0.0
    %8177 = vmatprep.subr.mxu0 0.0
    %8178 = vmatpush1.msra.mxu0 0.0
    %8179 = vmatprep.subr.mxu0 0.0
    %v8180 = vand.u32 %v52, 4294901760
    %v8181 = vsub.f32 %v52, %v8180
    %v8182 = vand.u32 %v8181, 4294901760
    %8183 = vmatpush1.msra.mxu0 %v8182
    %8184 = vmatprep.subr.mxu0 0.0
    %v8185 = vand.u32 %v51, 4294901760
    %v8186 = vsub.f32 %v51, %v8185
    %v8187 = vand.u32 %v8186, 4294901760
    %8188 = vmatpush1.msra.mxu0 %v8187
    %8189 = vmatprep.subr.mxu0 0.0
    %v8190 = vand.u32 %v50, 4294901760
    %v8191 = vsub.f32 %v50, %v8190
    %v8192 = vand.u32 %v8191, 4294901760
    %8193 = vmatpush1.msra.mxu0 %v8192
    %8194 = vmatprep.subr.mxu0 0.0
    %v8195 = vand.u32 %v49, 4294901760
    %v8196 = vsub.f32 %v49, %v8195
    %v8197 = vand.u32 %v8196, 4294901760
    %8198 = vmatpush1.msra.mxu0 %v8197
    %8199 = vmatprep.subr.mxu0 0.0
    %v8200 = vand.u32 %v48, 4294901760
    %v8201 = vsub.f32 %v48, %v8200
    %v8202 = vand.u32 %v8201, 4294901760
    %8203 = vmatpush1.msra.mxu0 %v8202
    %8204 = vmatprep.subr.mxu0 0.0
    %v8205 = vand.u32 %v47, 4294901760
    %v8206 = vsub.f32 %v47, %v8205
    %v8207 = vand.u32 %v8206, 4294901760
    %8208 = vmatpush1.msra.mxu0 %v8207
    %8209 = vmatprep.subr.mxu0 0.0
    %v8210 = vand.u32 %v46, 4294901760
    %v8211 = vsub.f32 %v46, %v8210
    %v8212 = vand.u32 %v8211, 4294901760
    %8213 = vmatpush1.msra.mxu0 %v8212
    %8214 = vmatprep.subr.mxu0 0.0
    %v8215 = vand.u32 %v45, 4294901760
    %v8216 = vsub.f32 %v45, %v8215
    %v8217 = vand.u32 %v8216, 4294901760
    %8218 = vmatpush1.msra.mxu0 %v8217
    %8219 = vmatprep.subr.mxu0 0.0
    %8220 = vmatpush2.msra.mxu0 0.0
    %8221 = vmatprep.subr.mxu0 0.0
    %8222 = vmatpush2.msra.mxu0 0.0
    %8223 = vmatprep.subr.mxu0 0.0
    %8224 = vmatpush2.msra.mxu0 0.0
    %8225 = vmatprep.subr.mxu0 0.0
    %8226 = vmatpush2.msra.mxu0 0.0
    %8227 = vmatprep.subr.mxu0 0.0
    %8228 = vmatpush2.msra.mxu0 0.0
    %8229 = vmatprep.subr.mxu0 0.0
    %8230 = vmatpush2.msra.mxu0 0.0
    %8231 = vmatprep.subr.mxu0 0.0
    %8232 = vmatpush2.msra.mxu0 0.0
    %8233 = vmatprep.subr.mxu0 0.0
    %8234 = vmatpush2.msra.mxu0 0.0
    %8235 = vmatprep.subr.mxu0 0.0
    %8236 = vmatpush2.msra.mxu0 0.0
    %8237 = vmatprep.subr.mxu0 0.0
    %8238 = vmatpush2.msra.mxu0 0.0
    %8239 = vmatprep.subr.mxu0 0.0
    %8240 = vmatpush2.msra.mxu0 0.0
    %8241 = vmatprep.subr.mxu0 0.0
    %8242 = vmatpush2.msra.mxu0 0.0
    %8243 = vmatprep.subr.mxu0 0.0
    %8244 = vmatpush2.msra.mxu0 0.0
    %8245 = vmatprep.subr.mxu0 0.0
    %8246 = vmatpush2.msra.mxu0 0.0
    %8247 = vmatprep.subr.mxu0 0.0
    %8248 = vmatpush2.msra.mxu0 0.0
    %8249 = vmatprep.subr.mxu0 0.0
    %8250 = vmatpush2.msra.mxu0 0.0
    %8251 = vmatprep.mubr.f32.mxu0 0.0
    %v8252 = vand.u32 %v7798, 4294901760
    %8253 = vmatmul.mubr.f32.gmra.mxu0 %v8252
    %v8254 = vpop.f32.mrf.mxu0
    %v8255 = vadd.f32 %v8160, %v8254
    %v8256 = vpop.f32.mrf.mxu0
    %8257 = vdwg.mxu0
    %8258 = vmatprep.subr.mxu0 0.0
    %8259 = vmatpush1.msra.mxu0 0.0
    %8260 = vmatprep.subr.mxu0 0.0
    %8261 = vmatpush1.msra.mxu0 0.0
    %8262 = vmatprep.subr.mxu0 0.0
    %8263 = vmatpush1.msra.mxu0 0.0
    %8264 = vmatprep.subr.mxu0 0.0
    %8265 = vmatpush1.msra.mxu0 0.0
    %8266 = vmatprep.subr.mxu0 0.0
    %8267 = vmatpush1.msra.mxu0 0.0
    %8268 = vmatprep.subr.mxu0 0.0
    %8269 = vmatpush1.msra.mxu0 0.0
    %8270 = vmatprep.subr.mxu0 0.0
    %8271 = vmatpush1.msra.mxu0 0.0
    %8272 = vmatprep.subr.mxu0 0.0
    %8273 = vmatpush1.msra.mxu0 0.0
    %8274 = vmatprep.subr.mxu0 0.0
    %v8275 = vand.u32 %v52, 4294901760
    %8276 = vmatpush1.msra.mxu0 %v8275
    %8277 = vmatprep.subr.mxu0 0.0
    %v8278 = vand.u32 %v51, 4294901760
    %8279 = vmatpush1.msra.mxu0 %v8278
    %8280 = vmatprep.subr.mxu0 0.0
    %v8281 = vand.u32 %v50, 4294901760
    %8282 = vmatpush1.msra.mxu0 %v8281
    %8283 = vmatprep.subr.mxu0 0.0
    %v8284 = vand.u32 %v49, 4294901760
    %8285 = vmatpush1.msra.mxu0 %v8284
    %8286 = vmatprep.subr.mxu0 0.0
    %v8287 = vand.u32 %v48, 4294901760
    %8288 = vmatpush1.msra.mxu0 %v8287
    %8289 = vmatprep.subr.mxu0 0.0
    %v8290 = vand.u32 %v47, 4294901760
    %8291 = vmatpush1.msra.mxu0 %v8290
    %8292 = vmatprep.subr.mxu0 0.0
    %v8293 = vand.u32 %v46, 4294901760
    %8294 = vmatpush1.msra.mxu0 %v8293
    %8295 = vmatprep.subr.mxu0 0.0
    %v8296 = vand.u32 %v45, 4294901760
    %8297 = vmatpush1.msra.mxu0 %v8296
    %8298 = vmatprep.subr.mxu0 0.0
    %8299 = vmatpush2.msra.mxu0 0.0
    %8300 = vmatprep.subr.mxu0 0.0
    %8301 = vmatpush2.msra.mxu0 0.0
    %8302 = vmatprep.subr.mxu0 0.0
    %8303 = vmatpush2.msra.mxu0 0.0
    %8304 = vmatprep.subr.mxu0 0.0
    %8305 = vmatpush2.msra.mxu0 0.0
    %8306 = vmatprep.subr.mxu0 0.0
    %8307 = vmatpush2.msra.mxu0 0.0
    %8308 = vmatprep.subr.mxu0 0.0
    %8309 = vmatpush2.msra.mxu0 0.0
    %8310 = vmatprep.subr.mxu0 0.0
    %8311 = vmatpush2.msra.mxu0 0.0
    %8312 = vmatprep.subr.mxu0 0.0
    %8313 = vmatpush2.msra.mxu0 0.0
    %8314 = vmatprep.subr.mxu0 0.0
    %8315 = vmatpush2.msra.mxu0 0.0
    %8316 = vmatprep.subr.mxu0 0.0
    %8317 = vmatpush2.msra.mxu0 0.0
    %8318 = vmatprep.subr.mxu0 0.0
    %8319 = vmatpush2.msra.mxu0 0.0
    %8320 = vmatprep.subr.mxu0 0.0
    %8321 = vmatpush2.msra.mxu0 0.0
    %8322 = vmatprep.subr.mxu0 0.0
    %8323 = vmatpush2.msra.mxu0 0.0
    %8324 = vmatprep.subr.mxu0 0.0
    %8325 = vmatpush2.msra.mxu0 0.0
    %8326 = vmatprep.subr.mxu0 0.0
    %8327 = vmatpush2.msra.mxu0 0.0
    %8328 = vmatprep.subr.mxu0 0.0
    %8329 = vmatpush2.msra.mxu0 0.0
    %8330 = vmatprep.mubr.f32.mxu0 0.0
    %v8331 = vand.u32 %v7798, 4294901760
    %8332 = vmatmul.mubr.f32.gmra.mxu0 %v8331
    %v8333 = vpop.f32.mrf.mxu0
    %v8334 = vadd.f32 %v8255, %v8333
    %v8335 = vpop.f32.mrf.mxu0
    %8336 = vdwg.mxu0
    %v8337 = vtanh.pop %v8334
    %v8339 = vrot.slane %v8337, 1
    %8340 = vrot.lane.b32.xlu0 %v8339, 32
    %v8341 = vpop.permute.xlu0 %8340
    %v8343 = vsel %vm64, %v7789, %v8341
    %v8345 = vrot.slane %v8343, 7
    %v8346 = vsel %vm1544, %v8345, 0
    %8348 = vmatprep.subr.mxu0 0.0
    %8349 = vmatpush1.msra.mxu0 0.0
    %8350 = vmatprep.subr.mxu0 0.0
    %8351 = vmatpush1.msra.mxu0 0.0
    %8352 = vmatprep.subr.mxu0 0.0
    %8353 = vmatpush1.msra.mxu0 0.0
    %8354 = vmatprep.subr.mxu0 0.0
    %8355 = vmatpush1.msra.mxu0 0.0
    %8356 = vmatprep.subr.mxu0 0.0
    %8357 = vmatpush1.msra.mxu0 0.0
    %8358 = vmatprep.subr.mxu0 0.0
    %8359 = vmatpush1.msra.mxu0 0.0
    %8360 = vmatprep.subr.mxu0 0.0
    %8361 = vmatpush1.msra.mxu0 0.0
    %8362 = vmatprep.subr.mxu0 0.0
    %8363 = vmatpush1.msra.mxu0 0.0
    %8364 = vmatprep.subr.mxu0 0.0
    %v8365 = vand.u32 %v52, 4294901760
    %8366 = vmatpush1.msra.mxu0 %v8365
    %8367 = vmatprep.subr.mxu0 0.0
    %v8368 = vand.u32 %v51, 4294901760
    %8369 = vmatpush1.msra.mxu0 %v8368
    %8370 = vmatprep.subr.mxu0 0.0
    %v8371 = vand.u32 %v50, 4294901760
    %8372 = vmatpush1.msra.mxu0 %v8371
    %8373 = vmatprep.subr.mxu0 0.0
    %v8374 = vand.u32 %v49, 4294901760
    %8375 = vmatpush1.msra.mxu0 %v8374
    %8376 = vmatprep.subr.mxu0 0.0
    %v8377 = vand.u32 %v48, 4294901760
    %8378 = vmatpush1.msra.mxu0 %v8377
    %8379 = vmatprep.subr.mxu0 0.0
    %v8380 = vand.u32 %v47, 4294901760
    %8381 = vmatpush1.msra.mxu0 %v8380
    %8382 = vmatprep.subr.mxu0 0.0
    %v8383 = vand.u32 %v46, 4294901760
    %8384 = vmatpush1.msra.mxu0 %v8383
    %8385 = vmatprep.subr.mxu0 0.0
    %v8386 = vand.u32 %v45, 4294901760
    %8387 = vmatpush1.msra.mxu0 %v8386
    %8388 = vmatprep.subr.mxu0 0.0
    %8389 = vmatpush2.msra.mxu0 0.0
    %8390 = vmatprep.subr.mxu0 0.0
    %8391 = vmatpush2.msra.mxu0 0.0
    %8392 = vmatprep.subr.mxu0 0.0
    %8393 = vmatpush2.msra.mxu0 0.0
    %8394 = vmatprep.subr.mxu0 0.0
    %8395 = vmatpush2.msra.mxu0 0.0
    %8396 = vmatprep.subr.mxu0 0.0
    %8397 = vmatpush2.msra.mxu0 0.0
    %8398 = vmatprep.subr.mxu0 0.0
    %8399 = vmatpush2.msra.mxu0 0.0
    %8400 = vmatprep.subr.mxu0 0.0
    %8401 = vmatpush2.msra.mxu0 0.0
    %8402 = vmatprep.subr.mxu0 0.0
    %8403 = vmatpush2.msra.mxu0 0.0
    %8404 = vmatprep.subr.mxu0 0.0
    %8405 = vmatpush2.msra.mxu0 0.0
    %8406 = vmatprep.subr.mxu0 0.0
    %8407 = vmatpush2.msra.mxu0 0.0
    %8408 = vmatprep.subr.mxu0 0.0
    %8409 = vmatpush2.msra.mxu0 0.0
    %8410 = vmatprep.subr.mxu0 0.0
    %8411 = vmatpush2.msra.mxu0 0.0
    %8412 = vmatprep.subr.mxu0 0.0
    %8413 = vmatpush2.msra.mxu0 0.0
    %8414 = vmatprep.subr.mxu0 0.0
    %8415 = vmatpush2.msra.mxu0 0.0
    %8416 = vmatprep.subr.mxu0 0.0
    %8417 = vmatpush2.msra.mxu0 0.0
    %8418 = vmatprep.subr.mxu0 0.0
    %8419 = vmatpush2.msra.mxu0 0.0
    %8420 = vmatprep.mubr.f32.mxu0 0.0
    %v8421 = vand.u32 %v8346, 4294901760
    %v8422 = vsub.f32 %v8346, %v8421
    %v8423 = vand.u32 %v8422, 4294901760
    %v8424 = vsub.f32 %v8422, %v8423
    %v8425 = vand.u32 %v8424, 4294901760
    %8426 = vmatmul.mubr.f32.gmra.mxu0 %v8425
    %v8427 = vpop.f32.mrf.mxu0
    %v8428 = vadd.f32 %v1542, %v8427
    %v8429 = vpop.f32.mrf.mxu0
    %8430 = vdwg.mxu0
    %8431 = vmatprep.subr.mxu0 0.0
    %8432 = vmatpush1.msra.mxu0 0.0
    %8433 = vmatprep.subr.mxu0 0.0
    %8434 = vmatpush1.msra.mxu0 0.0
    %8435 = vmatprep.subr.mxu0 0.0
    %8436 = vmatpush1.msra.mxu0 0.0
    %8437 = vmatprep.subr.mxu0 0.0
    %8438 = vmatpush1.msra.mxu0 0.0
    %8439 = vmatprep.subr.mxu0 0.0
    %8440 = vmatpush1.msra.mxu0 0.0
    %8441 = vmatprep.subr.mxu0 0.0
    %8442 = vmatpush1.msra.mxu0 0.0
    %8443 = vmatprep.subr.mxu0 0.0
    %8444 = vmatpush1.msra.mxu0 0.0
    %8445 = vmatprep.subr.mxu0 0.0
    %8446 = vmatpush1.msra.mxu0 0.0
    %8447 = vmatprep.subr.mxu0 0.0
    %v8448 = vand.u32 %v52, 4294901760
    %v8449 = vsub.f32 %v52, %v8448
    %v8450 = vand.u32 %v8449, 4294901760
    %v8451 = vsub.f32 %v8449, %v8450
    %v8452 = vand.u32 %v8451, 4294901760
    %8453 = vmatpush1.msra.mxu0 %v8452
    %8454 = vmatprep.subr.mxu0 0.0
    %v8455 = vand.u32 %v51, 4294901760
    %v8456 = vsub.f32 %v51, %v8455
    %v8457 = vand.u32 %v8456, 4294901760
    %v8458 = vsub.f32 %v8456, %v8457
    %v8459 = vand.u32 %v8458, 4294901760
    %8460 = vmatpush1.msra.mxu0 %v8459
    %8461 = vmatprep.subr.mxu0 0.0
    %v8462 = vand.u32 %v50, 4294901760
    %v8463 = vsub.f32 %v50, %v8462
    %v8464 = vand.u32 %v8463, 4294901760
    %v8465 = vsub.f32 %v8463, %v8464
    %v8466 = vand.u32 %v8465, 4294901760
    %8467 = vmatpush1.msra.mxu0 %v8466
    %8468 = vmatprep.subr.mxu0 0.0
    %v8469 = vand.u32 %v49, 4294901760
    %v8470 = vsub.f32 %v49, %v8469
    %v8471 = vand.u32 %v8470, 4294901760
    %v8472 = vsub.f32 %v8470, %v8471
    %v8473 = vand.u32 %v8472, 4294901760
    %8474 = vmatpush1.msra.mxu0 %v8473
    %8475 = vmatprep.subr.mxu0 0.0
    %v8476 = vand.u32 %v48, 4294901760
    %v8477 = vsub.f32 %v48, %v8476
    %v8478 = vand.u32 %v8477, 4294901760
    %v8479 = vsub.f32 %v8477, %v8478
    %v8480 = vand.u32 %v8479, 4294901760
    %8481 = vmatpush1.msra.mxu0 %v8480
    %8482 = vmatprep.subr.mxu0 0.0
    %v8483 = vand.u32 %v47, 4294901760
    %v8484 = vsub.f32 %v47, %v8483
    %v8485 = vand.u32 %v8484, 4294901760
    %v8486 = vsub.f32 %v8484, %v8485
    %v8487 = vand.u32 %v8486, 4294901760
    %8488 = vmatpush1.msra.mxu0 %v8487
    %8489 = vmatprep.subr.mxu0 0.0
    %v8490 = vand.u32 %v46, 4294901760
    %v8491 = vsub.f32 %v46, %v8490
    %v8492 = vand.u32 %v8491, 4294901760
    %v8493 = vsub.f32 %v8491, %v8492
    %v8494 = vand.u32 %v8493, 4294901760
    %8495 = vmatpush1.msra.mxu0 %v8494
    %8496 = vmatprep.subr.mxu0 0.0
    %v8497 = vand.u32 %v45, 4294901760
    %v8498 = vsub.f32 %v45, %v8497
    %v8499 = vand.u32 %v8498, 4294901760
    %v8500 = vsub.f32 %v8498, %v8499
    %v8501 = vand.u32 %v8500, 4294901760
    %8502 = vmatpush1.msra.mxu0 %v8501
    %8503 = vmatprep.subr.mxu0 0.0
    %8504 = vmatpush2.msra.mxu0 0.0
    %8505 = vmatprep.subr.mxu0 0.0
    %8506 = vmatpush2.msra.mxu0 0.0
    %8507 = vmatprep.subr.mxu0 0.0
    %8508 = vmatpush2.msra.mxu0 0.0
    %8509 = vmatprep.subr.mxu0 0.0
    %8510 = vmatpush2.msra.mxu0 0.0
    %8511 = vmatprep.subr.mxu0 0.0
    %8512 = vmatpush2.msra.mxu0 0.0
    %8513 = vmatprep.subr.mxu0 0.0
    %8514 = vmatpush2.msra.mxu0 0.0
    %8515 = vmatprep.subr.mxu0 0.0
    %8516 = vmatpush2.msra.mxu0 0.0
    %8517 = vmatprep.subr.mxu0 0.0
    %8518 = vmatpush2.msra.mxu0 0.0
    %8519 = vmatprep.subr.mxu0 0.0
    %8520 = vmatpush2.msra.mxu0 0.0
    %8521 = vmatprep.subr.mxu0 0.0
    %8522 = vmatpush2.msra.mxu0 0.0
    %8523 = vmatprep.subr.mxu0 0.0
    %8524 = vmatpush2.msra.mxu0 0.0
    %8525 = vmatprep.subr.mxu0 0.0
    %8526 = vmatpush2.msra.mxu0 0.0
    %8527 = vmatprep.subr.mxu0 0.0
    %8528 = vmatpush2.msra.mxu0 0.0
    %8529 = vmatprep.subr.mxu0 0.0
    %8530 = vmatpush2.msra.mxu0 0.0
    %8531 = vmatprep.subr.mxu0 0.0
    %8532 = vmatpush2.msra.mxu0 0.0
    %8533 = vmatprep.subr.mxu0 0.0
    %8534 = vmatpush2.msra.mxu0 0.0
    %8535 = vmatprep.mubr.f32.mxu0 0.0
    %v8536 = vand.u32 %v8346, 4294901760
    %8537 = vmatmul.mubr.f32.gmra.mxu0 %v8536
    %v8538 = vpop.f32.mrf.mxu0
    %v8539 = vadd.f32 %v8428, %v8538
    %v8540 = vpop.f32.mrf.mxu0
    %8541 = vdwg.mxu0
    %8542 = vmatprep.subr.mxu0 0.0
    %8543 = vmatpush1.msra.mxu0 0.0
    %8544 = vmatprep.subr.mxu0 0.0
    %8545 = vmatpush1.msra.mxu0 0.0
    %8546 = vmatprep.subr.mxu0 0.0
    %8547 = vmatpush1.msra.mxu0 0.0
    %8548 = vmatprep.subr.mxu0 0.0
    %8549 = vmatpush1.msra.mxu0 0.0
    %8550 = vmatprep.subr.mxu0 0.0
    %8551 = vmatpush1.msra.mxu0 0.0
    %8552 = vmatprep.subr.mxu0 0.0
    %8553 = vmatpush1.msra.mxu0 0.0
    %8554 = vmatprep.subr.mxu0 0.0
    %8555 = vmatpush1.msra.mxu0 0.0
    %8556 = vmatprep.subr.mxu0 0.0
    %8557 = vmatpush1.msra.mxu0 0.0
    %8558 = vmatprep.subr.mxu0 0.0
    %v8559 = vand.u32 %v52, 4294901760
    %v8560 = vsub.f32 %v52, %v8559
    %8561 = vmatpush1.msra.mxu0 %v8560
    %8562 = vmatprep.subr.mxu0 0.0
    %v8563 = vand.u32 %v51, 4294901760
    %v8564 = vsub.f32 %v51, %v8563
    %8565 = vmatpush1.msra.mxu0 %v8564
    %8566 = vmatprep.subr.mxu0 0.0
    %v8567 = vand.u32 %v50, 4294901760
    %v8568 = vsub.f32 %v50, %v8567
    %8569 = vmatpush1.msra.mxu0 %v8568
    %8570 = vmatprep.subr.mxu0 0.0
    %v8571 = vand.u32 %v49, 4294901760
    %v8572 = vsub.f32 %v49, %v8571
    %8573 = vmatpush1.msra.mxu0 %v8572
    %8574 = vmatprep.subr.mxu0 0.0
    %v8575 = vand.u32 %v48, 4294901760
    %v8576 = vsub.f32 %v48, %v8575
    %8577 = vmatpush1.msra.mxu0 %v8576
    %8578 = vmatprep.subr.mxu0 0.0
    %v8579 = vand.u32 %v47, 4294901760
    %v8580 = vsub.f32 %v47, %v8579
    %8581 = vmatpush1.msra.mxu0 %v8580
    %8582 = vmatprep.subr.mxu0 0.0
    %v8583 = vand.u32 %v46, 4294901760
    %v8584 = vsub.f32 %v46, %v8583
    %8585 = vmatpush1.msra.mxu0 %v8584
    %8586 = vmatprep.subr.mxu0 0.0
    %v8587 = vand.u32 %v45, 4294901760
    %v8588 = vsub.f32 %v45, %v8587
    %8589 = vmatpush1.msra.mxu0 %v8588
    %8590 = vmatprep.subr.mxu0 0.0
    %8591 = vmatpush2.msra.mxu0 0.0
    %8592 = vmatprep.subr.mxu0 0.0
    %8593 = vmatpush2.msra.mxu0 0.0
    %8594 = vmatprep.subr.mxu0 0.0
    %8595 = vmatpush2.msra.mxu0 0.0
    %8596 = vmatprep.subr.mxu0 0.0
    %8597 = vmatpush2.msra.mxu0 0.0
    %8598 = vmatprep.subr.mxu0 0.0
    %8599 = vmatpush2.msra.mxu0 0.0
    %8600 = vmatprep.subr.mxu0 0.0
    %8601 = vmatpush2.msra.mxu0 0.0
    %8602 = vmatprep.subr.mxu0 0.0
    %8603 = vmatpush2.msra.mxu0 0.0
    %8604 = vmatprep.subr.mxu0 0.0
    %8605 = vmatpush2.msra.mxu0 0.0
    %8606 = vmatprep.subr.mxu0 0.0
    %8607 = vmatpush2.msra.mxu0 0.0
    %8608 = vmatprep.subr.mxu0 0.0
    %8609 = vmatpush2.msra.mxu0 0.0
    %8610 = vmatprep.subr.mxu0 0.0
    %8611 = vmatpush2.msra.mxu0 0.0
    %8612 = vmatprep.subr.mxu0 0.0
    %8613 = vmatpush2.msra.mxu0 0.0
    %8614 = vmatprep.subr.mxu0 0.0
    %8615 = vmatpush2.msra.mxu0 0.0
    %8616 = vmatprep.subr.mxu0 0.0
    %8617 = vmatpush2.msra.mxu0 0.0
    %8618 = vmatprep.subr.mxu0 0.0
    %8619 = vmatpush2.msra.mxu0 0.0
    %8620 = vmatprep.subr.mxu0 0.0
    %8621 = vmatpush2.msra.mxu0 0.0
    %8622 = vmatprep.mubr.f32.mxu0 0.0
    %v8623 = vand.u32 %v8346, 4294901760
    %v8624 = vsub.f32 %v8346, %v8623
    %8625 = vmatmul.mubr.f32.gmra.mxu0 %v8624
    %v8626 = vpop.f32.mrf.mxu0
    %v8627 = vadd.f32 %v8539, %v8626
    %v8628 = vpop.f32.mrf.mxu0
    %8629 = vdwg.mxu0
    %8630 = vmatprep.subr.mxu0 0.0
    %8631 = vmatpush1.msra.mxu0 0.0
    %8632 = vmatprep.subr.mxu0 0.0
    %8633 = vmatpush1.msra.mxu0 0.0
    %8634 = vmatprep.subr.mxu0 0.0
    %8635 = vmatpush1.msra.mxu0 0.0
    %8636 = vmatprep.subr.mxu0 0.0
    %8637 = vmatpush1.msra.mxu0 0.0
    %8638 = vmatprep.subr.mxu0 0.0
    %8639 = vmatpush1.msra.mxu0 0.0
    %8640 = vmatprep.subr.mxu0 0.0
    %8641 = vmatpush1.msra.mxu0 0.0
    %8642 = vmatprep.subr.mxu0 0.0
    %8643 = vmatpush1.msra.mxu0 0.0
    %8644 = vmatprep.subr.mxu0 0.0
    %8645 = vmatpush1.msra.mxu0 0.0
    %8646 = vmatprep.subr.mxu0 0.0
    %v8647 = vand.u32 %v52, 4294901760
    %8648 = vmatpush1.msra.mxu0 %v8647
    %8649 = vmatprep.subr.mxu0 0.0
    %v8650 = vand.u32 %v51, 4294901760
    %8651 = vmatpush1.msra.mxu0 %v8650
    %8652 = vmatprep.subr.mxu0 0.0
    %v8653 = vand.u32 %v50, 4294901760
    %8654 = vmatpush1.msra.mxu0 %v8653
    %8655 = vmatprep.subr.mxu0 0.0
    %v8656 = vand.u32 %v49, 4294901760
    %8657 = vmatpush1.msra.mxu0 %v8656
    %8658 = vmatprep.subr.mxu0 0.0
    %v8659 = vand.u32 %v48, 4294901760
    %8660 = vmatpush1.msra.mxu0 %v8659
    %8661 = vmatprep.subr.mxu0 0.0
    %v8662 = vand.u32 %v47, 4294901760
    %8663 = vmatpush1.msra.mxu0 %v8662
    %8664 = vmatprep.subr.mxu0 0.0
    %v8665 = vand.u32 %v46, 4294901760
    %8666 = vmatpush1.msra.mxu0 %v8665
    %8667 = vmatprep.subr.mxu0 0.0
    %v8668 = vand.u32 %v45, 4294901760
    %8669 = vmatpush1.msra.mxu0 %v8668
    %8670 = vmatprep.subr.mxu0 0.0
    %8671 = vmatpush2.msra.mxu0 0.0
    %8672 = vmatprep.subr.mxu0 0.0
    %8673 = vmatpush2.msra.mxu0 0.0
    %8674 = vmatprep.subr.mxu0 0.0
    %8675 = vmatpush2.msra.mxu0 0.0
    %8676 = vmatprep.subr.mxu0 0.0
    %8677 = vmatpush2.msra.mxu0 0.0
    %8678 = vmatprep.subr.mxu0 0.0
    %8679 = vmatpush2.msra.mxu0 0.0
    %8680 = vmatprep.subr.mxu0 0.0
    %8681 = vmatpush2.msra.mxu0 0.0
    %8682 = vmatprep.subr.mxu0 0.0
    %8683 = vmatpush2.msra.mxu0 0.0
    %8684 = vmatprep.subr.mxu0 0.0
    %8685 = vmatpush2.msra.mxu0 0.0
    %8686 = vmatprep.subr.mxu0 0.0
    %8687 = vmatpush2.msra.mxu0 0.0
    %8688 = vmatprep.subr.mxu0 0.0
    %8689 = vmatpush2.msra.mxu0 0.0
    %8690 = vmatprep.subr.mxu0 0.0
    %8691 = vmatpush2.msra.mxu0 0.0
    %8692 = vmatprep.subr.mxu0 0.0
    %8693 = vmatpush2.msra.mxu0 0.0
    %8694 = vmatprep.subr.mxu0 0.0
    %8695 = vmatpush2.msra.mxu0 0.0
    %8696 = vmatprep.subr.mxu0 0.0
    %8697 = vmatpush2.msra.mxu0 0.0
    %8698 = vmatprep.subr.mxu0 0.0
    %8699 = vmatpush2.msra.mxu0 0.0
    %8700 = vmatprep.subr.mxu0 0.0
    %8701 = vmatpush2.msra.mxu0 0.0
    %8702 = vmatprep.mubr.f32.mxu0 0.0
    %v8703 = vand.u32 %v8346, 4294901760
    %v8704 = vsub.f32 %v8346, %v8703
    %v8705 = vand.u32 %v8704, 4294901760
    %8706 = vmatmul.mubr.f32.gmra.mxu0 %v8705
    %v8707 = vpop.f32.mrf.mxu0
    %v8708 = vadd.f32 %v8627, %v8707
    %v8709 = vpop.f32.mrf.mxu0
    %8710 = vdwg.mxu0
    %8711 = vmatprep.subr.mxu0 0.0
    %8712 = vmatpush1.msra.mxu0 0.0
    %8713 = vmatprep.subr.mxu0 0.0
    %8714 = vmatpush1.msra.mxu0 0.0
    %8715 = vmatprep.subr.mxu0 0.0
    %8716 = vmatpush1.msra.mxu0 0.0
    %8717 = vmatprep.subr.mxu0 0.0
    %8718 = vmatpush1.msra.mxu0 0.0
    %8719 = vmatprep.subr.mxu0 0.0
    %8720 = vmatpush1.msra.mxu0 0.0
    %8721 = vmatprep.subr.mxu0 0.0
    %8722 = vmatpush1.msra.mxu0 0.0
    %8723 = vmatprep.subr.mxu0 0.0
    %8724 = vmatpush1.msra.mxu0 0.0
    %8725 = vmatprep.subr.mxu0 0.0
    %8726 = vmatpush1.msra.mxu0 0.0
    %8727 = vmatprep.subr.mxu0 0.0
    %v8728 = vand.u32 %v52, 4294901760
    %v8729 = vsub.f32 %v52, %v8728
    %v8730 = vand.u32 %v8729, 4294901760
    %8731 = vmatpush1.msra.mxu0 %v8730
    %8732 = vmatprep.subr.mxu0 0.0
    %v8733 = vand.u32 %v51, 4294901760
    %v8734 = vsub.f32 %v51, %v8733
    %v8735 = vand.u32 %v8734, 4294901760
    %8736 = vmatpush1.msra.mxu0 %v8735
    %8737 = vmatprep.subr.mxu0 0.0
    %v8738 = vand.u32 %v50, 4294901760
    %v8739 = vsub.f32 %v50, %v8738
    %v8740 = vand.u32 %v8739, 4294901760
    %8741 = vmatpush1.msra.mxu0 %v8740
    %8742 = vmatprep.subr.mxu0 0.0
    %v8743 = vand.u32 %v49, 4294901760
    %v8744 = vsub.f32 %v49, %v8743
    %v8745 = vand.u32 %v8744, 4294901760
    %8746 = vmatpush1.msra.mxu0 %v8745
    %8747 = vmatprep.subr.mxu0 0.0
    %v8748 = vand.u32 %v48, 4294901760
    %v8749 = vsub.f32 %v48, %v8748
    %v8750 = vand.u32 %v8749, 4294901760
    %8751 = vmatpush1.msra.mxu0 %v8750
    %8752 = vmatprep.subr.mxu0 0.0
    %v8753 = vand.u32 %v47, 4294901760
    %v8754 = vsub.f32 %v47, %v8753
    %v8755 = vand.u32 %v8754, 4294901760
    %8756 = vmatpush1.msra.mxu0 %v8755
    %8757 = vmatprep.subr.mxu0 0.0
    %v8758 = vand.u32 %v46, 4294901760
    %v8759 = vsub.f32 %v46, %v8758
    %v8760 = vand.u32 %v8759, 4294901760
    %8761 = vmatpush1.msra.mxu0 %v8760
    %8762 = vmatprep.subr.mxu0 0.0
    %v8763 = vand.u32 %v45, 4294901760
    %v8764 = vsub.f32 %v45, %v8763
    %v8765 = vand.u32 %v8764, 4294901760
    %8766 = vmatpush1.msra.mxu0 %v8765
    %8767 = vmatprep.subr.mxu0 0.0
    %8768 = vmatpush2.msra.mxu0 0.0
    %8769 = vmatprep.subr.mxu0 0.0
    %8770 = vmatpush2.msra.mxu0 0.0
    %8771 = vmatprep.subr.mxu0 0.0
    %8772 = vmatpush2.msra.mxu0 0.0
    %8773 = vmatprep.subr.mxu0 0.0
    %8774 = vmatpush2.msra.mxu0 0.0
    %8775 = vmatprep.subr.mxu0 0.0
    %8776 = vmatpush2.msra.mxu0 0.0
    %8777 = vmatprep.subr.mxu0 0.0
    %8778 = vmatpush2.msra.mxu0 0.0
    %8779 = vmatprep.subr.mxu0 0.0
    %8780 = vmatpush2.msra.mxu0 0.0
    %8781 = vmatprep.subr.mxu0 0.0
    %8782 = vmatpush2.msra.mxu0 0.0
    %8783 = vmatprep.subr.mxu0 0.0
    %8784 = vmatpush2.msra.mxu0 0.0
    %8785 = vmatprep.subr.mxu0 0.0
    %8786 = vmatpush2.msra.mxu0 0.0
    %8787 = vmatprep.subr.mxu0 0.0
    %8788 = vmatpush2.msra.mxu0 0.0
    %8789 = vmatprep.subr.mxu0 0.0
    %8790 = vmatpush2.msra.mxu0 0.0
    %8791 = vmatprep.subr.mxu0 0.0
    %8792 = vmatpush2.msra.mxu0 0.0
    %8793 = vmatprep.subr.mxu0 0.0
    %8794 = vmatpush2.msra.mxu0 0.0
    %8795 = vmatprep.subr.mxu0 0.0
    %8796 = vmatpush2.msra.mxu0 0.0
    %8797 = vmatprep.subr.mxu0 0.0
    %8798 = vmatpush2.msra.mxu0 0.0
    %8799 = vmatprep.mubr.f32.mxu0 0.0
    %v8800 = vand.u32 %v8346, 4294901760
    %8801 = vmatmul.mubr.f32.gmra.mxu0 %v8800
    %v8802 = vpop.f32.mrf.mxu0
    %v8803 = vadd.f32 %v8708, %v8802
    %v8804 = vpop.f32.mrf.mxu0
    %8805 = vdwg.mxu0
    %8806 = vmatprep.subr.mxu0 0.0
    %8807 = vmatpush1.msra.mxu0 0.0
    %8808 = vmatprep.subr.mxu0 0.0
    %8809 = vmatpush1.msra.mxu0 0.0
    %8810 = vmatprep.subr.mxu0 0.0
    %8811 = vmatpush1.msra.mxu0 0.0
    %8812 = vmatprep.subr.mxu0 0.0
    %8813 = vmatpush1.msra.mxu0 0.0
    %8814 = vmatprep.subr.mxu0 0.0
    %8815 = vmatpush1.msra.mxu0 0.0
    %8816 = vmatprep.subr.mxu0 0.0
    %8817 = vmatpush1.msra.mxu0 0.0
    %8818 = vmatprep.subr.mxu0 0.0
    %8819 = vmatpush1.msra.mxu0 0.0
    %8820 = vmatprep.subr.mxu0 0.0
    %8821 = vmatpush1.msra.mxu0 0.0
    %8822 = vmatprep.subr.mxu0 0.0
    %v8823 = vand.u32 %v52, 4294901760
    %8824 = vmatpush1.msra.mxu0 %v8823
    %8825 = vmatprep.subr.mxu0 0.0
    %v8826 = vand.u32 %v51, 4294901760
    %8827 = vmatpush1.msra.mxu0 %v8826
    %8828 = vmatprep.subr.mxu0 0.0
    %v8829 = vand.u32 %v50, 4294901760
    %8830 = vmatpush1.msra.mxu0 %v8829
    %8831 = vmatprep.subr.mxu0 0.0
    %v8832 = vand.u32 %v49, 4294901760
    %8833 = vmatpush1.msra.mxu0 %v8832
    %8834 = vmatprep.subr.mxu0 0.0
    %v8835 = vand.u32 %v48, 4294901760
    %8836 = vmatpush1.msra.mxu0 %v8835
    %8837 = vmatprep.subr.mxu0 0.0
    %v8838 = vand.u32 %v47, 4294901760
    %8839 = vmatpush1.msra.mxu0 %v8838
    %8840 = vmatprep.subr.mxu0 0.0
    %v8841 = vand.u32 %v46, 4294901760
    %8842 = vmatpush1.msra.mxu0 %v8841
    %8843 = vmatprep.subr.mxu0 0.0
    %v8844 = vand.u32 %v45, 4294901760
    %8845 = vmatpush1.msra.mxu0 %v8844
    %8846 = vmatprep.subr.mxu0 0.0
    %8847 = vmatpush2.msra.mxu0 0.0
    %8848 = vmatprep.subr.mxu0 0.0
    %8849 = vmatpush2.msra.mxu0 0.0
    %8850 = vmatprep.subr.mxu0 0.0
    %8851 = vmatpush2.msra.mxu0 0.0
    %8852 = vmatprep.subr.mxu0 0.0
    %8853 = vmatpush2.msra.mxu0 0.0
    %8854 = vmatprep.subr.mxu0 0.0
    %8855 = vmatpush2.msra.mxu0 0.0
    %8856 = vmatprep.subr.mxu0 0.0
    %8857 = vmatpush2.msra.mxu0 0.0
    %8858 = vmatprep.subr.mxu0 0.0
    %8859 = vmatpush2.msra.mxu0 0.0
    %8860 = vmatprep.subr.mxu0 0.0
    %8861 = vmatpush2.msra.mxu0 0.0
    %8862 = vmatprep.subr.mxu0 0.0
    %8863 = vmatpush2.msra.mxu0 0.0
    %8864 = vmatprep.subr.mxu0 0.0
    %8865 = vmatpush2.msra.mxu0 0.0
    %8866 = vmatprep.subr.mxu0 0.0
    %8867 = vmatpush2.msra.mxu0 0.0
    %8868 = vmatprep.subr.mxu0 0.0
    %8869 = vmatpush2.msra.mxu0 0.0
    %8870 = vmatprep.subr.mxu0 0.0
    %8871 = vmatpush2.msra.mxu0 0.0
    %8872 = vmatprep.subr.mxu0 0.0
    %8873 = vmatpush2.msra.mxu0 0.0
    %8874 = vmatprep.subr.mxu0 0.0
    %8875 = vmatpush2.msra.mxu0 0.0
    %8876 = vmatprep.subr.mxu0 0.0
    %8877 = vmatpush2.msra.mxu0 0.0
    %8878 = vmatprep.mubr.f32.mxu0 0.0
    %v8879 = vand.u32 %v8346, 4294901760
    %8880 = vmatmul.mubr.f32.gmra.mxu0 %v8879
    %v8881 = vpop.f32.mrf.mxu0
    %v8882 = vadd.f32 %v8803, %v8881
    %v8883 = vpop.f32.mrf.mxu0
    %8884 = vdwg.mxu0
    %v8885 = vtanh.pop %v8882
    %v8886 = vrot.slane %v3127, 7
    %v8888 = vrot.slane %v4169, 6
    %v8890 = vrot.slane %v5211, 5
    %v8892 = vrot.slane %v6253, 4
    %v8894 = vrot.slane %v7295, 3
    %v8896 = vrot.slane %v8337, 2
    %v8899 = vrot.slane %v8885, 1
    %vm8901 = vcmask 1040384
    %v8902 = vsel %vm8901, %v2085, %v8886
    %vm8903 = vcmask 1041408
    %v8904 = vsel %vm8903, %v8902, %v8888
    %vm8905 = vcmask 1042432
    %v8906 = vsel %vm8905, %v8904, %v8890
    %vm8907 = vcmask 1043456
    %v8908 = vsel %vm8907, %v8906, %v8892
    %vm8909 = vcmask 1044480
    %v8910 = vsel %vm8909, %v8908, %v8894
    %vm8911 = vcmask 1045504
    %v8912 = vsel %vm8911, %v8910, %v8896
    %vm8913 = vcmask 1046528
    %v8914 = vsel %vm8913, %v8912, %v8899
    %v8915 = vld [vmem:[%s4] sm:$0xff]
    %v8916 = vld [vmem:[%s4 + $0x8] sm:$0xff]
    %v8917 = vld [vmem:[%s4 + $0x10] sm:$0xff]
    %v8918 = vld [vmem:[%s4 + $0x18] sm:$0xff]
    %v8919 = vld [vmem:[%s4 + $0x20] sm:$0x1]
    %v8920 = vlaneseq
    %v8921 = vshrl.u32 %v8920, 7
    %v8922 = vsub.s32 0, %v8921
    %v8923 = vrot.slane %v8919, %v8922
    %v8925 = vsel %vm64, %v8914, 0
    %8927 = vmatprep.subr.mxu0 0.0
    %8928 = vmatpush1.msra.mxu0 0.0
    %8929 = vmatprep.subr.mxu0 0.0
    %8930 = vmatpush1.msra.mxu0 0.0
    %8931 = vmatprep.subr.mxu0 0.0
    %8932 = vmatpush1.msra.mxu0 0.0
    %8933 = vmatprep.subr.mxu0 0.0
    %8934 = vmatpush1.msra.mxu0 0.0
    %8935 = vmatprep.subr.mxu0 0.0
    %8936 = vmatpush1.msra.mxu0 0.0
    %8937 = vmatprep.subr.mxu0 0.0
    %8938 = vmatpush1.msra.mxu0 0.0
    %8939 = vmatprep.subr.mxu0 0.0
    %8940 = vmatpush1.msra.mxu0 0.0
    %8941 = vmatprep.subr.mxu0 0.0
    %8942 = vmatpush1.msra.mxu0 0.0
    %8943 = vmatprep.subr.mxu0 0.0
    %8944 = vmatpush1.msra.mxu0 0.0
    %8945 = vmatprep.subr.mxu0 0.0
    %8946 = vmatpush1.msra.mxu0 0.0
    %8947 = vmatprep.subr.mxu0 0.0
    %8948 = vmatpush1.msra.mxu0 0.0
    %8949 = vmatprep.subr.mxu0 0.0
    %8950 = vmatpush1.msra.mxu0 0.0
    %8951 = vmatprep.subr.mxu0 0.0
    %v8952 = vand.u32 %v8918, 4294901760
    %8953 = vmatpush1.msra.mxu0 %v8952
    %8954 = vmatprep.subr.mxu0 0.0
    %v8955 = vand.u32 %v8917, 4294901760
    %8956 = vmatpush1.msra.mxu0 %v8955
    %8957 = vmatprep.subr.mxu0 0.0
    %v8958 = vand.u32 %v8916, 4294901760
    %8959 = vmatpush1.msra.mxu0 %v8958
    %8960 = vmatprep.subr.mxu0 0.0
    %v8961 = vand.u32 %v8915, 4294901760
    %8962 = vmatpush1.msra.mxu0 %v8961
    %8963 = vmatprep.subr.mxu0 0.0
    %8964 = vmatpush2.msra.mxu0 0.0
    %8965 = vmatprep.subr.mxu0 0.0
    %8966 = vmatpush2.msra.mxu0 0.0
    %8967 = vmatprep.subr.mxu0 0.0
    %8968 = vmatpush2.msra.mxu0 0.0
    %8969 = vmatprep.subr.mxu0 0.0
    %8970 = vmatpush2.msra.mxu0 0.0
    %8971 = vmatprep.subr.mxu0 0.0
    %8972 = vmatpush2.msra.mxu0 0.0
    %8973 = vmatprep.subr.mxu0 0.0
    %8974 = vmatpush2.msra.mxu0 0.0
    %8975 = vmatprep.subr.mxu0 0.0
    %8976 = vmatpush2.msra.mxu0 0.0
    %8977 = vmatprep.subr.mxu0 0.0
    %8978 = vmatpush2.msra.mxu0 0.0
    %8979 = vmatprep.subr.mxu0 0.0
    %8980 = vmatpush2.msra.mxu0 0.0
    %8981 = vmatprep.subr.mxu0 0.0
    %8982 = vmatpush2.msra.mxu0 0.0
    %8983 = vmatprep.subr.mxu0 0.0
    %8984 = vmatpush2.msra.mxu0 0.0
    %8985 = vmatprep.subr.mxu0 0.0
    %8986 = vmatpush2.msra.mxu0 0.0
    %8987 = vmatprep.subr.mxu0 0.0
    %8988 = vmatpush2.msra.mxu0 0.0
    %8989 = vmatprep.subr.mxu0 0.0
    %8990 = vmatpush2.msra.mxu0 0.0
    %8991 = vmatprep.subr.mxu0 0.0
    %8992 = vmatpush2.msra.mxu0 0.0
    %8993 = vmatprep.subr.mxu0 0.0
    %8994 = vmatpush2.msra.mxu0 0.0
    %8995 = vmatprep.mubr.f32.mxu0 0.0
    %v8996 = vand.u32 %v8925, 4294901760
    %v8997 = vsub.f32 %v8925, %v8996
    %v8998 = vand.u32 %v8997, 4294901760
    %v8999 = vsub.f32 %v8997, %v8998
    %v9000 = vand.u32 %v8999, 4294901760
    %9001 = vmatmul.mubr.f32.gmra.mxu0 %v9000
    %v9002 = vpop.f32.mrf.mxu0
    %v9003 = vadd.f32 %v8923, %v9002
    %v9004 = vpop.f32.mrf.mxu0
    %9005 = vdwg.mxu0
    %9006 = vmatprep.subr.mxu0 0.0
    %9007 = vmatpush1.msra.mxu0 0.0
    %9008 = vmatprep.subr.mxu0 0.0
    %9009 = vmatpush1.msra.mxu0 0.0
    %9010 = vmatprep.subr.mxu0 0.0
    %9011 = vmatpush1.msra.mxu0 0.0
    %9012 = vmatprep.subr.mxu0 0.0
    %9013 = vmatpush1.msra.mxu0 0.0
    %9014 = vmatprep.subr.mxu0 0.0
    %9015 = vmatpush1.msra.mxu0 0.0
    %9016 = vmatprep.subr.mxu0 0.0
    %9017 = vmatpush1.msra.mxu0 0.0
    %9018 = vmatprep.subr.mxu0 0.0
    %9019 = vmatpush1.msra.mxu0 0.0
    %9020 = vmatprep.subr.mxu0 0.0
    %9021 = vmatpush1.msra.mxu0 0.0
    %9022 = vmatprep.subr.mxu0 0.0
    %9023 = vmatpush1.msra.mxu0 0.0
    %9024 = vmatprep.subr.mxu0 0.0
    %9025 = vmatpush1.msra.mxu0 0.0
    %9026 = vmatprep.subr.mxu0 0.0
    %9027 = vmatpush1.msra.mxu0 0.0
    %9028 = vmatprep.subr.mxu0 0.0
    %9029 = vmatpush1.msra.mxu0 0.0
    %9030 = vmatprep.subr.mxu0 0.0
    %v9031 = vand.u32 %v8918, 4294901760
    %v9032 = vsub.f32 %v8918, %v9031
    %v9033 = vand.u32 %v9032, 4294901760
    %v9034 = vsub.f32 %v9032, %v9033
    %v9035 = vand.u32 %v9034, 4294901760
    %9036 = vmatpush1.msra.mxu0 %v9035
    %9037 = vmatprep.subr.mxu0 0.0
    %v9038 = vand.u32 %v8917, 4294901760
    %v9039 = vsub.f32 %v8917, %v9038
    %v9040 = vand.u32 %v9039, 4294901760
    %v9041 = vsub.f32 %v9039, %v9040
    %v9042 = vand.u32 %v9041, 4294901760
    %9043 = vmatpush1.msra.mxu0 %v9042
    %9044 = vmatprep.subr.mxu0 0.0
    %v9045 = vand.u32 %v8916, 4294901760
    %v9046 = vsub.f32 %v8916, %v9045
    %v9047 = vand.u32 %v9046, 4294901760
    %v9048 = vsub.f32 %v9046, %v9047
    %v9049 = vand.u32 %v9048, 4294901760
    %9050 = vmatpush1.msra.mxu0 %v9049
    %9051 = vmatprep.subr.mxu0 0.0
    %v9052 = vand.u32 %v8915, 4294901760
    %v9053 = vsub.f32 %v8915, %v9052
    %v9054 = vand.u32 %v9053, 4294901760
    %v9055 = vsub.f32 %v9053, %v9054
    %v9056 = vand.u32 %v9055, 4294901760
    %9057 = vmatpush1.msra.mxu0 %v9056
    %9058 = vmatprep.subr.mxu0 0.0
    %9059 = vmatpush2.msra.mxu0 0.0
    %9060 = vmatprep.subr.mxu0 0.0
    %9061 = vmatpush2.msra.mxu0 0.0
    %9062 = vmatprep.subr.mxu0 0.0
    %9063 = vmatpush2.msra.mxu0 0.0
    %9064 = vmatprep.subr.mxu0 0.0
    %9065 = vmatpush2.msra.mxu0 0.0
    %9066 = vmatprep.subr.mxu0 0.0
    %9067 = vmatpush2.msra.mxu0 0.0
    %9068 = vmatprep.subr.mxu0 0.0
    %9069 = vmatpush2.msra.mxu0 0.0
    %9070 = vmatprep.subr.mxu0 0.0
    %9071 = vmatpush2.msra.mxu0 0.0
    %9072 = vmatprep.subr.mxu0 0.0
    %9073 = vmatpush2.msra.mxu0 0.0
    %9074 = vmatprep.subr.mxu0 0.0
    %9075 = vmatpush2.msra.mxu0 0.0
    %9076 = vmatprep.subr.mxu0 0.0
    %9077 = vmatpush2.msra.mxu0 0.0
    %9078 = vmatprep.subr.mxu0 0.0
    %9079 = vmatpush2.msra.mxu0 0.0
    %9080 = vmatprep.subr.mxu0 0.0
    %9081 = vmatpush2.msra.mxu0 0.0
    %9082 = vmatprep.subr.mxu0 0.0
    %9083 = vmatpush2.msra.mxu0 0.0
    %9084 = vmatprep.subr.mxu0 0.0
    %9085 = vmatpush2.msra.mxu0 0.0
    %9086 = vmatprep.subr.mxu0 0.0
    %9087 = vmatpush2.msra.mxu0 0.0
    %9088 = vmatprep.subr.mxu0 0.0
    %9089 = vmatpush2.msra.mxu0 0.0
    %9090 = vmatprep.mubr.f32.mxu0 0.0
    %v9091 = vand.u32 %v8925, 4294901760
    %9092 = vmatmul.mubr.f32.gmra.mxu0 %v9091
    %v9093 = vpop.f32.mrf.mxu0
    %v9094 = vadd.f32 %v9003, %v9093
    %v9095 = vpop.f32.mrf.mxu0
    %9096 = vdwg.mxu0
    %9097 = vmatprep.subr.mxu0 0.0
    %9098 = vmatpush1.msra.mxu0 0.0
    %9099 = vmatprep.subr.mxu0 0.0
    %9100 = vmatpush1.msra.mxu0 0.0
    %9101 = vmatprep.subr.mxu0 0.0
    %9102 = vmatpush1.msra.mxu0 0.0
    %9103 = vmatprep.subr.mxu0 0.0
    %9104 = vmatpush1.msra.mxu0 0.0
    %9105 = vmatprep.subr.mxu0 0.0
    %9106 = vmatpush1.msra.mxu0 0.0
    %9107 = vmatprep.subr.mxu0 0.0
    %9108 = vmatpush1.msra.mxu0 0.0
    %9109 = vmatprep.subr.mxu0 0.0
    %9110 = vmatpush1.msra.mxu0 0.0
    %9111 = vmatprep.subr.mxu0 0.0
    %9112 = vmatpush1.msra.mxu0 0.0
    %9113 = vmatprep.subr.mxu0 0.0
    %9114 = vmatpush1.msra.mxu0 0.0
    %9115 = vmatprep.subr.mxu0 0.0
    %9116 = vmatpush1.msra.mxu0 0.0
    %9117 = vmatprep.subr.mxu0 0.0
    %9118 = vmatpush1.msra.mxu0 0.0
    %9119 = vmatprep.subr.mxu0 0.0
    %9120 = vmatpush1.msra.mxu0 0.0
    %9121 = vmatprep.subr.mxu0 0.0
    %v9122 = vand.u32 %v8918, 4294901760
    %v9123 = vsub.f32 %v8918, %v9122
    %9124 = vmatpush1.msra.mxu0 %v9123
    %9125 = vmatprep.subr.mxu0 0.0
    %v9126 = vand.u32 %v8917, 4294901760
    %v9127 = vsub.f32 %v8917, %v9126
    %9128 = vmatpush1.msra.mxu0 %v9127
    %9129 = vmatprep.subr.mxu0 0.0
    %v9130 = vand.u32 %v8916, 4294901760
    %v9131 = vsub.f32 %v8916, %v9130
    %9132 = vmatpush1.msra.mxu0 %v9131
    %9133 = vmatprep.subr.mxu0 0.0
    %v9134 = vand.u32 %v8915, 4294901760
    %v9135 = vsub.f32 %v8915, %v9134
    %9136 = vmatpush1.msra.mxu0 %v9135
    %9137 = vmatprep.subr.mxu0 0.0
    %9138 = vmatpush2.msra.mxu0 0.0
    %9139 = vmatprep.subr.mxu0 0.0
    %9140 = vmatpush2.msra.mxu0 0.0
    %9141 = vmatprep.subr.mxu0 0.0
    %9142 = vmatpush2.msra.mxu0 0.0
    %9143 = vmatprep.subr.mxu0 0.0
    %9144 = vmatpush2.msra.mxu0 0.0
    %9145 = vmatprep.subr.mxu0 0.0
    %9146 = vmatpush2.msra.mxu0 0.0
    %9147 = vmatprep.subr.mxu0 0.0
    %9148 = vmatpush2.msra.mxu0 0.0
    %9149 = vmatprep.subr.mxu0 0.0
    %9150 = vmatpush2.msra.mxu0 0.0
    %9151 = vmatprep.subr.mxu0 0.0
    %9152 = vmatpush2.msra.mxu0 0.0
    %9153 = vmatprep.subr.mxu0 0.0
    %9154 = vmatpush2.msra.mxu0 0.0
    %9155 = vmatprep.subr.mxu0 0.0
    %9156 = vmatpush2.msra.mxu0 0.0
    %9157 = vmatprep.subr.mxu0 0.0
    %9158 = vmatpush2.msra.mxu0 0.0
    %9159 = vmatprep.subr.mxu0 0.0
    %9160 = vmatpush2.msra.mxu0 0.0
    %9161 = vmatprep.subr.mxu0 0.0
    %9162 = vmatpush2.msra.mxu0 0.0
    %9163 = vmatprep.subr.mxu0 0.0
    %9164 = vmatpush2.msra.mxu0 0.0
    %9165 = vmatprep.subr.mxu0 0.0
    %9166 = vmatpush2.msra.mxu0 0.0
    %9167 = vmatprep.subr.mxu0 0.0
    %9168 = vmatpush2.msra.mxu0 0.0
    %9169 = vmatprep.mubr.f32.mxu0 0.0
    %v9170 = vand.u32 %v8925, 4294901760
    %v9171 = vsub.f32 %v8925, %v9170
    %9172 = vmatmul.mubr.f32.gmra.mxu0 %v9171
    %v9173 = vpop.f32.mrf.mxu0
    %v9174 = vadd.f32 %v9094, %v9173
    %v9175 = vpop.f32.mrf.mxu0
    %9176 = vdwg.mxu0
    %9177 = vmatprep.subr.mxu0 0.0
    %9178 = vmatpush1.msra.mxu0 0.0
    %9179 = vmatprep.subr.mxu0 0.0
    %9180 = vmatpush1.msra.mxu0 0.0
    %9181 = vmatprep.subr.mxu0 0.0
    %9182 = vmatpush1.msra.mxu0 0.0
    %9183 = vmatprep.subr.mxu0 0.0
    %9184 = vmatpush1.msra.mxu0 0.0
    %9185 = vmatprep.subr.mxu0 0.0
    %9186 = vmatpush1.msra.mxu0 0.0
    %9187 = vmatprep.subr.mxu0 0.0
    %9188 = vmatpush1.msra.mxu0 0.0
    %9189 = vmatprep.subr.mxu0 0.0
    %9190 = vmatpush1.msra.mxu0 0.0
    %9191 = vmatprep.subr.mxu0 0.0
    %9192 = vmatpush1.msra.mxu0 0.0
    %9193 = vmatprep.subr.mxu0 0.0
    %9194 = vmatpush1.msra.mxu0 0.0
    %9195 = vmatprep.subr.mxu0 0.0
    %9196 = vmatpush1.msra.mxu0 0.0
    %9197 = vmatprep.subr.mxu0 0.0
    %9198 = vmatpush1.msra.mxu0 0.0
    %9199 = vmatprep.subr.mxu0 0.0
    %9200 = vmatpush1.msra.mxu0 0.0
    %9201 = vmatprep.subr.mxu0 0.0
    %v9202 = vand.u32 %v8918, 4294901760
    %9203 = vmatpush1.msra.mxu0 %v9202
    %9204 = vmatprep.subr.mxu0 0.0
    %v9205 = vand.u32 %v8917, 4294901760
    %9206 = vmatpush1.msra.mxu0 %v9205
    %9207 = vmatprep.subr.mxu0 0.0
    %v9208 = vand.u32 %v8916, 4294901760
    %9209 = vmatpush1.msra.mxu0 %v9208
    %9210 = vmatprep.subr.mxu0 0.0
    %v9211 = vand.u32 %v8915, 4294901760
    %9212 = vmatpush1.msra.mxu0 %v9211
    %9213 = vmatprep.subr.mxu0 0.0
    %9214 = vmatpush2.msra.mxu0 0.0
    %9215 = vmatprep.subr.mxu0 0.0
    %9216 = vmatpush2.msra.mxu0 0.0
    %9217 = vmatprep.subr.mxu0 0.0
    %9218 = vmatpush2.msra.mxu0 0.0
    %9219 = vmatprep.subr.mxu0 0.0
    %9220 = vmatpush2.msra.mxu0 0.0
    %9221 = vmatprep.subr.mxu0 0.0
    %9222 = vmatpush2.msra.mxu0 0.0
    %9223 = vmatprep.subr.mxu0 0.0
    %9224 = vmatpush2.msra.mxu0 0.0
    %9225 = vmatprep.subr.mxu0 0.0
    %9226 = vmatpush2.msra.mxu0 0.0
    %9227 = vmatprep.subr.mxu0 0.0
    %9228 = vmatpush2.msra.mxu0 0.0
    %9229 = vmatprep.subr.mxu0 0.0
    %9230 = vmatpush2.msra.mxu0 0.0
    %9231 = vmatprep.subr.mxu0 0.0
    %9232 = vmatpush2.msra.mxu0 0.0
    %9233 = vmatprep.subr.mxu0 0.0
    %9234 = vmatpush2.msra.mxu0 0.0
    %9235 = vmatprep.subr.mxu0 0.0
    %9236 = vmatpush2.msra.mxu0 0.0
    %9237 = vmatprep.subr.mxu0 0.0
    %9238 = vmatpush2.msra.mxu0 0.0
    %9239 = vmatprep.subr.mxu0 0.0
    %9240 = vmatpush2.msra.mxu0 0.0
    %9241 = vmatprep.subr.mxu0 0.0
    %9242 = vmatpush2.msra.mxu0 0.0
    %9243 = vmatprep.subr.mxu0 0.0
    %9244 = vmatpush2.msra.mxu0 0.0
    %9245 = vmatprep.mubr.f32.mxu0 0.0
    %v9246 = vand.u32 %v8925, 4294901760
    %v9247 = vsub.f32 %v8925, %v9246
    %v9248 = vand.u32 %v9247, 4294901760
    %9249 = vmatmul.mubr.f32.gmra.mxu0 %v9248
    %v9250 = vpop.f32.mrf.mxu0
    %v9251 = vadd.f32 %v9174, %v9250
    %v9252 = vpop.f32.mrf.mxu0
    %9253 = vdwg.mxu0
    %9254 = vmatprep.subr.mxu0 0.0
    %9255 = vmatpush1.msra.mxu0 0.0
    %9256 = vmatprep.subr.mxu0 0.0
    %9257 = vmatpush1.msra.mxu0 0.0
    %9258 = vmatprep.subr.mxu0 0.0
    %9259 = vmatpush1.msra.mxu0 0.0
    %9260 = vmatprep.subr.mxu0 0.0
    %9261 = vmatpush1.msra.mxu0 0.0
    %9262 = vmatprep.subr.mxu0 0.0
    %9263 = vmatpush1.msra.mxu0 0.0
    %9264 = vmatprep.subr.mxu0 0.0
    %9265 = vmatpush1.msra.mxu0 0.0
    %9266 = vmatprep.subr.mxu0 0.0
    %9267 = vmatpush1.msra.mxu0 0.0
    %9268 = vmatprep.subr.mxu0 0.0
    %9269 = vmatpush1.msra.mxu0 0.0
    %9270 = vmatprep.subr.mxu0 0.0
    %9271 = vmatpush1.msra.mxu0 0.0
    %9272 = vmatprep.subr.mxu0 0.0
    %9273 = vmatpush1.msra.mxu0 0.0
    %9274 = vmatprep.subr.mxu0 0.0
    %9275 = vmatpush1.msra.mxu0 0.0
    %9276 = vmatprep.subr.mxu0 0.0
    %9277 = vmatpush1.msra.mxu0 0.0
    %9278 = vmatprep.subr.mxu0 0.0
    %v9279 = vand.u32 %v8918, 4294901760
    %v9280 = vsub.f32 %v8918, %v9279
    %v9281 = vand.u32 %v9280, 4294901760
    %9282 = vmatpush1.msra.mxu0 %v9281
    %9283 = vmatprep.subr.mxu0 0.0
    %v9284 = vand.u32 %v8917, 4294901760
    %v9285 = vsub.f32 %v8917, %v9284
    %v9286 = vand.u32 %v9285, 4294901760
    %9287 = vmatpush1.msra.mxu0 %v9286
    %9288 = vmatprep.subr.mxu0 0.0
    %v9289 = vand.u32 %v8916, 4294901760
    %v9290 = vsub.f32 %v8916, %v9289
    %v9291 = vand.u32 %v9290, 4294901760
    %9292 = vmatpush1.msra.mxu0 %v9291
    %9293 = vmatprep.subr.mxu0 0.0
    %v9294 = vand.u32 %v8915, 4294901760
    %v9295 = vsub.f32 %v8915, %v9294
    %v9296 = vand.u32 %v9295, 4294901760
    %9297 = vmatpush1.msra.mxu0 %v9296
    %9298 = vmatprep.subr.mxu0 0.0
    %9299 = vmatpush2.msra.mxu0 0.0
    %9300 = vmatprep.subr.mxu0 0.0
    %9301 = vmatpush2.msra.mxu0 0.0
    %9302 = vmatprep.subr.mxu0 0.0
    %9303 = vmatpush2.msra.mxu0 0.0
    %9304 = vmatprep.subr.mxu0 0.0
    %9305 = vmatpush2.msra.mxu0 0.0
    %9306 = vmatprep.subr.mxu0 0.0
    %9307 = vmatpush2.msra.mxu0 0.0
    %9308 = vmatprep.subr.mxu0 0.0
    %9309 = vmatpush2.msra.mxu0 0.0
    %9310 = vmatprep.subr.mxu0 0.0
    %9311 = vmatpush2.msra.mxu0 0.0
    %9312 = vmatprep.subr.mxu0 0.0
    %9313 = vmatpush2.msra.mxu0 0.0
    %9314 = vmatprep.subr.mxu0 0.0
    %9315 = vmatpush2.msra.mxu0 0.0
    %9316 = vmatprep.subr.mxu0 0.0
    %9317 = vmatpush2.msra.mxu0 0.0
    %9318 = vmatprep.subr.mxu0 0.0
    %9319 = vmatpush2.msra.mxu0 0.0
    %9320 = vmatprep.subr.mxu0 0.0
    %9321 = vmatpush2.msra.mxu0 0.0
    %9322 = vmatprep.subr.mxu0 0.0
    %9323 = vmatpush2.msra.mxu0 0.0
    %9324 = vmatprep.subr.mxu0 0.0
    %9325 = vmatpush2.msra.mxu0 0.0
    %9326 = vmatprep.subr.mxu0 0.0
    %9327 = vmatpush2.msra.mxu0 0.0
    %9328 = vmatprep.subr.mxu0 0.0
    %9329 = vmatpush2.msra.mxu0 0.0
    %9330 = vmatprep.mubr.f32.mxu0 0.0
    %v9331 = vand.u32 %v8925, 4294901760
    %9332 = vmatmul.mubr.f32.gmra.mxu0 %v9331
    %v9333 = vpop.f32.mrf.mxu0
    %v9334 = vadd.f32 %v9251, %v9333
    %v9335 = vpop.f32.mrf.mxu0
    %9336 = vdwg.mxu0
    %9337 = vmatprep.subr.mxu0 0.0
    %9338 = vmatpush1.msra.mxu0 0.0
    %9339 = vmatprep.subr.mxu0 0.0
    %9340 = vmatpush1.msra.mxu0 0.0
    %9341 = vmatprep.subr.mxu0 0.0
    %9342 = vmatpush1.msra.mxu0 0.0
    %9343 = vmatprep.subr.mxu0 0.0
    %9344 = vmatpush1.msra.mxu0 0.0
    %9345 = vmatprep.subr.mxu0 0.0
    %9346 = vmatpush1.msra.mxu0 0.0
    %9347 = vmatprep.subr.mxu0 0.0
    %9348 = vmatpush1.msra.mxu0 0.0
    %9349 = vmatprep.subr.mxu0 0.0
    %9350 = vmatpush1.msra.mxu0 0.0
    %9351 = vmatprep.subr.mxu0 0.0
    %9352 = vmatpush1.msra.mxu0 0.0
    %9353 = vmatprep.subr.mxu0 0.0
    %9354 = vmatpush1.msra.mxu0 0.0
    %9355 = vmatprep.subr.mxu0 0.0
    %9356 = vmatpush1.msra.mxu0 0.0
    %9357 = vmatprep.subr.mxu0 0.0
    %9358 = vmatpush1.msra.mxu0 0.0
    %9359 = vmatprep.subr.mxu0 0.0
    %9360 = vmatpush1.msra.mxu0 0.0
    %9361 = vmatprep.subr.mxu0 0.0
    %v9362 = vand.u32 %v8918, 4294901760
    %9363 = vmatpush1.msra.mxu0 %v9362
    %9364 = vmatprep.subr.mxu0 0.0
    %v9365 = vand.u32 %v8917, 4294901760
    %9366 = vmatpush1.msra.mxu0 %v9365
    %9367 = vmatprep.subr.mxu0 0.0
    %v9368 = vand.u32 %v8916, 4294901760
    %9369 = vmatpush1.msra.mxu0 %v9368
    %9370 = vmatprep.subr.mxu0 0.0
    %v9371 = vand.u32 %v8915, 4294901760
    %9372 = vmatpush1.msra.mxu0 %v9371
    %9373 = vmatprep.subr.mxu0 0.0
    %9374 = vmatpush2.msra.mxu0 0.0
    %9375 = vmatprep.subr.mxu0 0.0
    %9376 = vmatpush2.msra.mxu0 0.0
    %9377 = vmatprep.subr.mxu0 0.0
    %9378 = vmatpush2.msra.mxu0 0.0
    %9379 = vmatprep.subr.mxu0 0.0
    %9380 = vmatpush2.msra.mxu0 0.0
    %9381 = vmatprep.subr.mxu0 0.0
    %9382 = vmatpush2.msra.mxu0 0.0
    %9383 = vmatprep.subr.mxu0 0.0
    %9384 = vmatpush2.msra.mxu0 0.0
    %9385 = vmatprep.subr.mxu0 0.0
    %9386 = vmatpush2.msra.mxu0 0.0
    %9387 = vmatprep.subr.mxu0 0.0
    %9388 = vmatpush2.msra.mxu0 0.0
    %9389 = vmatprep.subr.mxu0 0.0
    %9390 = vmatpush2.msra.mxu0 0.0
    %9391 = vmatprep.subr.mxu0 0.0
    %9392 = vmatpush2.msra.mxu0 0.0
    %9393 = vmatprep.subr.mxu0 0.0
    %9394 = vmatpush2.msra.mxu0 0.0
    %9395 = vmatprep.subr.mxu0 0.0
    %9396 = vmatpush2.msra.mxu0 0.0
    %9397 = vmatprep.subr.mxu0 0.0
    %9398 = vmatpush2.msra.mxu0 0.0
    %9399 = vmatprep.subr.mxu0 0.0
    %9400 = vmatpush2.msra.mxu0 0.0
    %9401 = vmatprep.subr.mxu0 0.0
    %9402 = vmatpush2.msra.mxu0 0.0
    %9403 = vmatprep.subr.mxu0 0.0
    %9404 = vmatpush2.msra.mxu0 0.0
    %9405 = vmatprep.mubr.f32.mxu0 0.0
    %v9406 = vand.u32 %v8925, 4294901760
    %9407 = vmatmul.mubr.f32.gmra.mxu0 %v9406
    %v9408 = vpop.f32.mrf.mxu0
    %v9409 = vadd.f32 %v9334, %v9408
    %v9410 = vpop.f32.mrf.mxu0
    %9411 = vdwg.mxu0
    %vm9412 = vcmask 130048
    %9413 = vst.msk [vmem:[#allocation5] sm:$0xff] %vm9412, %v9409
    %v9415 = vrot.slane %v7789, 7
    %v9417 = vrot.slane %v8885, 7
    %v9419 = vsel %vm8901, %v9415, %v9417
    %vm9420 = vcmask 254976
    %9421 = vst.msk [vmem:[#allocation6] sm:$0x3] %vm9420, %v9419
    // Predicated region
    $region30: #{model_forward.1} parent=1 // pred_check
      _
    $region31: #{model_forward.1} parent=1 // pred_check_branch
      %9423 = sbr.rel (0) target = $region33
    $region32: #{model_forward.1} parent=1 // pred_region
      %s9425 = ssub.s32 128, 128
      %9426 = vsyncadd [#allocation4], %s9425
      %s9428 = sshll.u32 [#allocation5], 4
      %s9429 = int_to_ptr.vmem [resolvable:$true] %s9428
      %9431 = dma.vmem_to_hbm [thread:$0]  %s9429, 128, %s6, [#allocation4]
    $region33: #{model_forward.1} parent=1 // pred_fallthru
      _
    // Predicated region
    $region34: #{model_forward.1} parent=1 // pred_check
      _
    $region35: #{model_forward.1} parent=1 // pred_check_branch
      %9433 = sbr.rel (0) target = $region37
    $region36: #{model_forward.1} parent=1 // pred_region
      %s9435 = ssub.s32 32, 32
      %9436 = vsyncadd [#allocation7], %s9435
      %s9438 = sshll.u32 [#allocation6], 4
      %s9439 = int_to_ptr.vmem [resolvable:$true] %s9438
      %9441 = dma.vmem_to_hbm [thread:$0]  %s9439, 32, %s7, [#allocation7]
    $region37: #{model_forward.1} parent=1 // pred_fallthru
      _
    // Predicated region
    $region38: #{model_forward.1} parent=1 // pred_check
      _
    $region39: #{model_forward.1} parent=1 // pred_check_branch
      %9443 = sbr.rel (0) target = $region41
    $region40: #{model_forward.1} parent=1 // pred_region
      %9444 = dma.done [#allocation4], 128
    $region41: #{model_forward.1} parent=1 // pred_fallthru
      _
    // Predicated region
    $region42: #{model_forward.1} parent=1 // pred_check
      _
    $region43: #{model_forward.1} parent=1 // pred_check_branch
      %9446 = sbr.rel (0) target = $region45
    $region44: #{model_forward.1} parent=1 // pred_region
      %9447 = dma.done [#allocation7], 32
    $region45: #{model_forward.1} parent=1 // pred_fallthru
      _
    %9448 = vsyncpa [#allocation3], 1
    %9449 = vsyncpa [#allocation4], 1
    %9450 = vsyncpa [#allocation7], 1

</llo_original>
